<compile_context>
chip_gen: v7x
topology: tpu7x:2x2x1
jax: 0.10.0
libtpu: 0.0.40
codegen_flags: <defaults>
</compile_context>

<pallas_src>
import functools

import jax
import jax.numpy as jnp
from jax.experimental import pallas as pl
from jax.experimental.pallas import tpu as pltpu


# ----------------------------------------------------------------------------
# In-kernel helpers
# ----------------------------------------------------------------------------
def _write_padded(pad_ref, interior, p):
    """Write `interior` into `pad_ref` with a zero halo of width `p`.

    Only the halo rows/cols are zeroed (cheap); re-done every grid step so
    correctness never depends on scratch persistence across steps/cores.
    """
    Hi, Wi, C = interior.shape
    dt = pad_ref.dtype
    if p > 0:
        Wp = Wi + 2 * p
        pad_ref[:p, :, :] = jnp.zeros((p, Wp, C), dt)
        pad_ref[Hi + p:, :, :] = jnp.zeros((p, Wp, C), dt)
        pad_ref[p:Hi + p, :p, :] = jnp.zeros((Hi, p, C), dt)
        pad_ref[p:Hi + p, Wi + p:, :] = jnp.zeros((Hi, p, C), dt)
    pad_ref[p:Hi + p, p:Wi + p, :] = interior.astype(dt)


def _conv3x3_bias_relu(pad_ref, w_ref, b_ref, Ho, Wo):
    """3x3 stride-1 valid conv over a padded VMEM scratch + bias + ReLU.

    pad_ref: (Ho+2, Wo+2, Cin)  bf16 scratch, already zero-padded
    w_ref:   (9*Cin, Cout)      bf16, K order (dy, dx, cin), BN scale folded
    b_ref:   (1, Cout)          f32 folded BN bias
    returns  (Ho*Wo, Cout)      f32
    """
    Cin = pad_ref.shape[-1]
    Cout = w_ref.shape[-1]
    if Cin >= 128:
        # Deep stages: 9 accumulating K=Cin matmuls -- the MXU K dim is already
        # saturated per tap and we avoid materialising the 9x im2col copy
        # (VPU / vector-store + VMEM savings, per perf review).
        acc = jnp.zeros((Ho * Wo, Cout), jnp.float32)
        t = 0
        for dy in range(3):
            for dx in range(3):
                tap = pad_ref[dy:dy + Ho, dx:dx + Wo, :].reshape(Ho * Wo, Cin)
                acc = acc + jnp.dot(tap, w_ref[t * Cin:(t + 1) * Cin, :],
                                    preferred_element_type=jnp.float32)
                t += 1
    else:
        # Small Cin: one im2col patch -> single MXU matmul with K = 9*Cin.
        taps = [pad_ref[dy:dy + Ho, dx:dx + Wo, :]
                for dy in range(3) for dx in range(3)]
        patches = jnp.concatenate(taps, axis=-1).reshape(Ho * Wo, 9 * Cin)
        acc = jnp.dot(patches, w_ref[...], preferred_element_type=jnp.float32)
    return jnp.maximum(acc + b_ref[...], 0.0)


def _stage_kernel(x_ref, w1_ref, b1_ref, w2_ref, b2_ref, route_ref,
                  xpad_ref, midpad_ref, *, padding, pool_input):
    """One Encoder stage: [MaxPool2x2 prologue] -> Conv-BN-ReLU -> Conv-BN-ReLU.

    pool_input=False: x_ref is (1, H, W, Cin)
    pool_input=True:  x_ref is (1, H/2, 2, W/2, 2*Cin) -- free wrapper reshape
                      of the previous stage's full-res route; pooling happens
                      on resident data so the pooled tensor never touches HBM.
    route_ref: (1, Ho, Wo, Cout) bf16 -- this stage's CNNBlocks output.
    """
    p = padding
    Cmid = w1_ref.shape[-1]
    Cout = w2_ref.shape[-1]

    if pool_input:
        x5 = x_ref[0]                                         # (H, 2, W, 2*Cin)
        Cin = x5.shape[-1] // 2
        hmax = jnp.maximum(x5[:, 0], x5[:, 1])                # pool H: leading-dim max
        x_in = jnp.maximum(hmax[:, :, :Cin], hmax[:, :, Cin:])  # pool W: lane-slice max
    else:
        x_in = x_ref[0]
    x_in = x_in.astype(jnp.bfloat16)
    H, W, _ = x_in.shape
    H1, W1 = H + 2 * p - 2, W + 2 * p - 2
    H2, W2 = H1 + 2 * p - 2, W1 + 2 * p - 2

    # conv1 + folded BN + ReLU (zero padding built in a VMEM scratch)
    _write_padded(xpad_ref, x_in, p)
    y1 = _conv3x3_bias_relu(xpad_ref, w1_ref, b1_ref, H1, W1)        # f32

    # conv2 + folded BN + ReLU -- intermediate activation never leaves VMEM
    _write_padded(midpad_ref, y1.reshape(H1, W1, Cmid), p)
    y2 = _conv3x3_bias_relu(midpad_ref, w2_ref, b2_ref, H2, W2)      # f32

    route_ref[0] = y2.reshape(H2, W2, Cout).astype(route_ref.dtype)


# ----------------------------------------------------------------------------
# pallas_call wrapper (NHWC, bf16 activations)
# ----------------------------------------------------------------------------
def cnn_stage(x_nhwc, params, *, padding=1, pool_input=False):
    """Run one Encoder stage as a single fused Pallas kernel."""
    (w1, b1), (w2, b2) = params
    N, H, W, Cin = x_nhwc.shape
    if pool_input:
        Hc, Wc = H // 2, W // 2                        # PyTorch MaxPool floor
        x_in = x_nhwc[:, :2 * Hc, :2 * Wc, :].reshape(N, Hc, 2, Wc, 2 * Cin)
        x_spec = pl.BlockSpec((1, Hc, 2, Wc, 2 * Cin), lambda n: (n, 0, 0, 0, 0))
    else:
        Hc, Wc = H, W
        x_in = x_nhwc
        x_spec = pl.BlockSpec((1, H, W, Cin), lambda n: (n, 0, 0, 0))
    Cmid, Cout = w1.shape[-1], w2.shape[-1]
    p = padding
    H1, W1 = Hc + 2 * p - 2, Wc + 2 * p - 2
    H2, W2 = H1 + 2 * p - 2, W1 + 2 * p - 2

    kernel = functools.partial(_stage_kernel, padding=padding,
                               pool_input=pool_input)
    return pl.pallas_call(
        kernel,
        out_shape=jax.ShapeDtypeStruct((N, H2, W2, Cout), jnp.bfloat16),
        grid=(N,),
        in_specs=[
            x_spec,
            pl.BlockSpec((9 * Cin, Cmid), lambda n: (0, 0)),
            pl.BlockSpec((1, Cmid), lambda n: (0, 0)),
            pl.BlockSpec((9 * Cmid, Cout), lambda n: (0, 0)),
            pl.BlockSpec((1, Cout), lambda n: (0, 0)),
        ],
        out_specs=pl.BlockSpec((1, H2, W2, Cout), lambda n: (n, 0, 0, 0)),
        scratch_shapes=[
            pltpu.VMEM((Hc + 2 * p, Wc + 2 * p, Cin), jnp.bfloat16),
            pltpu.VMEM((H1 + 2 * p, W1 + 2 * p, Cmid), jnp.bfloat16),
        ],
        compiler_params=pltpu.CompilerParams(
            dimension_semantics=("parallel",)),
    )(x_in, w1, b1, w2, b2)


# ----------------------------------------------------------------------------
# Deterministic parameter init (mirrors Encoder.__init__ shapes).
# BN scale is folded into the conv weights host-side; weights are reshaped to
# (9*Cin, Cout) bf16 for the MXU matmuls.
# ----------------------------------------------------------------------------
def _init_cnn_block(key, cin, cout, eps=1e-5):
    kw, kg, kb, km, kv = jax.random.split(key, 5)
    w = jax.random.normal(kw, (3, 3, cin, cout), jnp.float32) \
        * ((2.0 / (9.0 * cin)) ** 0.5)
    gamma = 1.0 + 0.1 * jax.random.normal(kg, (cout,), jnp.float32)
    beta = 0.1 * jax.random.normal(kb, (cout,), jnp.float32)
    mean = 0.05 * jax.random.normal(km, (cout,), jnp.float32)
    var = jax.random.uniform(kv, (cout,), jnp.float32, 0.5, 1.5)
    scale = gamma / jnp.sqrt(var + eps)
    bias = beta - mean * scale
    w_folded = (w * scale[None, None, None, :]).reshape(9 * cin, cout)
    return (w_folded.astype(jnp.bfloat16),
            bias.reshape(1, cout).astype(jnp.float32))


def init_encoder_params(key, in_channels, out_channels, downhill):
    """Returns a list of stages; each stage = CNNBlocks(n_conv=2) = [block, block]."""
    stages = []
    cin, cout = in_channels, out_channels
    for _ in range(downhill):
        key, k1, k2 = jax.random.split(key, 3)
        stages.append([_init_cnn_block(k1, cin, cout),
                       _init_cnn_block(k2, cout, cout)])
        cin, cout = cout, cout * 2
    key, k1, k2 = jax.random.split(key, 3)
    stages.append([_init_cnn_block(k1, cin, cout),
                   _init_cnn_block(k2, cout, cout)])
    return stages


# ----------------------------------------------------------------------------
# Encoder forward (matches Encoder.forward: returns (x, route_connection)).
# All compute stays NHWC/bf16; NCHW + fp32 only at the module boundary.
# ----------------------------------------------------------------------------
@functools.partial(jax.jit, static_argnames=("padding",))
def encoder_forward(x_nchw, stages, padding=1):
    x = jnp.transpose(x_nchw, (0, 2, 3, 1))            # NCHW -> NHWC, once
    routes_nhwc = []
    for i, stage in enumerate(stages):
        inp = x if i == 0 else routes_nhwc[-1]         # MaxPool fused into stage i>0
        routes_nhwc.append(
            cnn_stage(inp, stage, padding=padding, pool_input=(i > 0)))
    to_nchw = lambda t: jnp.transpose(t, (0, 3, 1, 2)).astype(jnp.float32)
    return to_nchw(routes_nhwc[-1]), [to_nchw(r) for r in routes_nhwc]


# ----------------------------------------------------------------------------
# Pure-XLA fp32 reference (same folded params) for a numerical sanity check.
# ----------------------------------------------------------------------------
def _ref_conv_bn_relu(x, w_flat, bias, padding):
    cin, cout = x.shape[-1], w_flat.shape[-1]
    w = w_flat.astype(jnp.float32).reshape(3, 3, cin, cout)          # HWIO
    y = jax.lax.conv_general_dilated(
        x.astype(jnp.float32), w, window_strides=(1, 1),
        padding=[(padding, padding), (padding, padding)],
        dimension_numbers=("NHWC", "HWIO", "NHWC"))
    return jnp.maximum(y + bias.astype(jnp.float32).reshape(1, 1, 1, cout), 0.0)


def _ref_maxpool2x2(x):
    n, h, w, c = x.shape
    x = x[:, :2 * (h // 2), :2 * (w // 2), :]
    return jnp.max(x.reshape(n, h // 2, 2, w // 2, 2, c), axis=(2, 4))


def encoder_reference(x_nchw, stages, padding=1):
    x = jnp.transpose(x_nchw, (0, 2, 3, 1))
    routes = []
    for i, stage in enumerate(stages):
        if i > 0:
            x = _ref_maxpool2x2(x)
        for (w_flat, bias) in stage:
            x = _ref_conv_bn_relu(x, w_flat, bias, padding)
        routes.append(jnp.transpose(x, (0, 3, 1, 2)))
    return routes[-1], routes


# ----------------------------------------------------------------------------
if __name__ == "__main__":
    key = jax.random.PRNGKey(0)
    k_x, k_p = jax.random.split(key)

    # Encoder(in_channels=4, out_channels=8, padding=1, downhill=2), 16x16 input.
    batch, in_channels, out_channels, spatial, downhill, padding = 2, 4, 8, 16, 2, 1

    x = jax.random.normal(k_x, (batch, in_channels, spatial, spatial), jnp.float32)
    stages = init_encoder_params(k_p, in_channels, out_channels, downhill)

    out, routes = encoder_forward(x, stages, padding=padding)
    out = jax.block_until_ready(out)
    routes = [jax.block_until_ready(r) for r in routes]

    # Shape sanity checks vs. the PyTorch module semantics.
    assert out.shape == (batch, out_channels * (2 ** downhill),
                         spatial // (2 ** downhill),
                         spatial // (2 ** downhill)), out.shape
    assert len(routes) == downhill + 1
    expect_c, expect_s = out_channels, spatial
    for r in routes:
        assert r.shape == (batch, expect_c, expect_s, expect_s), r.shape
        expect_c, expect_s = expect_c * 2, expect_s // 2
    assert bool(jnp.isfinite(out).all())
    assert all(bool(jnp.isfinite(r).all()) for r in routes)

    # Numerical check against the fp32 XLA reference (bf16 activation storage
    # inside the Pallas path -> allow a few percent of the max magnitude).
    ref_out, ref_routes = encoder_reference(x, stages, padding)

    def _close(a, b, tol=0.05):
        scale = max(float(jnp.max(jnp.abs(b))), 1.0)
        return float(jnp.max(jnp.abs(a - b))) <= tol * scale

    assert _close(out, ref_out)
    for r, rr in zip(routes, ref_routes):
        assert _close(r, rr)

    print("KERNEL_OK")
</pallas_src>

<mosaic_0001>
module attributes {stable_mosaic.version = 11 : i64} {
  func.func @_stage_kernel(%arg0: i32, %arg1: memref<1x16x16x4xf32, #tpu.memory_space<vmem>>, %arg2: memref<36x8xbf16, #tpu.memory_space<vmem>>, %arg3: memref<1x8xf32, #tpu.memory_space<vmem>>, %arg4: memref<72x8xbf16, #tpu.memory_space<vmem>>, %arg5: memref<1x8xf32, #tpu.memory_space<vmem>>, %arg6: memref<1x16x16x8xbf16, #tpu.memory_space<vmem>>, %arg7: memref<18x18x4xbf16, #tpu.memory_space<vmem>>, %arg8: memref<18x18x8xbf16, #tpu.memory_space<vmem>>) attributes {dimension_semantics = [#tpu.dimension_semantics<parallel>], iteration_bounds = array<i64: 2>, scalar_prefetch = 0 : i64, scratch_operands = 2 : i64, tpu.core_type = #tpu.core_type<tc>, window_params = [{transform_indices = @transform_0, window_bounds = array<i64: 1, 16, 16, 4>}, {pipeline_mode = #tpu.pipeline_mode<synchronous>, transform_indices = @transform_1, window_bounds = array<i64: 36, 8>}, {pipeline_mode = #tpu.pipeline_mode<synchronous>, transform_indices = @transform_2, window_bounds = array<i64: 1, 8>}, {pipeline_mode = #tpu.pipeline_mode<synchronous>, transform_indices = @transform_3, window_bounds = array<i64: 72, 8>}, {pipeline_mode = #tpu.pipeline_mode<synchronous>, transform_indices = @transform_4, window_bounds = array<i64: 1, 8>}, {transform_indices = @transform_5, window_bounds = array<i64: 1, 16, 16, 8>}]} {
    %c0 = arith.constant 0 : index
    %c0_0 = arith.constant 0 : index
    %c0_1 = arith.constant 0 : index
    %c0_2 = arith.constant 0 : index
    %0 = vector.load %arg1[%c0, %c0_0, %c0_1, %c0_2] : memref<1x16x16x4xf32, #tpu.memory_space<vmem>>, vector<1x16x16x4xf32>
    %1 = vector.shape_cast %0 : vector<1x16x16x4xf32> to vector<16x16x4xf32>
    %2 = arith.truncf %1 : vector<16x16x4xf32> to vector<16x16x4xbf16>
    %cst = arith.constant 0.000000e+00 : bf16
    %3 = vector.broadcast %cst : bf16 to vector<1x18x4xbf16>
    %c0_3 = arith.constant 0 : index
    %c0_4 = arith.constant 0 : index
    %c0_5 = arith.constant 0 : index
    %4 = vector.load %arg7[%c0_3, %c0_4, %c0_5] : memref<18x18x4xbf16, #tpu.memory_space<vmem>>, vector<1x18x4xbf16>
    tpu.vector_store %arg7[%c0_3, %c0_4, %c0_5], %3 {strides = array<i32>} : memref<18x18x4xbf16, #tpu.memory_space<vmem>>, vector<1x18x4xbf16>,
    %cst_6 = arith.constant 0.000000e+00 : bf16
    %5 = vector.broadcast %cst_6 : bf16 to vector<1x18x4xbf16>
    %c17 = arith.constant 17 : index
    %c0_7 = arith.constant 0 : index
    %c0_8 = arith.constant 0 : index
    %6 = vector.load %arg7[%c17, %c0_7, %c0_8] : memref<18x18x4xbf16, #tpu.memory_space<vmem>>, vector<1x18x4xbf16>
    tpu.vector_store %arg7[%c17, %c0_7, %c0_8], %5 {strides = array<i32>} : memref<18x18x4xbf16, #tpu.memory_space<vmem>>, vector<1x18x4xbf16>,
    %cst_9 = arith.constant 0.000000e+00 : bf16
    %7 = vector.broadcast %cst_9 : bf16 to vector<16x1x4xbf16>
    %c1 = arith.constant 1 : index
    %c0_10 = arith.constant 0 : index
    %c0_11 = arith.constant 0 : index
    %8 = vector.load %arg7[%c1, %c0_10, %c0_11] : memref<18x18x4xbf16, #tpu.memory_space<vmem>>, vector<16x1x4xbf16>
    tpu.vector_store %arg7[%c1, %c0_10, %c0_11], %7 {strides = array<i32>} : memref<18x18x4xbf16, #tpu.memory_space<vmem>>, vector<16x1x4xbf16>,
    %cst_12 = arith.constant 0.000000e+00 : bf16
    %9 = vector.broadcast %cst_12 : bf16 to vector<16x1x4xbf16>
    %c1_13 = arith.constant 1 : index
    %c17_14 = arith.constant 17 : index
    %c0_15 = arith.constant 0 : index
    %10 = vector.load %arg7[%c1_13, %c17_14, %c0_15] : memref<18x18x4xbf16, #tpu.memory_space<vmem>>, vector<16x1x4xbf16>
    tpu.vector_store %arg7[%c1_13, %c17_14, %c0_15], %9 {strides = array<i32>} : memref<18x18x4xbf16, #tpu.memory_space<vmem>>, vector<16x1x4xbf16>,
    %c1_16 = arith.constant 1 : index
    %c1_17 = arith.constant 1 : index
    %c0_18 = arith.constant 0 : index
    %11 = vector.load %arg7[%c1_16, %c1_17, %c0_18] : memref<18x18x4xbf16, #tpu.memory_space<vmem>>, vector<16x16x4xbf16>
    tpu.vector_store %arg7[%c1_16, %c1_17, %c0_18], %2 {strides = array<i32>} : memref<18x18x4xbf16, #tpu.memory_space<vmem>>, vector<16x16x4xbf16>,
    %c0_19 = arith.constant 0 : index
    %c0_20 = arith.constant 0 : index
    %c0_21 = arith.constant 0 : index
    %12 = vector.load %arg7[%c0_19, %c0_20, %c0_21] : memref<18x18x4xbf16, #tpu.memory_space<vmem>>, vector<16x16x4xbf16>
    %c0_22 = arith.constant 0 : index
    %c1_23 = arith.constant 1 : index
    %c0_24 = arith.constant 0 : index
    %13 = vector.load %arg7[%c0_22, %c1_23, %c0_24] : memref<18x18x4xbf16, #tpu.memory_space<vmem>>, vector<16x16x4xbf16>
    %c0_25 = arith.constant 0 : index
    %c2 = arith.constant 2 : index
    %c0_26 = arith.constant 0 : index
    %14 = vector.load %arg7[%c0_25, %c2, %c0_26] : memref<18x18x4xbf16, #tpu.memory_space<vmem>>, vector<16x16x4xbf16>
    %c1_27 = arith.constant 1 : index
    %c0_28 = arith.constant 0 : index
    %c0_29 = arith.constant 0 : index
    %15 = vector.load %arg7[%c1_27, %c0_28, %c0_29] : memref<18x18x4xbf16, #tpu.memory_space<vmem>>, vector<16x16x4xbf16>
    %c1_30 = arith.constant 1 : index
    %c1_31 = arith.constant 1 : index
    %c0_32 = arith.constant 0 : index
    %16 = vector.load %arg7[%c1_30, %c1_31, %c0_32] : memref<18x18x4xbf16, #tpu.memory_space<vmem>>, vector<16x16x4xbf16>
    %c1_33 = arith.constant 1 : index
    %c2_34 = arith.constant 2 : index
    %c0_35 = arith.constant 0 : index
    %17 = vector.load %arg7[%c1_33, %c2_34, %c0_35] : memref<18x18x4xbf16, #tpu.memory_space<vmem>>, vector<16x16x4xbf16>
    %c2_36 = arith.constant 2 : index
    %c0_37 = arith.constant 0 : index
    %c0_38 = arith.constant 0 : index
    %18 = vector.load %arg7[%c2_36, %c0_37, %c0_38] : memref<18x18x4xbf16, #tpu.memory_space<vmem>>, vector<16x16x4xbf16>
    %c2_39 = arith.constant 2 : index
    %c1_40 = arith.constant 1 : index
    %c0_41 = arith.constant 0 : index
    %19 = vector.load %arg7[%c2_39, %c1_40, %c0_41] : memref<18x18x4xbf16, #tpu.memory_space<vmem>>, vector<16x16x4xbf16>
    %c2_42 = arith.constant 2 : index
    %c2_43 = arith.constant 2 : index
    %c0_44 = arith.constant 0 : index
    %20 = vector.load %arg7[%c2_42, %c2_43, %c0_44] : memref<18x18x4xbf16, #tpu.memory_space<vmem>>, vector<16x16x4xbf16>
    %21 = tpu.concatenate %12, %13, %14, %15, %16, %17, %18, %19, %20 in 2 : vector<16x16x4xbf16>, vector<16x16x4xbf16>, vector<16x16x4xbf16>, vector<16x16x4xbf16>, vector<16x16x4xbf16>, vector<16x16x4xbf16>, vector<16x16x4xbf16>, vector<16x16x4xbf16>, vector<16x16x4xbf16> -> vector<16x16x36xbf16>
    %22 = vector.shape_cast %21 : vector<16x16x36xbf16> to vector<256x36xbf16>
    %c0_45 = arith.constant 0 : index
    %c0_46 = arith.constant 0 : index
    %23 = vector.load %arg2[%c0_45, %c0_46] : memref<36x8xbf16, #tpu.memory_space<vmem>>, vector<36x8xbf16>
    %cst_47 = arith.constant dense<0.000000e+00> : vector<256x8xf32>
    %24 = tpu.matmul %22, %23, %cst_47 {dimension_numbers = #tpu.dot_dimension_numbers<[1], [0], [0], [1], [0, 0, 1, 1], [], []>} : vector<256x36xbf16>, vector<36x8xbf16>, vector<256x8xf32> -> vector<256x8xf32>
    %c0_48 = arith.constant 0 : index
    %c0_49 = arith.constant 0 : index
    %25 = vector.load %arg3[%c0_48, %c0_49] : memref<1x8xf32, #tpu.memory_space<vmem>>, vector<1x8xf32>
    %26 = vector.broadcast %25 : vector<1x8xf32> to vector<256x8xf32>
    %27 = arith.addf %24, %26 : vector<256x8xf32>
    %cst_50 = arith.constant 0.000000e+00 : f32
    %28 = vector.broadcast %cst_50 : f32 to vector<256x8xf32>
    %29 = arith.maximumf %27, %28 : vector<256x8xf32>
    %30 = vector.shape_cast %29 : vector<256x8xf32> to vector<16x16x8xf32>
    %cst_51 = arith.constant 0.000000e+00 : bf16
    %31 = vector.broadcast %cst_51 : bf16 to vector<1x18x8xbf16>
    %c0_52 = arith.constant 0 : index
    %c0_53 = arith.constant 0 : index
    %c0_54 = arith.constant 0 : index
    %32 = vector.load %arg8[%c0_52, %c0_53, %c0_54] : memref<18x18x8xbf16, #tpu.memory_space<vmem>>, vector<1x18x8xbf16>
    tpu.vector_store %arg8[%c0_52, %c0_53, %c0_54], %31 {strides = array<i32>} : memref<18x18x8xbf16, #tpu.memory_space<vmem>>, vector<1x18x8xbf16>,
    %cst_55 = arith.constant 0.000000e+00 : bf16
    %33 = vector.broadcast %cst_55 : bf16 to vector<1x18x8xbf16>
    %c17_56 = arith.constant 17 : index
    %c0_57 = arith.constant 0 : index
    %c0_58 = arith.constant 0 : index
    %34 = vector.load %arg8[%c17_56, %c0_57, %c0_58] : memref<18x18x8xbf16, #tpu.memory_space<vmem>>, vector<1x18x8xbf16>
    tpu.vector_store %arg8[%c17_56, %c0_57, %c0_58], %33 {strides = array<i32>} : memref<18x18x8xbf16, #tpu.memory_space<vmem>>, vector<1x18x8xbf16>,
    %cst_59 = arith.constant 0.000000e+00 : bf16
    %35 = vector.broadcast %cst_59 : bf16 to vector<16x1x8xbf16>
    %c1_60 = arith.constant 1 : index
    %c0_61 = arith.constant 0 : index
    %c0_62 = arith.constant 0 : index
    %36 = vector.load %arg8[%c1_60, %c0_61, %c0_62] : memref<18x18x8xbf16, #tpu.memory_space<vmem>>, vector<16x1x8xbf16>
    tpu.vector_store %arg8[%c1_60, %c0_61, %c0_62], %35 {strides = array<i32>} : memref<18x18x8xbf16, #tpu.memory_space<vmem>>, vector<16x1x8xbf16>,
    %cst_63 = arith.constant 0.000000e+00 : bf16
    %37 = vector.broadcast %cst_63 : bf16 to vector<16x1x8xbf16>
    %c1_64 = arith.constant 1 : index
    %c17_65 = arith.constant 17 : index
    %c0_66 = arith.constant 0 : index
    %38 = vector.load %arg8[%c1_64, %c17_65, %c0_66] : memref<18x18x8xbf16, #tpu.memory_space<vmem>>, vector<16x1x8xbf16>
    tpu.vector_store %arg8[%c1_64, %c17_65, %c0_66], %37 {strides = array<i32>} : memref<18x18x8xbf16, #tpu.memory_space<vmem>>, vector<16x1x8xbf16>,
    %39 = arith.truncf %30 : vector<16x16x8xf32> to vector<16x16x8xbf16>
    %c1_67 = arith.constant 1 : index
    %c1_68 = arith.constant 1 : index
    %c0_69 = arith.constant 0 : index
    %40 = vector.load %arg8[%c1_67, %c1_68, %c0_69] : memref<18x18x8xbf16, #tpu.memory_space<vmem>>, vector<16x16x8xbf16>
    tpu.vector_store %arg8[%c1_67, %c1_68, %c0_69], %39 {strides = array<i32>} : memref<18x18x8xbf16, #tpu.memory_space<vmem>>, vector<16x16x8xbf16>,
    %c0_70 = arith.constant 0 : index
    %c0_71 = arith.constant 0 : index
    %c0_72 = arith.constant 0 : index
    %41 = vector.load %arg8[%c0_70, %c0_71, %c0_72] : memref<18x18x8xbf16, #tpu.memory_space<vmem>>, vector<16x16x8xbf16>
    %c0_73 = arith.constant 0 : index
    %c1_74 = arith.constant 1 : index
    %c0_75 = arith.constant 0 : index
    %42 = vector.load %arg8[%c0_73, %c1_74, %c0_75] : memref<18x18x8xbf16, #tpu.memory_space<vmem>>, vector<16x16x8xbf16>
    %c0_76 = arith.constant 0 : index
    %c2_77 = arith.constant 2 : index
    %c0_78 = arith.constant 0 : index
    %43 = vector.load %arg8[%c0_76, %c2_77, %c0_78] : memref<18x18x8xbf16, #tpu.memory_space<vmem>>, vector<16x16x8xbf16>
    %c1_79 = arith.constant 1 : index
    %c0_80 = arith.constant 0 : index
    %c0_81 = arith.constant 0 : index
    %44 = vector.load %arg8[%c1_79, %c0_80, %c0_81] : memref<18x18x8xbf16, #tpu.memory_space<vmem>>, vector<16x16x8xbf16>
    %c1_82 = arith.constant 1 : index
    %c1_83 = arith.constant 1 : index
    %c0_84 = arith.constant 0 : index
    %45 = vector.load %arg8[%c1_82, %c1_83, %c0_84] : memref<18x18x8xbf16, #tpu.memory_space<vmem>>, vector<16x16x8xbf16>
    %c1_85 = arith.constant 1 : index
    %c2_86 = arith.constant 2 : index
    %c0_87 = arith.constant 0 : index
    %46 = vector.load %arg8[%c1_85, %c2_86, %c0_87] : memref<18x18x8xbf16, #tpu.memory_space<vmem>>, vector<16x16x8xbf16>
    %c2_88 = arith.constant 2 : index
    %c0_89 = arith.constant 0 : index
    %c0_90 = arith.constant 0 : index
    %47 = vector.load %arg8[%c2_88, %c0_89, %c0_90] : memref<18x18x8xbf16, #tpu.memory_space<vmem>>, vector<16x16x8xbf16>
    %c2_91 = arith.constant 2 : index
    %c1_92 = arith.constant 1 : index
    %c0_93 = arith.constant 0 : index
    %48 = vector.load %arg8[%c2_91, %c1_92, %c0_93] : memref<18x18x8xbf16, #tpu.memory_space<vmem>>, vector<16x16x8xbf16>
    %c2_94 = arith.constant 2 : index
    %c2_95 = arith.constant 2 : index
    %c0_96 = arith.constant 0 : index
    %49 = vector.load %arg8[%c2_94, %c2_95, %c0_96] : memref<18x18x8xbf16, #tpu.memory_space<vmem>>, vector<16x16x8xbf16>
    %50 = tpu.concatenate %41, %42, %43, %44, %45, %46, %47, %48, %49 in 2 : vector<16x16x8xbf16>, vector<16x16x8xbf16>, vector<16x16x8xbf16>, vector<16x16x8xbf16>, vector<16x16x8xbf16>, vector<16x16x8xbf16>, vector<16x16x8xbf16>, vector<16x16x8xbf16>, vector<16x16x8xbf16> -> vector<16x16x72xbf16>
    %51 = vector.shape_cast %50 : vector<16x16x72xbf16> to vector<256x72xbf16>
    %c0_97 = arith.constant 0 : index
    %c0_98 = arith.constant 0 : index
    %52 = vector.load %arg4[%c0_97, %c0_98] : memref<72x8xbf16, #tpu.memory_space<vmem>>, vector<72x8xbf16>
    %cst_99 = arith.constant dense<0.000000e+00> : vector<256x8xf32>
    %53 = tpu.matmul %51, %52, %cst_99 {dimension_numbers = #tpu.dot_dimension_numbers<[1], [0], [0], [1], [0, 0, 1, 1], [], []>} : vector<256x72xbf16>, vector<72x8xbf16>, vector<256x8xf32> -> vector<256x8xf32>
    %c0_100 = arith.constant 0 : index
    %c0_101 = arith.constant 0 : index
    %54 = vector.load %arg5[%c0_100, %c0_101] : memref<1x8xf32, #tpu.memory_space<vmem>>, vector<1x8xf32>
    %55 = vector.broadcast %54 : vector<1x8xf32> to vector<256x8xf32>
    %56 = arith.addf %53, %55 : vector<256x8xf32>
    %cst_102 = arith.constant 0.000000e+00 : f32
    %57 = vector.broadcast %cst_102 : f32 to vector<256x8xf32>
    %58 = arith.maximumf %56, %57 : vector<256x8xf32>
    %59 = vector.shape_cast %58 : vector<256x8xf32> to vector<16x16x8xf32>
    %60 = arith.truncf %59 : vector<16x16x8xf32> to vector<16x16x8xbf16>
    %c0_103 = arith.constant 0 : index
    %c0_104 = arith.constant 0 : index
    %c0_105 = arith.constant 0 : index
    %c0_106 = arith.constant 0 : index
    %61 = vector.load %arg6[%c0_103, %c0_104, %c0_105, %c0_106] : memref<1x16x16x8xbf16, #tpu.memory_space<vmem>>, vector<1x16x16x8xbf16>
    %62 = vector.shape_cast %61 : vector<1x16x16x8xbf16> to vector<16x16x8xbf16>
    %63 = vector.shape_cast %60 : vector<16x16x8xbf16> to vector<1x16x16x8xbf16>
    tpu.vector_store %arg6[%c0_103, %c0_104, %c0_105, %c0_106], %63 {strides = array<i32>} : memref<1x16x16x8xbf16, #tpu.memory_space<vmem>>, vector<1x16x16x8xbf16>,
    return
  }
  func.func @transform_0(%arg0: i32) -> (i32, i32, i32, i32) {
    %c0_i32 = arith.constant 0 : i32
    %c0_i32_0 = arith.constant 0 : i32
    %c0_i32_1 = arith.constant 0 : i32
    %c0_i32_2 = arith.constant 0 : i32
    return %arg0, %c0_i32, %c0_i32_0, %c0_i32_1 : i32, i32, i32, i32
  }
  func.func @transform_1(%arg0: i32) -> (i32, i32) {
    %c0_i32 = arith.constant 0 : i32
    %c0_i32_0 = arith.constant 0 : i32
    %c0_i32_1 = arith.constant 0 : i32
    return %c0_i32, %c0_i32_0 : i32, i32
  }
  func.func @transform_2(%arg0: i32) -> (i32, i32) {
    %c0_i32 = arith.constant 0 : i32
    %c0_i32_0 = arith.constant 0 : i32
    %c0_i32_1 = arith.constant 0 : i32
    return %c0_i32, %c0_i32_0 : i32, i32
  }
  func.func @transform_3(%arg0: i32) -> (i32, i32) {
    %c0_i32 = arith.constant 0 : i32
    %c0_i32_0 = arith.constant 0 : i32
    %c0_i32_1 = arith.constant 0 : i32
    return %c0_i32, %c0_i32_0 : i32, i32
  }
  func.func @transform_4(%arg0: i32) -> (i32, i32) {
    %c0_i32 = arith.constant 0 : i32
    %c0_i32_0 = arith.constant 0 : i32
    %c0_i32_1 = arith.constant 0 : i32
    return %c0_i32, %c0_i32_0 : i32, i32
  }
  func.func @transform_5(%arg0: i32) -> (i32, i32, i32, i32) {
    %c0_i32 = arith.constant 0 : i32
    %c0_i32_0 = arith.constant 0 : i32
    %c0_i32_1 = arith.constant 0 : i32
    %c0_i32_2 = arith.constant 0 : i32
    return %arg0, %c0_i32, %c0_i32_0, %c0_i32_1 : i32, i32, i32, i32
  }
}

module attributes {stable_mosaic.version = 11 : i64} {
  func.func @_stage_kernel(%arg0: i32, %arg1: memref<1x8x2x8x16xbf16, #tpu.memory_space<vmem>>, %arg2: memref<72x16xbf16, #tpu.memory_space<vmem>>, %arg3: memref<1x16xf32, #tpu.memory_space<vmem>>, %arg4: memref<144x16xbf16, #tpu.memory_space<vmem>>, %arg5: memref<1x16xf32, #tpu.memory_space<vmem>>, %arg6: memref<1x8x8x16xbf16, #tpu.memory_space<vmem>>, %arg7: memref<10x10x8xbf16, #tpu.memory_space<vmem>>, %arg8: memref<10x10x16xbf16, #tpu.memory_space<vmem>>) attributes {dimension_semantics = [#tpu.dimension_semantics<parallel>], iteration_bounds = array<i64: 2>, scalar_prefetch = 0 : i64, scratch_operands = 2 : i64, tpu.core_type = #tpu.core_type<tc>, window_params = [{transform_indices = @transform_0, window_bounds = array<i64: 1, 8, 2, 8, 16>}, {pipeline_mode = #tpu.pipeline_mode<synchronous>, transform_indices = @transform_1, window_bounds = array<i64: 72, 16>}, {pipeline_mode = #tpu.pipeline_mode<synchronous>, transform_indices = @transform_2, window_bounds = array<i64: 1, 16>}, {pipeline_mode = #tpu.pipeline_mode<synchronous>, transform_indices = @transform_3, window_bounds = array<i64: 144, 16>}, {pipeline_mode = #tpu.pipeline_mode<synchronous>, transform_indices = @transform_4, window_bounds = array<i64: 1, 16>}, {transform_indices = @transform_5, window_bounds = array<i64: 1, 8, 8, 16>}]} {
    %c0 = arith.constant 0 : index
    %c0_0 = arith.constant 0 : index
    %c0_1 = arith.constant 0 : index
    %c0_2 = arith.constant 0 : index
    %c0_3 = arith.constant 0 : index
    %0 = vector.load %arg1[%c0, %c0_0, %c0_1, %c0_2, %c0_3] : memref<1x8x2x8x16xbf16, #tpu.memory_space<vmem>>, vector<1x8x2x8x16xbf16>
    %1 = vector.shape_cast %0 : vector<1x8x2x8x16xbf16> to vector<8x2x8x16xbf16>
    %2 = vector.extract_strided_slice %1 {offsets = [0, 0, 0, 0], sizes = [8, 1, 8, 16], strides = [1, 1, 1, 1]} : vector<8x2x8x16xbf16> to vector<8x1x8x16xbf16>
    %3 = vector.shape_cast %2 : vector<8x1x8x16xbf16> to vector<8x8x16xbf16>
    %4 = vector.extract_strided_slice %1 {offsets = [0, 1, 0, 0], sizes = [8, 1, 8, 16], strides = [1, 1, 1, 1]} : vector<8x2x8x16xbf16> to vector<8x1x8x16xbf16>
    %5 = vector.shape_cast %4 : vector<8x1x8x16xbf16> to vector<8x8x16xbf16>
    %6 = arith.maximumf %3, %5 : vector<8x8x16xbf16>
    %7 = vector.extract_strided_slice %6 {offsets = [0, 0, 0], sizes = [8, 8, 8], strides = [1, 1, 1]} : vector<8x8x16xbf16> to vector<8x8x8xbf16>
    %8 = vector.extract_strided_slice %6 {offsets = [0, 0, 8], sizes = [8, 8, 8], strides = [1, 1, 1]} : vector<8x8x16xbf16> to vector<8x8x8xbf16>
    %9 = arith.maximumf %7, %8 : vector<8x8x8xbf16>
    %cst = arith.constant 0.000000e+00 : bf16
    %10 = vector.broadcast %cst : bf16 to vector<1x10x8xbf16>
    %c0_4 = arith.constant 0 : index
    %c0_5 = arith.constant 0 : index
    %c0_6 = arith.constant 0 : index
    %11 = vector.load %arg7[%c0_4, %c0_5, %c0_6] : memref<10x10x8xbf16, #tpu.memory_space<vmem>>, vector<1x10x8xbf16>
    tpu.vector_store %arg7[%c0_4, %c0_5, %c0_6], %10 {strides = array<i32>} : memref<10x10x8xbf16, #tpu.memory_space<vmem>>, vector<1x10x8xbf16>,
    %cst_7 = arith.constant 0.000000e+00 : bf16
    %12 = vector.broadcast %cst_7 : bf16 to vector<1x10x8xbf16>
    %c9 = arith.constant 9 : index
    %c0_8 = arith.constant 0 : index
    %c0_9 = arith.constant 0 : index
    %13 = vector.load %arg7[%c9, %c0_8, %c0_9] : memref<10x10x8xbf16, #tpu.memory_space<vmem>>, vector<1x10x8xbf16>
    tpu.vector_store %arg7[%c9, %c0_8, %c0_9], %12 {strides = array<i32>} : memref<10x10x8xbf16, #tpu.memory_space<vmem>>, vector<1x10x8xbf16>,
    %cst_10 = arith.constant 0.000000e+00 : bf16
    %14 = vector.broadcast %cst_10 : bf16 to vector<8x1x8xbf16>
    %c1 = arith.constant 1 : index
    %c0_11 = arith.constant 0 : index
    %c0_12 = arith.constant 0 : index
    %15 = vector.load %arg7[%c1, %c0_11, %c0_12] : memref<10x10x8xbf16, #tpu.memory_space<vmem>>, vector<8x1x8xbf16>
    tpu.vector_store %arg7[%c1, %c0_11, %c0_12], %14 {strides = array<i32>} : memref<10x10x8xbf16, #tpu.memory_space<vmem>>, vector<8x1x8xbf16>,
    %cst_13 = arith.constant 0.000000e+00 : bf16
    %16 = vector.broadcast %cst_13 : bf16 to vector<8x1x8xbf16>
    %c1_14 = arith.constant 1 : index
    %c9_15 = arith.constant 9 : index
    %c0_16 = arith.constant 0 : index
    %17 = vector.load %arg7[%c1_14, %c9_15, %c0_16] : memref<10x10x8xbf16, #tpu.memory_space<vmem>>, vector<8x1x8xbf16>
    tpu.vector_store %arg7[%c1_14, %c9_15, %c0_16], %16 {strides = array<i32>} : memref<10x10x8xbf16, #tpu.memory_space<vmem>>, vector<8x1x8xbf16>,
    %c1_17 = arith.constant 1 : index
    %c1_18 = arith.constant 1 : index
    %c0_19 = arith.constant 0 : index
    %18 = vector.load %arg7[%c1_17, %c1_18, %c0_19] : memref<10x10x8xbf16, #tpu.memory_space<vmem>>, vector<8x8x8xbf16>
    tpu.vector_store %arg7[%c1_17, %c1_18, %c0_19], %9 {strides = array<i32>} : memref<10x10x8xbf16, #tpu.memory_space<vmem>>, vector<8x8x8xbf16>,
    %c0_20 = arith.constant 0 : index
    %c0_21 = arith.constant 0 : index
    %c0_22 = arith.constant 0 : index
    %19 = vector.load %arg7[%c0_20, %c0_21, %c0_22] : memref<10x10x8xbf16, #tpu.memory_space<vmem>>, vector<8x8x8xbf16>
    %c0_23 = arith.constant 0 : index
    %c1_24 = arith.constant 1 : index
    %c0_25 = arith.constant 0 : index
    %20 = vector.load %arg7[%c0_23, %c1_24, %c0_25] : memref<10x10x8xbf16, #tpu.memory_space<vmem>>, vector<8x8x8xbf16>
    %c0_26 = arith.constant 0 : index
    %c2 = arith.constant 2 : index
    %c0_27 = arith.constant 0 : index
    %21 = vector.load %arg7[%c0_26, %c2, %c0_27] : memref<10x10x8xbf16, #tpu.memory_space<vmem>>, vector<8x8x8xbf16>
    %c1_28 = arith.constant 1 : index
    %c0_29 = arith.constant 0 : index
    %c0_30 = arith.constant 0 : index
    %22 = vector.load %arg7[%c1_28, %c0_29, %c0_30] : memref<10x10x8xbf16, #tpu.memory_space<vmem>>, vector<8x8x8xbf16>
    %c1_31 = arith.constant 1 : index
    %c1_32 = arith.constant 1 : index
    %c0_33 = arith.constant 0 : index
    %23 = vector.load %arg7[%c1_31, %c1_32, %c0_33] : memref<10x10x8xbf16, #tpu.memory_space<vmem>>, vector<8x8x8xbf16>
    %c1_34 = arith.constant 1 : index
    %c2_35 = arith.constant 2 : index
    %c0_36 = arith.constant 0 : index
    %24 = vector.load %arg7[%c1_34, %c2_35, %c0_36] : memref<10x10x8xbf16, #tpu.memory_space<vmem>>, vector<8x8x8xbf16>
    %c2_37 = arith.constant 2 : index
    %c0_38 = arith.constant 0 : index
    %c0_39 = arith.constant 0 : index
    %25 = vector.load %arg7[%c2_37, %c0_38, %c0_39] : memref<10x10x8xbf16, #tpu.memory_space<vmem>>, vector<8x8x8xbf16>
    %c2_40 = arith.constant 2 : index
    %c1_41 = arith.constant 1 : index
    %c0_42 = arith.constant 0 : index
    %26 = vector.load %arg7[%c2_40, %c1_41, %c0_42] : memref<10x10x8xbf16, #tpu.memory_space<vmem>>, vector<8x8x8xbf16>
    %c2_43 = arith.constant 2 : index
    %c2_44 = arith.constant 2 : index
    %c0_45 = arith.constant 0 : index
    %27 = vector.load %arg7[%c2_43, %c2_44, %c0_45] : memref<10x10x8xbf16, #tpu.memory_space<vmem>>, vector<8x8x8xbf16>
    %28 = tpu.concatenate %19, %20, %21, %22, %23, %24, %25, %26, %27 in 2 : vector<8x8x8xbf16>, vector<8x8x8xbf16>, vector<8x8x8xbf16>, vector<8x8x8xbf16>, vector<8x8x8xbf16>, vector<8x8x8xbf16>, vector<8x8x8xbf16>, vector<8x8x8xbf16>, vector<8x8x8xbf16> -> vector<8x8x72xbf16>
    %29 = vector.shape_cast %28 : vector<8x8x72xbf16> to vector<64x72xbf16>
    %c0_46 = arith.constant 0 : index
    %c0_47 = arith.constant 0 : index
    %30 = vector.load %arg2[%c0_46, %c0_47] : memref<72x16xbf16, #tpu.memory_space<vmem>>, vector<72x16xbf16>
    %cst_48 = arith.constant dense<0.000000e+00> : vector<64x16xf32>
    %31 = tpu.matmul %29, %30, %cst_48 {dimension_numbers = #tpu.dot_dimension_numbers<[1], [0], [0], [1], [0, 0, 1, 1], [], []>} : vector<64x72xbf16>, vector<72x16xbf16>, vector<64x16xf32> -> vector<64x16xf32>
    %c0_49 = arith.constant 0 : index
    %c0_50 = arith.constant 0 : index
    %32 = vector.load %arg3[%c0_49, %c0_50] : memref<1x16xf32, #tpu.memory_space<vmem>>, vector<1x16xf32>
    %33 = vector.broadcast %32 : vector<1x16xf32> to vector<64x16xf32>
    %34 = arith.addf %31, %33 : vector<64x16xf32>
    %cst_51 = arith.constant 0.000000e+00 : f32
    %35 = vector.broadcast %cst_51 : f32 to vector<64x16xf32>
    %36 = arith.maximumf %34, %35 : vector<64x16xf32>
    %37 = vector.shape_cast %36 : vector<64x16xf32> to vector<8x8x16xf32>
    %cst_52 = arith.constant 0.000000e+00 : bf16
    %38 = vector.broadcast %cst_52 : bf16 to vector<1x10x16xbf16>
    %c0_53 = arith.constant 0 : index
    %c0_54 = arith.constant 0 : index
    %c0_55 = arith.constant 0 : index
    %39 = vector.load %arg8[%c0_53, %c0_54, %c0_55] : memref<10x10x16xbf16, #tpu.memory_space<vmem>>, vector<1x10x16xbf16>
    tpu.vector_store %arg8[%c0_53, %c0_54, %c0_55], %38 {strides = array<i32>} : memref<10x10x16xbf16, #tpu.memory_space<vmem>>, vector<1x10x16xbf16>,
    %cst_56 = arith.constant 0.000000e+00 : bf16
    %40 = vector.broadcast %cst_56 : bf16 to vector<1x10x16xbf16>
    %c9_57 = arith.constant 9 : index
    %c0_58 = arith.constant 0 : index
    %c0_59 = arith.constant 0 : index
    %41 = vector.load %arg8[%c9_57, %c0_58, %c0_59] : memref<10x10x16xbf16, #tpu.memory_space<vmem>>, vector<1x10x16xbf16>
    tpu.vector_store %arg8[%c9_57, %c0_58, %c0_59], %40 {strides = array<i32>} : memref<10x10x16xbf16, #tpu.memory_space<vmem>>, vector<1x10x16xbf16>,
    %cst_60 = arith.constant 0.000000e+00 : bf16
    %42 = vector.broadcast %cst_60 : bf16 to vector<8x1x16xbf16>
    %c1_61 = arith.constant 1 : index
    %c0_62 = arith.constant 0 : index
    %c0_63 = arith.constant 0 : index
    %43 = vector.load %arg8[%c1_61, %c0_62, %c0_63] : memref<10x10x16xbf16, #tpu.memory_space<vmem>>, vector<8x1x16xbf16>
    tpu.vector_store %arg8[%c1_61, %c0_62, %c0_63], %42 {strides = array<i32>} : memref<10x10x16xbf16, #tpu.memory_space<vmem>>, vector<8x1x16xbf16>,
    %cst_64 = arith.constant 0.000000e+00 : bf16
    %44 = vector.broadcast %cst_64 : bf16 to vector<8x1x16xbf16>
    %c1_65 = arith.constant 1 : index
    %c9_66 = arith.constant 9 : index
    %c0_67 = arith.constant 0 : index
    %45 = vector.load %arg8[%c1_65, %c9_66, %c0_67] : memref<10x10x16xbf16, #tpu.memory_space<vmem>>, vector<8x1x16xbf16>
    tpu.vector_store %arg8[%c1_65, %c9_66, %c0_67], %44 {strides = array<i32>} : memref<10x10x16xbf16, #tpu.memory_space<vmem>>, vector<8x1x16xbf16>,
    %46 = arith.truncf %37 : vector<8x8x16xf32> to vector<8x8x16xbf16>
    %c1_68 = arith.constant 1 : index
    %c1_69 = arith.constant 1 : index
    %c0_70 = arith.constant 0 : index
    %47 = vector.load %arg8[%c1_68, %c1_69, %c0_70] : memref<10x10x16xbf16, #tpu.memory_space<vmem>>, vector<8x8x16xbf16>
    tpu.vector_store %arg8[%c1_68, %c1_69, %c0_70], %46 {strides = array<i32>} : memref<10x10x16xbf16, #tpu.memory_space<vmem>>, vector<8x8x16xbf16>,
    %c0_71 = arith.constant 0 : index
    %c0_72 = arith.constant 0 : index
    %c0_73 = arith.constant 0 : index
    %48 = vector.load %arg8[%c0_71, %c0_72, %c0_73] : memref<10x10x16xbf16, #tpu.memory_space<vmem>>, vector<8x8x16xbf16>
    %c0_74 = arith.constant 0 : index
    %c1_75 = arith.constant 1 : index
    %c0_76 = arith.constant 0 : index
    %49 = vector.load %arg8[%c0_74, %c1_75, %c0_76] : memref<10x10x16xbf16, #tpu.memory_space<vmem>>, vector<8x8x16xbf16>
    %c0_77 = arith.constant 0 : index
    %c2_78 = arith.constant 2 : index
    %c0_79 = arith.constant 0 : index
    %50 = vector.load %arg8[%c0_77, %c2_78, %c0_79] : memref<10x10x16xbf16, #tpu.memory_space<vmem>>, vector<8x8x16xbf16>
    %c1_80 = arith.constant 1 : index
    %c0_81 = arith.constant 0 : index
    %c0_82 = arith.constant 0 : index
    %51 = vector.load %arg8[%c1_80, %c0_81, %c0_82] : memref<10x10x16xbf16, #tpu.memory_space<vmem>>, vector<8x8x16xbf16>
    %c1_83 = arith.constant 1 : index
    %c1_84 = arith.constant 1 : index
    %c0_85 = arith.constant 0 : index
    %52 = vector.load %arg8[%c1_83, %c1_84, %c0_85] : memref<10x10x16xbf16, #tpu.memory_space<vmem>>, vector<8x8x16xbf16>
    %c1_86 = arith.constant 1 : index
    %c2_87 = arith.constant 2 : index
    %c0_88 = arith.constant 0 : index
    %53 = vector.load %arg8[%c1_86, %c2_87, %c0_88] : memref<10x10x16xbf16, #tpu.memory_space<vmem>>, vector<8x8x16xbf16>
    %c2_89 = arith.constant 2 : index
    %c0_90 = arith.constant 0 : index
    %c0_91 = arith.constant 0 : index
    %54 = vector.load %arg8[%c2_89, %c0_90, %c0_91] : memref<10x10x16xbf16, #tpu.memory_space<vmem>>, vector<8x8x16xbf16>
    %c2_92 = arith.constant 2 : index
    %c1_93 = arith.constant 1 : index
    %c0_94 = arith.constant 0 : index
    %55 = vector.load %arg8[%c2_92, %c1_93, %c0_94] : memref<10x10x16xbf16, #tpu.memory_space<vmem>>, vector<8x8x16xbf16>
    %c2_95 = arith.constant 2 : index
    %c2_96 = arith.constant 2 : index
    %c0_97 = arith.constant 0 : index
    %56 = vector.load %arg8[%c2_95, %c2_96, %c0_97] : memref<10x10x16xbf16, #tpu.memory_space<vmem>>, vector<8x8x16xbf16>
    %57 = tpu.concatenate %48, %49, %50, %51, %52, %53, %54, %55, %56 in 2 : vector<8x8x16xbf16>, vector<8x8x16xbf16>, vector<8x8x16xbf16>, vector<8x8x16xbf16>, vector<8x8x16xbf16>, vector<8x8x16xbf16>, vector<8x8x16xbf16>, vector<8x8x16xbf16>, vector<8x8x16xbf16> -> vector<8x8x144xbf16>
    %58 = vector.shape_cast %57 : vector<8x8x144xbf16> to vector<64x144xbf16>
    %c0_98 = arith.constant 0 : index
    %c0_99 = arith.constant 0 : index
    %59 = vector.load %arg4[%c0_98, %c0_99] : memref<144x16xbf16, #tpu.memory_space<vmem>>, vector<144x16xbf16>
    %cst_100 = arith.constant dense<0.000000e+00> : vector<64x16xf32>
    %60 = tpu.matmul %58, %59, %cst_100 {dimension_numbers = #tpu.dot_dimension_numbers<[1], [0], [0], [1], [0, 0, 1, 1], [], []>} : vector<64x144xbf16>, vector<144x16xbf16>, vector<64x16xf32> -> vector<64x16xf32>
    %c0_101 = arith.constant 0 : index
    %c0_102 = arith.constant 0 : index
    %61 = vector.load %arg5[%c0_101, %c0_102] : memref<1x16xf32, #tpu.memory_space<vmem>>, vector<1x16xf32>
    %62 = vector.broadcast %61 : vector<1x16xf32> to vector<64x16xf32>
    %63 = arith.addf %60, %62 : vector<64x16xf32>
    %cst_103 = arith.constant 0.000000e+00 : f32
    %64 = vector.broadcast %cst_103 : f32 to vector<64x16xf32>
    %65 = arith.maximumf %63, %64 : vector<64x16xf32>
    %66 = vector.shape_cast %65 : vector<64x16xf32> to vector<8x8x16xf32>
    %67 = arith.truncf %66 : vector<8x8x16xf32> to vector<8x8x16xbf16>
    %c0_104 = arith.constant 0 : index
    %c0_105 = arith.constant 0 : index
    %c0_106 = arith.constant 0 : index
    %c0_107 = arith.constant 0 : index
    %68 = vector.load %arg6[%c0_104, %c0_105, %c0_106, %c0_107] : memref<1x8x8x16xbf16, #tpu.memory_space<vmem>>, vector<1x8x8x16xbf16>
    %69 = vector.shape_cast %68 : vector<1x8x8x16xbf16> to vector<8x8x16xbf16>
    %70 = vector.shape_cast %67 : vector<8x8x16xbf16> to vector<1x8x8x16xbf16>
    tpu.vector_store %arg6[%c0_104, %c0_105, %c0_106, %c0_107], %70 {strides = array<i32>} : memref<1x8x8x16xbf16, #tpu.memory_space<vmem>>, vector<1x8x8x16xbf16>,
    return
  }
  func.func @transform_0(%arg0: i32) -> (i32, i32, i32, i32, i32) {
    %c0_i32 = arith.constant 0 : i32
    %c0_i32_0 = arith.constant 0 : i32
    %c0_i32_1 = arith.constant 0 : i32
    %c0_i32_2 = arith.constant 0 : i32
    %c0_i32_3 = arith.constant 0 : i32
    return %arg0, %c0_i32, %c0_i32_0, %c0_i32_1, %c0_i32_2 : i32, i32, i32, i32, i32
  }
  func.func @transform_1(%arg0: i32) -> (i32, i32) {
    %c0_i32 = arith.constant 0 : i32
    %c0_i32_0 = arith.constant 0 : i32
    %c0_i32_1 = arith.constant 0 : i32
    return %c0_i32, %c0_i32_0 : i32, i32
  }
  func.func @transform_2(%arg0: i32) -> (i32, i32) {
    %c0_i32 = arith.constant 0 : i32
    %c0_i32_0 = arith.constant 0 : i32
    %c0_i32_1 = arith.constant 0 : i32
    return %c0_i32, %c0_i32_0 : i32, i32
  }
  func.func @transform_3(%arg0: i32) -> (i32, i32) {
    %c0_i32 = arith.constant 0 : i32
    %c0_i32_0 = arith.constant 0 : i32
    %c0_i32_1 = arith.constant 0 : i32
    return %c0_i32, %c0_i32_0 : i32, i32
  }
  func.func @transform_4(%arg0: i32) -> (i32, i32) {
    %c0_i32 = arith.constant 0 : i32
    %c0_i32_0 = arith.constant 0 : i32
    %c0_i32_1 = arith.constant 0 : i32
    return %c0_i32, %c0_i32_0 : i32, i32
  }
  func.func @transform_5(%arg0: i32) -> (i32, i32, i32, i32) {
    %c0_i32 = arith.constant 0 : i32
    %c0_i32_0 = arith.constant 0 : i32
    %c0_i32_1 = arith.constant 0 : i32
    %c0_i32_2 = arith.constant 0 : i32
    return %arg0, %c0_i32, %c0_i32_0, %c0_i32_1 : i32, i32, i32, i32
  }
}

module attributes {stable_mosaic.version = 11 : i64} {
  func.func @_stage_kernel(%arg0: i32, %arg1: memref<1x4x2x4x32xbf16, #tpu.memory_space<vmem>>, %arg2: memref<144x32xbf16, #tpu.memory_space<vmem>>, %arg3: memref<1x32xf32, #tpu.memory_space<vmem>>, %arg4: memref<288x32xbf16, #tpu.memory_space<vmem>>, %arg5: memref<1x32xf32, #tpu.memory_space<vmem>>, %arg6: memref<1x4x4x32xbf16, #tpu.memory_space<vmem>>, %arg7: memref<6x6x16xbf16, #tpu.memory_space<vmem>>, %arg8: memref<6x6x32xbf16, #tpu.memory_space<vmem>>) attributes {dimension_semantics = [#tpu.dimension_semantics<parallel>], iteration_bounds = array<i64: 2>, scalar_prefetch = 0 : i64, scratch_operands = 2 : i64, tpu.core_type = #tpu.core_type<tc>, window_params = [{transform_indices = @transform_0, window_bounds = array<i64: 1, 4, 2, 4, 32>}, {pipeline_mode = #tpu.pipeline_mode<synchronous>, transform_indices = @transform_1, window_bounds = array<i64: 144, 32>}, {pipeline_mode = #tpu.pipeline_mode<synchronous>, transform_indices = @transform_2, window_bounds = array<i64: 1, 32>}, {pipeline_mode = #tpu.pipeline_mode<synchronous>, transform_indices = @transform_3, window_bounds = array<i64: 288, 32>}, {pipeline_mode = #tpu.pipeline_mode<synchronous>, transform_indices = @transform_4, window_bounds = array<i64: 1, 32>}, {transform_indices = @transform_5, window_bounds = array<i64: 1, 4, 4, 32>}]} {
    %c0 = arith.constant 0 : index
    %c0_0 = arith.constant 0 : index
    %c0_1 = arith.constant 0 : index
    %c0_2 = arith.constant 0 : index
    %c0_3 = arith.constant 0 : index
    %0 = vector.load %arg1[%c0, %c0_0, %c0_1, %c0_2, %c0_3] : memref<1x4x2x4x32xbf16, #tpu.memory_space<vmem>>, vector<1x4x2x4x32xbf16>
    %1 = vector.shape_cast %0 : vector<1x4x2x4x32xbf16> to vector<4x2x4x32xbf16>
    %2 = vector.extract_strided_slice %1 {offsets = [0, 0, 0, 0], sizes = [4, 1, 4, 32], strides = [1, 1, 1, 1]} : vector<4x2x4x32xbf16> to vector<4x1x4x32xbf16>
    %3 = vector.shape_cast %2 : vector<4x1x4x32xbf16> to vector<4x4x32xbf16>
    %4 = vector.extract_strided_slice %1 {offsets = [0, 1, 0, 0], sizes = [4, 1, 4, 32], strides = [1, 1, 1, 1]} : vector<4x2x4x32xbf16> to vector<4x1x4x32xbf16>
    %5 = vector.shape_cast %4 : vector<4x1x4x32xbf16> to vector<4x4x32xbf16>
    %6 = arith.maximumf %3, %5 : vector<4x4x32xbf16>
    %7 = vector.extract_strided_slice %6 {offsets = [0, 0, 0], sizes = [4, 4, 16], strides = [1, 1, 1]} : vector<4x4x32xbf16> to vector<4x4x16xbf16>
    %8 = vector.extract_strided_slice %6 {offsets = [0, 0, 16], sizes = [4, 4, 16], strides = [1, 1, 1]} : vector<4x4x32xbf16> to vector<4x4x16xbf16>
    %9 = arith.maximumf %7, %8 : vector<4x4x16xbf16>
    %cst = arith.constant 0.000000e+00 : bf16
    %10 = vector.broadcast %cst : bf16 to vector<1x6x16xbf16>
    %c0_4 = arith.constant 0 : index
    %c0_5 = arith.constant 0 : index
    %c0_6 = arith.constant 0 : index
    %11 = vector.load %arg7[%c0_4, %c0_5, %c0_6] : memref<6x6x16xbf16, #tpu.memory_space<vmem>>, vector<1x6x16xbf16>
    tpu.vector_store %arg7[%c0_4, %c0_5, %c0_6], %10 {strides = array<i32>} : memref<6x6x16xbf16, #tpu.memory_space<vmem>>, vector<1x6x16xbf16>,
    %cst_7 = arith.constant 0.000000e+00 : bf16
    %12 = vector.broadcast %cst_7 : bf16 to vector<1x6x16xbf16>
    %c5 = arith.constant 5 : index
    %c0_8 = arith.constant 0 : index
    %c0_9 = arith.constant 0 : index
    %13 = vector.load %arg7[%c5, %c0_8, %c0_9] : memref<6x6x16xbf16, #tpu.memory_space<vmem>>, vector<1x6x16xbf16>
    tpu.vector_store %arg7[%c5, %c0_8, %c0_9], %12 {strides = array<i32>} : memref<6x6x16xbf16, #tpu.memory_space<vmem>>, vector<1x6x16xbf16>,
    %cst_10 = arith.constant 0.000000e+00 : bf16
    %14 = vector.broadcast %cst_10 : bf16 to vector<4x1x16xbf16>
    %c1 = arith.constant 1 : index
    %c0_11 = arith.constant 0 : index
    %c0_12 = arith.constant 0 : index
    %15 = vector.load %arg7[%c1, %c0_11, %c0_12] : memref<6x6x16xbf16, #tpu.memory_space<vmem>>, vector<4x1x16xbf16>
    tpu.vector_store %arg7[%c1, %c0_11, %c0_12], %14 {strides = array<i32>} : memref<6x6x16xbf16, #tpu.memory_space<vmem>>, vector<4x1x16xbf16>,
    %cst_13 = arith.constant 0.000000e+00 : bf16
    %16 = vector.broadcast %cst_13 : bf16 to vector<4x1x16xbf16>
    %c1_14 = arith.constant 1 : index
    %c5_15 = arith.constant 5 : index
    %c0_16 = arith.constant 0 : index
    %17 = vector.load %arg7[%c1_14, %c5_15, %c0_16] : memref<6x6x16xbf16, #tpu.memory_space<vmem>>, vector<4x1x16xbf16>
    tpu.vector_store %arg7[%c1_14, %c5_15, %c0_16], %16 {strides = array<i32>} : memref<6x6x16xbf16, #tpu.memory_space<vmem>>, vector<4x1x16xbf16>,
    %c1_17 = arith.constant 1 : index
    %c1_18 = arith.constant 1 : index
    %c0_19 = arith.constant 0 : index
    %18 = vector.load %arg7[%c1_17, %c1_18, %c0_19] : memref<6x6x16xbf16, #tpu.memory_space<vmem>>, vector<4x4x16xbf16>
    tpu.vector_store %arg7[%c1_17, %c1_18, %c0_19], %9 {strides = array<i32>} : memref<6x6x16xbf16, #tpu.memory_space<vmem>>, vector<4x4x16xbf16>,
    %c0_20 = arith.constant 0 : index
    %c0_21 = arith.constant 0 : index
    %c0_22 = arith.constant 0 : index
    %19 = vector.load %arg7[%c0_20, %c0_21, %c0_22] : memref<6x6x16xbf16, #tpu.memory_space<vmem>>, vector<4x4x16xbf16>
    %c0_23 = arith.constant 0 : index
    %c1_24 = arith.constant 1 : index
    %c0_25 = arith.constant 0 : index
    %20 = vector.load %arg7[%c0_23, %c1_24, %c0_25] : memref<6x6x16xbf16, #tpu.memory_space<vmem>>, vector<4x4x16xbf16>
    %c0_26 = arith.constant 0 : index
    %c2 = arith.constant 2 : index
    %c0_27 = arith.constant 0 : index
    %21 = vector.load %arg7[%c0_26, %c2, %c0_27] : memref<6x6x16xbf16, #tpu.memory_space<vmem>>, vector<4x4x16xbf16>
    %c1_28 = arith.constant 1 : index
    %c0_29 = arith.constant 0 : index
    %c0_30 = arith.constant 0 : index
    %22 = vector.load %arg7[%c1_28, %c0_29, %c0_30] : memref<6x6x16xbf16, #tpu.memory_space<vmem>>, vector<4x4x16xbf16>
    %c1_31 = arith.constant 1 : index
    %c1_32 = arith.constant 1 : index
    %c0_33 = arith.constant 0 : index
    %23 = vector.load %arg7[%c1_31, %c1_32, %c0_33] : memref<6x6x16xbf16, #tpu.memory_space<vmem>>, vector<4x4x16xbf16>
    %c1_34 = arith.constant 1 : index
    %c2_35 = arith.constant 2 : index
    %c0_36 = arith.constant 0 : index
    %24 = vector.load %arg7[%c1_34, %c2_35, %c0_36] : memref<6x6x16xbf16, #tpu.memory_space<vmem>>, vector<4x4x16xbf16>
    %c2_37 = arith.constant 2 : index
    %c0_38 = arith.constant 0 : index
    %c0_39 = arith.constant 0 : index
    %25 = vector.load %arg7[%c2_37, %c0_38, %c0_39] : memref<6x6x16xbf16, #tpu.memory_space<vmem>>, vector<4x4x16xbf16>
    %c2_40 = arith.constant 2 : index
    %c1_41 = arith.constant 1 : index
    %c0_42 = arith.constant 0 : index
    %26 = vector.load %arg7[%c2_40, %c1_41, %c0_42] : memref<6x6x16xbf16, #tpu.memory_space<vmem>>, vector<4x4x16xbf16>
    %c2_43 = arith.constant 2 : index
    %c2_44 = arith.constant 2 : index
    %c0_45 = arith.constant 0 : index
    %27 = vector.load %arg7[%c2_43, %c2_44, %c0_45] : memref<6x6x16xbf16, #tpu.memory_space<vmem>>, vector<4x4x16xbf16>
    %28 = tpu.concatenate %19, %20, %21, %22, %23, %24, %25, %26, %27 in 2 : vector<4x4x16xbf16>, vector<4x4x16xbf16>, vector<4x4x16xbf16>, vector<4x4x16xbf16>, vector<4x4x16xbf16>, vector<4x4x16xbf16>, vector<4x4x16xbf16>, vector<4x4x16xbf16>, vector<4x4x16xbf16> -> vector<4x4x144xbf16>
    %29 = vector.shape_cast %28 : vector<4x4x144xbf16> to vector<16x144xbf16>
    %c0_46 = arith.constant 0 : index
    %c0_47 = arith.constant 0 : index
    %30 = vector.load %arg2[%c0_46, %c0_47] : memref<144x32xbf16, #tpu.memory_space<vmem>>, vector<144x32xbf16>
    %cst_48 = arith.constant dense<0.000000e+00> : vector<16x32xf32>
    %31 = tpu.matmul %29, %30, %cst_48 {dimension_numbers = #tpu.dot_dimension_numbers<[1], [0], [0], [1], [0, 0, 1, 1], [], []>} : vector<16x144xbf16>, vector<144x32xbf16>, vector<16x32xf32> -> vector<16x32xf32>
    %c0_49 = arith.constant 0 : index
    %c0_50 = arith.constant 0 : index
    %32 = vector.load %arg3[%c0_49, %c0_50] : memref<1x32xf32, #tpu.memory_space<vmem>>, vector<1x32xf32>
    %33 = vector.broadcast %32 : vector<1x32xf32> to vector<16x32xf32>
    %34 = arith.addf %31, %33 : vector<16x32xf32>
    %cst_51 = arith.constant 0.000000e+00 : f32
    %35 = vector.broadcast %cst_51 : f32 to vector<16x32xf32>
    %36 = arith.maximumf %34, %35 : vector<16x32xf32>
    %37 = vector.shape_cast %36 : vector<16x32xf32> to vector<4x4x32xf32>
    %cst_52 = arith.constant 0.000000e+00 : bf16
    %38 = vector.broadcast %cst_52 : bf16 to vector<1x6x32xbf16>
    %c0_53 = arith.constant 0 : index
    %c0_54 = arith.constant 0 : index
    %c0_55 = arith.constant 0 : index
    %39 = vector.load %arg8[%c0_53, %c0_54, %c0_55] : memref<6x6x32xbf16, #tpu.memory_space<vmem>>, vector<1x6x32xbf16>
    tpu.vector_store %arg8[%c0_53, %c0_54, %c0_55], %38 {strides = array<i32>} : memref<6x6x32xbf16, #tpu.memory_space<vmem>>, vector<1x6x32xbf16>,
    %cst_56 = arith.constant 0.000000e+00 : bf16
    %40 = vector.broadcast %cst_56 : bf16 to vector<1x6x32xbf16>
    %c5_57 = arith.constant 5 : index
    %c0_58 = arith.constant 0 : index
    %c0_59 = arith.constant 0 : index
    %41 = vector.load %arg8[%c5_57, %c0_58, %c0_59] : memref<6x6x32xbf16, #tpu.memory_space<vmem>>, vector<1x6x32xbf16>
    tpu.vector_store %arg8[%c5_57, %c0_58, %c0_59], %40 {strides = array<i32>} : memref<6x6x32xbf16, #tpu.memory_space<vmem>>, vector<1x6x32xbf16>,
    %cst_60 = arith.constant 0.000000e+00 : bf16
    %42 = vector.broadcast %cst_60 : bf16 to vector<4x1x32xbf16>
    %c1_61 = arith.constant 1 : index
    %c0_62 = arith.constant 0 : index
    %c0_63 = arith.constant 0 : index
    %43 = vector.load %arg8[%c1_61, %c0_62, %c0_63] : memref<6x6x32xbf16, #tpu.memory_space<vmem>>, vector<4x1x32xbf16>
    tpu.vector_store %arg8[%c1_61, %c0_62, %c0_63], %42 {strides = array<i32>} : memref<6x6x32xbf16, #tpu.memory_space<vmem>>, vector<4x1x32xbf16>,
    %cst_64 = arith.constant 0.000000e+00 : bf16
    %44 = vector.broadcast %cst_64 : bf16 to vector<4x1x32xbf16>
    %c1_65 = arith.constant 1 : index
    %c5_66 = arith.constant 5 : index
    %c0_67 = arith.constant 0 : index
    %45 = vector.load %arg8[%c1_65, %c5_66, %c0_67] : memref<6x6x32xbf16, #tpu.memory_space<vmem>>, vector<4x1x32xbf16>
    tpu.vector_store %arg8[%c1_65, %c5_66, %c0_67], %44 {strides = array<i32>} : memref<6x6x32xbf16, #tpu.memory_space<vmem>>, vector<4x1x32xbf16>,
    %46 = arith.truncf %37 : vector<4x4x32xf32> to vector<4x4x32xbf16>
    %c1_68 = arith.constant 1 : index
    %c1_69 = arith.constant 1 : index
    %c0_70 = arith.constant 0 : index
    %47 = vector.load %arg8[%c1_68, %c1_69, %c0_70] : memref<6x6x32xbf16, #tpu.memory_space<vmem>>, vector<4x4x32xbf16>
    tpu.vector_store %arg8[%c1_68, %c1_69, %c0_70], %46 {strides = array<i32>} : memref<6x6x32xbf16, #tpu.memory_space<vmem>>, vector<4x4x32xbf16>,
    %c0_71 = arith.constant 0 : index
    %c0_72 = arith.constant 0 : index
    %c0_73 = arith.constant 0 : index
    %48 = vector.load %arg8[%c0_71, %c0_72, %c0_73] : memref<6x6x32xbf16, #tpu.memory_space<vmem>>, vector<4x4x32xbf16>
    %c0_74 = arith.constant 0 : index
    %c1_75 = arith.constant 1 : index
    %c0_76 = arith.constant 0 : index
    %49 = vector.load %arg8[%c0_74, %c1_75, %c0_76] : memref<6x6x32xbf16, #tpu.memory_space<vmem>>, vector<4x4x32xbf16>
    %c0_77 = arith.constant 0 : index
    %c2_78 = arith.constant 2 : index
    %c0_79 = arith.constant 0 : index
    %50 = vector.load %arg8[%c0_77, %c2_78, %c0_79] : memref<6x6x32xbf16, #tpu.memory_space<vmem>>, vector<4x4x32xbf16>
    %c1_80 = arith.constant 1 : index
    %c0_81 = arith.constant 0 : index
    %c0_82 = arith.constant 0 : index
    %51 = vector.load %arg8[%c1_80, %c0_81, %c0_82] : memref<6x6x32xbf16, #tpu.memory_space<vmem>>, vector<4x4x32xbf16>
    %c1_83 = arith.constant 1 : index
    %c1_84 = arith.constant 1 : index
    %c0_85 = arith.constant 0 : index
    %52 = vector.load %arg8[%c1_83, %c1_84, %c0_85] : memref<6x6x32xbf16, #tpu.memory_space<vmem>>, vector<4x4x32xbf16>
    %c1_86 = arith.constant 1 : index
    %c2_87 = arith.constant 2 : index
    %c0_88 = arith.constant 0 : index
    %53 = vector.load %arg8[%c1_86, %c2_87, %c0_88] : memref<6x6x32xbf16, #tpu.memory_space<vmem>>, vector<4x4x32xbf16>
    %c2_89 = arith.constant 2 : index
    %c0_90 = arith.constant 0 : index
    %c0_91 = arith.constant 0 : index
    %54 = vector.load %arg8[%c2_89, %c0_90, %c0_91] : memref<6x6x32xbf16, #tpu.memory_space<vmem>>, vector<4x4x32xbf16>
    %c2_92 = arith.constant 2 : index
    %c1_93 = arith.constant 1 : index
    %c0_94 = arith.constant 0 : index
    %55 = vector.load %arg8[%c2_92, %c1_93, %c0_94] : memref<6x6x32xbf16, #tpu.memory_space<vmem>>, vector<4x4x32xbf16>
    %c2_95 = arith.constant 2 : index
    %c2_96 = arith.constant 2 : index
    %c0_97 = arith.constant 0 : index
    %56 = vector.load %arg8[%c2_95, %c2_96, %c0_97] : memref<6x6x32xbf16, #tpu.memory_space<vmem>>, vector<4x4x32xbf16>
    %57 = tpu.concatenate %48, %49, %50, %51, %52, %53, %54, %55, %56 in 2 : vector<4x4x32xbf16>, vector<4x4x32xbf16>, vector<4x4x32xbf16>, vector<4x4x32xbf16>, vector<4x4x32xbf16>, vector<4x4x32xbf16>, vector<4x4x32xbf16>, vector<4x4x32xbf16>, vector<4x4x32xbf16> -> vector<4x4x288xbf16>
    %58 = vector.shape_cast %57 : vector<4x4x288xbf16> to vector<16x288xbf16>
    %c0_98 = arith.constant 0 : index
    %c0_99 = arith.constant 0 : index
    %59 = vector.load %arg4[%c0_98, %c0_99] : memref<288x32xbf16, #tpu.memory_space<vmem>>, vector<288x32xbf16>
    %cst_100 = arith.constant dense<0.000000e+00> : vector<16x32xf32>
    %60 = tpu.matmul %58, %59, %cst_100 {dimension_numbers = #tpu.dot_dimension_numbers<[1], [0], [0], [1], [0, 0, 1, 1], [], []>} : vector<16x288xbf16>, vector<288x32xbf16>, vector<16x32xf32> -> vector<16x32xf32>
    %c0_101 = arith.constant 0 : index
    %c0_102 = arith.constant 0 : index
    %61 = vector.load %arg5[%c0_101, %c0_102] : memref<1x32xf32, #tpu.memory_space<vmem>>, vector<1x32xf32>
    %62 = vector.broadcast %61 : vector<1x32xf32> to vector<16x32xf32>
    %63 = arith.addf %60, %62 : vector<16x32xf32>
    %cst_103 = arith.constant 0.000000e+00 : f32
    %64 = vector.broadcast %cst_103 : f32 to vector<16x32xf32>
    %65 = arith.maximumf %63, %64 : vector<16x32xf32>
    %66 = vector.shape_cast %65 : vector<16x32xf32> to vector<4x4x32xf32>
    %67 = arith.truncf %66 : vector<4x4x32xf32> to vector<4x4x32xbf16>
    %c0_104 = arith.constant 0 : index
    %c0_105 = arith.constant 0 : index
    %c0_106 = arith.constant 0 : index
    %c0_107 = arith.constant 0 : index
    %68 = vector.load %arg6[%c0_104, %c0_105, %c0_106, %c0_107] : memref<1x4x4x32xbf16, #tpu.memory_space<vmem>>, vector<1x4x4x32xbf16>
    %69 = vector.shape_cast %68 : vector<1x4x4x32xbf16> to vector<4x4x32xbf16>
    %70 = vector.shape_cast %67 : vector<4x4x32xbf16> to vector<1x4x4x32xbf16>
    tpu.vector_store %arg6[%c0_104, %c0_105, %c0_106, %c0_107], %70 {strides = array<i32>} : memref<1x4x4x32xbf16, #tpu.memory_space<vmem>>, vector<1x4x4x32xbf16>,
    return
  }
  func.func @transform_0(%arg0: i32) -> (i32, i32, i32, i32, i32) {
    %c0_i32 = arith.constant 0 : i32
    %c0_i32_0 = arith.constant 0 : i32
    %c0_i32_1 = arith.constant 0 : i32
    %c0_i32_2 = arith.constant 0 : i32
    %c0_i32_3 = arith.constant 0 : i32
    return %arg0, %c0_i32, %c0_i32_0, %c0_i32_1, %c0_i32_2 : i32, i32, i32, i32, i32
  }
  func.func @transform_1(%arg0: i32) -> (i32, i32) {
    %c0_i32 = arith.constant 0 : i32
    %c0_i32_0 = arith.constant 0 : i32
    %c0_i32_1 = arith.constant 0 : i32
    return %c0_i32, %c0_i32_0 : i32, i32
  }
  func.func @transform_2(%arg0: i32) -> (i32, i32) {
    %c0_i32 = arith.constant 0 : i32
    %c0_i32_0 = arith.constant 0 : i32
    %c0_i32_1 = arith.constant 0 : i32
    return %c0_i32, %c0_i32_0 : i32, i32
  }
  func.func @transform_3(%arg0: i32) -> (i32, i32) {
    %c0_i32 = arith.constant 0 : i32
    %c0_i32_0 = arith.constant 0 : i32
    %c0_i32_1 = arith.constant 0 : i32
    return %c0_i32, %c0_i32_0 : i32, i32
  }
  func.func @transform_4(%arg0: i32) -> (i32, i32) {
    %c0_i32 = arith.constant 0 : i32
    %c0_i32_0 = arith.constant 0 : i32
    %c0_i32_1 = arith.constant 0 : i32
    return %c0_i32, %c0_i32_0 : i32, i32
  }
  func.func @transform_5(%arg0: i32) -> (i32, i32, i32, i32) {
    %c0_i32 = arith.constant 0 : i32
    %c0_i32_0 = arith.constant 0 : i32
    %c0_i32_1 = arith.constant 0 : i32
    %c0_i32_2 = arith.constant 0 : i32
    return %arg0, %c0_i32, %c0_i32_0, %c0_i32_1 : i32, i32, i32, i32
  }
}

</mosaic_0001>

<llo_original>
// kernel: encoder_forward.5
$region0: #{encoder_forward.5}
  #allocation0 [shape = 'u32[]', space=smem, size = 0x4, offset = 0x4, fixed_abs, tag = 'smem constant byte address 0x4 - core index']
  #allocation1 [shape = 'u32[144,128]{1,0:T(1,128)}', space=vmem, size = 0x12000, scoped, tag = 'internal scratch']
  #allocation2 [shape = 'bf16[6,6,16]{2,1,0:T(8,128)(2,1)}', space=vmem, size = 0x3000, scoped, tag = 'scratch operand']
  #allocation3 [shape = 'bf16[6,6,32]{2,1,0:T(8,128)(2,1)}', space=vmem, size = 0x3000, scoped, tag = 'scratch operand']
  %s0 = inlined_call_operand.vmem [shape: bf16[2,4,2,4,32], index: 0, kind: input, shape index: {}]
  %s1 = inlined_call_operand.vmem [shape: bf16[144,32], index: 1, kind: input, shape index: {}]
  %s2 = inlined_call_operand.vmem [shape: f32[1,32], index: 2, kind: input, shape index: {}]
  %s3 = inlined_call_operand.vmem [shape: bf16[288,32], index: 3, kind: input, shape index: {}]
  %s4 = inlined_call_operand.vmem [shape: f32[1,32], index: 4, kind: input, shape index: {}]
  %s5 = inlined_call_operand.vmem [shape: bf16[2,4,4,32], index: 5, kind: output, shape index: {}]
  %s6 = sld [smem:[#allocation0]]
  $region53: #{encoder_forward.5} parent=0
    _
  %s8 = ssub.s32 1, %s6
  %s9 = scalar_select 0, %s8, %s6
  loop: start=0, step=1, limit=4
  $region2: #{encoder_forward.5} parent=0 // loop_pre_header
    _
  $region3: #{encoder_forward.5} parent=0 // loop_header
    %s11 = sphi 0, %s15
    %p12 = scmp.ge.s32.totalorder %s11, 4
    %s21 = sphi 0, %s23
    %s24 = sphi 0, %s21
    %s25 = sphi 0, %s24
    %s41 = sphi 0, %s25
    %s45 = sphi 0, %s45
    %s47 = sphi 0, %s45
    %s48 = sphi 0, %s47
    %s62 = sphi 0, %s48
    %s66 = sphi 0, %s66
    %s68 = sphi 0, %s66
    %s69 = sphi 0, %s68
    %s83 = sphi 0, %s69
    %s87 = sphi 0, %s87
    %s89 = sphi 0, %s87
    %s90 = sphi 0, %s89
    %s104 = sphi 0, %s90
    %s108 = sphi 0, %s108
    %s110 = sphi 0, %s108
    %s111 = sphi 0, %s110
    %s125 = sphi 0, %s111
    %s131 = sphi 0, %s133
    %s134 = sphi 0, %s131
    %s135 = sphi 0, %s134
    %s151 = sphi 0, %s135
  $region4: #{encoder_forward.5} parent=0 // loop_header_branch
    %14 = sbr.rel (%p12) target = $region8
  $region5: #{encoder_forward.5} parent=0 // loop_body
    %s16 = ssub.s32 %s11, 1
    %s17 = ssub.s32 %s11, 2
    %s18 = sadd.s32 %s11, 1
    %s19 = ssub.s32 %s11, %s18
    %p20 = scmp.eq.s32.totalorder %s19, 0
    %s22 = sadd.s32 %s21, 1
    %s23 = scalar_select %p20, %s21, %s22
    %p26 = pneg %p20
    %p27 = scmp.eq.s32.totalorder %s11, 1
    %p28 = por %p26, %p27
    %p29 = scmp.ne.s32.totalorder %s21, %s24
    %p30 = scmp.eq.s32.totalorder %s11, 0
    %p31 = por %p29, %p30
    %p32 = scmp.ne.s32.totalorder %s21, %s24
    %p33 = scmp.eq.s32.totalorder %s16, 1
    %p34 = por %p32, %p33
    %p35 = scmp.ne.s32.totalorder %s24, %s25
    %p36 = scmp.eq.s32.totalorder %s16, 0
    %p37 = por %p35, %p36
    %p38 = scmp.ne.s32.totalorder %s24, %s25
    %p39 = scmp.eq.s32.totalorder %s17, 1
    %p40 = por %p38, %p39
    %p42 = scmp.ne.s32.totalorder %s25, %s41
    %p43 = scmp.eq.s32.totalorder %s17, 0
    %p44 = por %p42, %p43
    %s46 = sadd.s32 %s45, 1
    %p49 = scmp.eq.s32.totalorder %s11, 1
    %p50 = scmp.ne.s32.totalorder %s45, %s47
    %p51 = scmp.eq.s32.totalorder %s11, 0
    %p52 = por %p50, %p51
    %p53 = scmp.ne.s32.totalorder %s45, %s47
    %p54 = scmp.eq.s32.totalorder %s16, 1
    %p55 = por %p53, %p54
    %p56 = scmp.ne.s32.totalorder %s47, %s48
    %p57 = scmp.eq.s32.totalorder %s16, 0
    %p58 = por %p56, %p57
    %p59 = scmp.ne.s32.totalorder %s47, %s48
    %p60 = scmp.eq.s32.totalorder %s17, 1
    %p61 = por %p59, %p60
    %p63 = scmp.ne.s32.totalorder %s48, %s62
    %p64 = scmp.eq.s32.totalorder %s17, 0
    %p65 = por %p63, %p64
    %s67 = sadd.s32 %s66, 1
    %p70 = scmp.eq.s32.totalorder %s11, 1
    %p71 = scmp.ne.s32.totalorder %s66, %s68
    %p72 = scmp.eq.s32.totalorder %s11, 0
    %p73 = por %p71, %p72
    %p74 = scmp.ne.s32.totalorder %s66, %s68
    %p75 = scmp.eq.s32.totalorder %s16, 1
    %p76 = por %p74, %p75
    %p77 = scmp.ne.s32.totalorder %s68, %s69
    %p78 = scmp.eq.s32.totalorder %s16, 0
    %p79 = por %p77, %p78
    %p80 = scmp.ne.s32.totalorder %s68, %s69
    %p81 = scmp.eq.s32.totalorder %s17, 1
    %p82 = por %p80, %p81
    %p84 = scmp.ne.s32.totalorder %s69, %s83
    %p85 = scmp.eq.s32.totalorder %s17, 0
    %p86 = por %p84, %p85
    %s88 = sadd.s32 %s87, 1
    %p91 = scmp.eq.s32.totalorder %s11, 1
    %p92 = scmp.ne.s32.totalorder %s87, %s89
    %p93 = scmp.eq.s32.totalorder %s11, 0
    %p94 = por %p92, %p93
    %p95 = scmp.ne.s32.totalorder %s87, %s89
    %p96 = scmp.eq.s32.totalorder %s16, 1
    %p97 = por %p95, %p96
    %p98 = scmp.ne.s32.totalorder %s89, %s90
    %p99 = scmp.eq.s32.totalorder %s16, 0
    %p100 = por %p98, %p99
    %p101 = scmp.ne.s32.totalorder %s89, %s90
    %p102 = scmp.eq.s32.totalorder %s17, 1
    %p103 = por %p101, %p102
    %p105 = scmp.ne.s32.totalorder %s90, %s104
    %p106 = scmp.eq.s32.totalorder %s17, 0
    %p107 = por %p105, %p106
    %s109 = sadd.s32 %s108, 1
    %p112 = scmp.eq.s32.totalorder %s11, 1
    %p113 = scmp.ne.s32.totalorder %s108, %s110
    %p114 = scmp.eq.s32.totalorder %s11, 0
    %p115 = por %p113, %p114
    %p116 = scmp.ne.s32.totalorder %s108, %s110
    %p117 = scmp.eq.s32.totalorder %s16, 1
    %p118 = por %p116, %p117
    %p119 = scmp.ne.s32.totalorder %s110, %s111
    %p120 = scmp.eq.s32.totalorder %s16, 0
    %p121 = por %p119, %p120
    %p122 = scmp.ne.s32.totalorder %s110, %s111
    %p123 = scmp.eq.s32.totalorder %s17, 1
    %p124 = por %p122, %p123
    %p126 = scmp.ne.s32.totalorder %s111, %s125
    %p127 = scmp.eq.s32.totalorder %s17, 0
    %p128 = por %p126, %p127
    %s129 = ssub.s32 %s11, %s18
    %p130 = scmp.eq.s32.totalorder %s129, 0
    %s132 = sadd.s32 %s131, 1
    %s133 = scalar_select %p130, %s131, %s132
    %p136 = pneg %p130
    %p137 = scmp.eq.s32.totalorder %s11, 1
    %p138 = por %p136, %p137
    %p139 = scmp.ne.s32.totalorder %s131, %s134
    %p140 = scmp.eq.s32.totalorder %s11, 0
    %p141 = por %p139, %p140
    %p142 = scmp.ne.s32.totalorder %s131, %s134
    %p143 = scmp.eq.s32.totalorder %s16, 1
    %p144 = por %p142, %p143
    %p145 = scmp.ne.s32.totalorder %s134, %s135
    %p146 = scmp.eq.s32.totalorder %s16, 0
    %p147 = por %p145, %p146
    %p148 = scmp.ne.s32.totalorder %s134, %s135
    %p149 = scmp.eq.s32.totalorder %s17, 1
    %p150 = por %p148, %p149
    %p152 = scmp.ne.s32.totalorder %s135, %s151
    %p153 = scmp.eq.s32.totalorder %s17, 0
    %p154 = por %p152, %p153
    %p155 = scmp.le.s32.totalorder 1, %s11
    %p156 = scmp.lt.s32.totalorder %s11, 3
    %p157 = pnand %p155, %p156
    %p158 = pneg %p157
    // Predicated region
    $region9: #{encoder_forward.5} parent=5 // pred_check
      _
    $region10: #{encoder_forward.5} parent=5 // pred_check_branch
      %160 = sbr.rel (%p157) target = $region12
    $region11: #{encoder_forward.5} parent=5 // pred_region
      %s161 = ssub.s32 %s11, 1
      // Predicated region
      $region13: #{encoder_forward.5} parent=11 // pred_check
        %p162 = pneg %p58
      $region14: #{encoder_forward.5} parent=11 // pred_check_branch
        %164 = sbr.rel (%p162) target = $region16
      $region15: #{encoder_forward.5} parent=11 // pred_region
        _
      $region16: #{encoder_forward.5} parent=11 // pred_fallthru
        _
      // Predicated region
      $region17: #{encoder_forward.5} parent=11 // pred_check
        %p165 = pneg %p79
      $region18: #{encoder_forward.5} parent=11 // pred_check_branch
        %167 = sbr.rel (%p165) target = $region20
      $region19: #{encoder_forward.5} parent=11 // pred_region
        _
      $region20: #{encoder_forward.5} parent=11 // pred_fallthru
        _
      // Predicated region
      $region21: #{encoder_forward.5} parent=11 // pred_check
        %p168 = pneg %p100
      $region22: #{encoder_forward.5} parent=11 // pred_check_branch
        %170 = sbr.rel (%p168) target = $region24
      $region23: #{encoder_forward.5} parent=11 // pred_region
        _
      $region24: #{encoder_forward.5} parent=11 // pred_fallthru
        _
      // Predicated region
      $region25: #{encoder_forward.5} parent=11 // pred_check
        %p171 = pneg %p121
      $region26: #{encoder_forward.5} parent=11 // pred_check_branch
        %173 = sbr.rel (%p171) target = $region28
      $region27: #{encoder_forward.5} parent=11 // pred_region
        _
      $region28: #{encoder_forward.5} parent=11 // pred_fallthru
        _
    $region12: #{encoder_forward.5} parent=5 // pred_fallthru
      _
    %p174 = scmp.lt.s32.totalorder %s11, 2
    // Predicated region
    $region29: #{encoder_forward.5} parent=5 // pred_check
      %p175 = pneg %p174
    $region30: #{encoder_forward.5} parent=5 // pred_check_branch
      %177 = sbr.rel (%p175) target = $region32
    $region31: #{encoder_forward.5} parent=5 // pred_region
      // Predicated region
      $region33: #{encoder_forward.5} parent=31 // pred_check
        %p178 = pneg %p31
      $region34: #{encoder_forward.5} parent=31 // pred_check_branch
        %180 = sbr.rel (%p178) target = $region36
      $region35: #{encoder_forward.5} parent=31 // pred_region
        %p181 = scmp.lt.s32.totalorder %s11, 1
        %s182 = scalar_select %p181, %s11, 1
        %s183 = smul.addr %s182, 8
        %s184 = smul.addr %s183, 2
        %s185 = scalar_lea.vmem %s0, %s184
      $region36: #{encoder_forward.5} parent=31 // pred_fallthru
        _
    $region32: #{encoder_forward.5} parent=5 // pred_fallthru
      _
    %p186 = scmp.le.s32.totalorder 1, %s11
    %p187 = scmp.lt.s32.totalorder %s11, 3
    %p188 = pnand %p186, %p187
    %p189 = pneg %p188
    // Predicated region
    $region37: #{encoder_forward.5} parent=5 // pred_check
      _
    $region38: #{encoder_forward.5} parent=5 // pred_check_branch
      %191 = sbr.rel (%p188) target = $region40
    $region39: #{encoder_forward.5} parent=5 // pred_region
      %s192 = ssub.s32 %s11, 1
      %p193 = scmp.lt.s32.totalorder %s16, 1
      %s194 = scalar_select %p193, %s16, 1
      %s195 = smul.addr %s194, 8
      %s196 = smul.addr %s195, 2
      %s197 = scalar_lea.vmem %s0, %s196
      %p198 = pneg %p37
      %p199 = pneg %p34
      %p200 = pneg %p58
      %p201 = pneg %p55
      %p202 = pneg %p79
      %p203 = pneg %p76
      %p204 = pneg %p100
      %p205 = pneg %p97
      %p206 = pneg %p121
      %p207 = pneg %p118
      %p208 = pneg %p147
      %p209 = pneg %p144
      %p210 = scmp.lt.s32.totalorder %s16, 1
      %s211 = scalar_select %p210, %s16, 1
      %s212 = smul.addr %s211, 4
      %s213 = smul.addr %s212, 2
      %s214 = scalar_lea.vmem %s5, %s213
      %p215 = scmp.lt.s32.totalorder %s16, 1
      %s216 = scalar_select %p215, %s16, 1
      %s217 = smul.addr %s216, 8
      %s218 = smul.addr %s217, 2
      %s219 = scalar_lea.vmem %s0, %s218
      %p220 = scmp.lt.s32.totalorder %s16, 1
      %s221 = scalar_select %p220, %s16, 1
      %s222 = smul.addr %s221, 4
      %s223 = smul.addr %s222, 2
      %s224 = scalar_lea.vmem %s5, %s223
      %v226 = vld [vmem:[%s219] sm:$0x3]
      %v227 = vld [vmem:[%s219 + $0x2] sm:$0x3]
      %v228 = vld [vmem:[%s219 + $0x4] sm:$0x3]
      %v229 = vld [vmem:[%s219 + $0x6] sm:$0x3]
      %v230 = vld [vmem:[%s219 + $0x8] sm:$0x3]
      %v231 = vld [vmem:[%s219 + $0xa] sm:$0x3]
      %v232 = vld [vmem:[%s219 + $0xc] sm:$0x3]
      %v233 = vld [vmem:[%s219 + $0xe] sm:$0x3]
      %v234 = vmax.bf16 %v226, %v227
      %v235 = vmax.bf16 %v228, %v229
      %v236 = vmax.bf16 %v230, %v231
      %v237 = vmax.bf16 %v232, %v233
      %242 = vrot.lane.b32.xlu0 %v234, 112
      %v243 = vpop.permute.xlu0 %242
      %244 = vrot.lane.b32.xlu0 %v235, 112
      %v245 = vpop.permute.xlu0 %244
      %246 = vrot.lane.b32.xlu0 %v236, 112
      %v247 = vpop.permute.xlu0 %246
      %248 = vrot.lane.b32.xlu0 %v237, 112
      %v249 = vpop.permute.xlu0 %248
      %v254 = vmax.bf16 %v234, %v243
      %v255 = vmax.bf16 %v235, %v245
      %v256 = vmax.bf16 %v236, %v247
      %v257 = vmax.bf16 %v237, %v249
      %vm258 = vcmask 124928
      %259 = vst.msk [vmem:[#allocation2] sm:$0x7] %vm258, 0
      %s260 = scalar_lea.vmem [#allocation2], 20
      %261 = vst.msk [vmem:[%s260] sm:$0x7] %vm258, 0
      %s262 = scalar_lea.vmem [#allocation2], 4
      %vm263 = vcmask 122880
      %vm264 = vsmask.f32 256
      %vm265 = vmand %vm263, %vm264
      %v266 = vld [vmem:[%s262] sm:$0x1]
      %v267 = vsel %vm265, 0, %v266
      %268 = vst [vmem:[%s262] sm:$0x1] %v267
      %v269 = vld [vmem:[%s262 + $0x4] sm:$0x1]
      %v270 = vsel %vm265, 0, %v269
      %271 = vst [vmem:[%s262 + $0x4] sm:$0x1] %v270
      %v272 = vld [vmem:[%s262 + $0x8] sm:$0x1]
      %v273 = vsel %vm265, 0, %v272
      %274 = vst [vmem:[%s262 + $0x8] sm:$0x1] %v273
      %v275 = vld [vmem:[%s262 + $0xc] sm:$0x1]
      %v276 = vsel %vm265, 0, %v275
      %277 = vst [vmem:[%s262 + $0xc] sm:$0x1] %v276
      %vm278 = vcmask 124930
      %vm279 = vsmask.f32 7946
      %vm280 = vmand %vm278, %vm279
      %v281 = vld [vmem:[%s262] sm:$0x4]
      %v282 = vsel %vm280, 0, %v281
      %283 = vst [vmem:[%s262] sm:$0x4] %v282
      %v284 = vld [vmem:[%s262 + $0x4] sm:$0x4]
      %v285 = vsel %vm280, 0, %v284
      %286 = vst [vmem:[%s262 + $0x4] sm:$0x4] %v285
      %v287 = vld [vmem:[%s262 + $0x8] sm:$0x4]
      %v288 = vsel %vm280, 0, %v287
      %289 = vst [vmem:[%s262 + $0x8] sm:$0x4] %v288
      %v290 = vld [vmem:[%s262 + $0xc] sm:$0x4]
      %v291 = vsel %vm280, 0, %v290
      %292 = vst [vmem:[%s262 + $0xc] sm:$0x4] %v291
      %v298 = vunpack.c.l.s4 1983009808
      %v299 = vunpack.c.0.s8 %v298
      %v300 = vlaneseq
      %v301 = vshrl.u32 %v300, 7
      %v302 = vsub.s32 %v299, %v301
      %v303 = vrot.slane %v254, %v302
      %v305 = vunpack.c.l.s4 1983009808
      %v306 = vunpack.c.0.s8 %v305
      %v307 = vlaneseq
      %v308 = vshrl.u32 %v307, 7
      %v309 = vsub.s32 %v306, %v308
      %v310 = vrot.slane %v255, %v309
      %v312 = vunpack.c.l.s4 1983009808
      %v313 = vunpack.c.0.s8 %v312
      %v314 = vlaneseq
      %v315 = vshrl.u32 %v314, 7
      %v316 = vsub.s32 %v313, %v315
      %v317 = vrot.slane %v256, %v316
      %v319 = vunpack.c.l.s4 1983009808
      %v320 = vunpack.c.0.s8 %v319
      %v321 = vlaneseq
      %v322 = vshrl.u32 %v321, 7
      %v323 = vsub.s32 %v320, %v322
      %v324 = vrot.slane %v257, %v323
      %v326 = vshrl.u32 %v303, 16
      %v328 = vrot.slane %v326, 7
      %v329 = vshll.u32 %v303, 16
      %v331 = vor.u32 %v328, %v329
      %v333 = vshrl.u32 %v310, 16
      %v335 = vrot.slane %v333, 7
      %v336 = vshll.u32 %v310, 16
      %v338 = vor.u32 %v335, %v336
      %v340 = vshrl.u32 %v317, 16
      %v342 = vrot.slane %v340, 7
      %v343 = vshll.u32 %v317, 16
      %v345 = vor.u32 %v342, %v343
      %v347 = vshrl.u32 %v324, 16
      %v349 = vrot.slane %v347, 7
      %v350 = vshll.u32 %v324, 16
      %v352 = vor.u32 %v349, %v350
      %vm357 = vcmask 124928
      %vm358 = vsmask.f32 2306
      %vm359 = vmand %vm357, %vm358
      %v360 = vld [vmem:[%s262] sm:$0x7]
      %v361 = vsel %vm359, %v331, %v360
      %362 = vst [vmem:[%s262] sm:$0x7] %v361
      %v363 = vld [vmem:[%s262 + $0x4] sm:$0x7]
      %v364 = vsel %vm359, %v338, %v363
      %365 = vst [vmem:[%s262 + $0x4] sm:$0x7] %v364
      %v366 = vld [vmem:[%s262 + $0x8] sm:$0x7]
      %v367 = vsel %vm359, %v345, %v366
      %368 = vst [vmem:[%s262 + $0x8] sm:$0x7] %v367
      %v369 = vld [vmem:[%s262 + $0xc] sm:$0x7]
      %v370 = vsel %vm359, %v352, %v369
      %371 = vst [vmem:[%s262 + $0xc] sm:$0x7] %v370
      %v372 = vld [vmem:[#allocation2] sm:$0x3]
      %v373 = vld [vmem:[#allocation2 + $0x4] sm:$0x3]
      %v374 = vld [vmem:[#allocation2 + $0x8] sm:$0x3]
      %v375 = vld [vmem:[#allocation2 + $0xc] sm:$0x3]
      %v376 = vld [vmem:[#allocation2] sm:$0x7]
      %v377 = vld [vmem:[#allocation2 + $0x4] sm:$0x7]
      %v378 = vld [vmem:[#allocation2 + $0x8] sm:$0x7]
      %v379 = vld [vmem:[#allocation2 + $0xc] sm:$0x7]
      %v380 = vld [vmem:[#allocation2] sm:$0x6]
      %v381 = vld [vmem:[#allocation2 + $0x4] sm:$0x6]
      %v382 = vld [vmem:[#allocation2 + $0x8] sm:$0x6]
      %v383 = vld [vmem:[#allocation2 + $0xc] sm:$0x6]
      %v384 = vld [vmem:[%s262] sm:$0x3]
      %v385 = vld [vmem:[%s262 + $0x4] sm:$0x3]
      %v386 = vld [vmem:[%s262 + $0x8] sm:$0x3]
      %v387 = vld [vmem:[%s262 + $0xc] sm:$0x3]
      %v388 = vld [vmem:[%s262] sm:$0x7]
      %v389 = vld [vmem:[%s262 + $0x4] sm:$0x7]
      %v390 = vld [vmem:[%s262 + $0x8] sm:$0x7]
      %v391 = vld [vmem:[%s262 + $0xc] sm:$0x7]
      %v392 = vld [vmem:[%s262] sm:$0x6]
      %v393 = vld [vmem:[%s262 + $0x4] sm:$0x6]
      %v394 = vld [vmem:[%s262 + $0x8] sm:$0x6]
      %v395 = vld [vmem:[%s262 + $0xc] sm:$0x6]
      %s396 = scalar_lea.vmem [#allocation2], 8
      %v397 = vld [vmem:[%s396] sm:$0x3]
      %v398 = vld [vmem:[%s396 + $0x4] sm:$0x3]
      %v399 = vld [vmem:[%s396 + $0x8] sm:$0x3]
      %v400 = vld [vmem:[%s396 + $0xc] sm:$0x3]
      %v401 = vld [vmem:[%s396] sm:$0x7]
      %v402 = vld [vmem:[%s396 + $0x4] sm:$0x7]
      %v403 = vld [vmem:[%s396 + $0x8] sm:$0x7]
      %v404 = vld [vmem:[%s396 + $0xc] sm:$0x7]
      %v405 = vld [vmem:[%s396] sm:$0x6]
      %v406 = vld [vmem:[%s396 + $0x4] sm:$0x6]
      %v407 = vld [vmem:[%s396 + $0x8] sm:$0x6]
      %v408 = vld [vmem:[%s396 + $0xc] sm:$0x6]
      %v413 = vunpack.c.l.b16 %v376
      %v414 = vunpack.c.l.b16 %v377
      %v415 = vunpack.c.l.b16 %v378
      %v416 = vunpack.c.l.b16 %v379
      %v417 = vpack.c.b16 %v413, %v413
      %v418 = vpack.c.b16 %v414, %v414
      %v419 = vpack.c.b16 %v415, %v415
      %v420 = vpack.c.b16 %v416, %v416
      %v422 = vshrl.u32 %v417, 16
      %v424 = vshll.u32 %v417, 16
      %v426 = vrot.slane %v424, 1
      %v427 = vor.u32 %v422, %v426
      %v429 = vshrl.u32 %v418, 16
      %v431 = vshll.u32 %v418, 16
      %v433 = vrot.slane %v431, 1
      %v434 = vor.u32 %v429, %v433
      %v436 = vshrl.u32 %v419, 16
      %v438 = vshll.u32 %v419, 16
      %v440 = vrot.slane %v438, 1
      %v441 = vor.u32 %v436, %v440
      %v443 = vshrl.u32 %v420, 16
      %v445 = vshll.u32 %v420, 16
      %v447 = vrot.slane %v445, 1
      %v448 = vor.u32 %v443, %v447
      %449 = vrot.lane.b32.xlu0 %v427, 16
      %v450 = vpop.permute.xlu0 %449
      %451 = vrot.lane.b32.xlu0 %v434, 16
      %v452 = vpop.permute.xlu0 %451
      %453 = vrot.lane.b32.xlu0 %v441, 16
      %v454 = vpop.permute.xlu0 %453
      %455 = vrot.lane.b32.xlu0 %v448, 16
      %v456 = vpop.permute.xlu0 %455
      %v461 = vunpack.c.l.b16 %v380
      %v462 = vunpack.c.l.b16 %v381
      %v463 = vunpack.c.l.b16 %v382
      %v464 = vunpack.c.l.b16 %v383
      %v465 = vpack.c.b16 %v461, %v461
      %v466 = vpack.c.b16 %v462, %v462
      %v467 = vpack.c.b16 %v463, %v463
      %v468 = vpack.c.b16 %v464, %v464
      %v469 = vrot.slane %v465, 1
      %v470 = vrot.slane %v466, 1
      %v471 = vrot.slane %v467, 1
      %v472 = vrot.slane %v468, 1
      %473 = vrot.lane.b32.xlu0 %v469, 32
      %v474 = vpop.permute.xlu0 %473
      %475 = vrot.lane.b32.xlu0 %v470, 32
      %v476 = vpop.permute.xlu0 %475
      %477 = vrot.lane.b32.xlu0 %v471, 32
      %v478 = vpop.permute.xlu0 %477
      %479 = vrot.lane.b32.xlu0 %v472, 32
      %v480 = vpop.permute.xlu0 %479
      %v485 = vunpack.c.l.b16 %v384
      %v486 = vunpack.c.l.b16 %v385
      %v487 = vunpack.c.l.b16 %v386
      %v488 = vunpack.c.l.b16 %v387
      %v489 = vpack.c.b16 %v485, %v485
      %v490 = vpack.c.b16 %v486, %v486
      %v491 = vpack.c.b16 %v487, %v487
      %v492 = vpack.c.b16 %v488, %v488
      %493 = vrot.lane.b32.xlu0 %v489, 48
      %v494 = vpop.permute.xlu0 %493
      %495 = vrot.lane.b32.xlu0 %v490, 48
      %v496 = vpop.permute.xlu0 %495
      %497 = vrot.lane.b32.xlu0 %v491, 48
      %v498 = vpop.permute.xlu0 %497
      %499 = vrot.lane.b32.xlu0 %v492, 48
      %v500 = vpop.permute.xlu0 %499
      %v505 = vunpack.c.l.b16 %v388
      %v506 = vunpack.c.l.b16 %v389
      %v507 = vunpack.c.l.b16 %v390
      %v508 = vunpack.c.l.b16 %v391
      %v509 = vpack.c.b16 %v505, %v505
      %v510 = vpack.c.b16 %v506, %v506
      %v511 = vpack.c.b16 %v507, %v507
      %v512 = vpack.c.b16 %v508, %v508
      %v514 = vshrl.u32 %v509, 16
      %v516 = vshll.u32 %v509, 16
      %v518 = vrot.slane %v516, 1
      %v519 = vor.u32 %v514, %v518
      %v521 = vshrl.u32 %v510, 16
      %v523 = vshll.u32 %v510, 16
      %v525 = vrot.slane %v523, 1
      %v526 = vor.u32 %v521, %v525
      %v528 = vshrl.u32 %v511, 16
      %v530 = vshll.u32 %v511, 16
      %v532 = vrot.slane %v530, 1
      %v533 = vor.u32 %v528, %v532
      %v535 = vshrl.u32 %v512, 16
      %v537 = vshll.u32 %v512, 16
      %v539 = vrot.slane %v537, 1
      %v540 = vor.u32 %v535, %v539
      %541 = vrot.lane.b32.xlu0 %v519, 64
      %v542 = vpop.permute.xlu0 %541
      %543 = vrot.lane.b32.xlu0 %v526, 64
      %v544 = vpop.permute.xlu0 %543
      %545 = vrot.lane.b32.xlu0 %v533, 64
      %v546 = vpop.permute.xlu0 %545
      %547 = vrot.lane.b32.xlu0 %v540, 64
      %v548 = vpop.permute.xlu0 %547
      %v553 = vunpack.c.l.b16 %v392
      %v554 = vunpack.c.l.b16 %v393
      %v555 = vunpack.c.l.b16 %v394
      %v556 = vunpack.c.l.b16 %v395
      %v557 = vpack.c.b16 %v553, %v553
      %v558 = vpack.c.b16 %v554, %v554
      %v559 = vpack.c.b16 %v555, %v555
      %v560 = vpack.c.b16 %v556, %v556
      %v561 = vrot.slane %v557, 1
      %v562 = vrot.slane %v558, 1
      %v563 = vrot.slane %v559, 1
      %v564 = vrot.slane %v560, 1
      %565 = vrot.lane.b32.xlu0 %v561, 80
      %v566 = vpop.permute.xlu0 %565
      %567 = vrot.lane.b32.xlu0 %v562, 80
      %v568 = vpop.permute.xlu0 %567
      %569 = vrot.lane.b32.xlu0 %v563, 80
      %v570 = vpop.permute.xlu0 %569
      %571 = vrot.lane.b32.xlu0 %v564, 80
      %v572 = vpop.permute.xlu0 %571
      %v577 = vunpack.c.l.b16 %v397
      %v578 = vunpack.c.l.b16 %v398
      %v579 = vunpack.c.l.b16 %v399
      %v580 = vunpack.c.l.b16 %v400
      %v581 = vpack.c.b16 %v577, %v577
      %v582 = vpack.c.b16 %v578, %v578
      %v583 = vpack.c.b16 %v579, %v579
      %v584 = vpack.c.b16 %v580, %v580
      %585 = vrot.lane.b32.xlu0 %v581, 96
      %v586 = vpop.permute.xlu0 %585
      %587 = vrot.lane.b32.xlu0 %v582, 96
      %v588 = vpop.permute.xlu0 %587
      %589 = vrot.lane.b32.xlu0 %v583, 96
      %v590 = vpop.permute.xlu0 %589
      %591 = vrot.lane.b32.xlu0 %v584, 96
      %v592 = vpop.permute.xlu0 %591
      %v597 = vunpack.c.l.b16 %v401
      %v598 = vunpack.c.l.b16 %v402
      %v599 = vunpack.c.l.b16 %v403
      %v600 = vunpack.c.l.b16 %v404
      %v601 = vpack.c.b16 %v597, %v597
      %v602 = vpack.c.b16 %v598, %v598
      %v603 = vpack.c.b16 %v599, %v599
      %v604 = vpack.c.b16 %v600, %v600
      %v606 = vshrl.u32 %v601, 16
      %v608 = vshll.u32 %v601, 16
      %v610 = vrot.slane %v608, 1
      %v611 = vor.u32 %v606, %v610
      %v613 = vshrl.u32 %v602, 16
      %v615 = vshll.u32 %v602, 16
      %v617 = vrot.slane %v615, 1
      %v618 = vor.u32 %v613, %v617
      %v620 = vshrl.u32 %v603, 16
      %v622 = vshll.u32 %v603, 16
      %v624 = vrot.slane %v622, 1
      %v625 = vor.u32 %v620, %v624
      %v627 = vshrl.u32 %v604, 16
      %v629 = vshll.u32 %v604, 16
      %v631 = vrot.slane %v629, 1
      %v632 = vor.u32 %v627, %v631
      %633 = vrot.lane.b32.xlu0 %v611, 112
      %v634 = vpop.permute.xlu0 %633
      %635 = vrot.lane.b32.xlu0 %v618, 112
      %v636 = vpop.permute.xlu0 %635
      %637 = vrot.lane.b32.xlu0 %v625, 112
      %v638 = vpop.permute.xlu0 %637
      %639 = vrot.lane.b32.xlu0 %v632, 112
      %v640 = vpop.permute.xlu0 %639
      %v645 = vunpack.c.l.b16 %v405
      %v646 = vunpack.c.l.b16 %v406
      %v647 = vunpack.c.l.b16 %v407
      %v648 = vunpack.c.l.b16 %v408
      %v649 = vpack.c.b16 %v645, %v645
      %v650 = vpack.c.b16 %v646, %v646
      %v651 = vpack.c.b16 %v647, %v647
      %v652 = vpack.c.b16 %v648, %v648
      %v653 = vrot.slane %v649, 1
      %v654 = vrot.slane %v650, 1
      %v655 = vrot.slane %v651, 1
      %v656 = vrot.slane %v652, 1
      %vm657 = vcmask 130048
      %v660 = vsel %vm657, %v372, %v450
      %v663 = vsel %vm657, %v373, %v452
      %v666 = vsel %vm657, %v374, %v454
      %v669 = vsel %vm657, %v375, %v456
      %vm670 = vcmask 261120
      %v672 = vsel %vm670, %v660, %v474
      %v674 = vsel %vm670, %v663, %v476
      %v676 = vsel %vm670, %v666, %v478
      %v678 = vsel %vm670, %v669, %v480
      %vm679 = vcmask 392192
      %v681 = vsel %vm679, %v672, %v494
      %v683 = vsel %vm679, %v674, %v496
      %v685 = vsel %vm679, %v676, %v498
      %v687 = vsel %vm679, %v678, %v500
      %vm688 = vcmask 523264
      %v690 = vsel %vm688, %v681, %v542
      %v692 = vsel %vm688, %v683, %v544
      %v694 = vsel %vm688, %v685, %v546
      %v696 = vsel %vm688, %v687, %v548
      %vm697 = vcmask 654336
      %v699 = vsel %vm697, %v690, %v566
      %v701 = vsel %vm697, %v692, %v568
      %v703 = vsel %vm697, %v694, %v570
      %v705 = vsel %vm697, %v696, %v572
      %vm706 = vcmask 785408
      %v708 = vsel %vm706, %v699, %v586
      %v710 = vsel %vm706, %v701, %v588
      %v712 = vsel %vm706, %v703, %v590
      %v714 = vsel %vm706, %v705, %v592
      %vm715 = vcmask 916480
      %v717 = vsel %vm715, %v708, %v634
      %v719 = vsel %vm715, %v710, %v636
      %v721 = vsel %vm715, %v712, %v638
      %v723 = vsel %vm715, %v714, %v640
      %v728 = vcombine.low %v717, %v653
      %v730 = vunpack.c.l.s4 1983009808
      %v731 = vunpack.c.0.s8 %v730
      %v732 = vlaneseq
      %v733 = vshrl.u32 %v732, 7
      %v734 = vsub.s32 %v731, %v733
      %v735 = vrot.slane %v728, %v734
      %v736 = vcombine.low %v719, %v654
      %v738 = vunpack.c.l.s4 1983009808
      %v739 = vunpack.c.0.s8 %v738
      %v740 = vlaneseq
      %v741 = vshrl.u32 %v740, 7
      %v742 = vsub.s32 %v739, %v741
      %v743 = vrot.slane %v736, %v742
      %v744 = vcombine.low %v721, %v655
      %v746 = vunpack.c.l.s4 1983009808
      %v747 = vunpack.c.0.s8 %v746
      %v748 = vlaneseq
      %v749 = vshrl.u32 %v748, 7
      %v750 = vsub.s32 %v747, %v749
      %v751 = vrot.slane %v744, %v750
      %v752 = vcombine.low %v723, %v656
      %v754 = vunpack.c.l.s4 1983009808
      %v755 = vunpack.c.0.s8 %v754
      %v756 = vlaneseq
      %v757 = vshrl.u32 %v756, 7
      %v758 = vsub.s32 %v755, %v757
      %v759 = vrot.slane %v752, %v758
      %v760 = vld [vmem:[%s1] sm:$0xf]
      %v761 = vld [vmem:[%s1 + $0x4] sm:$0xf]
      %v762 = vld [vmem:[%s1 + $0x8] sm:$0xf]
      %v763 = vld [vmem:[%s1 + $0xc] sm:$0xf]
      %v764 = vld [vmem:[%s1 + $0x10] sm:$0xf]
      %v765 = vld [vmem:[%s1 + $0x14] sm:$0xf]
      %v766 = vld [vmem:[%s1 + $0x18] sm:$0xf]
      %v767 = vld [vmem:[%s1 + $0x1c] sm:$0xf]
      %v768 = vld [vmem:[%s1 + $0x20] sm:$0xf]
      %v769 = vld [vmem:[%s1 + $0x24] sm:$0xf]
      %v770 = vld [vmem:[%s1 + $0x28] sm:$0xf]
      %v771 = vld [vmem:[%s1 + $0x2c] sm:$0xf]
      %v772 = vld [vmem:[%s1 + $0x30] sm:$0xf]
      %v773 = vld [vmem:[%s1 + $0x34] sm:$0xf]
      %v774 = vld [vmem:[%s1 + $0x38] sm:$0xf]
      %v775 = vld [vmem:[%s1 + $0x3c] sm:$0xf]
      %v776 = vld [vmem:[%s1 + $0x40] sm:$0xf]
      %v777 = vld [vmem:[%s1 + $0x44] sm:$0xf]
      %v778 = vld [vmem:[%s2] sm:$0x1]
      %v780 = vlaneseq
      %v781 = vshrl.u32 %v780, 7
      %v782 = vsub.s32 0, %v781
      %v783 = vrot.slane %v778, %v782
      %v785 = vcombine.low %v735, %v743
      %v786 = vcombine.low %v751, %v759
      %v788 = vunpack.c.l.s4 1983009808
      %v789 = vunpack.c.0.s8 %v788
      %v790 = vlaneseq
      %v791 = vshrl.u32 %v790, 7
      %v792 = vsub.s32 %v789, %v791
      %v793 = vrot.slane %v785, %v792
      %v795 = vunpack.c.l.s4 1983009808
      %v796 = vunpack.c.0.s8 %v795
      %v797 = vlaneseq
      %v798 = vshrl.u32 %v797, 7
      %v799 = vsub.s32 %v796, %v798
      %v800 = vrot.slane %v786, %v799
      %v801 = vcombine.low %v793, %v800
      %v802 = vcombine.high %v793, %v800
      %v822 = vunpack.c.l.b16 %v760
      %v823 = vunpack.c.l.b16 %v761
      %v824 = vunpack.c.l.b16 %v762
      %v825 = vunpack.c.l.b16 %v763
      %v826 = vunpack.c.l.b16 %v764
      %v827 = vunpack.c.l.b16 %v765
      %v828 = vunpack.c.l.b16 %v766
      %v829 = vunpack.c.l.b16 %v767
      %v830 = vunpack.c.l.b16 %v768
      %v831 = vunpack.c.l.b16 %v769
      %v832 = vunpack.c.l.b16 %v770
      %v833 = vunpack.c.l.b16 %v771
      %v834 = vunpack.c.l.b16 %v772
      %v835 = vunpack.c.l.b16 %v773
      %v836 = vunpack.c.l.b16 %v774
      %v837 = vunpack.c.l.b16 %v775
      %v838 = vunpack.c.l.b16 %v776
      %v839 = vunpack.c.l.b16 %v777
      %v840 = vpack.c.b16 %v823, %v822
      %v841 = vpack.c.b16 %v825, %v824
      %v842 = vpack.c.b16 %v827, %v826
      %v843 = vpack.c.b16 %v829, %v828
      %v844 = vpack.c.b16 %v831, %v830
      %v845 = vpack.c.b16 %v833, %v832
      %v846 = vpack.c.b16 %v835, %v834
      %v847 = vpack.c.b16 %v837, %v836
      %v848 = vpack.c.b16 %v839, %v838
      %v859 = vsel %vm657, %v802, 0
      %861 = vmatprep.subr.bf16.mxu0 0
      %862 = vmatpush1.bf16.msra.mxu0 %v840
      %863 = vmatprep.subr.bf16.mxu0 0
      %864 = vmatpush1.bf16.msra.mxu0 %v841
      %865 = vmatprep.subr.bf16.mxu0 0
      %866 = vmatpush1.bf16.msra.mxu0 %v842
      %867 = vmatprep.subr.bf16.mxu0 0
      %868 = vmatpush1.bf16.msra.mxu0 %v843
      %869 = vmatprep.subr.bf16.mxu0 0
      %870 = vmatpush1.bf16.msra.mxu0 %v844
      %871 = vmatprep.subr.bf16.mxu0 0
      %872 = vmatpush1.bf16.msra.mxu0 %v845
      %873 = vmatprep.subr.bf16.mxu0 0
      %874 = vmatpush1.bf16.msra.mxu0 %v846
      %875 = vmatprep.subr.bf16.mxu0 0
      %876 = vmatpush1.bf16.msra.mxu0 %v847
      %877 = vmatprep.subr.bf16.mxu0 0
      %878 = vmatpush1.bf16.msra.mxu0 %v848
      %879 = vmatprep.subr.bf16.mxu0 0
      %880 = vmatpush1.bf16.msra.mxu0 0
      %881 = vmatprep.subr.bf16.mxu0 0
      %882 = vmatpush1.bf16.msra.mxu0 0
      %883 = vmatprep.subr.bf16.mxu0 0
      %884 = vmatpush1.bf16.msra.mxu0 0
      %885 = vmatprep.subr.bf16.mxu0 0
      %886 = vmatpush1.bf16.msra.mxu0 0
      %887 = vmatprep.subr.bf16.mxu0 0
      %888 = vmatpush1.bf16.msra.mxu0 0
      %889 = vmatprep.subr.bf16.mxu0 0
      %890 = vmatpush1.bf16.msra.mxu0 0
      %891 = vmatprep.subr.bf16.mxu0 0
      %892 = vmatpush1.bf16.msra.mxu0 0
      %893 = vmatprep.mubr.bf16.mxu0 %v859
      %894 = vmatmul.mubr.bf16.gmra.mrb[0].mxu0 %v801
      %v895 = vpop.f32.mrb[0].mxu0
      %v896 = vadd.f32 %v783, %v895
      %v897 = vpop.f32.mrb[0].mxu0
      %v898 = vpop.f32.mrb[0].mxu0
      %v899 = vadd.f32 %v783, %v898
      %v900 = vpop.f32.mrb[0].mxu0
      %901 = vdwg.mxu0
      %v902 = vmax.f32 %v896, 0.0
      %v903 = vmax.f32 %v899, 0.0
      %v906 = vcombine.high %v902, %v902
      %v907 = vcombine.high %v903, %v903
      %vm910 = vcmask 256000
      %911 = vst.msk [vmem:[#allocation3] sm:$0x7] %vm910, 0
      %s912 = scalar_lea.vmem [#allocation3], 20
      %913 = vst.msk [vmem:[%s912] sm:$0x7] %vm910, 0
      %s914 = scalar_lea.vmem [#allocation3], 4
      %vm915 = vcmask 253952
      %vm916 = vmand %vm915, %vm264
      %v917 = vld [vmem:[%s914] sm:$0x1]
      %v918 = vsel %vm916, 0, %v917
      %919 = vst [vmem:[%s914] sm:$0x1] %v918
      %v920 = vld [vmem:[%s914 + $0x4] sm:$0x1]
      %v921 = vsel %vm916, 0, %v920
      %922 = vst [vmem:[%s914 + $0x4] sm:$0x1] %v921
      %v923 = vld [vmem:[%s914 + $0x8] sm:$0x1]
      %v924 = vsel %vm916, 0, %v923
      %925 = vst [vmem:[%s914 + $0x8] sm:$0x1] %v924
      %v926 = vld [vmem:[%s914 + $0xc] sm:$0x1]
      %v927 = vsel %vm916, 0, %v926
      %928 = vst [vmem:[%s914 + $0xc] sm:$0x1] %v927
      %vm929 = vcmask 256002
      %vm930 = vmand %vm929, %vm279
      %v931 = vld [vmem:[%s914] sm:$0x4]
      %v932 = vsel %vm930, 0, %v931
      %933 = vst [vmem:[%s914] sm:$0x4] %v932
      %v934 = vld [vmem:[%s914 + $0x4] sm:$0x4]
      %v935 = vsel %vm930, 0, %v934
      %936 = vst [vmem:[%s914 + $0x4] sm:$0x4] %v935
      %v937 = vld [vmem:[%s914 + $0x8] sm:$0x4]
      %v938 = vsel %vm930, 0, %v937
      %939 = vst [vmem:[%s914 + $0x8] sm:$0x4] %v938
      %v940 = vld [vmem:[%s914 + $0xc] sm:$0x4]
      %v941 = vsel %vm930, 0, %v940
      %942 = vst [vmem:[%s914 + $0xc] sm:$0x4] %v941
      %v943 = vpack.c.bf16 %v902, %v902
      %v944 = vpack.c.bf16 %v906, %v906
      %v945 = vpack.c.bf16 %v903, %v903
      %v946 = vpack.c.bf16 %v907, %v907
      %v951 = vunpack.c.l.b16 %v943
      %v952 = vunpack.c.l.b16 %v944
      %v953 = vunpack.c.l.b16 %v945
      %v954 = vunpack.c.l.b16 %v946
      %v955 = vpack.c.b16 %v951, %v951
      %v956 = vpack.c.b16 %v952, %v952
      %v957 = vpack.c.b16 %v953, %v953
      %v958 = vpack.c.b16 %v954, %v954
      %v960 = vshrl.u32 %v955, 16
      %v962 = vrot.slane %v960, 7
      %v963 = vshll.u32 %v955, 16
      %v965 = vor.u32 %v962, %v963
      %v967 = vshrl.u32 %v956, 16
      %v969 = vrot.slane %v967, 7
      %v970 = vshll.u32 %v956, 16
      %v972 = vor.u32 %v969, %v970
      %v974 = vshrl.u32 %v957, 16
      %v976 = vrot.slane %v974, 7
      %v977 = vshll.u32 %v957, 16
      %v979 = vor.u32 %v976, %v977
      %v981 = vshrl.u32 %v958, 16
      %v983 = vrot.slane %v981, 7
      %v984 = vshll.u32 %v958, 16
      %v986 = vor.u32 %v983, %v984
      %vm991 = vcmask 256000
      %vm992 = vmand %vm991, %vm358
      %v993 = vld [vmem:[%s914] sm:$0x7]
      %v994 = vsel %vm992, %v965, %v993
      %995 = vst [vmem:[%s914] sm:$0x7] %v994
      %v996 = vld [vmem:[%s914 + $0x4] sm:$0x7]
      %v997 = vsel %vm992, %v972, %v996
      %998 = vst [vmem:[%s914 + $0x4] sm:$0x7] %v997
      %v999 = vld [vmem:[%s914 + $0x8] sm:$0x7]
      %v1000 = vsel %vm992, %v979, %v999
      %1001 = vst [vmem:[%s914 + $0x8] sm:$0x7] %v1000
      %v1002 = vld [vmem:[%s914 + $0xc] sm:$0x7]
      %v1003 = vsel %vm992, %v986, %v1002
      %1004 = vst [vmem:[%s914 + $0xc] sm:$0x7] %v1003
      %v1005 = vld [vmem:[#allocation3] sm:$0x3]
      %v1006 = vld [vmem:[#allocation3 + $0x4] sm:$0x3]
      %v1007 = vld [vmem:[#allocation3 + $0x8] sm:$0x3]
      %v1008 = vld [vmem:[#allocation3 + $0xc] sm:$0x3]
      %v1009 = vld [vmem:[#allocation3] sm:$0x7]
      %v1010 = vld [vmem:[#allocation3 + $0x4] sm:$0x7]
      %v1011 = vld [vmem:[#allocation3 + $0x8] sm:$0x7]
      %v1012 = vld [vmem:[#allocation3 + $0xc] sm:$0x7]
      %v1013 = vld [vmem:[#allocation3] sm:$0x6]
      %v1014 = vld [vmem:[#allocation3 + $0x4] sm:$0x6]
      %v1015 = vld [vmem:[#allocation3 + $0x8] sm:$0x6]
      %v1016 = vld [vmem:[#allocation3 + $0xc] sm:$0x6]
      %v1017 = vld [vmem:[%s914] sm:$0x3]
      %v1018 = vld [vmem:[%s914 + $0x4] sm:$0x3]
      %v1019 = vld [vmem:[%s914 + $0x8] sm:$0x3]
      %v1020 = vld [vmem:[%s914 + $0xc] sm:$0x3]
      %v1021 = vld [vmem:[%s914] sm:$0x7]
      %v1022 = vld [vmem:[%s914 + $0x4] sm:$0x7]
      %v1023 = vld [vmem:[%s914 + $0x8] sm:$0x7]
      %v1024 = vld [vmem:[%s914 + $0xc] sm:$0x7]
      %v1025 = vld [vmem:[%s914] sm:$0x6]
      %v1026 = vld [vmem:[%s914 + $0x4] sm:$0x6]
      %v1027 = vld [vmem:[%s914 + $0x8] sm:$0x6]
      %v1028 = vld [vmem:[%s914 + $0xc] sm:$0x6]
      %s1029 = scalar_lea.vmem [#allocation3], 8
      %v1030 = vld [vmem:[%s1029] sm:$0x3]
      %v1031 = vld [vmem:[%s1029 + $0x4] sm:$0x3]
      %v1032 = vld [vmem:[%s1029 + $0x8] sm:$0x3]
      %v1033 = vld [vmem:[%s1029 + $0xc] sm:$0x3]
      %v1034 = vld [vmem:[%s1029] sm:$0x7]
      %v1035 = vld [vmem:[%s1029 + $0x4] sm:$0x7]
      %v1036 = vld [vmem:[%s1029 + $0x8] sm:$0x7]
      %v1037 = vld [vmem:[%s1029 + $0xc] sm:$0x7]
      %v1038 = vld [vmem:[%s1029] sm:$0x6]
      %v1039 = vld [vmem:[%s1029 + $0x4] sm:$0x6]
      %v1040 = vld [vmem:[%s1029 + $0x8] sm:$0x6]
      %v1041 = vld [vmem:[%s1029 + $0xc] sm:$0x6]
      %v1046 = vunpack.c.l.b16 %v1009
      %v1047 = vunpack.c.l.b16 %v1010
      %v1048 = vunpack.c.l.b16 %v1011
      %v1049 = vunpack.c.l.b16 %v1012
      %v1050 = vpack.c.b16 %v1046, %v1046
      %v1051 = vpack.c.b16 %v1047, %v1047
      %v1052 = vpack.c.b16 %v1048, %v1048
      %v1053 = vpack.c.b16 %v1049, %v1049
      %v1055 = vshrl.u32 %v1050, 16
      %v1057 = vshll.u32 %v1050, 16
      %v1059 = vrot.slane %v1057, 1
      %v1060 = vor.u32 %v1055, %v1059
      %v1062 = vshrl.u32 %v1051, 16
      %v1064 = vshll.u32 %v1051, 16
      %v1066 = vrot.slane %v1064, 1
      %v1067 = vor.u32 %v1062, %v1066
      %v1069 = vshrl.u32 %v1052, 16
      %v1071 = vshll.u32 %v1052, 16
      %v1073 = vrot.slane %v1071, 1
      %v1074 = vor.u32 %v1069, %v1073
      %v1076 = vshrl.u32 %v1053, 16
      %v1078 = vshll.u32 %v1053, 16
      %v1080 = vrot.slane %v1078, 1
      %v1081 = vor.u32 %v1076, %v1080
      %1082 = vrot.lane.b32.xlu0 %v1060, 32
      %v1083 = vpop.permute.xlu0 %1082
      %1084 = vrot.lane.b32.xlu0 %v1067, 32
      %v1085 = vpop.permute.xlu0 %1084
      %1086 = vrot.lane.b32.xlu0 %v1074, 32
      %v1087 = vpop.permute.xlu0 %1086
      %1088 = vrot.lane.b32.xlu0 %v1081, 32
      %v1089 = vpop.permute.xlu0 %1088
      %v1094 = vunpack.c.l.b16 %v1013
      %v1095 = vunpack.c.l.b16 %v1014
      %v1096 = vunpack.c.l.b16 %v1015
      %v1097 = vunpack.c.l.b16 %v1016
      %v1098 = vpack.c.b16 %v1094, %v1094
      %v1099 = vpack.c.b16 %v1095, %v1095
      %v1100 = vpack.c.b16 %v1096, %v1096
      %v1101 = vpack.c.b16 %v1097, %v1097
      %v1102 = vrot.slane %v1098, 1
      %v1103 = vrot.slane %v1099, 1
      %v1104 = vrot.slane %v1100, 1
      %v1105 = vrot.slane %v1101, 1
      %1106 = vrot.lane.b32.xlu0 %v1102, 64
      %v1107 = vpop.permute.xlu0 %1106
      %1108 = vrot.lane.b32.xlu0 %v1103, 64
      %v1109 = vpop.permute.xlu0 %1108
      %1110 = vrot.lane.b32.xlu0 %v1104, 64
      %v1111 = vpop.permute.xlu0 %1110
      %1112 = vrot.lane.b32.xlu0 %v1105, 64
      %v1113 = vpop.permute.xlu0 %1112
      %v1118 = vunpack.c.l.b16 %v1017
      %v1119 = vunpack.c.l.b16 %v1018
      %v1120 = vunpack.c.l.b16 %v1019
      %v1121 = vunpack.c.l.b16 %v1020
      %v1122 = vpack.c.b16 %v1118, %v1118
      %v1123 = vpack.c.b16 %v1119, %v1119
      %v1124 = vpack.c.b16 %v1120, %v1120
      %v1125 = vpack.c.b16 %v1121, %v1121
      %1126 = vrot.lane.b32.xlu0 %v1122, 96
      %v1127 = vpop.permute.xlu0 %1126
      %1128 = vrot.lane.b32.xlu0 %v1123, 96
      %v1129 = vpop.permute.xlu0 %1128
      %1130 = vrot.lane.b32.xlu0 %v1124, 96
      %v1131 = vpop.permute.xlu0 %1130
      %1132 = vrot.lane.b32.xlu0 %v1125, 96
      %v1133 = vpop.permute.xlu0 %1132
      %v1138 = vunpack.c.l.b16 %v1021
      %v1139 = vunpack.c.l.b16 %v1022
      %v1140 = vunpack.c.l.b16 %v1023
      %v1141 = vunpack.c.l.b16 %v1024
      %v1142 = vpack.c.b16 %v1138, %v1138
      %v1143 = vpack.c.b16 %v1139, %v1139
      %v1144 = vpack.c.b16 %v1140, %v1140
      %v1145 = vpack.c.b16 %v1141, %v1141
      %v1147 = vshrl.u32 %v1142, 16
      %v1149 = vshll.u32 %v1142, 16
      %v1151 = vrot.slane %v1149, 1
      %v1152 = vor.u32 %v1147, %v1151
      %v1154 = vshrl.u32 %v1143, 16
      %v1156 = vshll.u32 %v1143, 16
      %v1158 = vrot.slane %v1156, 1
      %v1159 = vor.u32 %v1154, %v1158
      %v1161 = vshrl.u32 %v1144, 16
      %v1163 = vshll.u32 %v1144, 16
      %v1165 = vrot.slane %v1163, 1
      %v1166 = vor.u32 %v1161, %v1165
      %v1168 = vshrl.u32 %v1145, 16
      %v1170 = vshll.u32 %v1145, 16
      %v1172 = vrot.slane %v1170, 1
      %v1173 = vor.u32 %v1168, %v1172
      %v1178 = vunpack.c.l.b16 %v1025
      %v1179 = vunpack.c.l.b16 %v1026
      %v1180 = vunpack.c.l.b16 %v1027
      %v1181 = vunpack.c.l.b16 %v1028
      %v1182 = vpack.c.b16 %v1178, %v1178
      %v1183 = vpack.c.b16 %v1179, %v1179
      %v1184 = vpack.c.b16 %v1180, %v1180
      %v1185 = vpack.c.b16 %v1181, %v1181
      %v1186 = vrot.slane %v1182, 1
      %v1187 = vrot.slane %v1183, 1
      %v1188 = vrot.slane %v1184, 1
      %v1189 = vrot.slane %v1185, 1
      %1190 = vrot.lane.b32.xlu0 %v1186, 32
      %v1191 = vpop.permute.xlu0 %1190
      %1192 = vrot.lane.b32.xlu0 %v1187, 32
      %v1193 = vpop.permute.xlu0 %1192
      %1194 = vrot.lane.b32.xlu0 %v1188, 32
      %v1195 = vpop.permute.xlu0 %1194
      %1196 = vrot.lane.b32.xlu0 %v1189, 32
      %v1197 = vpop.permute.xlu0 %1196
      %v1202 = vunpack.c.l.b16 %v1030
      %v1203 = vunpack.c.l.b16 %v1031
      %v1204 = vunpack.c.l.b16 %v1032
      %v1205 = vunpack.c.l.b16 %v1033
      %v1206 = vpack.c.b16 %v1202, %v1202
      %v1207 = vpack.c.b16 %v1203, %v1203
      %v1208 = vpack.c.b16 %v1204, %v1204
      %v1209 = vpack.c.b16 %v1205, %v1205
      %1210 = vrot.lane.b32.xlu0 %v1206, 64
      %v1211 = vpop.permute.xlu0 %1210
      %1212 = vrot.lane.b32.xlu0 %v1207, 64
      %v1213 = vpop.permute.xlu0 %1212
      %1214 = vrot.lane.b32.xlu0 %v1208, 64
      %v1215 = vpop.permute.xlu0 %1214
      %1216 = vrot.lane.b32.xlu0 %v1209, 64
      %v1217 = vpop.permute.xlu0 %1216
      %v1222 = vunpack.c.l.b16 %v1034
      %v1223 = vunpack.c.l.b16 %v1035
      %v1224 = vunpack.c.l.b16 %v1036
      %v1225 = vunpack.c.l.b16 %v1037
      %v1226 = vpack.c.b16 %v1222, %v1222
      %v1227 = vpack.c.b16 %v1223, %v1223
      %v1228 = vpack.c.b16 %v1224, %v1224
      %v1229 = vpack.c.b16 %v1225, %v1225
      %v1231 = vshrl.u32 %v1226, 16
      %v1233 = vshll.u32 %v1226, 16
      %v1235 = vrot.slane %v1233, 1
      %v1236 = vor.u32 %v1231, %v1235
      %v1238 = vshrl.u32 %v1227, 16
      %v1240 = vshll.u32 %v1227, 16
      %v1242 = vrot.slane %v1240, 1
      %v1243 = vor.u32 %v1238, %v1242
      %v1245 = vshrl.u32 %v1228, 16
      %v1247 = vshll.u32 %v1228, 16
      %v1249 = vrot.slane %v1247, 1
      %v1250 = vor.u32 %v1245, %v1249
      %v1252 = vshrl.u32 %v1229, 16
      %v1254 = vshll.u32 %v1229, 16
      %v1256 = vrot.slane %v1254, 1
      %v1257 = vor.u32 %v1252, %v1256
      %1258 = vrot.lane.b32.xlu0 %v1236, 96
      %v1259 = vpop.permute.xlu0 %1258
      %1260 = vrot.lane.b32.xlu0 %v1243, 96
      %v1261 = vpop.permute.xlu0 %1260
      %1262 = vrot.lane.b32.xlu0 %v1250, 96
      %v1263 = vpop.permute.xlu0 %1262
      %1264 = vrot.lane.b32.xlu0 %v1257, 96
      %v1265 = vpop.permute.xlu0 %1264
      %v1270 = vunpack.c.l.b16 %v1038
      %v1271 = vunpack.c.l.b16 %v1039
      %v1272 = vunpack.c.l.b16 %v1040
      %v1273 = vunpack.c.l.b16 %v1041
      %v1274 = vpack.c.b16 %v1270, %v1270
      %v1275 = vpack.c.b16 %v1271, %v1271
      %v1276 = vpack.c.b16 %v1272, %v1272
      %v1277 = vpack.c.b16 %v1273, %v1273
      %v1278 = vrot.slane %v1274, 1
      %v1279 = vrot.slane %v1275, 1
      %v1280 = vrot.slane %v1276, 1
      %v1281 = vrot.slane %v1277, 1
      %v1284 = vsel %vm670, %v1005, %v1083
      %v1287 = vsel %vm670, %v1006, %v1085
      %v1290 = vsel %vm670, %v1007, %v1087
      %v1293 = vsel %vm670, %v1008, %v1089
      %v1295 = vsel %vm688, %v1284, %v1107
      %v1297 = vsel %vm688, %v1287, %v1109
      %v1299 = vsel %vm688, %v1290, %v1111
      %v1301 = vsel %vm688, %v1293, %v1113
      %v1303 = vsel %vm706, %v1295, %v1127
      %v1305 = vsel %vm706, %v1297, %v1129
      %v1307 = vsel %vm706, %v1299, %v1131
      %v1309 = vsel %vm706, %v1301, %v1133
      %v1312 = vsel %vm670, %v1152, %v1191
      %v1315 = vsel %vm670, %v1159, %v1193
      %v1318 = vsel %vm670, %v1166, %v1195
      %v1321 = vsel %vm670, %v1173, %v1197
      %v1323 = vsel %vm688, %v1312, %v1211
      %v1325 = vsel %vm688, %v1315, %v1213
      %v1327 = vsel %vm688, %v1318, %v1215
      %v1329 = vsel %vm688, %v1321, %v1217
      %v1331 = vsel %vm706, %v1323, %v1259
      %v1333 = vsel %vm706, %v1325, %v1261
      %v1335 = vsel %vm706, %v1327, %v1263
      %v1337 = vsel %vm706, %v1329, %v1265
      %v1346 = vcombine.low %v1303, %v1331
      %v1348 = vunpack.c.l.s4 1983009808
      %v1349 = vunpack.c.0.s8 %v1348
      %v1350 = vlaneseq
      %v1351 = vshrl.u32 %v1350, 7
      %v1352 = vsub.s32 %v1349, %v1351
      %v1353 = vrot.slane %v1346, %v1352
      %v1355 = vunpack.c.l.s4 1983009808
      %v1356 = vunpack.c.0.s8 %v1355
      %v1357 = vlaneseq
      %v1358 = vshrl.u32 %v1357, 7
      %v1359 = vsub.s32 %v1356, %v1358
      %v1360 = vrot.slane %v1278, %v1359
      %v1361 = vcombine.low %v1353, %v1360
      %v1362 = vcombine.low %v1305, %v1333
      %v1364 = vunpack.c.l.s4 1983009808
      %v1365 = vunpack.c.0.s8 %v1364
      %v1366 = vlaneseq
      %v1367 = vshrl.u32 %v1366, 7
      %v1368 = vsub.s32 %v1365, %v1367
      %v1369 = vrot.slane %v1362, %v1368
      %v1371 = vunpack.c.l.s4 1983009808
      %v1372 = vunpack.c.0.s8 %v1371
      %v1373 = vlaneseq
      %v1374 = vshrl.u32 %v1373, 7
      %v1375 = vsub.s32 %v1372, %v1374
      %v1376 = vrot.slane %v1279, %v1375
      %v1377 = vcombine.low %v1369, %v1376
      %v1378 = vcombine.low %v1307, %v1335
      %v1380 = vunpack.c.l.s4 1983009808
      %v1381 = vunpack.c.0.s8 %v1380
      %v1382 = vlaneseq
      %v1383 = vshrl.u32 %v1382, 7
      %v1384 = vsub.s32 %v1381, %v1383
      %v1385 = vrot.slane %v1378, %v1384
      %v1387 = vunpack.c.l.s4 1983009808
      %v1388 = vunpack.c.0.s8 %v1387
      %v1389 = vlaneseq
      %v1390 = vshrl.u32 %v1389, 7
      %v1391 = vsub.s32 %v1388, %v1390
      %v1392 = vrot.slane %v1280, %v1391
      %v1393 = vcombine.low %v1385, %v1392
      %v1394 = vcombine.low %v1309, %v1337
      %v1396 = vunpack.c.l.s4 1983009808
      %v1397 = vunpack.c.0.s8 %v1396
      %v1398 = vlaneseq
      %v1399 = vshrl.u32 %v1398, 7
      %v1400 = vsub.s32 %v1397, %v1399
      %v1401 = vrot.slane %v1394, %v1400
      %v1403 = vunpack.c.l.s4 1983009808
      %v1404 = vunpack.c.0.s8 %v1403
      %v1405 = vlaneseq
      %v1406 = vshrl.u32 %v1405, 7
      %v1407 = vsub.s32 %v1404, %v1406
      %v1408 = vrot.slane %v1281, %v1407
      %v1409 = vcombine.low %v1401, %v1408
      %v1410 = vld [vmem:[%s3] sm:$0xf]
      %v1411 = vld [vmem:[%s3 + $0x4] sm:$0xf]
      %v1412 = vld [vmem:[%s3 + $0x8] sm:$0xf]
      %v1413 = vld [vmem:[%s3 + $0xc] sm:$0xf]
      %v1414 = vld [vmem:[%s3 + $0x10] sm:$0xf]
      %v1415 = vld [vmem:[%s3 + $0x14] sm:$0xf]
      %v1416 = vld [vmem:[%s3 + $0x18] sm:$0xf]
      %v1417 = vld [vmem:[%s3 + $0x1c] sm:$0xf]
      %v1418 = vld [vmem:[%s3 + $0x20] sm:$0xf]
      %v1419 = vld [vmem:[%s3 + $0x24] sm:$0xf]
      %v1420 = vld [vmem:[%s3 + $0x28] sm:$0xf]
      %v1421 = vld [vmem:[%s3 + $0x2c] sm:$0xf]
      %v1422 = vld [vmem:[%s3 + $0x30] sm:$0xf]
      %v1423 = vld [vmem:[%s3 + $0x34] sm:$0xf]
      %v1424 = vld [vmem:[%s3 + $0x38] sm:$0xf]
      %v1425 = vld [vmem:[%s3 + $0x3c] sm:$0xf]
      %v1426 = vld [vmem:[%s3 + $0x40] sm:$0xf]
      %v1427 = vld [vmem:[%s3 + $0x44] sm:$0xf]
      %v1428 = vld [vmem:[%s3 + $0x48] sm:$0xf]
      %v1429 = vld [vmem:[%s3 + $0x4c] sm:$0xf]
      %v1430 = vld [vmem:[%s3 + $0x50] sm:$0xf]
      %v1431 = vld [vmem:[%s3 + $0x54] sm:$0xf]
      %v1432 = vld [vmem:[%s3 + $0x58] sm:$0xf]
      %v1433 = vld [vmem:[%s3 + $0x5c] sm:$0xf]
      %v1434 = vld [vmem:[%s3 + $0x60] sm:$0xf]
      %v1435 = vld [vmem:[%s3 + $0x64] sm:$0xf]
      %v1436 = vld [vmem:[%s3 + $0x68] sm:$0xf]
      %v1437 = vld [vmem:[%s3 + $0x6c] sm:$0xf]
      %v1438 = vld [vmem:[%s3 + $0x70] sm:$0xf]
      %v1439 = vld [vmem:[%s3 + $0x74] sm:$0xf]
      %v1440 = vld [vmem:[%s3 + $0x78] sm:$0xf]
      %v1441 = vld [vmem:[%s3 + $0x7c] sm:$0xf]
      %v1442 = vld [vmem:[%s3 + $0x80] sm:$0xf]
      %v1443 = vld [vmem:[%s3 + $0x84] sm:$0xf]
      %v1444 = vld [vmem:[%s3 + $0x88] sm:$0xf]
      %v1445 = vld [vmem:[%s3 + $0x8c] sm:$0xf]
      %v1446 = vld [vmem:[%s4] sm:$0x1]
      %v1448 = vlaneseq
      %v1449 = vshrl.u32 %v1448, 7
      %v1450 = vsub.s32 0, %v1449
      %v1451 = vrot.slane %v1446, %v1450
      %v1453 = vcombine.low %v1361, %v1377
      %v1454 = vcombine.high %v1361, %v1377
      %v1455 = vcombine.low %v1393, %v1409
      %v1456 = vcombine.high %v1393, %v1409
      %v1458 = vunpack.c.l.s4 1983009808
      %v1459 = vunpack.c.0.s8 %v1458
      %v1460 = vlaneseq
      %v1461 = vshrl.u32 %v1460, 7
      %v1462 = vsub.s32 %v1459, %v1461
      %v1463 = vrot.slane %v1453, %v1462
      %v1465 = vunpack.c.l.s4 1983009808
      %v1466 = vunpack.c.0.s8 %v1465
      %v1467 = vlaneseq
      %v1468 = vshrl.u32 %v1467, 7
      %v1469 = vsub.s32 %v1466, %v1468
      %v1470 = vrot.slane %v1454, %v1469
      %v1472 = vunpack.c.l.s4 1983009808
      %v1473 = vunpack.c.0.s8 %v1472
      %v1474 = vlaneseq
      %v1475 = vshrl.u32 %v1474, 7
      %v1476 = vsub.s32 %v1473, %v1475
      %v1477 = vrot.slane %v1455, %v1476
      %v1479 = vunpack.c.l.s4 1983009808
      %v1480 = vunpack.c.0.s8 %v1479
      %v1481 = vlaneseq
      %v1482 = vshrl.u32 %v1481, 7
      %v1483 = vsub.s32 %v1480, %v1482
      %v1484 = vrot.slane %v1456, %v1483
      %v1485 = vcombine.low %v1463, %v1477
      %v1486 = vcombine.high %v1463, %v1477
      %v1487 = vcombine.low %v1470, %v1484
      %v1526 = vunpack.c.l.b16 %v1410
      %v1527 = vunpack.c.l.b16 %v1411
      %v1528 = vunpack.c.l.b16 %v1412
      %v1529 = vunpack.c.l.b16 %v1413
      %v1530 = vunpack.c.l.b16 %v1414
      %v1531 = vunpack.c.l.b16 %v1415
      %v1532 = vunpack.c.l.b16 %v1416
      %v1533 = vunpack.c.l.b16 %v1417
      %v1534 = vunpack.c.l.b16 %v1418
      %v1535 = vunpack.c.l.b16 %v1419
      %v1536 = vunpack.c.l.b16 %v1420
      %v1537 = vunpack.c.l.b16 %v1421
      %v1538 = vunpack.c.l.b16 %v1422
      %v1539 = vunpack.c.l.b16 %v1423
      %v1540 = vunpack.c.l.b16 %v1424
      %v1541 = vunpack.c.l.b16 %v1425
      %v1542 = vunpack.c.l.b16 %v1426
      %v1543 = vunpack.c.l.b16 %v1427
      %v1544 = vunpack.c.l.b16 %v1428
      %v1545 = vunpack.c.l.b16 %v1429
      %v1546 = vunpack.c.l.b16 %v1430
      %v1547 = vunpack.c.l.b16 %v1431
      %v1548 = vunpack.c.l.b16 %v1432
      %v1549 = vunpack.c.l.b16 %v1433
      %v1550 = vunpack.c.l.b16 %v1434
      %v1551 = vunpack.c.l.b16 %v1435
      %v1552 = vunpack.c.l.b16 %v1436
      %v1553 = vunpack.c.l.b16 %v1437
      %v1554 = vunpack.c.l.b16 %v1438
      %v1555 = vunpack.c.l.b16 %v1439
      %v1556 = vunpack.c.l.b16 %v1440
      %v1557 = vunpack.c.l.b16 %v1441
      %v1558 = vunpack.c.l.b16 %v1442
      %v1559 = vunpack.c.l.b16 %v1443
      %v1560 = vunpack.c.l.b16 %v1444
      %v1561 = vunpack.c.l.b16 %v1445
      %v1562 = vpack.c.b16 %v1527, %v1526
      %v1563 = vpack.c.b16 %v1529, %v1528
      %v1564 = vpack.c.b16 %v1531, %v1530
      %v1565 = vpack.c.b16 %v1533, %v1532
      %v1566 = vpack.c.b16 %v1535, %v1534
      %v1567 = vpack.c.b16 %v1537, %v1536
      %v1568 = vpack.c.b16 %v1539, %v1538
      %v1569 = vpack.c.b16 %v1541, %v1540
      %v1570 = vpack.c.b16 %v1543, %v1542
      %v1571 = vpack.c.b16 %v1545, %v1544
      %v1572 = vpack.c.b16 %v1547, %v1546
      %v1573 = vpack.c.b16 %v1549, %v1548
      %v1574 = vpack.c.b16 %v1551, %v1550
      %v1575 = vpack.c.b16 %v1553, %v1552
      %v1576 = vpack.c.b16 %v1555, %v1554
      %v1577 = vpack.c.b16 %v1557, %v1556
      %v1578 = vpack.c.b16 %v1559, %v1558
      %v1579 = vpack.c.b16 %v1561, %v1560
      %v1599 = vsel %vm670, %v1487, 0
      %1601 = vmatprep.subr.bf16.mxu0 0
      %1602 = vmatpush1.bf16.msra.mxu0 %v1562
      %1603 = vmatprep.subr.bf16.mxu0 0
      %1604 = vmatpush1.bf16.msra.mxu0 %v1563
      %1605 = vmatprep.subr.bf16.mxu0 0
      %1606 = vmatpush1.bf16.msra.mxu0 %v1564
      %1607 = vmatprep.subr.bf16.mxu0 0
      %1608 = vmatpush1.bf16.msra.mxu0 %v1565
      %1609 = vmatprep.subr.bf16.mxu0 0
      %1610 = vmatpush1.bf16.msra.mxu0 %v1566
      %1611 = vmatprep.subr.bf16.mxu0 0
      %1612 = vmatpush1.bf16.msra.mxu0 %v1567
      %1613 = vmatprep.subr.bf16.mxu0 0
      %1614 = vmatpush1.bf16.msra.mxu0 %v1568
      %1615 = vmatprep.subr.bf16.mxu0 0
      %1616 = vmatpush1.bf16.msra.mxu0 %v1569
      %1617 = vmatprep.subr.bf16.mxu0 0
      %1618 = vmatpush1.bf16.msra.mxu0 %v1570
      %1619 = vmatprep.subr.bf16.mxu0 0
      %1620 = vmatpush1.bf16.msra.mxu0 %v1571
      %1621 = vmatprep.subr.bf16.mxu0 0
      %1622 = vmatpush1.bf16.msra.mxu0 %v1572
      %1623 = vmatprep.subr.bf16.mxu0 0
      %1624 = vmatpush1.bf16.msra.mxu0 %v1573
      %1625 = vmatprep.subr.bf16.mxu0 0
      %1626 = vmatpush1.bf16.msra.mxu0 %v1574
      %1627 = vmatprep.subr.bf16.mxu0 0
      %1628 = vmatpush1.bf16.msra.mxu0 %v1575
      %1629 = vmatprep.subr.bf16.mxu0 0
      %1630 = vmatpush1.bf16.msra.mxu0 %v1576
      %1631 = vmatprep.subr.bf16.mxu0 0
      %1632 = vmatpush1.bf16.msra.mxu0 %v1577
      %1633 = vmatprep.mubr.bf16.mxu0 %v1486
      %1634 = vmatmul.mubr.bf16.gmra.mrb[0].mxu0 %v1485
      %v1635 = vpop.f32.mrb[0].mxu0
      %v1636 = vadd.f32 %v1451, %v1635
      %v1637 = vpop.f32.mrb[0].mxu0
      %v1638 = vpop.f32.mrb[0].mxu0
      %v1639 = vadd.f32 %v1451, %v1638
      %v1640 = vpop.f32.mrb[0].mxu0
      %1641 = vdwg.mxu0
      %1642 = vmatprep.subr.bf16.mxu0 0
      %1643 = vmatpush1.bf16.msra.mxu0 %v1578
      %1644 = vmatprep.subr.bf16.mxu0 0
      %1645 = vmatpush1.bf16.msra.mxu0 %v1579
      %1646 = vmatprep.subr.bf16.mxu0 0
      %1647 = vmatpush1.bf16.msra.mxu0 0
      %1648 = vmatprep.subr.bf16.mxu0 0
      %1649 = vmatpush1.bf16.msra.mxu0 0
      %1650 = vmatprep.subr.bf16.mxu0 0
      %1651 = vmatpush1.bf16.msra.mxu0 0
      %1652 = vmatprep.subr.bf16.mxu0 0
      %1653 = vmatpush1.bf16.msra.mxu0 0
      %1654 = vmatprep.subr.bf16.mxu0 0
      %1655 = vmatpush1.bf16.msra.mxu0 0
      %1656 = vmatprep.subr.bf16.mxu0 0
      %1657 = vmatpush1.bf16.msra.mxu0 0
      %1658 = vmatprep.subr.bf16.mxu0 0
      %1659 = vmatpush1.bf16.msra.mxu0 0
      %1660 = vmatprep.subr.bf16.mxu0 0
      %1661 = vmatpush1.bf16.msra.mxu0 0
      %1662 = vmatprep.subr.bf16.mxu0 0
      %1663 = vmatpush1.bf16.msra.mxu0 0
      %1664 = vmatprep.subr.bf16.mxu0 0
      %1665 = vmatpush1.bf16.msra.mxu0 0
      %1666 = vmatprep.subr.bf16.mxu0 0
      %1667 = vmatpush1.bf16.msra.mxu0 0
      %1668 = vmatprep.subr.bf16.mxu0 0
      %1669 = vmatpush1.bf16.msra.mxu0 0
      %1670 = vmatprep.subr.bf16.mxu0 0
      %1671 = vmatpush1.bf16.msra.mxu0 0
      %1672 = vmatprep.subr.bf16.mxu0 0
      %1673 = vmatpush1.bf16.msra.mxu0 0
      %1674 = vmatprep.mubr.bf16.mxu0 0
      %1675 = vmatmul.mubr.bf16.gmra.mrb[0].mxu0 %v1599
      %v1676 = vpop.f32.mrb[0].mxu0
      %v1677 = vadd.f32 %v1636, %v1676
      %v1678 = vpop.f32.mrb[0].mxu0
      %v1679 = vpop.f32.mrb[0].mxu0
      %v1680 = vadd.f32 %v1639, %v1679
      %v1681 = vpop.f32.mrb[0].mxu0
      %1682 = vdwg.mxu0
      %v1683 = vmax.f32 %v1677, 0.0
      %v1684 = vmax.f32 %v1680, 0.0
      %v1687 = vcombine.high %v1683, %v1683
      %v1688 = vcombine.high %v1684, %v1684
      %v1691 = vpack.c.bf16 %v1683, %v1683
      %v1692 = vpack.c.bf16 %v1687, %v1687
      %v1693 = vpack.c.bf16 %v1684, %v1684
      %v1694 = vpack.c.bf16 %v1688, %v1688
      %vm1695 = vcmask 254976
      %1696 = vst.msk [vmem:[%s224] sm:$0x3] %vm1695, %v1691
      %1697 = vst.msk [vmem:[%s224 + $0x2] sm:$0x3] %vm1695, %v1692
      %1698 = vst.msk [vmem:[%s224 + $0x4] sm:$0x3] %vm1695, %v1693
      %1699 = vst.msk [vmem:[%s224 + $0x6] sm:$0x3] %vm1695, %v1694
      %p1700 = scmp.lt.s32.totalorder %s16, 1
      %s1701 = scalar_select %p1700, %s16, 1
      %s1702 = smul.addr %s1701, 4
      %s1703 = smul.addr %s1702, 2
      %s1704 = scalar_lea.vmem %s5, %s1703
      // Predicated region
      $region41: #{encoder_forward.5} parent=39 // pred_check
        %p1705 = pneg %p144
      $region42: #{encoder_forward.5} parent=39 // pred_check_branch
        %1707 = sbr.rel (%p1705) target = $region44
      $region43: #{encoder_forward.5} parent=39 // pred_region
        _
      $region44: #{encoder_forward.5} parent=39 // pred_fallthru
        _
    $region40: #{encoder_forward.5} parent=5 // pred_fallthru
      _
    %p1708 = scmp.le.s32.totalorder 2, %s11
    // Predicated region
    $region45: #{encoder_forward.5} parent=5 // pred_check
      %p1709 = pneg %p1708
    $region46: #{encoder_forward.5} parent=5 // pred_check_branch
      %1711 = sbr.rel (%p1709) target = $region48
    $region47: #{encoder_forward.5} parent=5 // pred_region
      %s1712 = ssub.s32 %s11, 2
      // Predicated region
      $region49: #{encoder_forward.5} parent=47 // pred_check
        %p1713 = pneg %p150
      $region50: #{encoder_forward.5} parent=47 // pred_check_branch
        %1715 = sbr.rel (%p1713) target = $region52
      $region51: #{encoder_forward.5} parent=47 // pred_region
        %p1716 = scmp.lt.s32.totalorder %s17, 1
        %s1717 = scalar_select %p1716, %s17, 1
        %s1718 = smul.addr %s1717, 4
        %s1719 = smul.addr %s1718, 2
        %s1720 = scalar_lea.vmem %s5, %s1719
      $region52: #{encoder_forward.5} parent=47 // pred_fallthru
        _
    $region48: #{encoder_forward.5} parent=5 // pred_fallthru
      _
  $region6: #{encoder_forward.5} parent=0 // loop_footer
    %s15 = sadd.s32 1, %s11
  $region7: #{encoder_forward.5} parent=0 // loop_footer_branch
    %10 = sbr.rel target = $region3
  $region8: #{encoder_forward.5} parent=0 // loop_exit
    _

// kernel: encoder_forward.4
$region0: #{encoder_forward.4}
  #allocation0 [shape = 'u32[]', space=smem, size = 0x4, offset = 0x4, fixed_abs, tag = 'smem constant byte address 0x4 - core index']
  #allocation1 [shape = 'u32[144,128]{1,0:T(1,128)}', space=vmem, size = 0x12000, scoped, tag = 'internal scratch']
  #allocation2 [shape = 'bf16[10,10,8]{2,1,0:T(8,128)(2,1)}', space=vmem, size = 0xa000, scoped, tag = 'scratch operand']
  #allocation3 [shape = 'bf16[10,10,16]{2,1,0:T(8,128)(2,1)}', space=vmem, size = 0xa000, scoped, tag = 'scratch operand']
  %s0 = inlined_call_operand.vmem [shape: bf16[2,8,2,8,16], index: 0, kind: input, shape index: {}]
  %s1 = inlined_call_operand.vmem [shape: bf16[72,16], index: 1, kind: input, shape index: {}]
  %s2 = inlined_call_operand.vmem [shape: f32[1,16], index: 2, kind: input, shape index: {}]
  %s3 = inlined_call_operand.vmem [shape: bf16[144,16], index: 3, kind: input, shape index: {}]
  %s4 = inlined_call_operand.vmem [shape: f32[1,16], index: 4, kind: input, shape index: {}]
  %s5 = inlined_call_operand.vmem [shape: bf16[2,8,8,16], index: 5, kind: output, shape index: {}]
  %s6 = sld [smem:[#allocation0]]
  $region53: #{encoder_forward.4} parent=0
    _
  %s8 = ssub.s32 1, %s6
  %s9 = scalar_select 0, %s8, %s6
  loop: start=0, step=1, limit=4
  $region2: #{encoder_forward.4} parent=0 // loop_pre_header
    _
  $region3: #{encoder_forward.4} parent=0 // loop_header
    %s11 = sphi 0, %s15
    %p12 = scmp.ge.s32.totalorder %s11, 4
    %s21 = sphi 0, %s23
    %s24 = sphi 0, %s21
    %s25 = sphi 0, %s24
    %s41 = sphi 0, %s25
    %s45 = sphi 0, %s45
    %s47 = sphi 0, %s45
    %s48 = sphi 0, %s47
    %s62 = sphi 0, %s48
    %s66 = sphi 0, %s66
    %s68 = sphi 0, %s66
    %s69 = sphi 0, %s68
    %s83 = sphi 0, %s69
    %s87 = sphi 0, %s87
    %s89 = sphi 0, %s87
    %s90 = sphi 0, %s89
    %s104 = sphi 0, %s90
    %s108 = sphi 0, %s108
    %s110 = sphi 0, %s108
    %s111 = sphi 0, %s110
    %s125 = sphi 0, %s111
    %s131 = sphi 0, %s133
    %s134 = sphi 0, %s131
    %s135 = sphi 0, %s134
    %s151 = sphi 0, %s135
  $region4: #{encoder_forward.4} parent=0 // loop_header_branch
    %14 = sbr.rel (%p12) target = $region8
  $region5: #{encoder_forward.4} parent=0 // loop_body
    %s16 = ssub.s32 %s11, 1
    %s17 = ssub.s32 %s11, 2
    %s18 = sadd.s32 %s11, 1
    %s19 = ssub.s32 %s11, %s18
    %p20 = scmp.eq.s32.totalorder %s19, 0
    %s22 = sadd.s32 %s21, 1
    %s23 = scalar_select %p20, %s21, %s22
    %p26 = pneg %p20
    %p27 = scmp.eq.s32.totalorder %s11, 1
    %p28 = por %p26, %p27
    %p29 = scmp.ne.s32.totalorder %s21, %s24
    %p30 = scmp.eq.s32.totalorder %s11, 0
    %p31 = por %p29, %p30
    %p32 = scmp.ne.s32.totalorder %s21, %s24
    %p33 = scmp.eq.s32.totalorder %s16, 1
    %p34 = por %p32, %p33
    %p35 = scmp.ne.s32.totalorder %s24, %s25
    %p36 = scmp.eq.s32.totalorder %s16, 0
    %p37 = por %p35, %p36
    %p38 = scmp.ne.s32.totalorder %s24, %s25
    %p39 = scmp.eq.s32.totalorder %s17, 1
    %p40 = por %p38, %p39
    %p42 = scmp.ne.s32.totalorder %s25, %s41
    %p43 = scmp.eq.s32.totalorder %s17, 0
    %p44 = por %p42, %p43
    %s46 = sadd.s32 %s45, 1
    %p49 = scmp.eq.s32.totalorder %s11, 1
    %p50 = scmp.ne.s32.totalorder %s45, %s47
    %p51 = scmp.eq.s32.totalorder %s11, 0
    %p52 = por %p50, %p51
    %p53 = scmp.ne.s32.totalorder %s45, %s47
    %p54 = scmp.eq.s32.totalorder %s16, 1
    %p55 = por %p53, %p54
    %p56 = scmp.ne.s32.totalorder %s47, %s48
    %p57 = scmp.eq.s32.totalorder %s16, 0
    %p58 = por %p56, %p57
    %p59 = scmp.ne.s32.totalorder %s47, %s48
    %p60 = scmp.eq.s32.totalorder %s17, 1
    %p61 = por %p59, %p60
    %p63 = scmp.ne.s32.totalorder %s48, %s62
    %p64 = scmp.eq.s32.totalorder %s17, 0
    %p65 = por %p63, %p64
    %s67 = sadd.s32 %s66, 1
    %p70 = scmp.eq.s32.totalorder %s11, 1
    %p71 = scmp.ne.s32.totalorder %s66, %s68
    %p72 = scmp.eq.s32.totalorder %s11, 0
    %p73 = por %p71, %p72
    %p74 = scmp.ne.s32.totalorder %s66, %s68
    %p75 = scmp.eq.s32.totalorder %s16, 1
    %p76 = por %p74, %p75
    %p77 = scmp.ne.s32.totalorder %s68, %s69
    %p78 = scmp.eq.s32.totalorder %s16, 0
    %p79 = por %p77, %p78
    %p80 = scmp.ne.s32.totalorder %s68, %s69
    %p81 = scmp.eq.s32.totalorder %s17, 1
    %p82 = por %p80, %p81
    %p84 = scmp.ne.s32.totalorder %s69, %s83
    %p85 = scmp.eq.s32.totalorder %s17, 0
    %p86 = por %p84, %p85
    %s88 = sadd.s32 %s87, 1
    %p91 = scmp.eq.s32.totalorder %s11, 1
    %p92 = scmp.ne.s32.totalorder %s87, %s89
    %p93 = scmp.eq.s32.totalorder %s11, 0
    %p94 = por %p92, %p93
    %p95 = scmp.ne.s32.totalorder %s87, %s89
    %p96 = scmp.eq.s32.totalorder %s16, 1
    %p97 = por %p95, %p96
    %p98 = scmp.ne.s32.totalorder %s89, %s90
    %p99 = scmp.eq.s32.totalorder %s16, 0
    %p100 = por %p98, %p99
    %p101 = scmp.ne.s32.totalorder %s89, %s90
    %p102 = scmp.eq.s32.totalorder %s17, 1
    %p103 = por %p101, %p102
    %p105 = scmp.ne.s32.totalorder %s90, %s104
    %p106 = scmp.eq.s32.totalorder %s17, 0
    %p107 = por %p105, %p106
    %s109 = sadd.s32 %s108, 1
    %p112 = scmp.eq.s32.totalorder %s11, 1
    %p113 = scmp.ne.s32.totalorder %s108, %s110
    %p114 = scmp.eq.s32.totalorder %s11, 0
    %p115 = por %p113, %p114
    %p116 = scmp.ne.s32.totalorder %s108, %s110
    %p117 = scmp.eq.s32.totalorder %s16, 1
    %p118 = por %p116, %p117
    %p119 = scmp.ne.s32.totalorder %s110, %s111
    %p120 = scmp.eq.s32.totalorder %s16, 0
    %p121 = por %p119, %p120
    %p122 = scmp.ne.s32.totalorder %s110, %s111
    %p123 = scmp.eq.s32.totalorder %s17, 1
    %p124 = por %p122, %p123
    %p126 = scmp.ne.s32.totalorder %s111, %s125
    %p127 = scmp.eq.s32.totalorder %s17, 0
    %p128 = por %p126, %p127
    %s129 = ssub.s32 %s11, %s18
    %p130 = scmp.eq.s32.totalorder %s129, 0
    %s132 = sadd.s32 %s131, 1
    %s133 = scalar_select %p130, %s131, %s132
    %p136 = pneg %p130
    %p137 = scmp.eq.s32.totalorder %s11, 1
    %p138 = por %p136, %p137
    %p139 = scmp.ne.s32.totalorder %s131, %s134
    %p140 = scmp.eq.s32.totalorder %s11, 0
    %p141 = por %p139, %p140
    %p142 = scmp.ne.s32.totalorder %s131, %s134
    %p143 = scmp.eq.s32.totalorder %s16, 1
    %p144 = por %p142, %p143
    %p145 = scmp.ne.s32.totalorder %s134, %s135
    %p146 = scmp.eq.s32.totalorder %s16, 0
    %p147 = por %p145, %p146
    %p148 = scmp.ne.s32.totalorder %s134, %s135
    %p149 = scmp.eq.s32.totalorder %s17, 1
    %p150 = por %p148, %p149
    %p152 = scmp.ne.s32.totalorder %s135, %s151
    %p153 = scmp.eq.s32.totalorder %s17, 0
    %p154 = por %p152, %p153
    %p155 = scmp.le.s32.totalorder 1, %s11
    %p156 = scmp.lt.s32.totalorder %s11, 3
    %p157 = pnand %p155, %p156
    %p158 = pneg %p157
    // Predicated region
    $region9: #{encoder_forward.4} parent=5 // pred_check
      _
    $region10: #{encoder_forward.4} parent=5 // pred_check_branch
      %160 = sbr.rel (%p157) target = $region12
    $region11: #{encoder_forward.4} parent=5 // pred_region
      %s161 = ssub.s32 %s11, 1
      // Predicated region
      $region13: #{encoder_forward.4} parent=11 // pred_check
        %p162 = pneg %p58
      $region14: #{encoder_forward.4} parent=11 // pred_check_branch
        %164 = sbr.rel (%p162) target = $region16
      $region15: #{encoder_forward.4} parent=11 // pred_region
        _
      $region16: #{encoder_forward.4} parent=11 // pred_fallthru
        _
      // Predicated region
      $region17: #{encoder_forward.4} parent=11 // pred_check
        %p165 = pneg %p79
      $region18: #{encoder_forward.4} parent=11 // pred_check_branch
        %167 = sbr.rel (%p165) target = $region20
      $region19: #{encoder_forward.4} parent=11 // pred_region
        _
      $region20: #{encoder_forward.4} parent=11 // pred_fallthru
        _
      // Predicated region
      $region21: #{encoder_forward.4} parent=11 // pred_check
        %p168 = pneg %p100
      $region22: #{encoder_forward.4} parent=11 // pred_check_branch
        %170 = sbr.rel (%p168) target = $region24
      $region23: #{encoder_forward.4} parent=11 // pred_region
        _
      $region24: #{encoder_forward.4} parent=11 // pred_fallthru
        _
      // Predicated region
      $region25: #{encoder_forward.4} parent=11 // pred_check
        %p171 = pneg %p121
      $region26: #{encoder_forward.4} parent=11 // pred_check_branch
        %173 = sbr.rel (%p171) target = $region28
      $region27: #{encoder_forward.4} parent=11 // pred_region
        _
      $region28: #{encoder_forward.4} parent=11 // pred_fallthru
        _
    $region12: #{encoder_forward.4} parent=5 // pred_fallthru
      _
    %p174 = scmp.lt.s32.totalorder %s11, 2
    // Predicated region
    $region29: #{encoder_forward.4} parent=5 // pred_check
      %p175 = pneg %p174
    $region30: #{encoder_forward.4} parent=5 // pred_check_branch
      %177 = sbr.rel (%p175) target = $region32
    $region31: #{encoder_forward.4} parent=5 // pred_region
      // Predicated region
      $region33: #{encoder_forward.4} parent=31 // pred_check
        %p178 = pneg %p31
      $region34: #{encoder_forward.4} parent=31 // pred_check_branch
        %180 = sbr.rel (%p178) target = $region36
      $region35: #{encoder_forward.4} parent=31 // pred_region
        %p181 = scmp.lt.s32.totalorder %s11, 1
        %s182 = scalar_select %p181, %s11, 1
        %s183 = smul.addr %s182, 16
        %s184 = smul.addr %s183, 4
        %s185 = scalar_lea.vmem %s0, %s184
      $region36: #{encoder_forward.4} parent=31 // pred_fallthru
        _
    $region32: #{encoder_forward.4} parent=5 // pred_fallthru
      _
    %p186 = scmp.le.s32.totalorder 1, %s11
    %p187 = scmp.lt.s32.totalorder %s11, 3
    %p188 = pnand %p186, %p187
    %p189 = pneg %p188
    // Predicated region
    $region37: #{encoder_forward.4} parent=5 // pred_check
      _
    $region38: #{encoder_forward.4} parent=5 // pred_check_branch
      %191 = sbr.rel (%p188) target = $region40
    $region39: #{encoder_forward.4} parent=5 // pred_region
      %s192 = ssub.s32 %s11, 1
      %p193 = scmp.lt.s32.totalorder %s16, 1
      %s194 = scalar_select %p193, %s16, 1
      %s195 = smul.addr %s194, 16
      %s196 = smul.addr %s195, 4
      %s197 = scalar_lea.vmem %s0, %s196
      %p198 = pneg %p37
      %p199 = pneg %p34
      %p200 = pneg %p58
      %p201 = pneg %p55
      %p202 = pneg %p79
      %p203 = pneg %p76
      %p204 = pneg %p100
      %p205 = pneg %p97
      %p206 = pneg %p121
      %p207 = pneg %p118
      %p208 = pneg %p147
      %p209 = pneg %p144
      %p210 = scmp.lt.s32.totalorder %s16, 1
      %s211 = scalar_select %p210, %s16, 1
      %s212 = smul.addr %s211, 8
      %s213 = smul.addr %s212, 4
      %s214 = scalar_lea.vmem %s5, %s213
      %p215 = scmp.lt.s32.totalorder %s16, 1
      %s216 = scalar_select %p215, %s16, 1
      %s217 = smul.addr %s216, 16
      %s218 = smul.addr %s217, 4
      %s219 = scalar_lea.vmem %s0, %s218
      %p220 = scmp.lt.s32.totalorder %s16, 1
      %s221 = scalar_select %p220, %s16, 1
      %s222 = smul.addr %s221, 8
      %s223 = smul.addr %s222, 4
      %s224 = scalar_lea.vmem %s5, %s223
      %v226 = vld [vmem:[%s219] sm:$0xf]
      %v227 = vld [vmem:[%s219 + $0x4] sm:$0xf]
      %v228 = vld [vmem:[%s219 + $0x8] sm:$0xf]
      %v229 = vld [vmem:[%s219 + $0xc] sm:$0xf]
      %v230 = vld [vmem:[%s219 + $0x10] sm:$0xf]
      %v231 = vld [vmem:[%s219 + $0x14] sm:$0xf]
      %v232 = vld [vmem:[%s219 + $0x18] sm:$0xf]
      %v233 = vld [vmem:[%s219 + $0x1c] sm:$0xf]
      %v234 = vld [vmem:[%s219 + $0x20] sm:$0xf]
      %v235 = vld [vmem:[%s219 + $0x24] sm:$0xf]
      %v236 = vld [vmem:[%s219 + $0x28] sm:$0xf]
      %v237 = vld [vmem:[%s219 + $0x2c] sm:$0xf]
      %v238 = vld [vmem:[%s219 + $0x30] sm:$0xf]
      %v239 = vld [vmem:[%s219 + $0x34] sm:$0xf]
      %v240 = vld [vmem:[%s219 + $0x38] sm:$0xf]
      %v241 = vld [vmem:[%s219 + $0x3c] sm:$0xf]
      %v242 = vmax.bf16 %v226, %v227
      %v243 = vmax.bf16 %v228, %v229
      %v244 = vmax.bf16 %v230, %v231
      %v245 = vmax.bf16 %v232, %v233
      %v246 = vmax.bf16 %v234, %v235
      %v247 = vmax.bf16 %v236, %v237
      %v248 = vmax.bf16 %v238, %v239
      %v249 = vmax.bf16 %v240, %v241
      %258 = vrot.lane.b32.xlu0 %v242, 120
      %v259 = vpop.permute.xlu0 %258
      %260 = vrot.lane.b32.xlu0 %v243, 120
      %v261 = vpop.permute.xlu0 %260
      %262 = vrot.lane.b32.xlu0 %v244, 120
      %v263 = vpop.permute.xlu0 %262
      %264 = vrot.lane.b32.xlu0 %v245, 120
      %v265 = vpop.permute.xlu0 %264
      %266 = vrot.lane.b32.xlu0 %v246, 120
      %v267 = vpop.permute.xlu0 %266
      %268 = vrot.lane.b32.xlu0 %v247, 120
      %v269 = vpop.permute.xlu0 %268
      %270 = vrot.lane.b32.xlu0 %v248, 120
      %v271 = vpop.permute.xlu0 %270
      %272 = vrot.lane.b32.xlu0 %v249, 120
      %v273 = vpop.permute.xlu0 %272
      %v282 = vmax.bf16 %v242, %v259
      %v283 = vmax.bf16 %v243, %v261
      %v284 = vmax.bf16 %v244, %v263
      %v285 = vmax.bf16 %v245, %v265
      %v286 = vmax.bf16 %v246, %v267
      %v287 = vmax.bf16 %v247, %v269
      %v288 = vmax.bf16 %v248, %v271
      %v289 = vmax.bf16 %v249, %v273
      %vm290 = vcmask 60416
      %291 = vst.msk [vmem:[#allocation2] sm:$0xf] %vm290, 0
      %vm292 = vcmask 57344
      %293 = vst.msk [vmem:[#allocation2 + $0x4] sm:$0x1] %vm292, 0
      %s294 = scalar_lea.vmem [#allocation2], 72
      %295 = vst.msk [vmem:[%s294] sm:$0xf] %vm290, 0
      %296 = vst.msk [vmem:[%s294 + $0x4] sm:$0x1] %vm292, 0
      %s297 = scalar_lea.vmem [#allocation2], 8
      %vm298 = vcmask 57344
      %vm299 = vsmask.f32 256
      %vm300 = vmand %vm298, %vm299
      %v301 = vld [vmem:[%s297] sm:$0x1]
      %v302 = vsel %vm300, 0, %v301
      %303 = vst [vmem:[%s297] sm:$0x1] %v302
      %v304 = vld [vmem:[%s297 + $0x8] sm:$0x1]
      %v305 = vsel %vm300, 0, %v304
      %306 = vst [vmem:[%s297 + $0x8] sm:$0x1] %v305
      %v307 = vld [vmem:[%s297 + $0x10] sm:$0x1]
      %v308 = vsel %vm300, 0, %v307
      %309 = vst [vmem:[%s297 + $0x10] sm:$0x1] %v308
      %v310 = vld [vmem:[%s297 + $0x18] sm:$0x1]
      %v311 = vsel %vm300, 0, %v310
      %312 = vst [vmem:[%s297 + $0x18] sm:$0x1] %v311
      %v313 = vld [vmem:[%s297 + $0x20] sm:$0x1]
      %v314 = vsel %vm300, 0, %v313
      %315 = vst [vmem:[%s297 + $0x20] sm:$0x1] %v314
      %v316 = vld [vmem:[%s297 + $0x28] sm:$0x1]
      %v317 = vsel %vm300, 0, %v316
      %318 = vst [vmem:[%s297 + $0x28] sm:$0x1] %v317
      %v319 = vld [vmem:[%s297 + $0x30] sm:$0x1]
      %v320 = vsel %vm300, 0, %v319
      %321 = vst [vmem:[%s297 + $0x30] sm:$0x1] %v320
      %v322 = vld [vmem:[%s297 + $0x38] sm:$0x1]
      %v323 = vsel %vm300, 0, %v322
      %324 = vst [vmem:[%s297 + $0x38] sm:$0x1] %v323
      %vm325 = vsmask.f32 7938
      %vm326 = vmand %vm298, %vm325
      %v327 = vld [vmem:[%s297 + $0x4] sm:$0x1]
      %v328 = vsel %vm326, 0, %v327
      %329 = vst [vmem:[%s297 + $0x4] sm:$0x1] %v328
      %v330 = vld [vmem:[%s297 + $0xc] sm:$0x1]
      %v331 = vsel %vm326, 0, %v330
      %332 = vst [vmem:[%s297 + $0xc] sm:$0x1] %v331
      %v333 = vld [vmem:[%s297 + $0x14] sm:$0x1]
      %v334 = vsel %vm326, 0, %v333
      %335 = vst [vmem:[%s297 + $0x14] sm:$0x1] %v334
      %v336 = vld [vmem:[%s297 + $0x1c] sm:$0x1]
      %v337 = vsel %vm326, 0, %v336
      %338 = vst [vmem:[%s297 + $0x1c] sm:$0x1] %v337
      %v339 = vld [vmem:[%s297 + $0x24] sm:$0x1]
      %v340 = vsel %vm326, 0, %v339
      %341 = vst [vmem:[%s297 + $0x24] sm:$0x1] %v340
      %v342 = vld [vmem:[%s297 + $0x2c] sm:$0x1]
      %v343 = vsel %vm326, 0, %v342
      %344 = vst [vmem:[%s297 + $0x2c] sm:$0x1] %v343
      %v345 = vld [vmem:[%s297 + $0x34] sm:$0x1]
      %v346 = vsel %vm326, 0, %v345
      %347 = vst [vmem:[%s297 + $0x34] sm:$0x1] %v346
      %v348 = vld [vmem:[%s297 + $0x3c] sm:$0x1]
      %v349 = vsel %vm326, 0, %v348
      %350 = vst [vmem:[%s297 + $0x3c] sm:$0x1] %v349
      %v352 = vshrl.u32 %v282, 16
      %v354 = vrot.slane %v352, 7
      %v355 = vshll.u32 %v282, 16
      %v357 = vor.u32 %v354, %v355
      %v358 = vrot.slane %v354, 4
      %v360 = vshrl.u32 %v283, 16
      %v362 = vrot.slane %v360, 7
      %v363 = vshll.u32 %v283, 16
      %v365 = vor.u32 %v362, %v363
      %v366 = vrot.slane %v362, 4
      %v368 = vshrl.u32 %v284, 16
      %v370 = vrot.slane %v368, 7
      %v371 = vshll.u32 %v284, 16
      %v373 = vor.u32 %v370, %v371
      %v374 = vrot.slane %v370, 4
      %v376 = vshrl.u32 %v285, 16
      %v378 = vrot.slane %v376, 7
      %v379 = vshll.u32 %v285, 16
      %v381 = vor.u32 %v378, %v379
      %v382 = vrot.slane %v378, 4
      %v384 = vshrl.u32 %v286, 16
      %v386 = vrot.slane %v384, 7
      %v387 = vshll.u32 %v286, 16
      %v389 = vor.u32 %v386, %v387
      %v390 = vrot.slane %v386, 4
      %v392 = vshrl.u32 %v287, 16
      %v394 = vrot.slane %v392, 7
      %v395 = vshll.u32 %v287, 16
      %v397 = vor.u32 %v394, %v395
      %v398 = vrot.slane %v394, 4
      %v400 = vshrl.u32 %v288, 16
      %v402 = vrot.slane %v400, 7
      %v403 = vshll.u32 %v288, 16
      %v405 = vor.u32 %v402, %v403
      %v406 = vrot.slane %v402, 4
      %v408 = vshrl.u32 %v289, 16
      %v410 = vrot.slane %v408, 7
      %v411 = vshll.u32 %v289, 16
      %v413 = vor.u32 %v410, %v411
      %v414 = vrot.slane %v410, 4
      %vm431 = vcmask 60416
      %vm432 = vmand %vm431, %vm325
      %v433 = vld [vmem:[%s297] sm:$0xf]
      %v434 = vsel %vm432, %v357, %v433
      %435 = vst [vmem:[%s297] sm:$0xf] %v434
      %v436 = vld [vmem:[%s297 + $0x4] sm:$0x1]
      %v437 = vsel %vm300, %v358, %v436
      %438 = vst [vmem:[%s297 + $0x4] sm:$0x1] %v437
      %v439 = vld [vmem:[%s297 + $0x8] sm:$0xf]
      %v440 = vsel %vm432, %v365, %v439
      %441 = vst [vmem:[%s297 + $0x8] sm:$0xf] %v440
      %v442 = vld [vmem:[%s297 + $0xc] sm:$0x1]
      %v443 = vsel %vm300, %v366, %v442
      %444 = vst [vmem:[%s297 + $0xc] sm:$0x1] %v443
      %v445 = vld [vmem:[%s297 + $0x10] sm:$0xf]
      %v446 = vsel %vm432, %v373, %v445
      %447 = vst [vmem:[%s297 + $0x10] sm:$0xf] %v446
      %v448 = vld [vmem:[%s297 + $0x14] sm:$0x1]
      %v449 = vsel %vm300, %v374, %v448
      %450 = vst [vmem:[%s297 + $0x14] sm:$0x1] %v449
      %v451 = vld [vmem:[%s297 + $0x18] sm:$0xf]
      %v452 = vsel %vm432, %v381, %v451
      %453 = vst [vmem:[%s297 + $0x18] sm:$0xf] %v452
      %v454 = vld [vmem:[%s297 + $0x1c] sm:$0x1]
      %v455 = vsel %vm300, %v382, %v454
      %456 = vst [vmem:[%s297 + $0x1c] sm:$0x1] %v455
      %v457 = vld [vmem:[%s297 + $0x20] sm:$0xf]
      %v458 = vsel %vm432, %v389, %v457
      %459 = vst [vmem:[%s297 + $0x20] sm:$0xf] %v458
      %v460 = vld [vmem:[%s297 + $0x24] sm:$0x1]
      %v461 = vsel %vm300, %v390, %v460
      %462 = vst [vmem:[%s297 + $0x24] sm:$0x1] %v461
      %v463 = vld [vmem:[%s297 + $0x28] sm:$0xf]
      %v464 = vsel %vm432, %v397, %v463
      %465 = vst [vmem:[%s297 + $0x28] sm:$0xf] %v464
      %v466 = vld [vmem:[%s297 + $0x2c] sm:$0x1]
      %v467 = vsel %vm300, %v398, %v466
      %468 = vst [vmem:[%s297 + $0x2c] sm:$0x1] %v467
      %v469 = vld [vmem:[%s297 + $0x30] sm:$0xf]
      %v470 = vsel %vm432, %v405, %v469
      %471 = vst [vmem:[%s297 + $0x30] sm:$0xf] %v470
      %v472 = vld [vmem:[%s297 + $0x34] sm:$0x1]
      %v473 = vsel %vm300, %v406, %v472
      %474 = vst [vmem:[%s297 + $0x34] sm:$0x1] %v473
      %v475 = vld [vmem:[%s297 + $0x38] sm:$0xf]
      %v476 = vsel %vm432, %v413, %v475
      %477 = vst [vmem:[%s297 + $0x38] sm:$0xf] %v476
      %v478 = vld [vmem:[%s297 + $0x3c] sm:$0x1]
      %v479 = vsel %vm300, %v414, %v478
      %480 = vst [vmem:[%s297 + $0x3c] sm:$0x1] %v479
      %v481 = vld [vmem:[#allocation2] sm:$0xf]
      %v482 = vld [vmem:[#allocation2 + $0x8] sm:$0xf]
      %v483 = vld [vmem:[#allocation2 + $0x10] sm:$0xf]
      %v484 = vld [vmem:[#allocation2 + $0x18] sm:$0xf]
      %v485 = vld [vmem:[#allocation2 + $0x20] sm:$0xf]
      %v486 = vld [vmem:[#allocation2 + $0x28] sm:$0xf]
      %v487 = vld [vmem:[#allocation2 + $0x30] sm:$0xf]
      %v488 = vld [vmem:[#allocation2 + $0x38] sm:$0xf]
      %v489 = vld [vmem:[#allocation2 + $0x4] sm:$0x1]
      %v490 = vld [vmem:[#allocation2 + $0xc] sm:$0x1]
      %v491 = vld [vmem:[#allocation2 + $0x14] sm:$0x1]
      %v492 = vld [vmem:[#allocation2 + $0x1c] sm:$0x1]
      %v493 = vld [vmem:[#allocation2 + $0x24] sm:$0x1]
      %v494 = vld [vmem:[#allocation2 + $0x2c] sm:$0x1]
      %v495 = vld [vmem:[#allocation2 + $0x34] sm:$0x1]
      %v496 = vld [vmem:[#allocation2 + $0x3c] sm:$0x1]
      %v497 = vld [vmem:[#allocation2] sm:$0xe]
      %v498 = vld [vmem:[#allocation2 + $0x8] sm:$0xe]
      %v499 = vld [vmem:[#allocation2 + $0x10] sm:$0xe]
      %v500 = vld [vmem:[#allocation2 + $0x18] sm:$0xe]
      %v501 = vld [vmem:[#allocation2 + $0x20] sm:$0xe]
      %v502 = vld [vmem:[#allocation2 + $0x28] sm:$0xe]
      %v503 = vld [vmem:[#allocation2 + $0x30] sm:$0xe]
      %v504 = vld [vmem:[#allocation2 + $0x38] sm:$0xe]
      %v505 = vld [vmem:[%s297] sm:$0xf]
      %v506 = vld [vmem:[%s297 + $0x8] sm:$0xf]
      %v507 = vld [vmem:[%s297 + $0x10] sm:$0xf]
      %v508 = vld [vmem:[%s297 + $0x18] sm:$0xf]
      %v509 = vld [vmem:[%s297 + $0x20] sm:$0xf]
      %v510 = vld [vmem:[%s297 + $0x28] sm:$0xf]
      %v511 = vld [vmem:[%s297 + $0x30] sm:$0xf]
      %v512 = vld [vmem:[%s297 + $0x38] sm:$0xf]
      %v513 = vld [vmem:[%s297 + $0x4] sm:$0x1]
      %v514 = vld [vmem:[%s297 + $0xc] sm:$0x1]
      %v515 = vld [vmem:[%s297 + $0x14] sm:$0x1]
      %v516 = vld [vmem:[%s297 + $0x1c] sm:$0x1]
      %v517 = vld [vmem:[%s297 + $0x24] sm:$0x1]
      %v518 = vld [vmem:[%s297 + $0x2c] sm:$0x1]
      %v519 = vld [vmem:[%s297 + $0x34] sm:$0x1]
      %v520 = vld [vmem:[%s297 + $0x3c] sm:$0x1]
      %v521 = vld [vmem:[%s297] sm:$0xe]
      %v522 = vld [vmem:[%s297 + $0x8] sm:$0xe]
      %v523 = vld [vmem:[%s297 + $0x10] sm:$0xe]
      %v524 = vld [vmem:[%s297 + $0x18] sm:$0xe]
      %v525 = vld [vmem:[%s297 + $0x20] sm:$0xe]
      %v526 = vld [vmem:[%s297 + $0x28] sm:$0xe]
      %v527 = vld [vmem:[%s297 + $0x30] sm:$0xe]
      %v528 = vld [vmem:[%s297 + $0x38] sm:$0xe]
      %s529 = scalar_lea.vmem [#allocation2], 16
      %v530 = vld [vmem:[%s529] sm:$0xf]
      %v531 = vld [vmem:[%s529 + $0x8] sm:$0xf]
      %v532 = vld [vmem:[%s529 + $0x10] sm:$0xf]
      %v533 = vld [vmem:[%s529 + $0x18] sm:$0xf]
      %v534 = vld [vmem:[%s529 + $0x20] sm:$0xf]
      %v535 = vld [vmem:[%s529 + $0x28] sm:$0xf]
      %v536 = vld [vmem:[%s529 + $0x30] sm:$0xf]
      %v537 = vld [vmem:[%s529 + $0x38] sm:$0xf]
      %v538 = vld [vmem:[%s529 + $0x4] sm:$0x1]
      %v539 = vld [vmem:[%s529 + $0xc] sm:$0x1]
      %v540 = vld [vmem:[%s529 + $0x14] sm:$0x1]
      %v541 = vld [vmem:[%s529 + $0x1c] sm:$0x1]
      %v542 = vld [vmem:[%s529 + $0x24] sm:$0x1]
      %v543 = vld [vmem:[%s529 + $0x2c] sm:$0x1]
      %v544 = vld [vmem:[%s529 + $0x34] sm:$0x1]
      %v545 = vld [vmem:[%s529 + $0x3c] sm:$0x1]
      %v546 = vld [vmem:[%s529] sm:$0xe]
      %v547 = vld [vmem:[%s529 + $0x8] sm:$0xe]
      %v548 = vld [vmem:[%s529 + $0x10] sm:$0xe]
      %v549 = vld [vmem:[%s529 + $0x18] sm:$0xe]
      %v550 = vld [vmem:[%s529 + $0x20] sm:$0xe]
      %v551 = vld [vmem:[%s529 + $0x28] sm:$0xe]
      %v552 = vld [vmem:[%s529 + $0x30] sm:$0xe]
      %v553 = vld [vmem:[%s529 + $0x38] sm:$0xe]
      %v570 = vunpack.c.l.b16 %v481
      %v571 = vunpack.c.l.b16 %v489
      %v572 = vunpack.c.l.b16 %v482
      %v573 = vunpack.c.l.b16 %v490
      %v574 = vunpack.c.l.b16 %v483
      %v575 = vunpack.c.l.b16 %v491
      %v576 = vunpack.c.l.b16 %v484
      %v577 = vunpack.c.l.b16 %v492
      %v578 = vunpack.c.l.b16 %v485
      %v579 = vunpack.c.l.b16 %v493
      %v580 = vunpack.c.l.b16 %v486
      %v581 = vunpack.c.l.b16 %v494
      %v582 = vunpack.c.l.b16 %v487
      %v583 = vunpack.c.l.b16 %v495
      %v584 = vunpack.c.l.b16 %v488
      %v585 = vunpack.c.l.b16 %v496
      %v586 = vpack.c.b16 %v571, %v570
      %v587 = vpack.c.b16 %v573, %v572
      %v588 = vpack.c.b16 %v575, %v574
      %v589 = vpack.c.b16 %v577, %v576
      %v590 = vpack.c.b16 %v579, %v578
      %v591 = vpack.c.b16 %v581, %v580
      %v592 = vpack.c.b16 %v583, %v582
      %v593 = vpack.c.b16 %v585, %v584
      %v595 = vshrl.u32 %v586, 16
      %v597 = vshll.u32 %v586, 16
      %v599 = vrot.slane %v597, 1
      %v600 = vor.u32 %v595, %v599
      %v602 = vshrl.u32 %v587, 16
      %v604 = vshll.u32 %v587, 16
      %v606 = vrot.slane %v604, 1
      %v607 = vor.u32 %v602, %v606
      %v609 = vshrl.u32 %v588, 16
      %v611 = vshll.u32 %v588, 16
      %v613 = vrot.slane %v611, 1
      %v614 = vor.u32 %v609, %v613
      %v616 = vshrl.u32 %v589, 16
      %v618 = vshll.u32 %v589, 16
      %v620 = vrot.slane %v618, 1
      %v621 = vor.u32 %v616, %v620
      %v623 = vshrl.u32 %v590, 16
      %v625 = vshll.u32 %v590, 16
      %v627 = vrot.slane %v625, 1
      %v628 = vor.u32 %v623, %v627
      %v630 = vshrl.u32 %v591, 16
      %v632 = vshll.u32 %v591, 16
      %v634 = vrot.slane %v632, 1
      %v635 = vor.u32 %v630, %v634
      %v637 = vshrl.u32 %v592, 16
      %v639 = vshll.u32 %v592, 16
      %v641 = vrot.slane %v639, 1
      %v642 = vor.u32 %v637, %v641
      %v644 = vshrl.u32 %v593, 16
      %v646 = vshll.u32 %v593, 16
      %v648 = vrot.slane %v646, 1
      %v649 = vor.u32 %v644, %v648
      %650 = vrot.lane.b32.xlu0 %v600, 8
      %v651 = vpop.permute.xlu0 %650
      %652 = vrot.lane.b32.xlu0 %v607, 8
      %v653 = vpop.permute.xlu0 %652
      %654 = vrot.lane.b32.xlu0 %v614, 8
      %v655 = vpop.permute.xlu0 %654
      %656 = vrot.lane.b32.xlu0 %v621, 8
      %v657 = vpop.permute.xlu0 %656
      %658 = vrot.lane.b32.xlu0 %v628, 8
      %v659 = vpop.permute.xlu0 %658
      %660 = vrot.lane.b32.xlu0 %v635, 8
      %v661 = vpop.permute.xlu0 %660
      %662 = vrot.lane.b32.xlu0 %v642, 8
      %v663 = vpop.permute.xlu0 %662
      %664 = vrot.lane.b32.xlu0 %v649, 8
      %v665 = vpop.permute.xlu0 %664
      %v674 = vunpack.c.l.b16 %v497
      %v675 = vunpack.c.l.b16 %v498
      %v676 = vunpack.c.l.b16 %v499
      %v677 = vunpack.c.l.b16 %v500
      %v678 = vunpack.c.l.b16 %v501
      %v679 = vunpack.c.l.b16 %v502
      %v680 = vunpack.c.l.b16 %v503
      %v681 = vunpack.c.l.b16 %v504
      %v682 = vpack.c.b16 %v571, %v674
      %v683 = vpack.c.b16 %v573, %v675
      %v684 = vpack.c.b16 %v575, %v676
      %v685 = vpack.c.b16 %v577, %v677
      %v686 = vpack.c.b16 %v579, %v678
      %v687 = vpack.c.b16 %v581, %v679
      %v688 = vpack.c.b16 %v583, %v680
      %v689 = vpack.c.b16 %v585, %v681
      %v690 = vrot.slane %v682, 1
      %v691 = vrot.slane %v683, 1
      %v692 = vrot.slane %v684, 1
      %v693 = vrot.slane %v685, 1
      %v694 = vrot.slane %v686, 1
      %v695 = vrot.slane %v687, 1
      %v696 = vrot.slane %v688, 1
      %v697 = vrot.slane %v689, 1
      %698 = vrot.lane.b32.xlu0 %v690, 16
      %v699 = vpop.permute.xlu0 %698
      %700 = vrot.lane.b32.xlu0 %v691, 16
      %v701 = vpop.permute.xlu0 %700
      %702 = vrot.lane.b32.xlu0 %v692, 16
      %v703 = vpop.permute.xlu0 %702
      %704 = vrot.lane.b32.xlu0 %v693, 16
      %v705 = vpop.permute.xlu0 %704
      %706 = vrot.lane.b32.xlu0 %v694, 16
      %v707 = vpop.permute.xlu0 %706
      %708 = vrot.lane.b32.xlu0 %v695, 16
      %v709 = vpop.permute.xlu0 %708
      %710 = vrot.lane.b32.xlu0 %v696, 16
      %v711 = vpop.permute.xlu0 %710
      %712 = vrot.lane.b32.xlu0 %v697, 16
      %v713 = vpop.permute.xlu0 %712
      %v722 = vunpack.c.l.b16 %v505
      %v723 = vunpack.c.l.b16 %v506
      %v724 = vunpack.c.l.b16 %v507
      %v725 = vunpack.c.l.b16 %v508
      %v726 = vunpack.c.l.b16 %v509
      %v727 = vunpack.c.l.b16 %v510
      %v728 = vunpack.c.l.b16 %v511
      %v729 = vunpack.c.l.b16 %v512
      %v730 = vpack.c.b16 %v722, %v722
      %v731 = vpack.c.b16 %v723, %v723
      %v732 = vpack.c.b16 %v724, %v724
      %v733 = vpack.c.b16 %v725, %v725
      %v734 = vpack.c.b16 %v726, %v726
      %v735 = vpack.c.b16 %v727, %v727
      %v736 = vpack.c.b16 %v728, %v728
      %v737 = vpack.c.b16 %v729, %v729
      %738 = vrot.lane.b32.xlu0 %v730, 24
      %v739 = vpop.permute.xlu0 %738
      %740 = vrot.lane.b32.xlu0 %v731, 24
      %v741 = vpop.permute.xlu0 %740
      %742 = vrot.lane.b32.xlu0 %v732, 24
      %v743 = vpop.permute.xlu0 %742
      %744 = vrot.lane.b32.xlu0 %v733, 24
      %v745 = vpop.permute.xlu0 %744
      %746 = vrot.lane.b32.xlu0 %v734, 24
      %v747 = vpop.permute.xlu0 %746
      %748 = vrot.lane.b32.xlu0 %v735, 24
      %v749 = vpop.permute.xlu0 %748
      %750 = vrot.lane.b32.xlu0 %v736, 24
      %v751 = vpop.permute.xlu0 %750
      %752 = vrot.lane.b32.xlu0 %v737, 24
      %v753 = vpop.permute.xlu0 %752
      %v762 = vunpack.c.l.b16 %v513
      %v763 = vunpack.c.l.b16 %v514
      %v764 = vunpack.c.l.b16 %v515
      %v765 = vunpack.c.l.b16 %v516
      %v766 = vunpack.c.l.b16 %v517
      %v767 = vunpack.c.l.b16 %v518
      %v768 = vunpack.c.l.b16 %v519
      %v769 = vunpack.c.l.b16 %v520
      %v770 = vpack.c.b16 %v762, %v722
      %v771 = vpack.c.b16 %v763, %v723
      %v772 = vpack.c.b16 %v764, %v724
      %v773 = vpack.c.b16 %v765, %v725
      %v774 = vpack.c.b16 %v766, %v726
      %v775 = vpack.c.b16 %v767, %v727
      %v776 = vpack.c.b16 %v768, %v728
      %v777 = vpack.c.b16 %v769, %v729
      %v779 = vshrl.u32 %v770, 16
      %v781 = vshll.u32 %v770, 16
      %v783 = vrot.slane %v781, 1
      %v784 = vor.u32 %v779, %v783
      %v786 = vshrl.u32 %v771, 16
      %v788 = vshll.u32 %v771, 16
      %v790 = vrot.slane %v788, 1
      %v791 = vor.u32 %v786, %v790
      %v793 = vshrl.u32 %v772, 16
      %v795 = vshll.u32 %v772, 16
      %v797 = vrot.slane %v795, 1
      %v798 = vor.u32 %v793, %v797
      %v800 = vshrl.u32 %v773, 16
      %v802 = vshll.u32 %v773, 16
      %v804 = vrot.slane %v802, 1
      %v805 = vor.u32 %v800, %v804
      %v807 = vshrl.u32 %v774, 16
      %v809 = vshll.u32 %v774, 16
      %v811 = vrot.slane %v809, 1
      %v812 = vor.u32 %v807, %v811
      %v814 = vshrl.u32 %v775, 16
      %v816 = vshll.u32 %v775, 16
      %v818 = vrot.slane %v816, 1
      %v819 = vor.u32 %v814, %v818
      %v821 = vshrl.u32 %v776, 16
      %v823 = vshll.u32 %v776, 16
      %v825 = vrot.slane %v823, 1
      %v826 = vor.u32 %v821, %v825
      %v828 = vshrl.u32 %v777, 16
      %v830 = vshll.u32 %v777, 16
      %v832 = vrot.slane %v830, 1
      %v833 = vor.u32 %v828, %v832
      %834 = vrot.lane.b32.xlu0 %v784, 32
      %v835 = vpop.permute.xlu0 %834
      %836 = vrot.lane.b32.xlu0 %v791, 32
      %v837 = vpop.permute.xlu0 %836
      %838 = vrot.lane.b32.xlu0 %v798, 32
      %v839 = vpop.permute.xlu0 %838
      %840 = vrot.lane.b32.xlu0 %v805, 32
      %v841 = vpop.permute.xlu0 %840
      %842 = vrot.lane.b32.xlu0 %v812, 32
      %v843 = vpop.permute.xlu0 %842
      %844 = vrot.lane.b32.xlu0 %v819, 32
      %v845 = vpop.permute.xlu0 %844
      %846 = vrot.lane.b32.xlu0 %v826, 32
      %v847 = vpop.permute.xlu0 %846
      %848 = vrot.lane.b32.xlu0 %v833, 32
      %v849 = vpop.permute.xlu0 %848
      %v858 = vunpack.c.l.b16 %v521
      %v859 = vunpack.c.l.b16 %v522
      %v860 = vunpack.c.l.b16 %v523
      %v861 = vunpack.c.l.b16 %v524
      %v862 = vunpack.c.l.b16 %v525
      %v863 = vunpack.c.l.b16 %v526
      %v864 = vunpack.c.l.b16 %v527
      %v865 = vunpack.c.l.b16 %v528
      %v866 = vpack.c.b16 %v762, %v858
      %v867 = vpack.c.b16 %v763, %v859
      %v868 = vpack.c.b16 %v764, %v860
      %v869 = vpack.c.b16 %v765, %v861
      %v870 = vpack.c.b16 %v766, %v862
      %v871 = vpack.c.b16 %v767, %v863
      %v872 = vpack.c.b16 %v768, %v864
      %v873 = vpack.c.b16 %v769, %v865
      %v874 = vrot.slane %v866, 1
      %v875 = vrot.slane %v867, 1
      %v876 = vrot.slane %v868, 1
      %v877 = vrot.slane %v869, 1
      %v878 = vrot.slane %v870, 1
      %v879 = vrot.slane %v871, 1
      %v880 = vrot.slane %v872, 1
      %v881 = vrot.slane %v873, 1
      %882 = vrot.lane.b32.xlu0 %v874, 40
      %v883 = vpop.permute.xlu0 %882
      %884 = vrot.lane.b32.xlu0 %v875, 40
      %v885 = vpop.permute.xlu0 %884
      %886 = vrot.lane.b32.xlu0 %v876, 40
      %v887 = vpop.permute.xlu0 %886
      %888 = vrot.lane.b32.xlu0 %v877, 40
      %v889 = vpop.permute.xlu0 %888
      %890 = vrot.lane.b32.xlu0 %v878, 40
      %v891 = vpop.permute.xlu0 %890
      %892 = vrot.lane.b32.xlu0 %v879, 40
      %v893 = vpop.permute.xlu0 %892
      %894 = vrot.lane.b32.xlu0 %v880, 40
      %v895 = vpop.permute.xlu0 %894
      %896 = vrot.lane.b32.xlu0 %v881, 40
      %v897 = vpop.permute.xlu0 %896
      %v906 = vunpack.c.l.b16 %v530
      %v907 = vunpack.c.l.b16 %v531
      %v908 = vunpack.c.l.b16 %v532
      %v909 = vunpack.c.l.b16 %v533
      %v910 = vunpack.c.l.b16 %v534
      %v911 = vunpack.c.l.b16 %v535
      %v912 = vunpack.c.l.b16 %v536
      %v913 = vunpack.c.l.b16 %v537
      %v914 = vpack.c.b16 %v906, %v906
      %v915 = vpack.c.b16 %v907, %v907
      %v916 = vpack.c.b16 %v908, %v908
      %v917 = vpack.c.b16 %v909, %v909
      %v918 = vpack.c.b16 %v910, %v910
      %v919 = vpack.c.b16 %v911, %v911
      %v920 = vpack.c.b16 %v912, %v912
      %v921 = vpack.c.b16 %v913, %v913
      %922 = vrot.lane.b32.xlu0 %v914, 48
      %v923 = vpop.permute.xlu0 %922
      %924 = vrot.lane.b32.xlu0 %v915, 48
      %v925 = vpop.permute.xlu0 %924
      %926 = vrot.lane.b32.xlu0 %v916, 48
      %v927 = vpop.permute.xlu0 %926
      %928 = vrot.lane.b32.xlu0 %v917, 48
      %v929 = vpop.permute.xlu0 %928
      %930 = vrot.lane.b32.xlu0 %v918, 48
      %v931 = vpop.permute.xlu0 %930
      %932 = vrot.lane.b32.xlu0 %v919, 48
      %v933 = vpop.permute.xlu0 %932
      %934 = vrot.lane.b32.xlu0 %v920, 48
      %v935 = vpop.permute.xlu0 %934
      %936 = vrot.lane.b32.xlu0 %v921, 48
      %v937 = vpop.permute.xlu0 %936
      %v946 = vunpack.c.l.b16 %v538
      %v947 = vunpack.c.l.b16 %v539
      %v948 = vunpack.c.l.b16 %v540
      %v949 = vunpack.c.l.b16 %v541
      %v950 = vunpack.c.l.b16 %v542
      %v951 = vunpack.c.l.b16 %v543
      %v952 = vunpack.c.l.b16 %v544
      %v953 = vunpack.c.l.b16 %v545
      %v954 = vpack.c.b16 %v946, %v906
      %v955 = vpack.c.b16 %v947, %v907
      %v956 = vpack.c.b16 %v948, %v908
      %v957 = vpack.c.b16 %v949, %v909
      %v958 = vpack.c.b16 %v950, %v910
      %v959 = vpack.c.b16 %v951, %v911
      %v960 = vpack.c.b16 %v952, %v912
      %v961 = vpack.c.b16 %v953, %v913
      %v963 = vshrl.u32 %v954, 16
      %v965 = vshll.u32 %v954, 16
      %v967 = vrot.slane %v965, 1
      %v968 = vor.u32 %v963, %v967
      %v970 = vshrl.u32 %v955, 16
      %v972 = vshll.u32 %v955, 16
      %v974 = vrot.slane %v972, 1
      %v975 = vor.u32 %v970, %v974
      %v977 = vshrl.u32 %v956, 16
      %v979 = vshll.u32 %v956, 16
      %v981 = vrot.slane %v979, 1
      %v982 = vor.u32 %v977, %v981
      %v984 = vshrl.u32 %v957, 16
      %v986 = vshll.u32 %v957, 16
      %v988 = vrot.slane %v986, 1
      %v989 = vor.u32 %v984, %v988
      %v991 = vshrl.u32 %v958, 16
      %v993 = vshll.u32 %v958, 16
      %v995 = vrot.slane %v993, 1
      %v996 = vor.u32 %v991, %v995
      %v998 = vshrl.u32 %v959, 16
      %v1000 = vshll.u32 %v959, 16
      %v1002 = vrot.slane %v1000, 1
      %v1003 = vor.u32 %v998, %v1002
      %v1005 = vshrl.u32 %v960, 16
      %v1007 = vshll.u32 %v960, 16
      %v1009 = vrot.slane %v1007, 1
      %v1010 = vor.u32 %v1005, %v1009
      %v1012 = vshrl.u32 %v961, 16
      %v1014 = vshll.u32 %v961, 16
      %v1016 = vrot.slane %v1014, 1
      %v1017 = vor.u32 %v1012, %v1016
      %1018 = vrot.lane.b32.xlu0 %v968, 56
      %v1019 = vpop.permute.xlu0 %1018
      %1020 = vrot.lane.b32.xlu0 %v975, 56
      %v1021 = vpop.permute.xlu0 %1020
      %1022 = vrot.lane.b32.xlu0 %v982, 56
      %v1023 = vpop.permute.xlu0 %1022
      %1024 = vrot.lane.b32.xlu0 %v989, 56
      %v1025 = vpop.permute.xlu0 %1024
      %1026 = vrot.lane.b32.xlu0 %v996, 56
      %v1027 = vpop.permute.xlu0 %1026
      %1028 = vrot.lane.b32.xlu0 %v1003, 56
      %v1029 = vpop.permute.xlu0 %1028
      %1030 = vrot.lane.b32.xlu0 %v1010, 56
      %v1031 = vpop.permute.xlu0 %1030
      %1032 = vrot.lane.b32.xlu0 %v1017, 56
      %v1033 = vpop.permute.xlu0 %1032
      %v1042 = vunpack.c.l.b16 %v546
      %v1043 = vunpack.c.l.b16 %v547
      %v1044 = vunpack.c.l.b16 %v548
      %v1045 = vunpack.c.l.b16 %v549
      %v1046 = vunpack.c.l.b16 %v550
      %v1047 = vunpack.c.l.b16 %v551
      %v1048 = vunpack.c.l.b16 %v552
      %v1049 = vunpack.c.l.b16 %v553
      %v1050 = vpack.c.b16 %v946, %v1042
      %v1051 = vpack.c.b16 %v947, %v1043
      %v1052 = vpack.c.b16 %v948, %v1044
      %v1053 = vpack.c.b16 %v949, %v1045
      %v1054 = vpack.c.b16 %v950, %v1046
      %v1055 = vpack.c.b16 %v951, %v1047
      %v1056 = vpack.c.b16 %v952, %v1048
      %v1057 = vpack.c.b16 %v953, %v1049
      %v1058 = vrot.slane %v1050, 1
      %v1059 = vrot.slane %v1051, 1
      %v1060 = vrot.slane %v1052, 1
      %v1061 = vrot.slane %v1053, 1
      %v1062 = vrot.slane %v1054, 1
      %v1063 = vrot.slane %v1055, 1
      %v1064 = vrot.slane %v1056, 1
      %v1065 = vrot.slane %v1057, 1
      %1066 = vrot.lane.b32.xlu0 %v1058, 64
      %v1067 = vpop.permute.xlu0 %1066
      %1068 = vrot.lane.b32.xlu0 %v1059, 64
      %v1069 = vpop.permute.xlu0 %1068
      %1070 = vrot.lane.b32.xlu0 %v1060, 64
      %v1071 = vpop.permute.xlu0 %1070
      %1072 = vrot.lane.b32.xlu0 %v1061, 64
      %v1073 = vpop.permute.xlu0 %1072
      %1074 = vrot.lane.b32.xlu0 %v1062, 64
      %v1075 = vpop.permute.xlu0 %1074
      %1076 = vrot.lane.b32.xlu0 %v1063, 64
      %v1077 = vpop.permute.xlu0 %1076
      %1078 = vrot.lane.b32.xlu0 %v1064, 64
      %v1079 = vpop.permute.xlu0 %1078
      %1080 = vrot.lane.b32.xlu0 %v1065, 64
      %v1081 = vpop.permute.xlu0 %1080
      %vm1082 = vcmask 64512
      %v1085 = vsel %vm1082, %v481, %v651
      %v1088 = vsel %vm1082, %v482, %v653
      %v1091 = vsel %vm1082, %v483, %v655
      %v1094 = vsel %vm1082, %v484, %v657
      %v1097 = vsel %vm1082, %v485, %v659
      %v1100 = vsel %vm1082, %v486, %v661
      %v1103 = vsel %vm1082, %v487, %v663
      %v1106 = vsel %vm1082, %v488, %v665
      %vm1107 = vcmask 130048
      %v1109 = vsel %vm1107, %v1085, %v699
      %v1111 = vsel %vm1107, %v1088, %v701
      %v1113 = vsel %vm1107, %v1091, %v703
      %v1115 = vsel %vm1107, %v1094, %v705
      %v1117 = vsel %vm1107, %v1097, %v707
      %v1119 = vsel %vm1107, %v1100, %v709
      %v1121 = vsel %vm1107, %v1103, %v711
      %v1123 = vsel %vm1107, %v1106, %v713
      %vm1124 = vcmask 195584
      %v1126 = vsel %vm1124, %v1109, %v739
      %v1128 = vsel %vm1124, %v1111, %v741
      %v1130 = vsel %vm1124, %v1113, %v743
      %v1132 = vsel %vm1124, %v1115, %v745
      %v1134 = vsel %vm1124, %v1117, %v747
      %v1136 = vsel %vm1124, %v1119, %v749
      %v1138 = vsel %vm1124, %v1121, %v751
      %v1140 = vsel %vm1124, %v1123, %v753
      %vm1141 = vcmask 261120
      %v1143 = vsel %vm1141, %v1126, %v835
      %v1145 = vsel %vm1141, %v1128, %v837
      %v1147 = vsel %vm1141, %v1130, %v839
      %v1149 = vsel %vm1141, %v1132, %v841
      %v1151 = vsel %vm1141, %v1134, %v843
      %v1153 = vsel %vm1141, %v1136, %v845
      %v1155 = vsel %vm1141, %v1138, %v847
      %v1157 = vsel %vm1141, %v1140, %v849
      %vm1158 = vcmask 326656
      %v1160 = vsel %vm1158, %v1143, %v883
      %v1162 = vsel %vm1158, %v1145, %v885
      %v1164 = vsel %vm1158, %v1147, %v887
      %v1166 = vsel %vm1158, %v1149, %v889
      %v1168 = vsel %vm1158, %v1151, %v891
      %v1170 = vsel %vm1158, %v1153, %v893
      %v1172 = vsel %vm1158, %v1155, %v895
      %v1174 = vsel %vm1158, %v1157, %v897
      %vm1175 = vcmask 392192
      %v1177 = vsel %vm1175, %v1160, %v923
      %v1179 = vsel %vm1175, %v1162, %v925
      %v1181 = vsel %vm1175, %v1164, %v927
      %v1183 = vsel %vm1175, %v1166, %v929
      %v1185 = vsel %vm1175, %v1168, %v931
      %v1187 = vsel %vm1175, %v1170, %v933
      %v1189 = vsel %vm1175, %v1172, %v935
      %v1191 = vsel %vm1175, %v1174, %v937
      %vm1192 = vcmask 457728
      %v1194 = vsel %vm1192, %v1177, %v1019
      %v1196 = vsel %vm1192, %v1179, %v1021
      %v1198 = vsel %vm1192, %v1181, %v1023
      %v1200 = vsel %vm1192, %v1183, %v1025
      %v1202 = vsel %vm1192, %v1185, %v1027
      %v1204 = vsel %vm1192, %v1187, %v1029
      %v1206 = vsel %vm1192, %v1189, %v1031
      %v1208 = vsel %vm1192, %v1191, %v1033
      %vm1209 = vcmask 523264
      %v1211 = vsel %vm1209, %v1194, %v1067
      %v1213 = vsel %vm1209, %v1196, %v1069
      %v1215 = vsel %vm1209, %v1198, %v1071
      %v1217 = vsel %vm1209, %v1200, %v1073
      %v1219 = vsel %vm1209, %v1202, %v1075
      %v1221 = vsel %vm1209, %v1204, %v1077
      %v1223 = vsel %vm1209, %v1206, %v1079
      %v1225 = vsel %vm1209, %v1208, %v1081
      %v1226 = vld [vmem:[%s1] sm:$0xf]
      %v1227 = vld [vmem:[%s1 + $0x4] sm:$0xf]
      %v1228 = vld [vmem:[%s1 + $0x8] sm:$0xf]
      %v1229 = vld [vmem:[%s1 + $0xc] sm:$0xf]
      %v1230 = vld [vmem:[%s1 + $0x10] sm:$0xf]
      %v1231 = vld [vmem:[%s1 + $0x14] sm:$0xf]
      %v1232 = vld [vmem:[%s1 + $0x18] sm:$0xf]
      %v1233 = vld [vmem:[%s1 + $0x1c] sm:$0xf]
      %v1234 = vld [vmem:[%s1 + $0x20] sm:$0xf]
      %v1235 = vld [vmem:[%s2] sm:$0x1]
      %v1237 = vlaneseq
      %v1238 = vshrl.u32 %v1237, 7
      %v1239 = vsub.s32 0, %v1238
      %v1240 = vrot.slane %v1235, %v1239
      %v1250 = vunpack.c.l.b16 %v1211
      %v1251 = vunpack.c.l.b16 %v1213
      %v1252 = vunpack.c.l.b16 %v1215
      %v1253 = vunpack.c.l.b16 %v1217
      %v1254 = vunpack.c.l.b16 %v1219
      %v1255 = vunpack.c.l.b16 %v1221
      %v1256 = vunpack.c.l.b16 %v1223
      %v1257 = vunpack.c.l.b16 %v1225
      %v1258 = vpack.c.b16 %v1251, %v1250
      %v1259 = vpack.c.b16 %v1253, %v1252
      %v1260 = vpack.c.b16 %v1255, %v1254
      %v1261 = vpack.c.b16 %v1257, %v1256
      %v1271 = vunpack.c.l.b16 %v1226
      %v1272 = vunpack.c.l.b16 %v1227
      %v1273 = vunpack.c.l.b16 %v1228
      %v1274 = vunpack.c.l.b16 %v1229
      %v1275 = vunpack.c.l.b16 %v1230
      %v1276 = vunpack.c.l.b16 %v1231
      %v1277 = vunpack.c.l.b16 %v1232
      %v1278 = vunpack.c.l.b16 %v1233
      %v1279 = vunpack.c.l.b16 %v1234
      %v1280 = vpack.c.b16 %v1272, %v1271
      %v1281 = vpack.c.b16 %v1274, %v1273
      %v1282 = vpack.c.b16 %v1276, %v1275
      %v1283 = vpack.c.b16 %v1278, %v1277
      %v1284 = vpack.c.b16 %v1279, %v1279
      %vm1289 = vcmask 588800
      %v1291 = vsel %vm1289, %v1258, 0
      %v1294 = vsel %vm1289, %v1259, 0
      %v1297 = vsel %vm1289, %v1260, 0
      %v1300 = vsel %vm1289, %v1261, 0
      %vm1302 = vcmask 1043456
      %v1304 = vsel %vm1302, %v1284, 0
      %1306 = vmatprep.subr.bf16.mxu0 0
      %1307 = vmatpush1.bf16.msra.mxu0 %v1280
      %1308 = vmatprep.subr.bf16.mxu0 0
      %1309 = vmatpush1.bf16.msra.mxu0 %v1281
      %1310 = vmatprep.subr.bf16.mxu0 0
      %1311 = vmatpush1.bf16.msra.mxu0 %v1282
      %1312 = vmatprep.subr.bf16.mxu0 0
      %1313 = vmatpush1.bf16.msra.mxu0 %v1283
      %1314 = vmatprep.subr.bf16.mxu0 0
      %1315 = vmatpush1.bf16.msra.mxu0 %v1304
      %1316 = vmatprep.subr.bf16.mxu0 0
      %1317 = vmatpush1.bf16.msra.mxu0 0
      %1318 = vmatprep.subr.bf16.mxu0 0
      %1319 = vmatpush1.bf16.msra.mxu0 0
      %1320 = vmatprep.subr.bf16.mxu0 0
      %1321 = vmatpush1.bf16.msra.mxu0 0
      %1322 = vmatprep.subr.bf16.mxu0 0
      %1323 = vmatpush1.bf16.msra.mxu0 0
      %1324 = vmatprep.subr.bf16.mxu0 0
      %1325 = vmatpush1.bf16.msra.mxu0 0
      %1326 = vmatprep.subr.bf16.mxu0 0
      %1327 = vmatpush1.bf16.msra.mxu0 0
      %1328 = vmatprep.subr.bf16.mxu0 0
      %1329 = vmatpush1.bf16.msra.mxu0 0
      %1330 = vmatprep.subr.bf16.mxu0 0
      %1331 = vmatpush1.bf16.msra.mxu0 0
      %1332 = vmatprep.subr.bf16.mxu0 0
      %1333 = vmatpush1.bf16.msra.mxu0 0
      %1334 = vmatprep.subr.bf16.mxu0 0
      %1335 = vmatpush1.bf16.msra.mxu0 0
      %1336 = vmatprep.subr.bf16.mxu0 0
      %1337 = vmatpush1.bf16.msra.mxu0 0
      %1338 = vmatprep.mubr.bf16.mxu0 0
      %1339 = vmatmul.mubr.bf16.gmra.mrb[0].mxu0 %v1291
      %v1340 = vpop.f32.mrb[0].mxu0
      %v1341 = vadd.f32 %v1240, %v1340
      %v1342 = vpop.f32.mrb[0].mxu0
      %v1343 = vpop.f32.mrb[0].mxu0
      %v1344 = vadd.f32 %v1240, %v1343
      %v1345 = vpop.f32.mrb[0].mxu0
      %1346 = vmatprep.mubr.bf16.mxu0 0
      %1347 = vmatmul.mubr.bf16.gmra.mrb[0].mxu0 %v1294
      %v1348 = vpop.f32.mrb[0].mxu0
      %v1349 = vadd.f32 %v1240, %v1348
      %v1350 = vpop.f32.mrb[0].mxu0
      %v1351 = vpop.f32.mrb[0].mxu0
      %v1352 = vadd.f32 %v1240, %v1351
      %v1353 = vpop.f32.mrb[0].mxu0
      %1354 = vmatprep.mubr.bf16.mxu0 0
      %1355 = vmatmul.mubr.bf16.gmra.mrb[0].mxu0 %v1297
      %v1356 = vpop.f32.mrb[0].mxu0
      %v1357 = vadd.f32 %v1240, %v1356
      %v1358 = vpop.f32.mrb[0].mxu0
      %v1359 = vpop.f32.mrb[0].mxu0
      %v1360 = vadd.f32 %v1240, %v1359
      %v1361 = vpop.f32.mrb[0].mxu0
      %1362 = vmatprep.mubr.bf16.mxu0 0
      %1363 = vmatmul.mubr.bf16.gmra.mrb[0].mxu0 %v1300
      %v1364 = vpop.f32.mrb[0].mxu0
      %v1365 = vadd.f32 %v1240, %v1364
      %v1366 = vpop.f32.mrb[0].mxu0
      %v1367 = vpop.f32.mrb[0].mxu0
      %v1368 = vadd.f32 %v1240, %v1367
      %v1369 = vpop.f32.mrb[0].mxu0
      %1370 = vdwg.mxu0
      %v1371 = vmax.f32 %v1341, 0.0
      %v1372 = vmax.f32 %v1344, 0.0
      %v1373 = vmax.f32 %v1349, 0.0
      %v1374 = vmax.f32 %v1352, 0.0
      %v1375 = vmax.f32 %v1357, 0.0
      %v1376 = vmax.f32 %v1360, 0.0
      %v1377 = vmax.f32 %v1365, 0.0
      %v1378 = vmax.f32 %v1368, 0.0
      %vm1379 = vcmask 125952
      %1380 = vst.msk [vmem:[#allocation3] sm:$0xf] %vm1379, 0
      %vm1381 = vcmask 122880
      %1382 = vst.msk [vmem:[#allocation3 + $0x4] sm:$0x1] %vm1381, 0
      %s1383 = scalar_lea.vmem [#allocation3], 72
      %1384 = vst.msk [vmem:[%s1383] sm:$0xf] %vm1379, 0
      %1385 = vst.msk [vmem:[%s1383 + $0x4] sm:$0x1] %vm1381, 0
      %s1386 = scalar_lea.vmem [#allocation3], 8
      %vm1387 = vcmask 122880
      %vm1388 = vmand %vm1387, %vm299
      %v1389 = vld [vmem:[%s1386] sm:$0x1]
      %v1390 = vsel %vm1388, 0, %v1389
      %1391 = vst [vmem:[%s1386] sm:$0x1] %v1390
      %v1392 = vld [vmem:[%s1386 + $0x8] sm:$0x1]
      %v1393 = vsel %vm1388, 0, %v1392
      %1394 = vst [vmem:[%s1386 + $0x8] sm:$0x1] %v1393
      %v1395 = vld [vmem:[%s1386 + $0x10] sm:$0x1]
      %v1396 = vsel %vm1388, 0, %v1395
      %1397 = vst [vmem:[%s1386 + $0x10] sm:$0x1] %v1396
      %v1398 = vld [vmem:[%s1386 + $0x18] sm:$0x1]
      %v1399 = vsel %vm1388, 0, %v1398
      %1400 = vst [vmem:[%s1386 + $0x18] sm:$0x1] %v1399
      %v1401 = vld [vmem:[%s1386 + $0x20] sm:$0x1]
      %v1402 = vsel %vm1388, 0, %v1401
      %1403 = vst [vmem:[%s1386 + $0x20] sm:$0x1] %v1402
      %v1404 = vld [vmem:[%s1386 + $0x28] sm:$0x1]
      %v1405 = vsel %vm1388, 0, %v1404
      %1406 = vst [vmem:[%s1386 + $0x28] sm:$0x1] %v1405
      %v1407 = vld [vmem:[%s1386 + $0x30] sm:$0x1]
      %v1408 = vsel %vm1388, 0, %v1407
      %1409 = vst [vmem:[%s1386 + $0x30] sm:$0x1] %v1408
      %v1410 = vld [vmem:[%s1386 + $0x38] sm:$0x1]
      %v1411 = vsel %vm1388, 0, %v1410
      %1412 = vst [vmem:[%s1386 + $0x38] sm:$0x1] %v1411
      %vm1413 = vmand %vm1387, %vm325
      %v1414 = vld [vmem:[%s1386 + $0x4] sm:$0x1]
      %v1415 = vsel %vm1413, 0, %v1414
      %1416 = vst [vmem:[%s1386 + $0x4] sm:$0x1] %v1415
      %v1417 = vld [vmem:[%s1386 + $0xc] sm:$0x1]
      %v1418 = vsel %vm1413, 0, %v1417
      %1419 = vst [vmem:[%s1386 + $0xc] sm:$0x1] %v1418
      %v1420 = vld [vmem:[%s1386 + $0x14] sm:$0x1]
      %v1421 = vsel %vm1413, 0, %v1420
      %1422 = vst [vmem:[%s1386 + $0x14] sm:$0x1] %v1421
      %v1423 = vld [vmem:[%s1386 + $0x1c] sm:$0x1]
      %v1424 = vsel %vm1413, 0, %v1423
      %1425 = vst [vmem:[%s1386 + $0x1c] sm:$0x1] %v1424
      %v1426 = vld [vmem:[%s1386 + $0x24] sm:$0x1]
      %v1427 = vsel %vm1413, 0, %v1426
      %1428 = vst [vmem:[%s1386 + $0x24] sm:$0x1] %v1427
      %v1429 = vld [vmem:[%s1386 + $0x2c] sm:$0x1]
      %v1430 = vsel %vm1413, 0, %v1429
      %1431 = vst [vmem:[%s1386 + $0x2c] sm:$0x1] %v1430
      %v1432 = vld [vmem:[%s1386 + $0x34] sm:$0x1]
      %v1433 = vsel %vm1413, 0, %v1432
      %1434 = vst [vmem:[%s1386 + $0x34] sm:$0x1] %v1433
      %v1435 = vld [vmem:[%s1386 + $0x3c] sm:$0x1]
      %v1436 = vsel %vm1413, 0, %v1435
      %1437 = vst [vmem:[%s1386 + $0x3c] sm:$0x1] %v1436
      %v1438 = vpack.c.bf16 %v1371, %v1371
      %v1439 = vpack.c.bf16 %v1372, %v1372
      %v1440 = vpack.c.bf16 %v1373, %v1373
      %v1441 = vpack.c.bf16 %v1374, %v1374
      %v1442 = vpack.c.bf16 %v1375, %v1375
      %v1443 = vpack.c.bf16 %v1376, %v1376
      %v1444 = vpack.c.bf16 %v1377, %v1377
      %v1445 = vpack.c.bf16 %v1378, %v1378
      %v1454 = vunpack.c.l.b16 %v1438
      %v1455 = vunpack.c.l.b16 %v1439
      %v1456 = vunpack.c.l.b16 %v1440
      %v1457 = vunpack.c.l.b16 %v1441
      %v1458 = vunpack.c.l.b16 %v1442
      %v1459 = vunpack.c.l.b16 %v1443
      %v1460 = vunpack.c.l.b16 %v1444
      %v1461 = vunpack.c.l.b16 %v1445
      %v1462 = vpack.c.b16 %v1454, %v1454
      %v1463 = vpack.c.b16 %v1455, %v1455
      %v1464 = vpack.c.b16 %v1456, %v1456
      %v1465 = vpack.c.b16 %v1457, %v1457
      %v1466 = vpack.c.b16 %v1458, %v1458
      %v1467 = vpack.c.b16 %v1459, %v1459
      %v1468 = vpack.c.b16 %v1460, %v1460
      %v1469 = vpack.c.b16 %v1461, %v1461
      %v1471 = vshrl.u32 %v1462, 16
      %v1473 = vrot.slane %v1471, 7
      %v1474 = vshll.u32 %v1462, 16
      %v1476 = vor.u32 %v1473, %v1474
      %v1477 = vrot.slane %v1473, 4
      %v1479 = vshrl.u32 %v1463, 16
      %v1481 = vrot.slane %v1479, 7
      %v1482 = vshll.u32 %v1463, 16
      %v1484 = vor.u32 %v1481, %v1482
      %v1485 = vrot.slane %v1481, 4
      %v1487 = vshrl.u32 %v1464, 16
      %v1489 = vrot.slane %v1487, 7
      %v1490 = vshll.u32 %v1464, 16
      %v1492 = vor.u32 %v1489, %v1490
      %v1493 = vrot.slane %v1489, 4
      %v1495 = vshrl.u32 %v1465, 16
      %v1497 = vrot.slane %v1495, 7
      %v1498 = vshll.u32 %v1465, 16
      %v1500 = vor.u32 %v1497, %v1498
      %v1501 = vrot.slane %v1497, 4
      %v1503 = vshrl.u32 %v1466, 16
      %v1505 = vrot.slane %v1503, 7
      %v1506 = vshll.u32 %v1466, 16
      %v1508 = vor.u32 %v1505, %v1506
      %v1509 = vrot.slane %v1505, 4
      %v1511 = vshrl.u32 %v1467, 16
      %v1513 = vrot.slane %v1511, 7
      %v1514 = vshll.u32 %v1467, 16
      %v1516 = vor.u32 %v1513, %v1514
      %v1517 = vrot.slane %v1513, 4
      %v1519 = vshrl.u32 %v1468, 16
      %v1521 = vrot.slane %v1519, 7
      %v1522 = vshll.u32 %v1468, 16
      %v1524 = vor.u32 %v1521, %v1522
      %v1525 = vrot.slane %v1521, 4
      %v1527 = vshrl.u32 %v1469, 16
      %v1529 = vrot.slane %v1527, 7
      %v1530 = vshll.u32 %v1469, 16
      %v1532 = vor.u32 %v1529, %v1530
      %v1533 = vrot.slane %v1529, 4
      %vm1550 = vcmask 125952
      %vm1551 = vmand %vm1550, %vm325
      %v1552 = vld [vmem:[%s1386] sm:$0xf]
      %v1553 = vsel %vm1551, %v1476, %v1552
      %1554 = vst [vmem:[%s1386] sm:$0xf] %v1553
      %v1555 = vld [vmem:[%s1386 + $0x4] sm:$0x1]
      %v1556 = vsel %vm1388, %v1477, %v1555
      %1557 = vst [vmem:[%s1386 + $0x4] sm:$0x1] %v1556
      %v1558 = vld [vmem:[%s1386 + $0x8] sm:$0xf]
      %v1559 = vsel %vm1551, %v1484, %v1558
      %1560 = vst [vmem:[%s1386 + $0x8] sm:$0xf] %v1559
      %v1561 = vld [vmem:[%s1386 + $0xc] sm:$0x1]
      %v1562 = vsel %vm1388, %v1485, %v1561
      %1563 = vst [vmem:[%s1386 + $0xc] sm:$0x1] %v1562
      %v1564 = vld [vmem:[%s1386 + $0x10] sm:$0xf]
      %v1565 = vsel %vm1551, %v1492, %v1564
      %1566 = vst [vmem:[%s1386 + $0x10] sm:$0xf] %v1565
      %v1567 = vld [vmem:[%s1386 + $0x14] sm:$0x1]
      %v1568 = vsel %vm1388, %v1493, %v1567
      %1569 = vst [vmem:[%s1386 + $0x14] sm:$0x1] %v1568
      %v1570 = vld [vmem:[%s1386 + $0x18] sm:$0xf]
      %v1571 = vsel %vm1551, %v1500, %v1570
      %1572 = vst [vmem:[%s1386 + $0x18] sm:$0xf] %v1571
      %v1573 = vld [vmem:[%s1386 + $0x1c] sm:$0x1]
      %v1574 = vsel %vm1388, %v1501, %v1573
      %1575 = vst [vmem:[%s1386 + $0x1c] sm:$0x1] %v1574
      %v1576 = vld [vmem:[%s1386 + $0x20] sm:$0xf]
      %v1577 = vsel %vm1551, %v1508, %v1576
      %1578 = vst [vmem:[%s1386 + $0x20] sm:$0xf] %v1577
      %v1579 = vld [vmem:[%s1386 + $0x24] sm:$0x1]
      %v1580 = vsel %vm1388, %v1509, %v1579
      %1581 = vst [vmem:[%s1386 + $0x24] sm:$0x1] %v1580
      %v1582 = vld [vmem:[%s1386 + $0x28] sm:$0xf]
      %v1583 = vsel %vm1551, %v1516, %v1582
      %1584 = vst [vmem:[%s1386 + $0x28] sm:$0xf] %v1583
      %v1585 = vld [vmem:[%s1386 + $0x2c] sm:$0x1]
      %v1586 = vsel %vm1388, %v1517, %v1585
      %1587 = vst [vmem:[%s1386 + $0x2c] sm:$0x1] %v1586
      %v1588 = vld [vmem:[%s1386 + $0x30] sm:$0xf]
      %v1589 = vsel %vm1551, %v1524, %v1588
      %1590 = vst [vmem:[%s1386 + $0x30] sm:$0xf] %v1589
      %v1591 = vld [vmem:[%s1386 + $0x34] sm:$0x1]
      %v1592 = vsel %vm1388, %v1525, %v1591
      %1593 = vst [vmem:[%s1386 + $0x34] sm:$0x1] %v1592
      %v1594 = vld [vmem:[%s1386 + $0x38] sm:$0xf]
      %v1595 = vsel %vm1551, %v1532, %v1594
      %1596 = vst [vmem:[%s1386 + $0x38] sm:$0xf] %v1595
      %v1597 = vld [vmem:[%s1386 + $0x3c] sm:$0x1]
      %v1598 = vsel %vm1388, %v1533, %v1597
      %1599 = vst [vmem:[%s1386 + $0x3c] sm:$0x1] %v1598
      %v1600 = vld [vmem:[#allocation3] sm:$0xf]
      %v1601 = vld [vmem:[#allocation3 + $0x8] sm:$0xf]
      %v1602 = vld [vmem:[#allocation3 + $0x10] sm:$0xf]
      %v1603 = vld [vmem:[#allocation3 + $0x18] sm:$0xf]
      %v1604 = vld [vmem:[#allocation3 + $0x20] sm:$0xf]
      %v1605 = vld [vmem:[#allocation3 + $0x28] sm:$0xf]
      %v1606 = vld [vmem:[#allocation3 + $0x30] sm:$0xf]
      %v1607 = vld [vmem:[#allocation3 + $0x38] sm:$0xf]
      %v1608 = vld [vmem:[#allocation3 + $0x4] sm:$0x1]
      %v1609 = vld [vmem:[#allocation3 + $0xc] sm:$0x1]
      %v1610 = vld [vmem:[#allocation3 + $0x14] sm:$0x1]
      %v1611 = vld [vmem:[#allocation3 + $0x1c] sm:$0x1]
      %v1612 = vld [vmem:[#allocation3 + $0x24] sm:$0x1]
      %v1613 = vld [vmem:[#allocation3 + $0x2c] sm:$0x1]
      %v1614 = vld [vmem:[#allocation3 + $0x34] sm:$0x1]
      %v1615 = vld [vmem:[#allocation3 + $0x3c] sm:$0x1]
      %v1616 = vld [vmem:[#allocation3] sm:$0xe]
      %v1617 = vld [vmem:[#allocation3 + $0x8] sm:$0xe]
      %v1618 = vld [vmem:[#allocation3 + $0x10] sm:$0xe]
      %v1619 = vld [vmem:[#allocation3 + $0x18] sm:$0xe]
      %v1620 = vld [vmem:[#allocation3 + $0x20] sm:$0xe]
      %v1621 = vld [vmem:[#allocation3 + $0x28] sm:$0xe]
      %v1622 = vld [vmem:[#allocation3 + $0x30] sm:$0xe]
      %v1623 = vld [vmem:[#allocation3 + $0x38] sm:$0xe]
      %v1624 = vld [vmem:[%s1386] sm:$0xf]
      %v1625 = vld [vmem:[%s1386 + $0x8] sm:$0xf]
      %v1626 = vld [vmem:[%s1386 + $0x10] sm:$0xf]
      %v1627 = vld [vmem:[%s1386 + $0x18] sm:$0xf]
      %v1628 = vld [vmem:[%s1386 + $0x20] sm:$0xf]
      %v1629 = vld [vmem:[%s1386 + $0x28] sm:$0xf]
      %v1630 = vld [vmem:[%s1386 + $0x30] sm:$0xf]
      %v1631 = vld [vmem:[%s1386 + $0x38] sm:$0xf]
      %v1632 = vld [vmem:[%s1386 + $0x4] sm:$0x1]
      %v1633 = vld [vmem:[%s1386 + $0xc] sm:$0x1]
      %v1634 = vld [vmem:[%s1386 + $0x14] sm:$0x1]
      %v1635 = vld [vmem:[%s1386 + $0x1c] sm:$0x1]
      %v1636 = vld [vmem:[%s1386 + $0x24] sm:$0x1]
      %v1637 = vld [vmem:[%s1386 + $0x2c] sm:$0x1]
      %v1638 = vld [vmem:[%s1386 + $0x34] sm:$0x1]
      %v1639 = vld [vmem:[%s1386 + $0x3c] sm:$0x1]
      %v1640 = vld [vmem:[%s1386] sm:$0xe]
      %v1641 = vld [vmem:[%s1386 + $0x8] sm:$0xe]
      %v1642 = vld [vmem:[%s1386 + $0x10] sm:$0xe]
      %v1643 = vld [vmem:[%s1386 + $0x18] sm:$0xe]
      %v1644 = vld [vmem:[%s1386 + $0x20] sm:$0xe]
      %v1645 = vld [vmem:[%s1386 + $0x28] sm:$0xe]
      %v1646 = vld [vmem:[%s1386 + $0x30] sm:$0xe]
      %v1647 = vld [vmem:[%s1386 + $0x38] sm:$0xe]
      %s1648 = scalar_lea.vmem [#allocation3], 16
      %v1649 = vld [vmem:[%s1648] sm:$0xf]
      %v1650 = vld [vmem:[%s1648 + $0x8] sm:$0xf]
      %v1651 = vld [vmem:[%s1648 + $0x10] sm:$0xf]
      %v1652 = vld [vmem:[%s1648 + $0x18] sm:$0xf]
      %v1653 = vld [vmem:[%s1648 + $0x20] sm:$0xf]
      %v1654 = vld [vmem:[%s1648 + $0x28] sm:$0xf]
      %v1655 = vld [vmem:[%s1648 + $0x30] sm:$0xf]
      %v1656 = vld [vmem:[%s1648 + $0x38] sm:$0xf]
      %v1657 = vld [vmem:[%s1648 + $0x4] sm:$0x1]
      %v1658 = vld [vmem:[%s1648 + $0xc] sm:$0x1]
      %v1659 = vld [vmem:[%s1648 + $0x14] sm:$0x1]
      %v1660 = vld [vmem:[%s1648 + $0x1c] sm:$0x1]
      %v1661 = vld [vmem:[%s1648 + $0x24] sm:$0x1]
      %v1662 = vld [vmem:[%s1648 + $0x2c] sm:$0x1]
      %v1663 = vld [vmem:[%s1648 + $0x34] sm:$0x1]
      %v1664 = vld [vmem:[%s1648 + $0x3c] sm:$0x1]
      %v1665 = vld [vmem:[%s1648] sm:$0xe]
      %v1666 = vld [vmem:[%s1648 + $0x8] sm:$0xe]
      %v1667 = vld [vmem:[%s1648 + $0x10] sm:$0xe]
      %v1668 = vld [vmem:[%s1648 + $0x18] sm:$0xe]
      %v1669 = vld [vmem:[%s1648 + $0x20] sm:$0xe]
      %v1670 = vld [vmem:[%s1648 + $0x28] sm:$0xe]
      %v1671 = vld [vmem:[%s1648 + $0x30] sm:$0xe]
      %v1672 = vld [vmem:[%s1648 + $0x38] sm:$0xe]
      %v1689 = vunpack.c.l.b16 %v1600
      %v1690 = vunpack.c.l.b16 %v1608
      %v1691 = vunpack.c.l.b16 %v1601
      %v1692 = vunpack.c.l.b16 %v1609
      %v1693 = vunpack.c.l.b16 %v1602
      %v1694 = vunpack.c.l.b16 %v1610
      %v1695 = vunpack.c.l.b16 %v1603
      %v1696 = vunpack.c.l.b16 %v1611
      %v1697 = vunpack.c.l.b16 %v1604
      %v1698 = vunpack.c.l.b16 %v1612
      %v1699 = vunpack.c.l.b16 %v1605
      %v1700 = vunpack.c.l.b16 %v1613
      %v1701 = vunpack.c.l.b16 %v1606
      %v1702 = vunpack.c.l.b16 %v1614
      %v1703 = vunpack.c.l.b16 %v1607
      %v1704 = vunpack.c.l.b16 %v1615
      %v1705 = vpack.c.b16 %v1690, %v1689
      %v1706 = vpack.c.b16 %v1692, %v1691
      %v1707 = vpack.c.b16 %v1694, %v1693
      %v1708 = vpack.c.b16 %v1696, %v1695
      %v1709 = vpack.c.b16 %v1698, %v1697
      %v1710 = vpack.c.b16 %v1700, %v1699
      %v1711 = vpack.c.b16 %v1702, %v1701
      %v1712 = vpack.c.b16 %v1704, %v1703
      %v1714 = vshrl.u32 %v1705, 16
      %v1716 = vshll.u32 %v1705, 16
      %v1718 = vrot.slane %v1716, 1
      %v1719 = vor.u32 %v1714, %v1718
      %v1721 = vshrl.u32 %v1706, 16
      %v1723 = vshll.u32 %v1706, 16
      %v1725 = vrot.slane %v1723, 1
      %v1726 = vor.u32 %v1721, %v1725
      %v1728 = vshrl.u32 %v1707, 16
      %v1730 = vshll.u32 %v1707, 16
      %v1732 = vrot.slane %v1730, 1
      %v1733 = vor.u32 %v1728, %v1732
      %v1735 = vshrl.u32 %v1708, 16
      %v1737 = vshll.u32 %v1708, 16
      %v1739 = vrot.slane %v1737, 1
      %v1740 = vor.u32 %v1735, %v1739
      %v1742 = vshrl.u32 %v1709, 16
      %v1744 = vshll.u32 %v1709, 16
      %v1746 = vrot.slane %v1744, 1
      %v1747 = vor.u32 %v1742, %v1746
      %v1749 = vshrl.u32 %v1710, 16
      %v1751 = vshll.u32 %v1710, 16
      %v1753 = vrot.slane %v1751, 1
      %v1754 = vor.u32 %v1749, %v1753
      %v1756 = vshrl.u32 %v1711, 16
      %v1758 = vshll.u32 %v1711, 16
      %v1760 = vrot.slane %v1758, 1
      %v1761 = vor.u32 %v1756, %v1760
      %v1763 = vshrl.u32 %v1712, 16
      %v1765 = vshll.u32 %v1712, 16
      %v1767 = vrot.slane %v1765, 1
      %v1768 = vor.u32 %v1763, %v1767
      %1769 = vrot.lane.b32.xlu0 %v1719, 16
      %v1770 = vpop.permute.xlu0 %1769
      %1771 = vrot.lane.b32.xlu0 %v1726, 16
      %v1772 = vpop.permute.xlu0 %1771
      %1773 = vrot.lane.b32.xlu0 %v1733, 16
      %v1774 = vpop.permute.xlu0 %1773
      %1775 = vrot.lane.b32.xlu0 %v1740, 16
      %v1776 = vpop.permute.xlu0 %1775
      %1777 = vrot.lane.b32.xlu0 %v1747, 16
      %v1778 = vpop.permute.xlu0 %1777
      %1779 = vrot.lane.b32.xlu0 %v1754, 16
      %v1780 = vpop.permute.xlu0 %1779
      %1781 = vrot.lane.b32.xlu0 %v1761, 16
      %v1782 = vpop.permute.xlu0 %1781
      %1783 = vrot.lane.b32.xlu0 %v1768, 16
      %v1784 = vpop.permute.xlu0 %1783
      %v1793 = vunpack.c.l.b16 %v1616
      %v1794 = vunpack.c.l.b16 %v1617
      %v1795 = vunpack.c.l.b16 %v1618
      %v1796 = vunpack.c.l.b16 %v1619
      %v1797 = vunpack.c.l.b16 %v1620
      %v1798 = vunpack.c.l.b16 %v1621
      %v1799 = vunpack.c.l.b16 %v1622
      %v1800 = vunpack.c.l.b16 %v1623
      %v1801 = vpack.c.b16 %v1690, %v1793
      %v1802 = vpack.c.b16 %v1692, %v1794
      %v1803 = vpack.c.b16 %v1694, %v1795
      %v1804 = vpack.c.b16 %v1696, %v1796
      %v1805 = vpack.c.b16 %v1698, %v1797
      %v1806 = vpack.c.b16 %v1700, %v1798
      %v1807 = vpack.c.b16 %v1702, %v1799
      %v1808 = vpack.c.b16 %v1704, %v1800
      %v1809 = vrot.slane %v1801, 1
      %v1810 = vrot.slane %v1802, 1
      %v1811 = vrot.slane %v1803, 1
      %v1812 = vrot.slane %v1804, 1
      %v1813 = vrot.slane %v1805, 1
      %v1814 = vrot.slane %v1806, 1
      %v1815 = vrot.slane %v1807, 1
      %v1816 = vrot.slane %v1808, 1
      %1817 = vrot.lane.b32.xlu0 %v1809, 32
      %v1818 = vpop.permute.xlu0 %1817
      %1819 = vrot.lane.b32.xlu0 %v1810, 32
      %v1820 = vpop.permute.xlu0 %1819
      %1821 = vrot.lane.b32.xlu0 %v1811, 32
      %v1822 = vpop.permute.xlu0 %1821
      %1823 = vrot.lane.b32.xlu0 %v1812, 32
      %v1824 = vpop.permute.xlu0 %1823
      %1825 = vrot.lane.b32.xlu0 %v1813, 32
      %v1826 = vpop.permute.xlu0 %1825
      %1827 = vrot.lane.b32.xlu0 %v1814, 32
      %v1828 = vpop.permute.xlu0 %1827
      %1829 = vrot.lane.b32.xlu0 %v1815, 32
      %v1830 = vpop.permute.xlu0 %1829
      %1831 = vrot.lane.b32.xlu0 %v1816, 32
      %v1832 = vpop.permute.xlu0 %1831
      %v1841 = vunpack.c.l.b16 %v1624
      %v1842 = vunpack.c.l.b16 %v1625
      %v1843 = vunpack.c.l.b16 %v1626
      %v1844 = vunpack.c.l.b16 %v1627
      %v1845 = vunpack.c.l.b16 %v1628
      %v1846 = vunpack.c.l.b16 %v1629
      %v1847 = vunpack.c.l.b16 %v1630
      %v1848 = vunpack.c.l.b16 %v1631
      %v1849 = vpack.c.b16 %v1841, %v1841
      %v1850 = vpack.c.b16 %v1842, %v1842
      %v1851 = vpack.c.b16 %v1843, %v1843
      %v1852 = vpack.c.b16 %v1844, %v1844
      %v1853 = vpack.c.b16 %v1845, %v1845
      %v1854 = vpack.c.b16 %v1846, %v1846
      %v1855 = vpack.c.b16 %v1847, %v1847
      %v1856 = vpack.c.b16 %v1848, %v1848
      %1857 = vrot.lane.b32.xlu0 %v1849, 48
      %v1858 = vpop.permute.xlu0 %1857
      %1859 = vrot.lane.b32.xlu0 %v1850, 48
      %v1860 = vpop.permute.xlu0 %1859
      %1861 = vrot.lane.b32.xlu0 %v1851, 48
      %v1862 = vpop.permute.xlu0 %1861
      %1863 = vrot.lane.b32.xlu0 %v1852, 48
      %v1864 = vpop.permute.xlu0 %1863
      %1865 = vrot.lane.b32.xlu0 %v1853, 48
      %v1866 = vpop.permute.xlu0 %1865
      %1867 = vrot.lane.b32.xlu0 %v1854, 48
      %v1868 = vpop.permute.xlu0 %1867
      %1869 = vrot.lane.b32.xlu0 %v1855, 48
      %v1870 = vpop.permute.xlu0 %1869
      %1871 = vrot.lane.b32.xlu0 %v1856, 48
      %v1872 = vpop.permute.xlu0 %1871
      %v1881 = vunpack.c.l.b16 %v1632
      %v1882 = vunpack.c.l.b16 %v1633
      %v1883 = vunpack.c.l.b16 %v1634
      %v1884 = vunpack.c.l.b16 %v1635
      %v1885 = vunpack.c.l.b16 %v1636
      %v1886 = vunpack.c.l.b16 %v1637
      %v1887 = vunpack.c.l.b16 %v1638
      %v1888 = vunpack.c.l.b16 %v1639
      %v1889 = vpack.c.b16 %v1881, %v1841
      %v1890 = vpack.c.b16 %v1882, %v1842
      %v1891 = vpack.c.b16 %v1883, %v1843
      %v1892 = vpack.c.b16 %v1884, %v1844
      %v1893 = vpack.c.b16 %v1885, %v1845
      %v1894 = vpack.c.b16 %v1886, %v1846
      %v1895 = vpack.c.b16 %v1887, %v1847
      %v1896 = vpack.c.b16 %v1888, %v1848
      %v1898 = vshrl.u32 %v1889, 16
      %v1900 = vshll.u32 %v1889, 16
      %v1902 = vrot.slane %v1900, 1
      %v1903 = vor.u32 %v1898, %v1902
      %v1905 = vshrl.u32 %v1890, 16
      %v1907 = vshll.u32 %v1890, 16
      %v1909 = vrot.slane %v1907, 1
      %v1910 = vor.u32 %v1905, %v1909
      %v1912 = vshrl.u32 %v1891, 16
      %v1914 = vshll.u32 %v1891, 16
      %v1916 = vrot.slane %v1914, 1
      %v1917 = vor.u32 %v1912, %v1916
      %v1919 = vshrl.u32 %v1892, 16
      %v1921 = vshll.u32 %v1892, 16
      %v1923 = vrot.slane %v1921, 1
      %v1924 = vor.u32 %v1919, %v1923
      %v1926 = vshrl.u32 %v1893, 16
      %v1928 = vshll.u32 %v1893, 16
      %v1930 = vrot.slane %v1928, 1
      %v1931 = vor.u32 %v1926, %v1930
      %v1933 = vshrl.u32 %v1894, 16
      %v1935 = vshll.u32 %v1894, 16
      %v1937 = vrot.slane %v1935, 1
      %v1938 = vor.u32 %v1933, %v1937
      %v1940 = vshrl.u32 %v1895, 16
      %v1942 = vshll.u32 %v1895, 16
      %v1944 = vrot.slane %v1942, 1
      %v1945 = vor.u32 %v1940, %v1944
      %v1947 = vshrl.u32 %v1896, 16
      %v1949 = vshll.u32 %v1896, 16
      %v1951 = vrot.slane %v1949, 1
      %v1952 = vor.u32 %v1947, %v1951
      %1953 = vrot.lane.b32.xlu0 %v1903, 64
      %v1954 = vpop.permute.xlu0 %1953
      %1955 = vrot.lane.b32.xlu0 %v1910, 64
      %v1956 = vpop.permute.xlu0 %1955
      %1957 = vrot.lane.b32.xlu0 %v1917, 64
      %v1958 = vpop.permute.xlu0 %1957
      %1959 = vrot.lane.b32.xlu0 %v1924, 64
      %v1960 = vpop.permute.xlu0 %1959
      %1961 = vrot.lane.b32.xlu0 %v1931, 64
      %v1962 = vpop.permute.xlu0 %1961
      %1963 = vrot.lane.b32.xlu0 %v1938, 64
      %v1964 = vpop.permute.xlu0 %1963
      %1965 = vrot.lane.b32.xlu0 %v1945, 64
      %v1966 = vpop.permute.xlu0 %1965
      %1967 = vrot.lane.b32.xlu0 %v1952, 64
      %v1968 = vpop.permute.xlu0 %1967
      %v1977 = vunpack.c.l.b16 %v1640
      %v1978 = vunpack.c.l.b16 %v1641
      %v1979 = vunpack.c.l.b16 %v1642
      %v1980 = vunpack.c.l.b16 %v1643
      %v1981 = vunpack.c.l.b16 %v1644
      %v1982 = vunpack.c.l.b16 %v1645
      %v1983 = vunpack.c.l.b16 %v1646
      %v1984 = vunpack.c.l.b16 %v1647
      %v1985 = vpack.c.b16 %v1881, %v1977
      %v1986 = vpack.c.b16 %v1882, %v1978
      %v1987 = vpack.c.b16 %v1883, %v1979
      %v1988 = vpack.c.b16 %v1884, %v1980
      %v1989 = vpack.c.b16 %v1885, %v1981
      %v1990 = vpack.c.b16 %v1886, %v1982
      %v1991 = vpack.c.b16 %v1887, %v1983
      %v1992 = vpack.c.b16 %v1888, %v1984
      %v1993 = vrot.slane %v1985, 1
      %v1994 = vrot.slane %v1986, 1
      %v1995 = vrot.slane %v1987, 1
      %v1996 = vrot.slane %v1988, 1
      %v1997 = vrot.slane %v1989, 1
      %v1998 = vrot.slane %v1990, 1
      %v1999 = vrot.slane %v1991, 1
      %v2000 = vrot.slane %v1992, 1
      %2001 = vrot.lane.b32.xlu0 %v1993, 80
      %v2002 = vpop.permute.xlu0 %2001
      %2003 = vrot.lane.b32.xlu0 %v1994, 80
      %v2004 = vpop.permute.xlu0 %2003
      %2005 = vrot.lane.b32.xlu0 %v1995, 80
      %v2006 = vpop.permute.xlu0 %2005
      %2007 = vrot.lane.b32.xlu0 %v1996, 80
      %v2008 = vpop.permute.xlu0 %2007
      %2009 = vrot.lane.b32.xlu0 %v1997, 80
      %v2010 = vpop.permute.xlu0 %2009
      %2011 = vrot.lane.b32.xlu0 %v1998, 80
      %v2012 = vpop.permute.xlu0 %2011
      %2013 = vrot.lane.b32.xlu0 %v1999, 80
      %v2014 = vpop.permute.xlu0 %2013
      %2015 = vrot.lane.b32.xlu0 %v2000, 80
      %v2016 = vpop.permute.xlu0 %2015
      %v2025 = vunpack.c.l.b16 %v1649
      %v2026 = vunpack.c.l.b16 %v1650
      %v2027 = vunpack.c.l.b16 %v1651
      %v2028 = vunpack.c.l.b16 %v1652
      %v2029 = vunpack.c.l.b16 %v1653
      %v2030 = vunpack.c.l.b16 %v1654
      %v2031 = vunpack.c.l.b16 %v1655
      %v2032 = vunpack.c.l.b16 %v1656
      %v2033 = vpack.c.b16 %v2025, %v2025
      %v2034 = vpack.c.b16 %v2026, %v2026
      %v2035 = vpack.c.b16 %v2027, %v2027
      %v2036 = vpack.c.b16 %v2028, %v2028
      %v2037 = vpack.c.b16 %v2029, %v2029
      %v2038 = vpack.c.b16 %v2030, %v2030
      %v2039 = vpack.c.b16 %v2031, %v2031
      %v2040 = vpack.c.b16 %v2032, %v2032
      %2041 = vrot.lane.b32.xlu0 %v2033, 96
      %v2042 = vpop.permute.xlu0 %2041
      %2043 = vrot.lane.b32.xlu0 %v2034, 96
      %v2044 = vpop.permute.xlu0 %2043
      %2045 = vrot.lane.b32.xlu0 %v2035, 96
      %v2046 = vpop.permute.xlu0 %2045
      %2047 = vrot.lane.b32.xlu0 %v2036, 96
      %v2048 = vpop.permute.xlu0 %2047
      %2049 = vrot.lane.b32.xlu0 %v2037, 96
      %v2050 = vpop.permute.xlu0 %2049
      %2051 = vrot.lane.b32.xlu0 %v2038, 96
      %v2052 = vpop.permute.xlu0 %2051
      %2053 = vrot.lane.b32.xlu0 %v2039, 96
      %v2054 = vpop.permute.xlu0 %2053
      %2055 = vrot.lane.b32.xlu0 %v2040, 96
      %v2056 = vpop.permute.xlu0 %2055
      %v2065 = vunpack.c.l.b16 %v1657
      %v2066 = vunpack.c.l.b16 %v1658
      %v2067 = vunpack.c.l.b16 %v1659
      %v2068 = vunpack.c.l.b16 %v1660
      %v2069 = vunpack.c.l.b16 %v1661
      %v2070 = vunpack.c.l.b16 %v1662
      %v2071 = vunpack.c.l.b16 %v1663
      %v2072 = vunpack.c.l.b16 %v1664
      %v2073 = vpack.c.b16 %v2065, %v2025
      %v2074 = vpack.c.b16 %v2066, %v2026
      %v2075 = vpack.c.b16 %v2067, %v2027
      %v2076 = vpack.c.b16 %v2068, %v2028
      %v2077 = vpack.c.b16 %v2069, %v2029
      %v2078 = vpack.c.b16 %v2070, %v2030
      %v2079 = vpack.c.b16 %v2071, %v2031
      %v2080 = vpack.c.b16 %v2072, %v2032
      %v2082 = vshrl.u32 %v2073, 16
      %v2084 = vshll.u32 %v2073, 16
      %v2086 = vrot.slane %v2084, 1
      %v2087 = vor.u32 %v2082, %v2086
      %v2089 = vshrl.u32 %v2074, 16
      %v2091 = vshll.u32 %v2074, 16
      %v2093 = vrot.slane %v2091, 1
      %v2094 = vor.u32 %v2089, %v2093
      %v2096 = vshrl.u32 %v2075, 16
      %v2098 = vshll.u32 %v2075, 16
      %v2100 = vrot.slane %v2098, 1
      %v2101 = vor.u32 %v2096, %v2100
      %v2103 = vshrl.u32 %v2076, 16
      %v2105 = vshll.u32 %v2076, 16
      %v2107 = vrot.slane %v2105, 1
      %v2108 = vor.u32 %v2103, %v2107
      %v2110 = vshrl.u32 %v2077, 16
      %v2112 = vshll.u32 %v2077, 16
      %v2114 = vrot.slane %v2112, 1
      %v2115 = vor.u32 %v2110, %v2114
      %v2117 = vshrl.u32 %v2078, 16
      %v2119 = vshll.u32 %v2078, 16
      %v2121 = vrot.slane %v2119, 1
      %v2122 = vor.u32 %v2117, %v2121
      %v2124 = vshrl.u32 %v2079, 16
      %v2126 = vshll.u32 %v2079, 16
      %v2128 = vrot.slane %v2126, 1
      %v2129 = vor.u32 %v2124, %v2128
      %v2131 = vshrl.u32 %v2080, 16
      %v2133 = vshll.u32 %v2080, 16
      %v2135 = vrot.slane %v2133, 1
      %v2136 = vor.u32 %v2131, %v2135
      %2137 = vrot.lane.b32.xlu0 %v2087, 112
      %v2138 = vpop.permute.xlu0 %2137
      %2139 = vrot.lane.b32.xlu0 %v2094, 112
      %v2140 = vpop.permute.xlu0 %2139
      %2141 = vrot.lane.b32.xlu0 %v2101, 112
      %v2142 = vpop.permute.xlu0 %2141
      %2143 = vrot.lane.b32.xlu0 %v2108, 112
      %v2144 = vpop.permute.xlu0 %2143
      %2145 = vrot.lane.b32.xlu0 %v2115, 112
      %v2146 = vpop.permute.xlu0 %2145
      %2147 = vrot.lane.b32.xlu0 %v2122, 112
      %v2148 = vpop.permute.xlu0 %2147
      %2149 = vrot.lane.b32.xlu0 %v2129, 112
      %v2150 = vpop.permute.xlu0 %2149
      %2151 = vrot.lane.b32.xlu0 %v2136, 112
      %v2152 = vpop.permute.xlu0 %2151
      %v2161 = vunpack.c.l.b16 %v1665
      %v2162 = vunpack.c.l.b16 %v1666
      %v2163 = vunpack.c.l.b16 %v1667
      %v2164 = vunpack.c.l.b16 %v1668
      %v2165 = vunpack.c.l.b16 %v1669
      %v2166 = vunpack.c.l.b16 %v1670
      %v2167 = vunpack.c.l.b16 %v1671
      %v2168 = vunpack.c.l.b16 %v1672
      %v2169 = vpack.c.b16 %v2065, %v2161
      %v2170 = vpack.c.b16 %v2066, %v2162
      %v2171 = vpack.c.b16 %v2067, %v2163
      %v2172 = vpack.c.b16 %v2068, %v2164
      %v2173 = vpack.c.b16 %v2069, %v2165
      %v2174 = vpack.c.b16 %v2070, %v2166
      %v2175 = vpack.c.b16 %v2071, %v2167
      %v2176 = vpack.c.b16 %v2072, %v2168
      %v2177 = vrot.slane %v2169, 1
      %v2178 = vrot.slane %v2170, 1
      %v2179 = vrot.slane %v2171, 1
      %v2180 = vrot.slane %v2172, 1
      %v2181 = vrot.slane %v2173, 1
      %v2182 = vrot.slane %v2174, 1
      %v2183 = vrot.slane %v2175, 1
      %v2184 = vrot.slane %v2176, 1
      %v2187 = vsel %vm1107, %v1600, %v1770
      %v2190 = vsel %vm1107, %v1601, %v1772
      %v2193 = vsel %vm1107, %v1602, %v1774
      %v2196 = vsel %vm1107, %v1603, %v1776
      %v2199 = vsel %vm1107, %v1604, %v1778
      %v2202 = vsel %vm1107, %v1605, %v1780
      %v2205 = vsel %vm1107, %v1606, %v1782
      %v2208 = vsel %vm1107, %v1607, %v1784
      %v2210 = vsel %vm1141, %v2187, %v1818
      %v2212 = vsel %vm1141, %v2190, %v1820
      %v2214 = vsel %vm1141, %v2193, %v1822
      %v2216 = vsel %vm1141, %v2196, %v1824
      %v2218 = vsel %vm1141, %v2199, %v1826
      %v2220 = vsel %vm1141, %v2202, %v1828
      %v2222 = vsel %vm1141, %v2205, %v1830
      %v2224 = vsel %vm1141, %v2208, %v1832
      %v2226 = vsel %vm1175, %v2210, %v1858
      %v2228 = vsel %vm1175, %v2212, %v1860
      %v2230 = vsel %vm1175, %v2214, %v1862
      %v2232 = vsel %vm1175, %v2216, %v1864
      %v2234 = vsel %vm1175, %v2218, %v1866
      %v2236 = vsel %vm1175, %v2220, %v1868
      %v2238 = vsel %vm1175, %v2222, %v1870
      %v2240 = vsel %vm1175, %v2224, %v1872
      %v2242 = vsel %vm1209, %v2226, %v1954
      %v2244 = vsel %vm1209, %v2228, %v1956
      %v2246 = vsel %vm1209, %v2230, %v1958
      %v2248 = vsel %vm1209, %v2232, %v1960
      %v2250 = vsel %vm1209, %v2234, %v1962
      %v2252 = vsel %vm1209, %v2236, %v1964
      %v2254 = vsel %vm1209, %v2238, %v1966
      %v2256 = vsel %vm1209, %v2240, %v1968
      %vm2257 = vcmask 654336
      %v2259 = vsel %vm2257, %v2242, %v2002
      %v2261 = vsel %vm2257, %v2244, %v2004
      %v2263 = vsel %vm2257, %v2246, %v2006
      %v2265 = vsel %vm2257, %v2248, %v2008
      %v2267 = vsel %vm2257, %v2250, %v2010
      %v2269 = vsel %vm2257, %v2252, %v2012
      %v2271 = vsel %vm2257, %v2254, %v2014
      %v2273 = vsel %vm2257, %v2256, %v2016
      %vm2274 = vcmask 785408
      %v2276 = vsel %vm2274, %v2259, %v2042
      %v2278 = vsel %vm2274, %v2261, %v2044
      %v2280 = vsel %vm2274, %v2263, %v2046
      %v2282 = vsel %vm2274, %v2265, %v2048
      %v2284 = vsel %vm2274, %v2267, %v2050
      %v2286 = vsel %vm2274, %v2269, %v2052
      %v2288 = vsel %vm2274, %v2271, %v2054
      %v2290 = vsel %vm2274, %v2273, %v2056
      %vm2291 = vcmask 916480
      %v2293 = vsel %vm2291, %v2276, %v2138
      %v2295 = vsel %vm2291, %v2278, %v2140
      %v2297 = vsel %vm2291, %v2280, %v2142
      %v2299 = vsel %vm2291, %v2282, %v2144
      %v2301 = vsel %vm2291, %v2284, %v2146
      %v2303 = vsel %vm2291, %v2286, %v2148
      %v2305 = vsel %vm2291, %v2288, %v2150
      %v2307 = vsel %vm2291, %v2290, %v2152
      %v2316 = vunpack.c.l.b16 %v2293
      %v2317 = vunpack.c.l.b16 %v2177
      %v2318 = vunpack.c.l.b16 %v2295
      %v2319 = vunpack.c.l.b16 %v2178
      %v2320 = vunpack.c.l.b16 %v2297
      %v2321 = vunpack.c.l.b16 %v2179
      %v2322 = vunpack.c.l.b16 %v2299
      %v2323 = vunpack.c.l.b16 %v2180
      %v2324 = vunpack.c.l.b16 %v2301
      %v2325 = vunpack.c.l.b16 %v2181
      %v2326 = vunpack.c.l.b16 %v2303
      %v2327 = vunpack.c.l.b16 %v2182
      %v2328 = vunpack.c.l.b16 %v2305
      %v2329 = vunpack.c.l.b16 %v2183
      %v2330 = vunpack.c.l.b16 %v2307
      %v2331 = vunpack.c.l.b16 %v2184
      %v2332 = vld [vmem:[%s3] sm:$0xf]
      %v2333 = vld [vmem:[%s3 + $0x4] sm:$0xf]
      %v2334 = vld [vmem:[%s3 + $0x8] sm:$0xf]
      %v2335 = vld [vmem:[%s3 + $0xc] sm:$0xf]
      %v2336 = vld [vmem:[%s3 + $0x10] sm:$0xf]
      %v2337 = vld [vmem:[%s3 + $0x14] sm:$0xf]
      %v2338 = vld [vmem:[%s3 + $0x18] sm:$0xf]
      %v2339 = vld [vmem:[%s3 + $0x1c] sm:$0xf]
      %v2340 = vld [vmem:[%s3 + $0x20] sm:$0xf]
      %v2341 = vld [vmem:[%s3 + $0x24] sm:$0xf]
      %v2342 = vld [vmem:[%s3 + $0x28] sm:$0xf]
      %v2343 = vld [vmem:[%s3 + $0x2c] sm:$0xf]
      %v2344 = vld [vmem:[%s3 + $0x30] sm:$0xf]
      %v2345 = vld [vmem:[%s3 + $0x34] sm:$0xf]
      %v2346 = vld [vmem:[%s3 + $0x38] sm:$0xf]
      %v2347 = vld [vmem:[%s3 + $0x3c] sm:$0xf]
      %v2348 = vld [vmem:[%s3 + $0x40] sm:$0xf]
      %v2349 = vld [vmem:[%s3 + $0x44] sm:$0xf]
      %v2350 = vld [vmem:[%s4] sm:$0x1]
      %v2352 = vlaneseq
      %v2353 = vshrl.u32 %v2352, 7
      %v2354 = vsub.s32 0, %v2353
      %v2355 = vrot.slane %v2350, %v2354
      %v2357 = vpack.c.b16 %v2318, %v2316
      %v2358 = vpack.c.b16 %v2319, %v2317
      %v2359 = vpack.c.b16 %v2322, %v2320
      %v2360 = vpack.c.b16 %v2323, %v2321
      %v2361 = vpack.c.b16 %v2326, %v2324
      %v2362 = vpack.c.b16 %v2327, %v2325
      %v2363 = vpack.c.b16 %v2330, %v2328
      %v2364 = vpack.c.b16 %v2331, %v2329
      %v2387 = vunpack.c.l.b16 %v2332
      %v2388 = vunpack.c.l.b16 %v2333
      %v2389 = vunpack.c.l.b16 %v2334
      %v2390 = vunpack.c.l.b16 %v2335
      %v2391 = vunpack.c.l.b16 %v2336
      %v2392 = vunpack.c.l.b16 %v2337
      %v2393 = vunpack.c.l.b16 %v2338
      %v2394 = vunpack.c.l.b16 %v2339
      %v2395 = vunpack.c.l.b16 %v2340
      %v2396 = vunpack.c.l.b16 %v2341
      %v2397 = vunpack.c.l.b16 %v2342
      %v2398 = vunpack.c.l.b16 %v2343
      %v2399 = vunpack.c.l.b16 %v2344
      %v2400 = vunpack.c.l.b16 %v2345
      %v2401 = vunpack.c.l.b16 %v2346
      %v2402 = vunpack.c.l.b16 %v2347
      %v2403 = vunpack.c.l.b16 %v2348
      %v2404 = vunpack.c.l.b16 %v2349
      %v2405 = vpack.c.b16 %v2388, %v2387
      %v2406 = vpack.c.b16 %v2390, %v2389
      %v2407 = vpack.c.b16 %v2392, %v2391
      %v2408 = vpack.c.b16 %v2394, %v2393
      %v2409 = vpack.c.b16 %v2396, %v2395
      %v2410 = vpack.c.b16 %v2398, %v2397
      %v2411 = vpack.c.b16 %v2400, %v2399
      %v2412 = vpack.c.b16 %v2402, %v2401
      %v2413 = vpack.c.b16 %v2404, %v2403
      %v2424 = vsel %vm1107, %v2358, 0
      %v2427 = vsel %vm1107, %v2360, 0
      %v2430 = vsel %vm1107, %v2362, 0
      %v2433 = vsel %vm1107, %v2364, 0
      %2435 = vmatprep.subr.bf16.mxu0 0
      %2436 = vmatpush1.bf16.msra.mxu0 %v2405
      %2437 = vmatprep.subr.bf16.mxu0 0
      %2438 = vmatpush1.bf16.msra.mxu0 %v2406
      %2439 = vmatprep.subr.bf16.mxu0 0
      %2440 = vmatpush1.bf16.msra.mxu0 %v2407
      %2441 = vmatprep.subr.bf16.mxu0 0
      %2442 = vmatpush1.bf16.msra.mxu0 %v2408
      %2443 = vmatprep.subr.bf16.mxu0 0
      %2444 = vmatpush1.bf16.msra.mxu0 %v2409
      %2445 = vmatprep.subr.bf16.mxu0 0
      %2446 = vmatpush1.bf16.msra.mxu0 %v2410
      %2447 = vmatprep.subr.bf16.mxu0 0
      %2448 = vmatpush1.bf16.msra.mxu0 %v2411
      %2449 = vmatprep.subr.bf16.mxu0 0
      %2450 = vmatpush1.bf16.msra.mxu0 %v2412
      %2451 = vmatprep.subr.bf16.mxu0 0
      %2452 = vmatpush1.bf16.msra.mxu0 %v2413
      %2453 = vmatprep.subr.bf16.mxu0 0
      %2454 = vmatpush1.bf16.msra.mxu0 0
      %2455 = vmatprep.subr.bf16.mxu0 0
      %2456 = vmatpush1.bf16.msra.mxu0 0
      %2457 = vmatprep.subr.bf16.mxu0 0
      %2458 = vmatpush1.bf16.msra.mxu0 0
      %2459 = vmatprep.subr.bf16.mxu0 0
      %2460 = vmatpush1.bf16.msra.mxu0 0
      %2461 = vmatprep.subr.bf16.mxu0 0
      %2462 = vmatpush1.bf16.msra.mxu0 0
      %2463 = vmatprep.subr.bf16.mxu0 0
      %2464 = vmatpush1.bf16.msra.mxu0 0
      %2465 = vmatprep.subr.bf16.mxu0 0
      %2466 = vmatpush1.bf16.msra.mxu0 0
      %2467 = vmatprep.mubr.bf16.mxu0 %v2424
      %2468 = vmatmul.mubr.bf16.gmra.mrb[0].mxu0 %v2357
      %v2469 = vpop.f32.mrb[0].mxu0
      %v2470 = vadd.f32 %v2355, %v2469
      %v2471 = vpop.f32.mrb[0].mxu0
      %v2472 = vpop.f32.mrb[0].mxu0
      %v2473 = vadd.f32 %v2355, %v2472
      %v2474 = vpop.f32.mrb[0].mxu0
      %2475 = vmatprep.mubr.bf16.mxu0 %v2427
      %2476 = vmatmul.mubr.bf16.gmra.mrb[0].mxu0 %v2359
      %v2477 = vpop.f32.mrb[0].mxu0
      %v2478 = vadd.f32 %v2355, %v2477
      %v2479 = vpop.f32.mrb[0].mxu0
      %v2480 = vpop.f32.mrb[0].mxu0
      %v2481 = vadd.f32 %v2355, %v2480
      %v2482 = vpop.f32.mrb[0].mxu0
      %2483 = vmatprep.mubr.bf16.mxu0 %v2430
      %2484 = vmatmul.mubr.bf16.gmra.mrb[0].mxu0 %v2361
      %v2485 = vpop.f32.mrb[0].mxu0
      %v2486 = vadd.f32 %v2355, %v2485
      %v2487 = vpop.f32.mrb[0].mxu0
      %v2488 = vpop.f32.mrb[0].mxu0
      %v2489 = vadd.f32 %v2355, %v2488
      %v2490 = vpop.f32.mrb[0].mxu0
      %2491 = vmatprep.mubr.bf16.mxu0 %v2433
      %2492 = vmatmul.mubr.bf16.gmra.mrb[0].mxu0 %v2363
      %v2493 = vpop.f32.mrb[0].mxu0
      %v2494 = vadd.f32 %v2355, %v2493
      %v2495 = vpop.f32.mrb[0].mxu0
      %v2496 = vpop.f32.mrb[0].mxu0
      %v2497 = vadd.f32 %v2355, %v2496
      %v2498 = vpop.f32.mrb[0].mxu0
      %2499 = vdwg.mxu0
      %v2500 = vmax.f32 %v2470, 0.0
      %v2501 = vmax.f32 %v2473, 0.0
      %v2502 = vmax.f32 %v2478, 0.0
      %v2503 = vmax.f32 %v2481, 0.0
      %v2504 = vmax.f32 %v2486, 0.0
      %v2505 = vmax.f32 %v2489, 0.0
      %v2506 = vmax.f32 %v2494, 0.0
      %v2507 = vmax.f32 %v2497, 0.0
      %v2508 = vpack.c.bf16 %v2500, %v2500
      %v2509 = vpack.c.bf16 %v2501, %v2501
      %v2510 = vpack.c.bf16 %v2502, %v2502
      %v2511 = vpack.c.bf16 %v2503, %v2503
      %v2512 = vpack.c.bf16 %v2504, %v2504
      %v2513 = vpack.c.bf16 %v2505, %v2505
      %v2514 = vpack.c.bf16 %v2506, %v2506
      %v2515 = vpack.c.bf16 %v2507, %v2507
      %2516 = vst.msk [vmem:[%s224] sm:$0xf] %vm1379, %v2508
      %2517 = vst.msk [vmem:[%s224 + $0x4] sm:$0xf] %vm1379, %v2509
      %2518 = vst.msk [vmem:[%s224 + $0x8] sm:$0xf] %vm1379, %v2510
      %2519 = vst.msk [vmem:[%s224 + $0xc] sm:$0xf] %vm1379, %v2511
      %2520 = vst.msk [vmem:[%s224 + $0x10] sm:$0xf] %vm1379, %v2512
      %2521 = vst.msk [vmem:[%s224 + $0x14] sm:$0xf] %vm1379, %v2513
      %2522 = vst.msk [vmem:[%s224 + $0x18] sm:$0xf] %vm1379, %v2514
      %2523 = vst.msk [vmem:[%s224 + $0x1c] sm:$0xf] %vm1379, %v2515
      %p2524 = scmp.lt.s32.totalorder %s16, 1
      %s2525 = scalar_select %p2524, %s16, 1
      %s2526 = smul.addr %s2525, 8
      %s2527 = smul.addr %s2526, 4
      %s2528 = scalar_lea.vmem %s5, %s2527
      // Predicated region
      $region41: #{encoder_forward.4} parent=39 // pred_check
        %p2529 = pneg %p144
      $region42: #{encoder_forward.4} parent=39 // pred_check_branch
        %2531 = sbr.rel (%p2529) target = $region44
      $region43: #{encoder_forward.4} parent=39 // pred_region
        _
      $region44: #{encoder_forward.4} parent=39 // pred_fallthru
        _
    $region40: #{encoder_forward.4} parent=5 // pred_fallthru
      _
    %p2532 = scmp.le.s32.totalorder 2, %s11
    // Predicated region
    $region45: #{encoder_forward.4} parent=5 // pred_check
      %p2533 = pneg %p2532
    $region46: #{encoder_forward.4} parent=5 // pred_check_branch
      %2535 = sbr.rel (%p2533) target = $region48
    $region47: #{encoder_forward.4} parent=5 // pred_region
      %s2536 = ssub.s32 %s11, 2
      // Predicated region
      $region49: #{encoder_forward.4} parent=47 // pred_check
        %p2537 = pneg %p150
      $region50: #{encoder_forward.4} parent=47 // pred_check_branch
        %2539 = sbr.rel (%p2537) target = $region52
      $region51: #{encoder_forward.4} parent=47 // pred_region
        %p2540 = scmp.lt.s32.totalorder %s17, 1
        %s2541 = scalar_select %p2540, %s17, 1
        %s2542 = smul.addr %s2541, 8
        %s2543 = smul.addr %s2542, 4
        %s2544 = scalar_lea.vmem %s5, %s2543
      $region52: #{encoder_forward.4} parent=47 // pred_fallthru
        _
    $region48: #{encoder_forward.4} parent=5 // pred_fallthru
      _
  $region6: #{encoder_forward.4} parent=0 // loop_footer
    %s15 = sadd.s32 1, %s11
  $region7: #{encoder_forward.4} parent=0 // loop_footer_branch
    %10 = sbr.rel target = $region3
  $region8: #{encoder_forward.4} parent=0 // loop_exit
    _

// kernel: encoder_forward.3
$region0: #{encoder_forward.3}
  #allocation0 [shape = 'u32[]', space=smem, size = 0x4, offset = 0x4, fixed_abs, tag = 'smem constant byte address 0x4 - core index']
  #allocation1 [shape = 'u32[144,128]{1,0:T(1,128)}', space=vmem, size = 0x12000, scoped, tag = 'internal scratch']
  #allocation2 [shape = 'bf16[18,18,4]{2,1,0:T(8,128)(2,1)}', space=vmem, size = 0x1b000, scoped, tag = 'scratch operand']
  #allocation3 [shape = 'bf16[18,18,8]{2,1,0:T(8,128)(2,1)}', space=vmem, size = 0x1b000, scoped, tag = 'scratch operand']
  %s0 = inlined_call_operand.vmem [shape: f32[2,16,16,4], index: 0, kind: input, shape index: {}]
  %s1 = inlined_call_operand.vmem [shape: bf16[36,8], index: 1, kind: input, shape index: {}]
  %s2 = inlined_call_operand.vmem [shape: f32[1,8], index: 2, kind: input, shape index: {}]
  %s3 = inlined_call_operand.vmem [shape: bf16[72,8], index: 3, kind: input, shape index: {}]
  %s4 = inlined_call_operand.vmem [shape: f32[1,8], index: 4, kind: input, shape index: {}]
  %s5 = inlined_call_operand.vmem [shape: bf16[2,16,16,8], index: 5, kind: output, shape index: {}]
  %s6 = sld [smem:[#allocation0]]
  $region53: #{encoder_forward.3} parent=0
    _
  %s8 = ssub.s32 1, %s6
  %s9 = scalar_select 0, %s8, %s6
  loop: start=0, step=1, limit=4
  $region2: #{encoder_forward.3} parent=0 // loop_pre_header
    _
  $region3: #{encoder_forward.3} parent=0 // loop_header
    %s11 = sphi 0, %s15
    %p12 = scmp.ge.s32.totalorder %s11, 4
    %s21 = sphi 0, %s23
    %s24 = sphi 0, %s21
    %s25 = sphi 0, %s24
    %s41 = sphi 0, %s25
    %s45 = sphi 0, %s45
    %s47 = sphi 0, %s45
    %s48 = sphi 0, %s47
    %s62 = sphi 0, %s48
    %s66 = sphi 0, %s66
    %s68 = sphi 0, %s66
    %s69 = sphi 0, %s68
    %s83 = sphi 0, %s69
    %s87 = sphi 0, %s87
    %s89 = sphi 0, %s87
    %s90 = sphi 0, %s89
    %s104 = sphi 0, %s90
    %s108 = sphi 0, %s108
    %s110 = sphi 0, %s108
    %s111 = sphi 0, %s110
    %s125 = sphi 0, %s111
    %s131 = sphi 0, %s133
    %s134 = sphi 0, %s131
    %s135 = sphi 0, %s134
    %s151 = sphi 0, %s135
  $region4: #{encoder_forward.3} parent=0 // loop_header_branch
    %14 = sbr.rel (%p12) target = $region8
  $region5: #{encoder_forward.3} parent=0 // loop_body
    %s16 = ssub.s32 %s11, 1
    %s17 = ssub.s32 %s11, 2
    %s18 = sadd.s32 %s11, 1
    %s19 = ssub.s32 %s11, %s18
    %p20 = scmp.eq.s32.totalorder %s19, 0
    %s22 = sadd.s32 %s21, 1
    %s23 = scalar_select %p20, %s21, %s22
    %p26 = pneg %p20
    %p27 = scmp.eq.s32.totalorder %s11, 1
    %p28 = por %p26, %p27
    %p29 = scmp.ne.s32.totalorder %s21, %s24
    %p30 = scmp.eq.s32.totalorder %s11, 0
    %p31 = por %p29, %p30
    %p32 = scmp.ne.s32.totalorder %s21, %s24
    %p33 = scmp.eq.s32.totalorder %s16, 1
    %p34 = por %p32, %p33
    %p35 = scmp.ne.s32.totalorder %s24, %s25
    %p36 = scmp.eq.s32.totalorder %s16, 0
    %p37 = por %p35, %p36
    %p38 = scmp.ne.s32.totalorder %s24, %s25
    %p39 = scmp.eq.s32.totalorder %s17, 1
    %p40 = por %p38, %p39
    %p42 = scmp.ne.s32.totalorder %s25, %s41
    %p43 = scmp.eq.s32.totalorder %s17, 0
    %p44 = por %p42, %p43
    %s46 = sadd.s32 %s45, 1
    %p49 = scmp.eq.s32.totalorder %s11, 1
    %p50 = scmp.ne.s32.totalorder %s45, %s47
    %p51 = scmp.eq.s32.totalorder %s11, 0
    %p52 = por %p50, %p51
    %p53 = scmp.ne.s32.totalorder %s45, %s47
    %p54 = scmp.eq.s32.totalorder %s16, 1
    %p55 = por %p53, %p54
    %p56 = scmp.ne.s32.totalorder %s47, %s48
    %p57 = scmp.eq.s32.totalorder %s16, 0
    %p58 = por %p56, %p57
    %p59 = scmp.ne.s32.totalorder %s47, %s48
    %p60 = scmp.eq.s32.totalorder %s17, 1
    %p61 = por %p59, %p60
    %p63 = scmp.ne.s32.totalorder %s48, %s62
    %p64 = scmp.eq.s32.totalorder %s17, 0
    %p65 = por %p63, %p64
    %s67 = sadd.s32 %s66, 1
    %p70 = scmp.eq.s32.totalorder %s11, 1
    %p71 = scmp.ne.s32.totalorder %s66, %s68
    %p72 = scmp.eq.s32.totalorder %s11, 0
    %p73 = por %p71, %p72
    %p74 = scmp.ne.s32.totalorder %s66, %s68
    %p75 = scmp.eq.s32.totalorder %s16, 1
    %p76 = por %p74, %p75
    %p77 = scmp.ne.s32.totalorder %s68, %s69
    %p78 = scmp.eq.s32.totalorder %s16, 0
    %p79 = por %p77, %p78
    %p80 = scmp.ne.s32.totalorder %s68, %s69
    %p81 = scmp.eq.s32.totalorder %s17, 1
    %p82 = por %p80, %p81
    %p84 = scmp.ne.s32.totalorder %s69, %s83
    %p85 = scmp.eq.s32.totalorder %s17, 0
    %p86 = por %p84, %p85
    %s88 = sadd.s32 %s87, 1
    %p91 = scmp.eq.s32.totalorder %s11, 1
    %p92 = scmp.ne.s32.totalorder %s87, %s89
    %p93 = scmp.eq.s32.totalorder %s11, 0
    %p94 = por %p92, %p93
    %p95 = scmp.ne.s32.totalorder %s87, %s89
    %p96 = scmp.eq.s32.totalorder %s16, 1
    %p97 = por %p95, %p96
    %p98 = scmp.ne.s32.totalorder %s89, %s90
    %p99 = scmp.eq.s32.totalorder %s16, 0
    %p100 = por %p98, %p99
    %p101 = scmp.ne.s32.totalorder %s89, %s90
    %p102 = scmp.eq.s32.totalorder %s17, 1
    %p103 = por %p101, %p102
    %p105 = scmp.ne.s32.totalorder %s90, %s104
    %p106 = scmp.eq.s32.totalorder %s17, 0
    %p107 = por %p105, %p106
    %s109 = sadd.s32 %s108, 1
    %p112 = scmp.eq.s32.totalorder %s11, 1
    %p113 = scmp.ne.s32.totalorder %s108, %s110
    %p114 = scmp.eq.s32.totalorder %s11, 0
    %p115 = por %p113, %p114
    %p116 = scmp.ne.s32.totalorder %s108, %s110
    %p117 = scmp.eq.s32.totalorder %s16, 1
    %p118 = por %p116, %p117
    %p119 = scmp.ne.s32.totalorder %s110, %s111
    %p120 = scmp.eq.s32.totalorder %s16, 0
    %p121 = por %p119, %p120
    %p122 = scmp.ne.s32.totalorder %s110, %s111
    %p123 = scmp.eq.s32.totalorder %s17, 1
    %p124 = por %p122, %p123
    %p126 = scmp.ne.s32.totalorder %s111, %s125
    %p127 = scmp.eq.s32.totalorder %s17, 0
    %p128 = por %p126, %p127
    %s129 = ssub.s32 %s11, %s18
    %p130 = scmp.eq.s32.totalorder %s129, 0
    %s132 = sadd.s32 %s131, 1
    %s133 = scalar_select %p130, %s131, %s132
    %p136 = pneg %p130
    %p137 = scmp.eq.s32.totalorder %s11, 1
    %p138 = por %p136, %p137
    %p139 = scmp.ne.s32.totalorder %s131, %s134
    %p140 = scmp.eq.s32.totalorder %s11, 0
    %p141 = por %p139, %p140
    %p142 = scmp.ne.s32.totalorder %s131, %s134
    %p143 = scmp.eq.s32.totalorder %s16, 1
    %p144 = por %p142, %p143
    %p145 = scmp.ne.s32.totalorder %s134, %s135
    %p146 = scmp.eq.s32.totalorder %s16, 0
    %p147 = por %p145, %p146
    %p148 = scmp.ne.s32.totalorder %s134, %s135
    %p149 = scmp.eq.s32.totalorder %s17, 1
    %p150 = por %p148, %p149
    %p152 = scmp.ne.s32.totalorder %s135, %s151
    %p153 = scmp.eq.s32.totalorder %s17, 0
    %p154 = por %p152, %p153
    %p155 = scmp.le.s32.totalorder 1, %s11
    %p156 = scmp.lt.s32.totalorder %s11, 3
    %p157 = pnand %p155, %p156
    %p158 = pneg %p157
    // Predicated region
    $region9: #{encoder_forward.3} parent=5 // pred_check
      _
    $region10: #{encoder_forward.3} parent=5 // pred_check_branch
      %160 = sbr.rel (%p157) target = $region12
    $region11: #{encoder_forward.3} parent=5 // pred_region
      %s161 = ssub.s32 %s11, 1
      // Predicated region
      $region13: #{encoder_forward.3} parent=11 // pred_check
        %p162 = pneg %p58
      $region14: #{encoder_forward.3} parent=11 // pred_check_branch
        %164 = sbr.rel (%p162) target = $region16
      $region15: #{encoder_forward.3} parent=11 // pred_region
        _
      $region16: #{encoder_forward.3} parent=11 // pred_fallthru
        _
      // Predicated region
      $region17: #{encoder_forward.3} parent=11 // pred_check
        %p165 = pneg %p79
      $region18: #{encoder_forward.3} parent=11 // pred_check_branch
        %167 = sbr.rel (%p165) target = $region20
      $region19: #{encoder_forward.3} parent=11 // pred_region
        _
      $region20: #{encoder_forward.3} parent=11 // pred_fallthru
        _
      // Predicated region
      $region21: #{encoder_forward.3} parent=11 // pred_check
        %p168 = pneg %p100
      $region22: #{encoder_forward.3} parent=11 // pred_check_branch
        %170 = sbr.rel (%p168) target = $region24
      $region23: #{encoder_forward.3} parent=11 // pred_region
        _
      $region24: #{encoder_forward.3} parent=11 // pred_fallthru
        _
      // Predicated region
      $region25: #{encoder_forward.3} parent=11 // pred_check
        %p171 = pneg %p121
      $region26: #{encoder_forward.3} parent=11 // pred_check_branch
        %173 = sbr.rel (%p171) target = $region28
      $region27: #{encoder_forward.3} parent=11 // pred_region
        _
      $region28: #{encoder_forward.3} parent=11 // pred_fallthru
        _
    $region12: #{encoder_forward.3} parent=5 // pred_fallthru
      _
    %p174 = scmp.lt.s32.totalorder %s11, 2
    // Predicated region
    $region29: #{encoder_forward.3} parent=5 // pred_check
      %p175 = pneg %p174
    $region30: #{encoder_forward.3} parent=5 // pred_check_branch
      %177 = sbr.rel (%p175) target = $region32
    $region31: #{encoder_forward.3} parent=5 // pred_region
      // Predicated region
      $region33: #{encoder_forward.3} parent=31 // pred_check
        %p178 = pneg %p31
      $region34: #{encoder_forward.3} parent=31 // pred_check_branch
        %180 = sbr.rel (%p178) target = $region36
      $region35: #{encoder_forward.3} parent=31 // pred_region
        %p181 = scmp.lt.s32.totalorder %s11, 1
        %s182 = scalar_select %p181, %s11, 1
        %s183 = smul.addr %s182, 32
        %s184 = smul.addr %s183, 8
        %s185 = scalar_lea.vmem %s0, %s184
      $region36: #{encoder_forward.3} parent=31 // pred_fallthru
        _
    $region32: #{encoder_forward.3} parent=5 // pred_fallthru
      _
    %p186 = scmp.le.s32.totalorder 1, %s11
    %p187 = scmp.lt.s32.totalorder %s11, 3
    %p188 = pnand %p186, %p187
    %p189 = pneg %p188
    // Predicated region
    $region37: #{encoder_forward.3} parent=5 // pred_check
      _
    $region38: #{encoder_forward.3} parent=5 // pred_check_branch
      %191 = sbr.rel (%p188) target = $region40
    $region39: #{encoder_forward.3} parent=5 // pred_region
      %s192 = ssub.s32 %s11, 1
      %p193 = scmp.lt.s32.totalorder %s16, 1
      %s194 = scalar_select %p193, %s16, 1
      %s195 = smul.addr %s194, 32
      %s196 = smul.addr %s195, 8
      %s197 = scalar_lea.vmem %s0, %s196
      %p198 = pneg %p37
      %p199 = pneg %p34
      %p200 = pneg %p58
      %p201 = pneg %p55
      %p202 = pneg %p79
      %p203 = pneg %p76
      %p204 = pneg %p100
      %p205 = pneg %p97
      %p206 = pneg %p121
      %p207 = pneg %p118
      %p208 = pneg %p147
      %p209 = pneg %p144
      %p210 = scmp.lt.s32.totalorder %s16, 1
      %s211 = scalar_select %p210, %s16, 1
      %s212 = smul.addr %s211, 32
      %s213 = smul.addr %s212, 4
      %s214 = scalar_lea.vmem %s5, %s213
      %p215 = scmp.lt.s32.totalorder %s16, 1
      %s216 = scalar_select %p215, %s16, 1
      %s217 = smul.addr %s216, 32
      %s218 = smul.addr %s217, 8
      %s219 = scalar_lea.vmem %s0, %s218
      %p220 = scmp.lt.s32.totalorder %s16, 1
      %s221 = scalar_select %p220, %s16, 1
      %s222 = smul.addr %s221, 32
      %s223 = smul.addr %s222, 4
      %s224 = scalar_lea.vmem %s5, %s223
      %v226 = vld [vmem:[%s219] sm:$0xff]
      %v227 = vld [vmem:[%s219 + $0x8] sm:$0xff]
      %v228 = vld [vmem:[%s219 + $0x10] sm:$0xff]
      %v229 = vld [vmem:[%s219 + $0x18] sm:$0xff]
      %v230 = vld [vmem:[%s219 + $0x20] sm:$0xff]
      %v231 = vld [vmem:[%s219 + $0x28] sm:$0xff]
      %v232 = vld [vmem:[%s219 + $0x30] sm:$0xff]
      %v233 = vld [vmem:[%s219 + $0x38] sm:$0xff]
      %v234 = vld [vmem:[%s219 + $0x40] sm:$0xff]
      %v235 = vld [vmem:[%s219 + $0x48] sm:$0xff]
      %v236 = vld [vmem:[%s219 + $0x50] sm:$0xff]
      %v237 = vld [vmem:[%s219 + $0x58] sm:$0xff]
      %v238 = vld [vmem:[%s219 + $0x60] sm:$0xff]
      %v239 = vld [vmem:[%s219 + $0x68] sm:$0xff]
      %v240 = vld [vmem:[%s219 + $0x70] sm:$0xff]
      %v241 = vld [vmem:[%s219 + $0x78] sm:$0xff]
      %v242 = vld [vmem:[%s219 + $0x80] sm:$0xff]
      %v243 = vld [vmem:[%s219 + $0x88] sm:$0xff]
      %v244 = vld [vmem:[%s219 + $0x90] sm:$0xff]
      %v245 = vld [vmem:[%s219 + $0x98] sm:$0xff]
      %v246 = vld [vmem:[%s219 + $0xa0] sm:$0xff]
      %v247 = vld [vmem:[%s219 + $0xa8] sm:$0xff]
      %v248 = vld [vmem:[%s219 + $0xb0] sm:$0xff]
      %v249 = vld [vmem:[%s219 + $0xb8] sm:$0xff]
      %v250 = vld [vmem:[%s219 + $0xc0] sm:$0xff]
      %v251 = vld [vmem:[%s219 + $0xc8] sm:$0xff]
      %v252 = vld [vmem:[%s219 + $0xd0] sm:$0xff]
      %v253 = vld [vmem:[%s219 + $0xd8] sm:$0xff]
      %v254 = vld [vmem:[%s219 + $0xe0] sm:$0xff]
      %v255 = vld [vmem:[%s219 + $0xe8] sm:$0xff]
      %v256 = vld [vmem:[%s219 + $0xf0] sm:$0xff]
      %v257 = vld [vmem:[%s219 + $0xf8] sm:$0xff]
      %v258 = vpack.c.bf16 %v227, %v226
      %v259 = vpack.c.bf16 %v229, %v228
      %v260 = vpack.c.bf16 %v231, %v230
      %v261 = vpack.c.bf16 %v233, %v232
      %v262 = vpack.c.bf16 %v235, %v234
      %v263 = vpack.c.bf16 %v237, %v236
      %v264 = vpack.c.bf16 %v239, %v238
      %v265 = vpack.c.bf16 %v241, %v240
      %v266 = vpack.c.bf16 %v243, %v242
      %v267 = vpack.c.bf16 %v245, %v244
      %v268 = vpack.c.bf16 %v247, %v246
      %v269 = vpack.c.bf16 %v249, %v248
      %v270 = vpack.c.bf16 %v251, %v250
      %v271 = vpack.c.bf16 %v253, %v252
      %v272 = vpack.c.bf16 %v255, %v254
      %v273 = vpack.c.bf16 %v257, %v256
      %vm274 = vcmask 27648
      %275 = vst.msk [vmem:[#allocation2] sm:$0xf] %vm274, 0
      %276 = vst.msk [vmem:[#allocation2 + $0x4] sm:$0xf] %vm274, 0
      %vm277 = vcmask 24576
      %278 = vst.msk [vmem:[#allocation2 + $0x8] sm:$0x1] %vm277, 0
      %s279 = scalar_lea.vmem [#allocation2], 204
      %280 = vst.msk [vmem:[%s279] sm:$0xf] %vm274, 0
      %281 = vst.msk [vmem:[%s279 + $0x4] sm:$0xf] %vm274, 0
      %282 = vst.msk [vmem:[%s279 + $0x8] sm:$0x1] %vm277, 0
      %s283 = scalar_lea.vmem [#allocation2], 12
      %vm284 = vcmask 24576
      %vm285 = vsmask.f32 256
      %vm286 = vmand %vm284, %vm285
      %v287 = vld [vmem:[%s283] sm:$0x1]
      %v288 = vsel %vm286, 0, %v287
      %289 = vst [vmem:[%s283] sm:$0x1] %v288
      %v290 = vld [vmem:[%s283 + $0xc] sm:$0x1]
      %v291 = vsel %vm286, 0, %v290
      %292 = vst [vmem:[%s283 + $0xc] sm:$0x1] %v291
      %v293 = vld [vmem:[%s283 + $0x18] sm:$0x1]
      %v294 = vsel %vm286, 0, %v293
      %295 = vst [vmem:[%s283 + $0x18] sm:$0x1] %v294
      %v296 = vld [vmem:[%s283 + $0x24] sm:$0x1]
      %v297 = vsel %vm286, 0, %v296
      %298 = vst [vmem:[%s283 + $0x24] sm:$0x1] %v297
      %v299 = vld [vmem:[%s283 + $0x30] sm:$0x1]
      %v300 = vsel %vm286, 0, %v299
      %301 = vst [vmem:[%s283 + $0x30] sm:$0x1] %v300
      %v302 = vld [vmem:[%s283 + $0x3c] sm:$0x1]
      %v303 = vsel %vm286, 0, %v302
      %304 = vst [vmem:[%s283 + $0x3c] sm:$0x1] %v303
      %v305 = vld [vmem:[%s283 + $0x48] sm:$0x1]
      %v306 = vsel %vm286, 0, %v305
      %307 = vst [vmem:[%s283 + $0x48] sm:$0x1] %v306
      %v308 = vld [vmem:[%s283 + $0x54] sm:$0x1]
      %v309 = vsel %vm286, 0, %v308
      %310 = vst [vmem:[%s283 + $0x54] sm:$0x1] %v309
      %v311 = vld [vmem:[%s283 + $0x60] sm:$0x1]
      %v312 = vsel %vm286, 0, %v311
      %313 = vst [vmem:[%s283 + $0x60] sm:$0x1] %v312
      %v314 = vld [vmem:[%s283 + $0x6c] sm:$0x1]
      %v315 = vsel %vm286, 0, %v314
      %316 = vst [vmem:[%s283 + $0x6c] sm:$0x1] %v315
      %v317 = vld [vmem:[%s283 + $0x78] sm:$0x1]
      %v318 = vsel %vm286, 0, %v317
      %319 = vst [vmem:[%s283 + $0x78] sm:$0x1] %v318
      %v320 = vld [vmem:[%s283 + $0x84] sm:$0x1]
      %v321 = vsel %vm286, 0, %v320
      %322 = vst [vmem:[%s283 + $0x84] sm:$0x1] %v321
      %v323 = vld [vmem:[%s283 + $0x90] sm:$0x1]
      %v324 = vsel %vm286, 0, %v323
      %325 = vst [vmem:[%s283 + $0x90] sm:$0x1] %v324
      %v326 = vld [vmem:[%s283 + $0x9c] sm:$0x1]
      %v327 = vsel %vm286, 0, %v326
      %328 = vst [vmem:[%s283 + $0x9c] sm:$0x1] %v327
      %v329 = vld [vmem:[%s283 + $0xa8] sm:$0x1]
      %v330 = vsel %vm286, 0, %v329
      %331 = vst [vmem:[%s283 + $0xa8] sm:$0x1] %v330
      %v332 = vld [vmem:[%s283 + $0xb4] sm:$0x1]
      %v333 = vsel %vm286, 0, %v332
      %334 = vst [vmem:[%s283 + $0xb4] sm:$0x1] %v333
      %vm335 = vsmask.f32 7938
      %vm336 = vmand %vm284, %vm335
      %v337 = vld [vmem:[%s283 + $0x8] sm:$0x1]
      %v338 = vsel %vm336, 0, %v337
      %339 = vst [vmem:[%s283 + $0x8] sm:$0x1] %v338
      %v340 = vld [vmem:[%s283 + $0x14] sm:$0x1]
      %v341 = vsel %vm336, 0, %v340
      %342 = vst [vmem:[%s283 + $0x14] sm:$0x1] %v341
      %v343 = vld [vmem:[%s283 + $0x20] sm:$0x1]
      %v344 = vsel %vm336, 0, %v343
      %345 = vst [vmem:[%s283 + $0x20] sm:$0x1] %v344
      %v346 = vld [vmem:[%s283 + $0x2c] sm:$0x1]
      %v347 = vsel %vm336, 0, %v346
      %348 = vst [vmem:[%s283 + $0x2c] sm:$0x1] %v347
      %v349 = vld [vmem:[%s283 + $0x38] sm:$0x1]
      %v350 = vsel %vm336, 0, %v349
      %351 = vst [vmem:[%s283 + $0x38] sm:$0x1] %v350
      %v352 = vld [vmem:[%s283 + $0x44] sm:$0x1]
      %v353 = vsel %vm336, 0, %v352
      %354 = vst [vmem:[%s283 + $0x44] sm:$0x1] %v353
      %v355 = vld [vmem:[%s283 + $0x50] sm:$0x1]
      %v356 = vsel %vm336, 0, %v355
      %357 = vst [vmem:[%s283 + $0x50] sm:$0x1] %v356
      %v358 = vld [vmem:[%s283 + $0x5c] sm:$0x1]
      %v359 = vsel %vm336, 0, %v358
      %360 = vst [vmem:[%s283 + $0x5c] sm:$0x1] %v359
      %v361 = vld [vmem:[%s283 + $0x68] sm:$0x1]
      %v362 = vsel %vm336, 0, %v361
      %363 = vst [vmem:[%s283 + $0x68] sm:$0x1] %v362
      %v364 = vld [vmem:[%s283 + $0x74] sm:$0x1]
      %v365 = vsel %vm336, 0, %v364
      %366 = vst [vmem:[%s283 + $0x74] sm:$0x1] %v365
      %v367 = vld [vmem:[%s283 + $0x80] sm:$0x1]
      %v368 = vsel %vm336, 0, %v367
      %369 = vst [vmem:[%s283 + $0x80] sm:$0x1] %v368
      %v370 = vld [vmem:[%s283 + $0x8c] sm:$0x1]
      %v371 = vsel %vm336, 0, %v370
      %372 = vst [vmem:[%s283 + $0x8c] sm:$0x1] %v371
      %v373 = vld [vmem:[%s283 + $0x98] sm:$0x1]
      %v374 = vsel %vm336, 0, %v373
      %375 = vst [vmem:[%s283 + $0x98] sm:$0x1] %v374
      %v376 = vld [vmem:[%s283 + $0xa4] sm:$0x1]
      %v377 = vsel %vm336, 0, %v376
      %378 = vst [vmem:[%s283 + $0xa4] sm:$0x1] %v377
      %v379 = vld [vmem:[%s283 + $0xb0] sm:$0x1]
      %v380 = vsel %vm336, 0, %v379
      %381 = vst [vmem:[%s283 + $0xb0] sm:$0x1] %v380
      %v382 = vld [vmem:[%s283 + $0xbc] sm:$0x1]
      %v383 = vsel %vm336, 0, %v382
      %384 = vst [vmem:[%s283 + $0xbc] sm:$0x1] %v383
      %v401 = vunpack.c.l.b16 %v258
      %v402 = vunpack.c.h.b16 %v258
      %v403 = vunpack.c.l.b16 %v259
      %v404 = vunpack.c.h.b16 %v259
      %v405 = vunpack.c.l.b16 %v260
      %v406 = vunpack.c.h.b16 %v260
      %v407 = vunpack.c.l.b16 %v261
      %v408 = vunpack.c.h.b16 %v261
      %v409 = vunpack.c.l.b16 %v262
      %v410 = vunpack.c.h.b16 %v262
      %v411 = vunpack.c.l.b16 %v263
      %v412 = vunpack.c.h.b16 %v263
      %v413 = vunpack.c.l.b16 %v264
      %v414 = vunpack.c.h.b16 %v264
      %v415 = vunpack.c.l.b16 %v265
      %v416 = vunpack.c.h.b16 %v265
      %v417 = vunpack.c.l.b16 %v266
      %v418 = vunpack.c.h.b16 %v266
      %v419 = vunpack.c.l.b16 %v267
      %v420 = vunpack.c.h.b16 %v267
      %v421 = vunpack.c.l.b16 %v268
      %v422 = vunpack.c.h.b16 %v268
      %v423 = vunpack.c.l.b16 %v269
      %v424 = vunpack.c.h.b16 %v269
      %v425 = vunpack.c.l.b16 %v270
      %v426 = vunpack.c.h.b16 %v270
      %v427 = vunpack.c.l.b16 %v271
      %v428 = vunpack.c.h.b16 %v271
      %v429 = vunpack.c.l.b16 %v272
      %v430 = vunpack.c.h.b16 %v272
      %v431 = vunpack.c.l.b16 %v273
      %v432 = vunpack.c.h.b16 %v273
      %v433 = vpack.c.b16 %v401, %v401
      %v434 = vpack.c.b16 %v402, %v402
      %v435 = vpack.c.b16 %v403, %v403
      %v436 = vpack.c.b16 %v404, %v404
      %v437 = vpack.c.b16 %v405, %v405
      %v438 = vpack.c.b16 %v406, %v406
      %v439 = vpack.c.b16 %v407, %v407
      %v440 = vpack.c.b16 %v408, %v408
      %v441 = vpack.c.b16 %v409, %v409
      %v442 = vpack.c.b16 %v410, %v410
      %v443 = vpack.c.b16 %v411, %v411
      %v444 = vpack.c.b16 %v412, %v412
      %v445 = vpack.c.b16 %v413, %v413
      %v446 = vpack.c.b16 %v414, %v414
      %v447 = vpack.c.b16 %v415, %v415
      %v448 = vpack.c.b16 %v416, %v416
      %v449 = vpack.c.b16 %v417, %v417
      %v450 = vpack.c.b16 %v418, %v418
      %v451 = vpack.c.b16 %v419, %v419
      %v452 = vpack.c.b16 %v420, %v420
      %v453 = vpack.c.b16 %v421, %v421
      %v454 = vpack.c.b16 %v422, %v422
      %v455 = vpack.c.b16 %v423, %v423
      %v456 = vpack.c.b16 %v424, %v424
      %v457 = vpack.c.b16 %v425, %v425
      %v458 = vpack.c.b16 %v426, %v426
      %v459 = vpack.c.b16 %v427, %v427
      %v460 = vpack.c.b16 %v428, %v428
      %v461 = vpack.c.b16 %v429, %v429
      %v462 = vpack.c.b16 %v430, %v430
      %v463 = vpack.c.b16 %v431, %v431
      %v464 = vpack.c.b16 %v432, %v432
      %vm465 = vsmask.f32 4368
      %vm466 = vmor %vm285, %vm465
      %v468 = vshrl.u32 %v433, 16
      %v470 = vrot.slane %v468, 7
      %v471 = vshll.u32 %v433, 16
      %v473 = vor.u32 %v470, %v471
      %v474 = vrot.slane %v470, 4
      %v476 = vshrl.u32 %v434, 16
      %v478 = vrot.slane %v476, 7
      %v479 = vshll.u32 %v434, 16
      %v481 = vor.u32 %v478, %v479
      %v482 = vsel %vm466, %v474, %v481
      %v483 = vrot.slane %v478, 4
      %v485 = vshrl.u32 %v435, 16
      %v487 = vrot.slane %v485, 7
      %v488 = vshll.u32 %v435, 16
      %v490 = vor.u32 %v487, %v488
      %v491 = vrot.slane %v487, 4
      %v493 = vshrl.u32 %v436, 16
      %v495 = vrot.slane %v493, 7
      %v496 = vshll.u32 %v436, 16
      %v498 = vor.u32 %v495, %v496
      %v499 = vsel %vm466, %v491, %v498
      %v500 = vrot.slane %v495, 4
      %v502 = vshrl.u32 %v437, 16
      %v504 = vrot.slane %v502, 7
      %v505 = vshll.u32 %v437, 16
      %v507 = vor.u32 %v504, %v505
      %v508 = vrot.slane %v504, 4
      %v510 = vshrl.u32 %v438, 16
      %v512 = vrot.slane %v510, 7
      %v513 = vshll.u32 %v438, 16
      %v515 = vor.u32 %v512, %v513
      %v516 = vsel %vm466, %v508, %v515
      %v517 = vrot.slane %v512, 4
      %v519 = vshrl.u32 %v439, 16
      %v521 = vrot.slane %v519, 7
      %v522 = vshll.u32 %v439, 16
      %v524 = vor.u32 %v521, %v522
      %v525 = vrot.slane %v521, 4
      %v527 = vshrl.u32 %v440, 16
      %v529 = vrot.slane %v527, 7
      %v530 = vshll.u32 %v440, 16
      %v532 = vor.u32 %v529, %v530
      %v533 = vsel %vm466, %v525, %v532
      %v534 = vrot.slane %v529, 4
      %v536 = vshrl.u32 %v441, 16
      %v538 = vrot.slane %v536, 7
      %v539 = vshll.u32 %v441, 16
      %v541 = vor.u32 %v538, %v539
      %v542 = vrot.slane %v538, 4
      %v544 = vshrl.u32 %v442, 16
      %v546 = vrot.slane %v544, 7
      %v547 = vshll.u32 %v442, 16
      %v549 = vor.u32 %v546, %v547
      %v550 = vsel %vm466, %v542, %v549
      %v551 = vrot.slane %v546, 4
      %v553 = vshrl.u32 %v443, 16
      %v555 = vrot.slane %v553, 7
      %v556 = vshll.u32 %v443, 16
      %v558 = vor.u32 %v555, %v556
      %v559 = vrot.slane %v555, 4
      %v561 = vshrl.u32 %v444, 16
      %v563 = vrot.slane %v561, 7
      %v564 = vshll.u32 %v444, 16
      %v566 = vor.u32 %v563, %v564
      %v567 = vsel %vm466, %v559, %v566
      %v568 = vrot.slane %v563, 4
      %v570 = vshrl.u32 %v445, 16
      %v572 = vrot.slane %v570, 7
      %v573 = vshll.u32 %v445, 16
      %v575 = vor.u32 %v572, %v573
      %v576 = vrot.slane %v572, 4
      %v578 = vshrl.u32 %v446, 16
      %v580 = vrot.slane %v578, 7
      %v581 = vshll.u32 %v446, 16
      %v583 = vor.u32 %v580, %v581
      %v584 = vsel %vm466, %v576, %v583
      %v585 = vrot.slane %v580, 4
      %v587 = vshrl.u32 %v447, 16
      %v589 = vrot.slane %v587, 7
      %v590 = vshll.u32 %v447, 16
      %v592 = vor.u32 %v589, %v590
      %v593 = vrot.slane %v589, 4
      %v595 = vshrl.u32 %v448, 16
      %v597 = vrot.slane %v595, 7
      %v598 = vshll.u32 %v448, 16
      %v600 = vor.u32 %v597, %v598
      %v601 = vsel %vm466, %v593, %v600
      %v602 = vrot.slane %v597, 4
      %v604 = vshrl.u32 %v449, 16
      %v606 = vrot.slane %v604, 7
      %v607 = vshll.u32 %v449, 16
      %v609 = vor.u32 %v606, %v607
      %v610 = vrot.slane %v606, 4
      %v612 = vshrl.u32 %v450, 16
      %v614 = vrot.slane %v612, 7
      %v615 = vshll.u32 %v450, 16
      %v617 = vor.u32 %v614, %v615
      %v618 = vsel %vm466, %v610, %v617
      %v619 = vrot.slane %v614, 4
      %v621 = vshrl.u32 %v451, 16
      %v623 = vrot.slane %v621, 7
      %v624 = vshll.u32 %v451, 16
      %v626 = vor.u32 %v623, %v624
      %v627 = vrot.slane %v623, 4
      %v629 = vshrl.u32 %v452, 16
      %v631 = vrot.slane %v629, 7
      %v632 = vshll.u32 %v452, 16
      %v634 = vor.u32 %v631, %v632
      %v635 = vsel %vm466, %v627, %v634
      %v636 = vrot.slane %v631, 4
      %v638 = vshrl.u32 %v453, 16
      %v640 = vrot.slane %v638, 7
      %v641 = vshll.u32 %v453, 16
      %v643 = vor.u32 %v640, %v641
      %v644 = vrot.slane %v640, 4
      %v646 = vshrl.u32 %v454, 16
      %v648 = vrot.slane %v646, 7
      %v649 = vshll.u32 %v454, 16
      %v651 = vor.u32 %v648, %v649
      %v652 = vsel %vm466, %v644, %v651
      %v653 = vrot.slane %v648, 4
      %v655 = vshrl.u32 %v455, 16
      %v657 = vrot.slane %v655, 7
      %v658 = vshll.u32 %v455, 16
      %v660 = vor.u32 %v657, %v658
      %v661 = vrot.slane %v657, 4
      %v663 = vshrl.u32 %v456, 16
      %v665 = vrot.slane %v663, 7
      %v666 = vshll.u32 %v456, 16
      %v668 = vor.u32 %v665, %v666
      %v669 = vsel %vm466, %v661, %v668
      %v670 = vrot.slane %v665, 4
      %v672 = vshrl.u32 %v457, 16
      %v674 = vrot.slane %v672, 7
      %v675 = vshll.u32 %v457, 16
      %v677 = vor.u32 %v674, %v675
      %v678 = vrot.slane %v674, 4
      %v680 = vshrl.u32 %v458, 16
      %v682 = vrot.slane %v680, 7
      %v683 = vshll.u32 %v458, 16
      %v685 = vor.u32 %v682, %v683
      %v686 = vsel %vm466, %v678, %v685
      %v687 = vrot.slane %v682, 4
      %v689 = vshrl.u32 %v459, 16
      %v691 = vrot.slane %v689, 7
      %v692 = vshll.u32 %v459, 16
      %v694 = vor.u32 %v691, %v692
      %v695 = vrot.slane %v691, 4
      %v697 = vshrl.u32 %v460, 16
      %v699 = vrot.slane %v697, 7
      %v700 = vshll.u32 %v460, 16
      %v702 = vor.u32 %v699, %v700
      %v703 = vsel %vm466, %v695, %v702
      %v704 = vrot.slane %v699, 4
      %v706 = vshrl.u32 %v461, 16
      %v708 = vrot.slane %v706, 7
      %v709 = vshll.u32 %v461, 16
      %v711 = vor.u32 %v708, %v709
      %v712 = vrot.slane %v708, 4
      %v714 = vshrl.u32 %v462, 16
      %v716 = vrot.slane %v714, 7
      %v717 = vshll.u32 %v462, 16
      %v719 = vor.u32 %v716, %v717
      %v720 = vsel %vm466, %v712, %v719
      %v721 = vrot.slane %v716, 4
      %v723 = vshrl.u32 %v463, 16
      %v725 = vrot.slane %v723, 7
      %v726 = vshll.u32 %v463, 16
      %v728 = vor.u32 %v725, %v726
      %v729 = vrot.slane %v725, 4
      %v731 = vshrl.u32 %v464, 16
      %v733 = vrot.slane %v731, 7
      %v734 = vshll.u32 %v464, 16
      %v736 = vor.u32 %v733, %v734
      %v737 = vsel %vm466, %v729, %v736
      %v738 = vrot.slane %v733, 4
      %vm787 = vcmask 27648
      %vm788 = vmand %vm787, %vm335
      %v789 = vld [vmem:[%s283] sm:$0xf]
      %v790 = vsel %vm788, %v473, %v789
      %791 = vst [vmem:[%s283] sm:$0xf] %v790
      %792 = vst.msk [vmem:[%s283 + $0x4] sm:$0xf] %vm274, %v482
      %v793 = vld [vmem:[%s283 + $0x8] sm:$0x1]
      %v794 = vsel %vm286, %v483, %v793
      %795 = vst [vmem:[%s283 + $0x8] sm:$0x1] %v794
      %v796 = vld [vmem:[%s283 + $0xc] sm:$0xf]
      %v797 = vsel %vm788, %v490, %v796
      %798 = vst [vmem:[%s283 + $0xc] sm:$0xf] %v797
      %799 = vst.msk [vmem:[%s283 + $0x10] sm:$0xf] %vm274, %v499
      %v800 = vld [vmem:[%s283 + $0x14] sm:$0x1]
      %v801 = vsel %vm286, %v500, %v800
      %802 = vst [vmem:[%s283 + $0x14] sm:$0x1] %v801
      %v803 = vld [vmem:[%s283 + $0x18] sm:$0xf]
      %v804 = vsel %vm788, %v507, %v803
      %805 = vst [vmem:[%s283 + $0x18] sm:$0xf] %v804
      %806 = vst.msk [vmem:[%s283 + $0x1c] sm:$0xf] %vm274, %v516
      %v807 = vld [vmem:[%s283 + $0x20] sm:$0x1]
      %v808 = vsel %vm286, %v517, %v807
      %809 = vst [vmem:[%s283 + $0x20] sm:$0x1] %v808
      %v810 = vld [vmem:[%s283 + $0x24] sm:$0xf]
      %v811 = vsel %vm788, %v524, %v810
      %812 = vst [vmem:[%s283 + $0x24] sm:$0xf] %v811
      %813 = vst.msk [vmem:[%s283 + $0x28] sm:$0xf] %vm274, %v533
      %v814 = vld [vmem:[%s283 + $0x2c] sm:$0x1]
      %v815 = vsel %vm286, %v534, %v814
      %816 = vst [vmem:[%s283 + $0x2c] sm:$0x1] %v815
      %v817 = vld [vmem:[%s283 + $0x30] sm:$0xf]
      %v818 = vsel %vm788, %v541, %v817
      %819 = vst [vmem:[%s283 + $0x30] sm:$0xf] %v818
      %820 = vst.msk [vmem:[%s283 + $0x34] sm:$0xf] %vm274, %v550
      %v821 = vld [vmem:[%s283 + $0x38] sm:$0x1]
      %v822 = vsel %vm286, %v551, %v821
      %823 = vst [vmem:[%s283 + $0x38] sm:$0x1] %v822
      %v824 = vld [vmem:[%s283 + $0x3c] sm:$0xf]
      %v825 = vsel %vm788, %v558, %v824
      %826 = vst [vmem:[%s283 + $0x3c] sm:$0xf] %v825
      %827 = vst.msk [vmem:[%s283 + $0x40] sm:$0xf] %vm274, %v567
      %v828 = vld [vmem:[%s283 + $0x44] sm:$0x1]
      %v829 = vsel %vm286, %v568, %v828
      %830 = vst [vmem:[%s283 + $0x44] sm:$0x1] %v829
      %v831 = vld [vmem:[%s283 + $0x48] sm:$0xf]
      %v832 = vsel %vm788, %v575, %v831
      %833 = vst [vmem:[%s283 + $0x48] sm:$0xf] %v832
      %834 = vst.msk [vmem:[%s283 + $0x4c] sm:$0xf] %vm274, %v584
      %v835 = vld [vmem:[%s283 + $0x50] sm:$0x1]
      %v836 = vsel %vm286, %v585, %v835
      %837 = vst [vmem:[%s283 + $0x50] sm:$0x1] %v836
      %v838 = vld [vmem:[%s283 + $0x54] sm:$0xf]
      %v839 = vsel %vm788, %v592, %v838
      %840 = vst [vmem:[%s283 + $0x54] sm:$0xf] %v839
      %841 = vst.msk [vmem:[%s283 + $0x58] sm:$0xf] %vm274, %v601
      %v842 = vld [vmem:[%s283 + $0x5c] sm:$0x1]
      %v843 = vsel %vm286, %v602, %v842
      %844 = vst [vmem:[%s283 + $0x5c] sm:$0x1] %v843
      %v845 = vld [vmem:[%s283 + $0x60] sm:$0xf]
      %v846 = vsel %vm788, %v609, %v845
      %847 = vst [vmem:[%s283 + $0x60] sm:$0xf] %v846
      %848 = vst.msk [vmem:[%s283 + $0x64] sm:$0xf] %vm274, %v618
      %v849 = vld [vmem:[%s283 + $0x68] sm:$0x1]
      %v850 = vsel %vm286, %v619, %v849
      %851 = vst [vmem:[%s283 + $0x68] sm:$0x1] %v850
      %v852 = vld [vmem:[%s283 + $0x6c] sm:$0xf]
      %v853 = vsel %vm788, %v626, %v852
      %854 = vst [vmem:[%s283 + $0x6c] sm:$0xf] %v853
      %855 = vst.msk [vmem:[%s283 + $0x70] sm:$0xf] %vm274, %v635
      %v856 = vld [vmem:[%s283 + $0x74] sm:$0x1]
      %v857 = vsel %vm286, %v636, %v856
      %858 = vst [vmem:[%s283 + $0x74] sm:$0x1] %v857
      %v859 = vld [vmem:[%s283 + $0x78] sm:$0xf]
      %v860 = vsel %vm788, %v643, %v859
      %861 = vst [vmem:[%s283 + $0x78] sm:$0xf] %v860
      %862 = vst.msk [vmem:[%s283 + $0x7c] sm:$0xf] %vm274, %v652
      %v863 = vld [vmem:[%s283 + $0x80] sm:$0x1]
      %v864 = vsel %vm286, %v653, %v863
      %865 = vst [vmem:[%s283 + $0x80] sm:$0x1] %v864
      %v866 = vld [vmem:[%s283 + $0x84] sm:$0xf]
      %v867 = vsel %vm788, %v660, %v866
      %868 = vst [vmem:[%s283 + $0x84] sm:$0xf] %v867
      %869 = vst.msk [vmem:[%s283 + $0x88] sm:$0xf] %vm274, %v669
      %v870 = vld [vmem:[%s283 + $0x8c] sm:$0x1]
      %v871 = vsel %vm286, %v670, %v870
      %872 = vst [vmem:[%s283 + $0x8c] sm:$0x1] %v871
      %v873 = vld [vmem:[%s283 + $0x90] sm:$0xf]
      %v874 = vsel %vm788, %v677, %v873
      %875 = vst [vmem:[%s283 + $0x90] sm:$0xf] %v874
      %876 = vst.msk [vmem:[%s283 + $0x94] sm:$0xf] %vm274, %v686
      %v877 = vld [vmem:[%s283 + $0x98] sm:$0x1]
      %v878 = vsel %vm286, %v687, %v877
      %879 = vst [vmem:[%s283 + $0x98] sm:$0x1] %v878
      %v880 = vld [vmem:[%s283 + $0x9c] sm:$0xf]
      %v881 = vsel %vm788, %v694, %v880
      %882 = vst [vmem:[%s283 + $0x9c] sm:$0xf] %v881
      %883 = vst.msk [vmem:[%s283 + $0xa0] sm:$0xf] %vm274, %v703
      %v884 = vld [vmem:[%s283 + $0xa4] sm:$0x1]
      %v885 = vsel %vm286, %v704, %v884
      %886 = vst [vmem:[%s283 + $0xa4] sm:$0x1] %v885
      %v887 = vld [vmem:[%s283 + $0xa8] sm:$0xf]
      %v888 = vsel %vm788, %v711, %v887
      %889 = vst [vmem:[%s283 + $0xa8] sm:$0xf] %v888
      %890 = vst.msk [vmem:[%s283 + $0xac] sm:$0xf] %vm274, %v720
      %v891 = vld [vmem:[%s283 + $0xb0] sm:$0x1]
      %v892 = vsel %vm286, %v721, %v891
      %893 = vst [vmem:[%s283 + $0xb0] sm:$0x1] %v892
      %v894 = vld [vmem:[%s283 + $0xb4] sm:$0xf]
      %v895 = vsel %vm788, %v728, %v894
      %896 = vst [vmem:[%s283 + $0xb4] sm:$0xf] %v895
      %897 = vst.msk [vmem:[%s283 + $0xb8] sm:$0xf] %vm274, %v737
      %v898 = vld [vmem:[%s283 + $0xbc] sm:$0x1]
      %v899 = vsel %vm286, %v738, %v898
      %900 = vst [vmem:[%s283 + $0xbc] sm:$0x1] %v899
      %v901 = vld [vmem:[#allocation2] sm:$0xf]
      %v902 = vld [vmem:[#allocation2 + $0x4] sm:$0xf]
      %v903 = vld [vmem:[#allocation2 + $0xc] sm:$0xf]
      %v904 = vld [vmem:[#allocation2 + $0x10] sm:$0xf]
      %v905 = vld [vmem:[#allocation2 + $0x18] sm:$0xf]
      %v906 = vld [vmem:[#allocation2 + $0x1c] sm:$0xf]
      %v907 = vld [vmem:[#allocation2 + $0x24] sm:$0xf]
      %v908 = vld [vmem:[#allocation2 + $0x28] sm:$0xf]
      %v909 = vld [vmem:[#allocation2 + $0x30] sm:$0xf]
      %v910 = vld [vmem:[#allocation2 + $0x34] sm:$0xf]
      %v911 = vld [vmem:[#allocation2 + $0x3c] sm:$0xf]
      %v912 = vld [vmem:[#allocation2 + $0x40] sm:$0xf]
      %v913 = vld [vmem:[#allocation2 + $0x48] sm:$0xf]
      %v914 = vld [vmem:[#allocation2 + $0x4c] sm:$0xf]
      %v915 = vld [vmem:[#allocation2 + $0x54] sm:$0xf]
      %v916 = vld [vmem:[#allocation2 + $0x58] sm:$0xf]
      %v917 = vld [vmem:[#allocation2 + $0x60] sm:$0xf]
      %v918 = vld [vmem:[#allocation2 + $0x64] sm:$0xf]
      %v919 = vld [vmem:[#allocation2 + $0x6c] sm:$0xf]
      %v920 = vld [vmem:[#allocation2 + $0x70] sm:$0xf]
      %v921 = vld [vmem:[#allocation2 + $0x78] sm:$0xf]
      %v922 = vld [vmem:[#allocation2 + $0x7c] sm:$0xf]
      %v923 = vld [vmem:[#allocation2 + $0x84] sm:$0xf]
      %v924 = vld [vmem:[#allocation2 + $0x88] sm:$0xf]
      %v925 = vld [vmem:[#allocation2 + $0x90] sm:$0xf]
      %v926 = vld [vmem:[#allocation2 + $0x94] sm:$0xf]
      %v927 = vld [vmem:[#allocation2 + $0x9c] sm:$0xf]
      %v928 = vld [vmem:[#allocation2 + $0xa0] sm:$0xf]
      %v929 = vld [vmem:[#allocation2 + $0xa8] sm:$0xf]
      %v930 = vld [vmem:[#allocation2 + $0xac] sm:$0xf]
      %v931 = vld [vmem:[#allocation2 + $0xb4] sm:$0xf]
      %v932 = vld [vmem:[#allocation2 + $0xb8] sm:$0xf]
      %v933 = vld [vmem:[#allocation2 + $0x8] sm:$0x1]
      %v934 = vld [vmem:[#allocation2 + $0x14] sm:$0x1]
      %v935 = vld [vmem:[#allocation2 + $0x20] sm:$0x1]
      %v936 = vld [vmem:[#allocation2 + $0x2c] sm:$0x1]
      %v937 = vld [vmem:[#allocation2 + $0x38] sm:$0x1]
      %v938 = vld [vmem:[#allocation2 + $0x44] sm:$0x1]
      %v939 = vld [vmem:[#allocation2 + $0x50] sm:$0x1]
      %v940 = vld [vmem:[#allocation2 + $0x5c] sm:$0x1]
      %v941 = vld [vmem:[#allocation2 + $0x68] sm:$0x1]
      %v942 = vld [vmem:[#allocation2 + $0x74] sm:$0x1]
      %v943 = vld [vmem:[#allocation2 + $0x80] sm:$0x1]
      %v944 = vld [vmem:[#allocation2 + $0x8c] sm:$0x1]
      %v945 = vld [vmem:[#allocation2 + $0x98] sm:$0x1]
      %v946 = vld [vmem:[#allocation2 + $0xa4] sm:$0x1]
      %v947 = vld [vmem:[#allocation2 + $0xb0] sm:$0x1]
      %v948 = vld [vmem:[#allocation2 + $0xbc] sm:$0x1]
      %v949 = vld [vmem:[#allocation2] sm:$0xe]
      %v950 = vld [vmem:[#allocation2 + $0xc] sm:$0xe]
      %v951 = vld [vmem:[#allocation2 + $0x18] sm:$0xe]
      %v952 = vld [vmem:[#allocation2 + $0x24] sm:$0xe]
      %v953 = vld [vmem:[#allocation2 + $0x30] sm:$0xe]
      %v954 = vld [vmem:[#allocation2 + $0x3c] sm:$0xe]
      %v955 = vld [vmem:[#allocation2 + $0x48] sm:$0xe]
      %v956 = vld [vmem:[#allocation2 + $0x54] sm:$0xe]
      %v957 = vld [vmem:[#allocation2 + $0x60] sm:$0xe]
      %v958 = vld [vmem:[#allocation2 + $0x6c] sm:$0xe]
      %v959 = vld [vmem:[#allocation2 + $0x78] sm:$0xe]
      %v960 = vld [vmem:[#allocation2 + $0x84] sm:$0xe]
      %v961 = vld [vmem:[#allocation2 + $0x90] sm:$0xe]
      %v962 = vld [vmem:[#allocation2 + $0x9c] sm:$0xe]
      %v963 = vld [vmem:[#allocation2 + $0xa8] sm:$0xe]
      %v964 = vld [vmem:[#allocation2 + $0xb4] sm:$0xe]
      %v965 = vld [vmem:[%s283] sm:$0xf]
      %v966 = vld [vmem:[%s283 + $0x4] sm:$0xf]
      %v967 = vld [vmem:[%s283 + $0xc] sm:$0xf]
      %v968 = vld [vmem:[%s283 + $0x10] sm:$0xf]
      %v969 = vld [vmem:[%s283 + $0x18] sm:$0xf]
      %v970 = vld [vmem:[%s283 + $0x1c] sm:$0xf]
      %v971 = vld [vmem:[%s283 + $0x24] sm:$0xf]
      %v972 = vld [vmem:[%s283 + $0x28] sm:$0xf]
      %v973 = vld [vmem:[%s283 + $0x30] sm:$0xf]
      %v974 = vld [vmem:[%s283 + $0x34] sm:$0xf]
      %v975 = vld [vmem:[%s283 + $0x3c] sm:$0xf]
      %v976 = vld [vmem:[%s283 + $0x40] sm:$0xf]
      %v977 = vld [vmem:[%s283 + $0x48] sm:$0xf]
      %v978 = vld [vmem:[%s283 + $0x4c] sm:$0xf]
      %v979 = vld [vmem:[%s283 + $0x54] sm:$0xf]
      %v980 = vld [vmem:[%s283 + $0x58] sm:$0xf]
      %v981 = vld [vmem:[%s283 + $0x60] sm:$0xf]
      %v982 = vld [vmem:[%s283 + $0x64] sm:$0xf]
      %v983 = vld [vmem:[%s283 + $0x6c] sm:$0xf]
      %v984 = vld [vmem:[%s283 + $0x70] sm:$0xf]
      %v985 = vld [vmem:[%s283 + $0x78] sm:$0xf]
      %v986 = vld [vmem:[%s283 + $0x7c] sm:$0xf]
      %v987 = vld [vmem:[%s283 + $0x84] sm:$0xf]
      %v988 = vld [vmem:[%s283 + $0x88] sm:$0xf]
      %v989 = vld [vmem:[%s283 + $0x90] sm:$0xf]
      %v990 = vld [vmem:[%s283 + $0x94] sm:$0xf]
      %v991 = vld [vmem:[%s283 + $0x9c] sm:$0xf]
      %v992 = vld [vmem:[%s283 + $0xa0] sm:$0xf]
      %v993 = vld [vmem:[%s283 + $0xa8] sm:$0xf]
      %v994 = vld [vmem:[%s283 + $0xac] sm:$0xf]
      %v995 = vld [vmem:[%s283 + $0xb4] sm:$0xf]
      %v996 = vld [vmem:[%s283 + $0xb8] sm:$0xf]
      %v997 = vld [vmem:[%s283 + $0x8] sm:$0x1]
      %v998 = vld [vmem:[%s283 + $0x14] sm:$0x1]
      %v999 = vld [vmem:[%s283 + $0x20] sm:$0x1]
      %v1000 = vld [vmem:[%s283 + $0x2c] sm:$0x1]
      %v1001 = vld [vmem:[%s283 + $0x38] sm:$0x1]
      %v1002 = vld [vmem:[%s283 + $0x44] sm:$0x1]
      %v1003 = vld [vmem:[%s283 + $0x50] sm:$0x1]
      %v1004 = vld [vmem:[%s283 + $0x5c] sm:$0x1]
      %v1005 = vld [vmem:[%s283 + $0x68] sm:$0x1]
      %v1006 = vld [vmem:[%s283 + $0x74] sm:$0x1]
      %v1007 = vld [vmem:[%s283 + $0x80] sm:$0x1]
      %v1008 = vld [vmem:[%s283 + $0x8c] sm:$0x1]
      %v1009 = vld [vmem:[%s283 + $0x98] sm:$0x1]
      %v1010 = vld [vmem:[%s283 + $0xa4] sm:$0x1]
      %v1011 = vld [vmem:[%s283 + $0xb0] sm:$0x1]
      %v1012 = vld [vmem:[%s283 + $0xbc] sm:$0x1]
      %v1013 = vld [vmem:[%s283] sm:$0xe]
      %v1014 = vld [vmem:[%s283 + $0xc] sm:$0xe]
      %v1015 = vld [vmem:[%s283 + $0x18] sm:$0xe]
      %v1016 = vld [vmem:[%s283 + $0x24] sm:$0xe]
      %v1017 = vld [vmem:[%s283 + $0x30] sm:$0xe]
      %v1018 = vld [vmem:[%s283 + $0x3c] sm:$0xe]
      %v1019 = vld [vmem:[%s283 + $0x48] sm:$0xe]
      %v1020 = vld [vmem:[%s283 + $0x54] sm:$0xe]
      %v1021 = vld [vmem:[%s283 + $0x60] sm:$0xe]
      %v1022 = vld [vmem:[%s283 + $0x6c] sm:$0xe]
      %v1023 = vld [vmem:[%s283 + $0x78] sm:$0xe]
      %v1024 = vld [vmem:[%s283 + $0x84] sm:$0xe]
      %v1025 = vld [vmem:[%s283 + $0x90] sm:$0xe]
      %v1026 = vld [vmem:[%s283 + $0x9c] sm:$0xe]
      %v1027 = vld [vmem:[%s283 + $0xa8] sm:$0xe]
      %v1028 = vld [vmem:[%s283 + $0xb4] sm:$0xe]
      %s1029 = scalar_lea.vmem [#allocation2], 24
      %v1030 = vld [vmem:[%s1029] sm:$0xf]
      %v1031 = vld [vmem:[%s1029 + $0x4] sm:$0xf]
      %v1032 = vld [vmem:[%s1029 + $0xc] sm:$0xf]
      %v1033 = vld [vmem:[%s1029 + $0x10] sm:$0xf]
      %v1034 = vld [vmem:[%s1029 + $0x18] sm:$0xf]
      %v1035 = vld [vmem:[%s1029 + $0x1c] sm:$0xf]
      %v1036 = vld [vmem:[%s1029 + $0x24] sm:$0xf]
      %v1037 = vld [vmem:[%s1029 + $0x28] sm:$0xf]
      %v1038 = vld [vmem:[%s1029 + $0x30] sm:$0xf]
      %v1039 = vld [vmem:[%s1029 + $0x34] sm:$0xf]
      %v1040 = vld [vmem:[%s1029 + $0x3c] sm:$0xf]
      %v1041 = vld [vmem:[%s1029 + $0x40] sm:$0xf]
      %v1042 = vld [vmem:[%s1029 + $0x48] sm:$0xf]
      %v1043 = vld [vmem:[%s1029 + $0x4c] sm:$0xf]
      %v1044 = vld [vmem:[%s1029 + $0x54] sm:$0xf]
      %v1045 = vld [vmem:[%s1029 + $0x58] sm:$0xf]
      %v1046 = vld [vmem:[%s1029 + $0x60] sm:$0xf]
      %v1047 = vld [vmem:[%s1029 + $0x64] sm:$0xf]
      %v1048 = vld [vmem:[%s1029 + $0x6c] sm:$0xf]
      %v1049 = vld [vmem:[%s1029 + $0x70] sm:$0xf]
      %v1050 = vld [vmem:[%s1029 + $0x78] sm:$0xf]
      %v1051 = vld [vmem:[%s1029 + $0x7c] sm:$0xf]
      %v1052 = vld [vmem:[%s1029 + $0x84] sm:$0xf]
      %v1053 = vld [vmem:[%s1029 + $0x88] sm:$0xf]
      %v1054 = vld [vmem:[%s1029 + $0x90] sm:$0xf]
      %v1055 = vld [vmem:[%s1029 + $0x94] sm:$0xf]
      %v1056 = vld [vmem:[%s1029 + $0x9c] sm:$0xf]
      %v1057 = vld [vmem:[%s1029 + $0xa0] sm:$0xf]
      %v1058 = vld [vmem:[%s1029 + $0xa8] sm:$0xf]
      %v1059 = vld [vmem:[%s1029 + $0xac] sm:$0xf]
      %v1060 = vld [vmem:[%s1029 + $0xb4] sm:$0xf]
      %v1061 = vld [vmem:[%s1029 + $0xb8] sm:$0xf]
      %v1062 = vld [vmem:[%s1029 + $0x8] sm:$0x1]
      %v1063 = vld [vmem:[%s1029 + $0x14] sm:$0x1]
      %v1064 = vld [vmem:[%s1029 + $0x20] sm:$0x1]
      %v1065 = vld [vmem:[%s1029 + $0x2c] sm:$0x1]
      %v1066 = vld [vmem:[%s1029 + $0x38] sm:$0x1]
      %v1067 = vld [vmem:[%s1029 + $0x44] sm:$0x1]
      %v1068 = vld [vmem:[%s1029 + $0x50] sm:$0x1]
      %v1069 = vld [vmem:[%s1029 + $0x5c] sm:$0x1]
      %v1070 = vld [vmem:[%s1029 + $0x68] sm:$0x1]
      %v1071 = vld [vmem:[%s1029 + $0x74] sm:$0x1]
      %v1072 = vld [vmem:[%s1029 + $0x80] sm:$0x1]
      %v1073 = vld [vmem:[%s1029 + $0x8c] sm:$0x1]
      %v1074 = vld [vmem:[%s1029 + $0x98] sm:$0x1]
      %v1075 = vld [vmem:[%s1029 + $0xa4] sm:$0x1]
      %v1076 = vld [vmem:[%s1029 + $0xb0] sm:$0x1]
      %v1077 = vld [vmem:[%s1029 + $0xbc] sm:$0x1]
      %v1078 = vld [vmem:[%s1029] sm:$0xe]
      %v1079 = vld [vmem:[%s1029 + $0xc] sm:$0xe]
      %v1080 = vld [vmem:[%s1029 + $0x18] sm:$0xe]
      %v1081 = vld [vmem:[%s1029 + $0x24] sm:$0xe]
      %v1082 = vld [vmem:[%s1029 + $0x30] sm:$0xe]
      %v1083 = vld [vmem:[%s1029 + $0x3c] sm:$0xe]
      %v1084 = vld [vmem:[%s1029 + $0x48] sm:$0xe]
      %v1085 = vld [vmem:[%s1029 + $0x54] sm:$0xe]
      %v1086 = vld [vmem:[%s1029 + $0x60] sm:$0xe]
      %v1087 = vld [vmem:[%s1029 + $0x6c] sm:$0xe]
      %v1088 = vld [vmem:[%s1029 + $0x78] sm:$0xe]
      %v1089 = vld [vmem:[%s1029 + $0x84] sm:$0xe]
      %v1090 = vld [vmem:[%s1029 + $0x90] sm:$0xe]
      %v1091 = vld [vmem:[%s1029 + $0x9c] sm:$0xe]
      %v1092 = vld [vmem:[%s1029 + $0xa8] sm:$0xe]
      %v1093 = vld [vmem:[%s1029 + $0xb4] sm:$0xe]
      %v1126 = vunpack.c.l.b16 %v901
      %v1127 = vunpack.c.l.b16 %v902
      %v1128 = vunpack.c.l.b16 %v903
      %v1129 = vunpack.c.l.b16 %v904
      %v1130 = vunpack.c.l.b16 %v905
      %v1131 = vunpack.c.l.b16 %v906
      %v1132 = vunpack.c.l.b16 %v907
      %v1133 = vunpack.c.l.b16 %v908
      %v1134 = vunpack.c.l.b16 %v909
      %v1135 = vunpack.c.l.b16 %v910
      %v1136 = vunpack.c.l.b16 %v911
      %v1137 = vunpack.c.l.b16 %v912
      %v1138 = vunpack.c.l.b16 %v913
      %v1139 = vunpack.c.l.b16 %v914
      %v1140 = vunpack.c.l.b16 %v915
      %v1141 = vunpack.c.l.b16 %v916
      %v1142 = vunpack.c.l.b16 %v917
      %v1143 = vunpack.c.l.b16 %v918
      %v1144 = vunpack.c.l.b16 %v919
      %v1145 = vunpack.c.l.b16 %v920
      %v1146 = vunpack.c.l.b16 %v921
      %v1147 = vunpack.c.l.b16 %v922
      %v1148 = vunpack.c.l.b16 %v923
      %v1149 = vunpack.c.l.b16 %v924
      %v1150 = vunpack.c.l.b16 %v925
      %v1151 = vunpack.c.l.b16 %v926
      %v1152 = vunpack.c.l.b16 %v927
      %v1153 = vunpack.c.l.b16 %v928
      %v1154 = vunpack.c.l.b16 %v929
      %v1155 = vunpack.c.l.b16 %v930
      %v1156 = vunpack.c.l.b16 %v931
      %v1157 = vunpack.c.l.b16 %v932
      %v1158 = vpack.c.b16 %v1127, %v1126
      %v1159 = vpack.c.b16 %v1129, %v1128
      %v1160 = vpack.c.b16 %v1131, %v1130
      %v1161 = vpack.c.b16 %v1133, %v1132
      %v1162 = vpack.c.b16 %v1135, %v1134
      %v1163 = vpack.c.b16 %v1137, %v1136
      %v1164 = vpack.c.b16 %v1139, %v1138
      %v1165 = vpack.c.b16 %v1141, %v1140
      %v1166 = vpack.c.b16 %v1143, %v1142
      %v1167 = vpack.c.b16 %v1145, %v1144
      %v1168 = vpack.c.b16 %v1147, %v1146
      %v1169 = vpack.c.b16 %v1149, %v1148
      %v1170 = vpack.c.b16 %v1151, %v1150
      %v1171 = vpack.c.b16 %v1153, %v1152
      %v1172 = vpack.c.b16 %v1155, %v1154
      %v1173 = vpack.c.b16 %v1157, %v1156
      %v1190 = vunpack.c.l.b16 %v933
      %v1191 = vunpack.c.l.b16 %v934
      %v1192 = vunpack.c.l.b16 %v935
      %v1193 = vunpack.c.l.b16 %v936
      %v1194 = vunpack.c.l.b16 %v937
      %v1195 = vunpack.c.l.b16 %v938
      %v1196 = vunpack.c.l.b16 %v939
      %v1197 = vunpack.c.l.b16 %v940
      %v1198 = vunpack.c.l.b16 %v941
      %v1199 = vunpack.c.l.b16 %v942
      %v1200 = vunpack.c.l.b16 %v943
      %v1201 = vunpack.c.l.b16 %v944
      %v1202 = vunpack.c.l.b16 %v945
      %v1203 = vunpack.c.l.b16 %v946
      %v1204 = vunpack.c.l.b16 %v947
      %v1205 = vunpack.c.l.b16 %v948
      %v1206 = vpack.c.b16 %v1190, %v1190
      %v1207 = vpack.c.b16 %v1191, %v1191
      %v1208 = vpack.c.b16 %v1192, %v1192
      %v1209 = vpack.c.b16 %v1193, %v1193
      %v1210 = vpack.c.b16 %v1194, %v1194
      %v1211 = vpack.c.b16 %v1195, %v1195
      %v1212 = vpack.c.b16 %v1196, %v1196
      %v1213 = vpack.c.b16 %v1197, %v1197
      %v1214 = vpack.c.b16 %v1198, %v1198
      %v1215 = vpack.c.b16 %v1199, %v1199
      %v1216 = vpack.c.b16 %v1200, %v1200
      %v1217 = vpack.c.b16 %v1201, %v1201
      %v1218 = vpack.c.b16 %v1202, %v1202
      %v1219 = vpack.c.b16 %v1203, %v1203
      %v1220 = vpack.c.b16 %v1204, %v1204
      %v1221 = vpack.c.b16 %v1205, %v1205
      %vm1222 = vsmask.f32 7424
      %v1224 = vshrl.u32 %v1158, 16
      %v1226 = vshll.u32 %v1158, 16
      %v1228 = vrot.slane %v1226, 1
      %v1229 = vor.u32 %v1224, %v1228
      %v1231 = vshll.u32 %v1206, 16
      %v1233 = vrot.slane %v1231, 1
      %v1234 = vsel %vm1222, %v1229, %v1233
      %v1236 = vshrl.u32 %v1159, 16
      %v1238 = vshll.u32 %v1159, 16
      %v1240 = vrot.slane %v1238, 1
      %v1241 = vor.u32 %v1236, %v1240
      %v1243 = vshll.u32 %v1207, 16
      %v1245 = vrot.slane %v1243, 1
      %v1246 = vsel %vm1222, %v1241, %v1245
      %v1248 = vshrl.u32 %v1160, 16
      %v1250 = vshll.u32 %v1160, 16
      %v1252 = vrot.slane %v1250, 1
      %v1253 = vor.u32 %v1248, %v1252
      %v1255 = vshll.u32 %v1208, 16
      %v1257 = vrot.slane %v1255, 1
      %v1258 = vsel %vm1222, %v1253, %v1257
      %v1260 = vshrl.u32 %v1161, 16
      %v1262 = vshll.u32 %v1161, 16
      %v1264 = vrot.slane %v1262, 1
      %v1265 = vor.u32 %v1260, %v1264
      %v1267 = vshll.u32 %v1209, 16
      %v1269 = vrot.slane %v1267, 1
      %v1270 = vsel %vm1222, %v1265, %v1269
      %v1272 = vshrl.u32 %v1162, 16
      %v1274 = vshll.u32 %v1162, 16
      %v1276 = vrot.slane %v1274, 1
      %v1277 = vor.u32 %v1272, %v1276
      %v1279 = vshll.u32 %v1210, 16
      %v1281 = vrot.slane %v1279, 1
      %v1282 = vsel %vm1222, %v1277, %v1281
      %v1284 = vshrl.u32 %v1163, 16
      %v1286 = vshll.u32 %v1163, 16
      %v1288 = vrot.slane %v1286, 1
      %v1289 = vor.u32 %v1284, %v1288
      %v1291 = vshll.u32 %v1211, 16
      %v1293 = vrot.slane %v1291, 1
      %v1294 = vsel %vm1222, %v1289, %v1293
      %v1296 = vshrl.u32 %v1164, 16
      %v1298 = vshll.u32 %v1164, 16
      %v1300 = vrot.slane %v1298, 1
      %v1301 = vor.u32 %v1296, %v1300
      %v1303 = vshll.u32 %v1212, 16
      %v1305 = vrot.slane %v1303, 1
      %v1306 = vsel %vm1222, %v1301, %v1305
      %v1308 = vshrl.u32 %v1165, 16
      %v1310 = vshll.u32 %v1165, 16
      %v1312 = vrot.slane %v1310, 1
      %v1313 = vor.u32 %v1308, %v1312
      %v1315 = vshll.u32 %v1213, 16
      %v1317 = vrot.slane %v1315, 1
      %v1318 = vsel %vm1222, %v1313, %v1317
      %v1320 = vshrl.u32 %v1166, 16
      %v1322 = vshll.u32 %v1166, 16
      %v1324 = vrot.slane %v1322, 1
      %v1325 = vor.u32 %v1320, %v1324
      %v1327 = vshll.u32 %v1214, 16
      %v1329 = vrot.slane %v1327, 1
      %v1330 = vsel %vm1222, %v1325, %v1329
      %v1332 = vshrl.u32 %v1167, 16
      %v1334 = vshll.u32 %v1167, 16
      %v1336 = vrot.slane %v1334, 1
      %v1337 = vor.u32 %v1332, %v1336
      %v1339 = vshll.u32 %v1215, 16
      %v1341 = vrot.slane %v1339, 1
      %v1342 = vsel %vm1222, %v1337, %v1341
      %v1344 = vshrl.u32 %v1168, 16
      %v1346 = vshll.u32 %v1168, 16
      %v1348 = vrot.slane %v1346, 1
      %v1349 = vor.u32 %v1344, %v1348
      %v1351 = vshll.u32 %v1216, 16
      %v1353 = vrot.slane %v1351, 1
      %v1354 = vsel %vm1222, %v1349, %v1353
      %v1356 = vshrl.u32 %v1169, 16
      %v1358 = vshll.u32 %v1169, 16
      %v1360 = vrot.slane %v1358, 1
      %v1361 = vor.u32 %v1356, %v1360
      %v1363 = vshll.u32 %v1217, 16
      %v1365 = vrot.slane %v1363, 1
      %v1366 = vsel %vm1222, %v1361, %v1365
      %v1368 = vshrl.u32 %v1170, 16
      %v1370 = vshll.u32 %v1170, 16
      %v1372 = vrot.slane %v1370, 1
      %v1373 = vor.u32 %v1368, %v1372
      %v1375 = vshll.u32 %v1218, 16
      %v1377 = vrot.slane %v1375, 1
      %v1378 = vsel %vm1222, %v1373, %v1377
      %v1380 = vshrl.u32 %v1171, 16
      %v1382 = vshll.u32 %v1171, 16
      %v1384 = vrot.slane %v1382, 1
      %v1385 = vor.u32 %v1380, %v1384
      %v1387 = vshll.u32 %v1219, 16
      %v1389 = vrot.slane %v1387, 1
      %v1390 = vsel %vm1222, %v1385, %v1389
      %v1392 = vshrl.u32 %v1172, 16
      %v1394 = vshll.u32 %v1172, 16
      %v1396 = vrot.slane %v1394, 1
      %v1397 = vor.u32 %v1392, %v1396
      %v1399 = vshll.u32 %v1220, 16
      %v1401 = vrot.slane %v1399, 1
      %v1402 = vsel %vm1222, %v1397, %v1401
      %v1404 = vshrl.u32 %v1173, 16
      %v1406 = vshll.u32 %v1173, 16
      %v1408 = vrot.slane %v1406, 1
      %v1409 = vor.u32 %v1404, %v1408
      %v1411 = vshll.u32 %v1221, 16
      %v1413 = vrot.slane %v1411, 1
      %v1414 = vsel %vm1222, %v1409, %v1413
      %1415 = vrot.lane.b32.xlu0 %v1234, 4
      %v1416 = vpop.permute.xlu0 %1415
      %1417 = vrot.lane.b32.xlu0 %v1246, 4
      %v1418 = vpop.permute.xlu0 %1417
      %1419 = vrot.lane.b32.xlu0 %v1258, 4
      %v1420 = vpop.permute.xlu0 %1419
      %1421 = vrot.lane.b32.xlu0 %v1270, 4
      %v1422 = vpop.permute.xlu0 %1421
      %1423 = vrot.lane.b32.xlu0 %v1282, 4
      %v1424 = vpop.permute.xlu0 %1423
      %1425 = vrot.lane.b32.xlu0 %v1294, 4
      %v1426 = vpop.permute.xlu0 %1425
      %1427 = vrot.lane.b32.xlu0 %v1306, 4
      %v1428 = vpop.permute.xlu0 %1427
      %1429 = vrot.lane.b32.xlu0 %v1318, 4
      %v1430 = vpop.permute.xlu0 %1429
      %1431 = vrot.lane.b32.xlu0 %v1330, 4
      %v1432 = vpop.permute.xlu0 %1431
      %1433 = vrot.lane.b32.xlu0 %v1342, 4
      %v1434 = vpop.permute.xlu0 %1433
      %1435 = vrot.lane.b32.xlu0 %v1354, 4
      %v1436 = vpop.permute.xlu0 %1435
      %1437 = vrot.lane.b32.xlu0 %v1366, 4
      %v1438 = vpop.permute.xlu0 %1437
      %1439 = vrot.lane.b32.xlu0 %v1378, 4
      %v1440 = vpop.permute.xlu0 %1439
      %1441 = vrot.lane.b32.xlu0 %v1390, 4
      %v1442 = vpop.permute.xlu0 %1441
      %1443 = vrot.lane.b32.xlu0 %v1402, 4
      %v1444 = vpop.permute.xlu0 %1443
      %1445 = vrot.lane.b32.xlu0 %v1414, 4
      %v1446 = vpop.permute.xlu0 %1445
      %v1463 = vunpack.c.l.b16 %v949
      %v1464 = vunpack.c.l.b16 %v950
      %v1465 = vunpack.c.l.b16 %v951
      %v1466 = vunpack.c.l.b16 %v952
      %v1467 = vunpack.c.l.b16 %v953
      %v1468 = vunpack.c.l.b16 %v954
      %v1469 = vunpack.c.l.b16 %v955
      %v1470 = vunpack.c.l.b16 %v956
      %v1471 = vunpack.c.l.b16 %v957
      %v1472 = vunpack.c.l.b16 %v958
      %v1473 = vunpack.c.l.b16 %v959
      %v1474 = vunpack.c.l.b16 %v960
      %v1475 = vunpack.c.l.b16 %v961
      %v1476 = vunpack.c.l.b16 %v962
      %v1477 = vunpack.c.l.b16 %v963
      %v1478 = vunpack.c.l.b16 %v964
      %v1479 = vpack.c.b16 %v1127, %v1463
      %v1480 = vpack.c.b16 %v1129, %v1464
      %v1481 = vpack.c.b16 %v1131, %v1465
      %v1482 = vpack.c.b16 %v1133, %v1466
      %v1483 = vpack.c.b16 %v1135, %v1467
      %v1484 = vpack.c.b16 %v1137, %v1468
      %v1485 = vpack.c.b16 %v1139, %v1469
      %v1486 = vpack.c.b16 %v1141, %v1470
      %v1487 = vpack.c.b16 %v1143, %v1471
      %v1488 = vpack.c.b16 %v1145, %v1472
      %v1489 = vpack.c.b16 %v1147, %v1473
      %v1490 = vpack.c.b16 %v1149, %v1474
      %v1491 = vpack.c.b16 %v1151, %v1475
      %v1492 = vpack.c.b16 %v1153, %v1476
      %v1493 = vpack.c.b16 %v1155, %v1477
      %v1494 = vpack.c.b16 %v1157, %v1478
      %vm1495 = vcmask 1046528
      %v1496 = vrot.slane %v1479, 1
      %v1497 = vrot.slane %v1206, 1
      %v1498 = vsel %vm1495, %v1496, %v1497
      %v1499 = vrot.slane %v1480, 1
      %v1500 = vrot.slane %v1207, 1
      %v1501 = vsel %vm1495, %v1499, %v1500
      %v1502 = vrot.slane %v1481, 1
      %v1503 = vrot.slane %v1208, 1
      %v1504 = vsel %vm1495, %v1502, %v1503
      %v1505 = vrot.slane %v1482, 1
      %v1506 = vrot.slane %v1209, 1
      %v1507 = vsel %vm1495, %v1505, %v1506
      %v1508 = vrot.slane %v1483, 1
      %v1509 = vrot.slane %v1210, 1
      %v1510 = vsel %vm1495, %v1508, %v1509
      %v1511 = vrot.slane %v1484, 1
      %v1512 = vrot.slane %v1211, 1
      %v1513 = vsel %vm1495, %v1511, %v1512
      %v1514 = vrot.slane %v1485, 1
      %v1515 = vrot.slane %v1212, 1
      %v1516 = vsel %vm1495, %v1514, %v1515
      %v1517 = vrot.slane %v1486, 1
      %v1518 = vrot.slane %v1213, 1
      %v1519 = vsel %vm1495, %v1517, %v1518
      %v1520 = vrot.slane %v1487, 1
      %v1521 = vrot.slane %v1214, 1
      %v1522 = vsel %vm1495, %v1520, %v1521
      %v1523 = vrot.slane %v1488, 1
      %v1524 = vrot.slane %v1215, 1
      %v1525 = vsel %vm1495, %v1523, %v1524
      %v1526 = vrot.slane %v1489, 1
      %v1527 = vrot.slane %v1216, 1
      %v1528 = vsel %vm1495, %v1526, %v1527
      %v1529 = vrot.slane %v1490, 1
      %v1530 = vrot.slane %v1217, 1
      %v1531 = vsel %vm1495, %v1529, %v1530
      %v1532 = vrot.slane %v1491, 1
      %v1533 = vrot.slane %v1218, 1
      %v1534 = vsel %vm1495, %v1532, %v1533
      %v1535 = vrot.slane %v1492, 1
      %v1536 = vrot.slane %v1219, 1
      %v1537 = vsel %vm1495, %v1535, %v1536
      %v1538 = vrot.slane %v1493, 1
      %v1539 = vrot.slane %v1220, 1
      %v1540 = vsel %vm1495, %v1538, %v1539
      %v1541 = vrot.slane %v1494, 1
      %v1542 = vrot.slane %v1221, 1
      %v1543 = vsel %vm1495, %v1541, %v1542
      %1544 = vrot.lane.b32.xlu0 %v1498, 8
      %v1545 = vpop.permute.xlu0 %1544
      %1546 = vrot.lane.b32.xlu0 %v1501, 8
      %v1547 = vpop.permute.xlu0 %1546
      %1548 = vrot.lane.b32.xlu0 %v1504, 8
      %v1549 = vpop.permute.xlu0 %1548
      %1550 = vrot.lane.b32.xlu0 %v1507, 8
      %v1551 = vpop.permute.xlu0 %1550
      %1552 = vrot.lane.b32.xlu0 %v1510, 8
      %v1553 = vpop.permute.xlu0 %1552
      %1554 = vrot.lane.b32.xlu0 %v1513, 8
      %v1555 = vpop.permute.xlu0 %1554
      %1556 = vrot.lane.b32.xlu0 %v1516, 8
      %v1557 = vpop.permute.xlu0 %1556
      %1558 = vrot.lane.b32.xlu0 %v1519, 8
      %v1559 = vpop.permute.xlu0 %1558
      %1560 = vrot.lane.b32.xlu0 %v1522, 8
      %v1561 = vpop.permute.xlu0 %1560
      %1562 = vrot.lane.b32.xlu0 %v1525, 8
      %v1563 = vpop.permute.xlu0 %1562
      %1564 = vrot.lane.b32.xlu0 %v1528, 8
      %v1565 = vpop.permute.xlu0 %1564
      %1566 = vrot.lane.b32.xlu0 %v1531, 8
      %v1567 = vpop.permute.xlu0 %1566
      %1568 = vrot.lane.b32.xlu0 %v1534, 8
      %v1569 = vpop.permute.xlu0 %1568
      %1570 = vrot.lane.b32.xlu0 %v1537, 8
      %v1571 = vpop.permute.xlu0 %1570
      %1572 = vrot.lane.b32.xlu0 %v1540, 8
      %v1573 = vpop.permute.xlu0 %1572
      %1574 = vrot.lane.b32.xlu0 %v1543, 8
      %v1575 = vpop.permute.xlu0 %1574
      %v1608 = vunpack.c.l.b16 %v965
      %v1609 = vunpack.c.l.b16 %v966
      %v1610 = vunpack.c.l.b16 %v967
      %v1611 = vunpack.c.l.b16 %v968
      %v1612 = vunpack.c.l.b16 %v969
      %v1613 = vunpack.c.l.b16 %v970
      %v1614 = vunpack.c.l.b16 %v971
      %v1615 = vunpack.c.l.b16 %v972
      %v1616 = vunpack.c.l.b16 %v973
      %v1617 = vunpack.c.l.b16 %v974
      %v1618 = vunpack.c.l.b16 %v975
      %v1619 = vunpack.c.l.b16 %v976
      %v1620 = vunpack.c.l.b16 %v977
      %v1621 = vunpack.c.l.b16 %v978
      %v1622 = vunpack.c.l.b16 %v979
      %v1623 = vunpack.c.l.b16 %v980
      %v1624 = vunpack.c.l.b16 %v981
      %v1625 = vunpack.c.l.b16 %v982
      %v1626 = vunpack.c.l.b16 %v983
      %v1627 = vunpack.c.l.b16 %v984
      %v1628 = vunpack.c.l.b16 %v985
      %v1629 = vunpack.c.l.b16 %v986
      %v1630 = vunpack.c.l.b16 %v987
      %v1631 = vunpack.c.l.b16 %v988
      %v1632 = vunpack.c.l.b16 %v989
      %v1633 = vunpack.c.l.b16 %v990
      %v1634 = vunpack.c.l.b16 %v991
      %v1635 = vunpack.c.l.b16 %v992
      %v1636 = vunpack.c.l.b16 %v993
      %v1637 = vunpack.c.l.b16 %v994
      %v1638 = vunpack.c.l.b16 %v995
      %v1639 = vunpack.c.l.b16 %v996
      %v1640 = vpack.c.b16 %v1609, %v1608
      %v1641 = vpack.c.b16 %v1611, %v1610
      %v1642 = vpack.c.b16 %v1613, %v1612
      %v1643 = vpack.c.b16 %v1615, %v1614
      %v1644 = vpack.c.b16 %v1617, %v1616
      %v1645 = vpack.c.b16 %v1619, %v1618
      %v1646 = vpack.c.b16 %v1621, %v1620
      %v1647 = vpack.c.b16 %v1623, %v1622
      %v1648 = vpack.c.b16 %v1625, %v1624
      %v1649 = vpack.c.b16 %v1627, %v1626
      %v1650 = vpack.c.b16 %v1629, %v1628
      %v1651 = vpack.c.b16 %v1631, %v1630
      %v1652 = vpack.c.b16 %v1633, %v1632
      %v1653 = vpack.c.b16 %v1635, %v1634
      %v1654 = vpack.c.b16 %v1637, %v1636
      %v1655 = vpack.c.b16 %v1639, %v1638
      %1656 = vrot.lane.b32.xlu0 %v1640, 12
      %v1657 = vpop.permute.xlu0 %1656
      %1658 = vrot.lane.b32.xlu0 %v1641, 12
      %v1659 = vpop.permute.xlu0 %1658
      %1660 = vrot.lane.b32.xlu0 %v1642, 12
      %v1661 = vpop.permute.xlu0 %1660
      %1662 = vrot.lane.b32.xlu0 %v1643, 12
      %v1663 = vpop.permute.xlu0 %1662
      %1664 = vrot.lane.b32.xlu0 %v1644, 12
      %v1665 = vpop.permute.xlu0 %1664
      %1666 = vrot.lane.b32.xlu0 %v1645, 12
      %v1667 = vpop.permute.xlu0 %1666
      %1668 = vrot.lane.b32.xlu0 %v1646, 12
      %v1669 = vpop.permute.xlu0 %1668
      %1670 = vrot.lane.b32.xlu0 %v1647, 12
      %v1671 = vpop.permute.xlu0 %1670
      %1672 = vrot.lane.b32.xlu0 %v1648, 12
      %v1673 = vpop.permute.xlu0 %1672
      %1674 = vrot.lane.b32.xlu0 %v1649, 12
      %v1675 = vpop.permute.xlu0 %1674
      %1676 = vrot.lane.b32.xlu0 %v1650, 12
      %v1677 = vpop.permute.xlu0 %1676
      %1678 = vrot.lane.b32.xlu0 %v1651, 12
      %v1679 = vpop.permute.xlu0 %1678
      %1680 = vrot.lane.b32.xlu0 %v1652, 12
      %v1681 = vpop.permute.xlu0 %1680
      %1682 = vrot.lane.b32.xlu0 %v1653, 12
      %v1683 = vpop.permute.xlu0 %1682
      %1684 = vrot.lane.b32.xlu0 %v1654, 12
      %v1685 = vpop.permute.xlu0 %1684
      %1686 = vrot.lane.b32.xlu0 %v1655, 12
      %v1687 = vpop.permute.xlu0 %1686
      %v1704 = vunpack.c.l.b16 %v997
      %v1705 = vunpack.c.l.b16 %v998
      %v1706 = vunpack.c.l.b16 %v999
      %v1707 = vunpack.c.l.b16 %v1000
      %v1708 = vunpack.c.l.b16 %v1001
      %v1709 = vunpack.c.l.b16 %v1002
      %v1710 = vunpack.c.l.b16 %v1003
      %v1711 = vunpack.c.l.b16 %v1004
      %v1712 = vunpack.c.l.b16 %v1005
      %v1713 = vunpack.c.l.b16 %v1006
      %v1714 = vunpack.c.l.b16 %v1007
      %v1715 = vunpack.c.l.b16 %v1008
      %v1716 = vunpack.c.l.b16 %v1009
      %v1717 = vunpack.c.l.b16 %v1010
      %v1718 = vunpack.c.l.b16 %v1011
      %v1719 = vunpack.c.l.b16 %v1012
      %v1720 = vpack.c.b16 %v1704, %v1704
      %v1721 = vpack.c.b16 %v1705, %v1705
      %v1722 = vpack.c.b16 %v1706, %v1706
      %v1723 = vpack.c.b16 %v1707, %v1707
      %v1724 = vpack.c.b16 %v1708, %v1708
      %v1725 = vpack.c.b16 %v1709, %v1709
      %v1726 = vpack.c.b16 %v1710, %v1710
      %v1727 = vpack.c.b16 %v1711, %v1711
      %v1728 = vpack.c.b16 %v1712, %v1712
      %v1729 = vpack.c.b16 %v1713, %v1713
      %v1730 = vpack.c.b16 %v1714, %v1714
      %v1731 = vpack.c.b16 %v1715, %v1715
      %v1732 = vpack.c.b16 %v1716, %v1716
      %v1733 = vpack.c.b16 %v1717, %v1717
      %v1734 = vpack.c.b16 %v1718, %v1718
      %v1735 = vpack.c.b16 %v1719, %v1719
      %v1737 = vshrl.u32 %v1640, 16
      %v1739 = vshll.u32 %v1640, 16
      %v1741 = vrot.slane %v1739, 1
      %v1742 = vor.u32 %v1737, %v1741
      %v1744 = vshll.u32 %v1720, 16
      %v1746 = vrot.slane %v1744, 1
      %v1747 = vsel %vm1222, %v1742, %v1746
      %v1749 = vshrl.u32 %v1641, 16
      %v1751 = vshll.u32 %v1641, 16
      %v1753 = vrot.slane %v1751, 1
      %v1754 = vor.u32 %v1749, %v1753
      %v1756 = vshll.u32 %v1721, 16
      %v1758 = vrot.slane %v1756, 1
      %v1759 = vsel %vm1222, %v1754, %v1758
      %v1761 = vshrl.u32 %v1642, 16
      %v1763 = vshll.u32 %v1642, 16
      %v1765 = vrot.slane %v1763, 1
      %v1766 = vor.u32 %v1761, %v1765
      %v1768 = vshll.u32 %v1722, 16
      %v1770 = vrot.slane %v1768, 1
      %v1771 = vsel %vm1222, %v1766, %v1770
      %v1773 = vshrl.u32 %v1643, 16
      %v1775 = vshll.u32 %v1643, 16
      %v1777 = vrot.slane %v1775, 1
      %v1778 = vor.u32 %v1773, %v1777
      %v1780 = vshll.u32 %v1723, 16
      %v1782 = vrot.slane %v1780, 1
      %v1783 = vsel %vm1222, %v1778, %v1782
      %v1785 = vshrl.u32 %v1644, 16
      %v1787 = vshll.u32 %v1644, 16
      %v1789 = vrot.slane %v1787, 1
      %v1790 = vor.u32 %v1785, %v1789
      %v1792 = vshll.u32 %v1724, 16
      %v1794 = vrot.slane %v1792, 1
      %v1795 = vsel %vm1222, %v1790, %v1794
      %v1797 = vshrl.u32 %v1645, 16
      %v1799 = vshll.u32 %v1645, 16
      %v1801 = vrot.slane %v1799, 1
      %v1802 = vor.u32 %v1797, %v1801
      %v1804 = vshll.u32 %v1725, 16
      %v1806 = vrot.slane %v1804, 1
      %v1807 = vsel %vm1222, %v1802, %v1806
      %v1809 = vshrl.u32 %v1646, 16
      %v1811 = vshll.u32 %v1646, 16
      %v1813 = vrot.slane %v1811, 1
      %v1814 = vor.u32 %v1809, %v1813
      %v1816 = vshll.u32 %v1726, 16
      %v1818 = vrot.slane %v1816, 1
      %v1819 = vsel %vm1222, %v1814, %v1818
      %v1821 = vshrl.u32 %v1647, 16
      %v1823 = vshll.u32 %v1647, 16
      %v1825 = vrot.slane %v1823, 1
      %v1826 = vor.u32 %v1821, %v1825
      %v1828 = vshll.u32 %v1727, 16
      %v1830 = vrot.slane %v1828, 1
      %v1831 = vsel %vm1222, %v1826, %v1830
      %v1833 = vshrl.u32 %v1648, 16
      %v1835 = vshll.u32 %v1648, 16
      %v1837 = vrot.slane %v1835, 1
      %v1838 = vor.u32 %v1833, %v1837
      %v1840 = vshll.u32 %v1728, 16
      %v1842 = vrot.slane %v1840, 1
      %v1843 = vsel %vm1222, %v1838, %v1842
      %v1845 = vshrl.u32 %v1649, 16
      %v1847 = vshll.u32 %v1649, 16
      %v1849 = vrot.slane %v1847, 1
      %v1850 = vor.u32 %v1845, %v1849
      %v1852 = vshll.u32 %v1729, 16
      %v1854 = vrot.slane %v1852, 1
      %v1855 = vsel %vm1222, %v1850, %v1854
      %v1857 = vshrl.u32 %v1650, 16
      %v1859 = vshll.u32 %v1650, 16
      %v1861 = vrot.slane %v1859, 1
      %v1862 = vor.u32 %v1857, %v1861
      %v1864 = vshll.u32 %v1730, 16
      %v1866 = vrot.slane %v1864, 1
      %v1867 = vsel %vm1222, %v1862, %v1866
      %v1869 = vshrl.u32 %v1651, 16
      %v1871 = vshll.u32 %v1651, 16
      %v1873 = vrot.slane %v1871, 1
      %v1874 = vor.u32 %v1869, %v1873
      %v1876 = vshll.u32 %v1731, 16
      %v1878 = vrot.slane %v1876, 1
      %v1879 = vsel %vm1222, %v1874, %v1878
      %v1881 = vshrl.u32 %v1652, 16
      %v1883 = vshll.u32 %v1652, 16
      %v1885 = vrot.slane %v1883, 1
      %v1886 = vor.u32 %v1881, %v1885
      %v1888 = vshll.u32 %v1732, 16
      %v1890 = vrot.slane %v1888, 1
      %v1891 = vsel %vm1222, %v1886, %v1890
      %v1893 = vshrl.u32 %v1653, 16
      %v1895 = vshll.u32 %v1653, 16
      %v1897 = vrot.slane %v1895, 1
      %v1898 = vor.u32 %v1893, %v1897
      %v1900 = vshll.u32 %v1733, 16
      %v1902 = vrot.slane %v1900, 1
      %v1903 = vsel %vm1222, %v1898, %v1902
      %v1905 = vshrl.u32 %v1654, 16
      %v1907 = vshll.u32 %v1654, 16
      %v1909 = vrot.slane %v1907, 1
      %v1910 = vor.u32 %v1905, %v1909
      %v1912 = vshll.u32 %v1734, 16
      %v1914 = vrot.slane %v1912, 1
      %v1915 = vsel %vm1222, %v1910, %v1914
      %v1917 = vshrl.u32 %v1655, 16
      %v1919 = vshll.u32 %v1655, 16
      %v1921 = vrot.slane %v1919, 1
      %v1922 = vor.u32 %v1917, %v1921
      %v1924 = vshll.u32 %v1735, 16
      %v1926 = vrot.slane %v1924, 1
      %v1927 = vsel %vm1222, %v1922, %v1926
      %1928 = vrot.lane.b32.xlu0 %v1747, 16
      %v1929 = vpop.permute.xlu0 %1928
      %1930 = vrot.lane.b32.xlu0 %v1759, 16
      %v1931 = vpop.permute.xlu0 %1930
      %1932 = vrot.lane.b32.xlu0 %v1771, 16
      %v1933 = vpop.permute.xlu0 %1932
      %1934 = vrot.lane.b32.xlu0 %v1783, 16
      %v1935 = vpop.permute.xlu0 %1934
      %1936 = vrot.lane.b32.xlu0 %v1795, 16
      %v1937 = vpop.permute.xlu0 %1936
      %1938 = vrot.lane.b32.xlu0 %v1807, 16
      %v1939 = vpop.permute.xlu0 %1938
      %1940 = vrot.lane.b32.xlu0 %v1819, 16
      %v1941 = vpop.permute.xlu0 %1940
      %1942 = vrot.lane.b32.xlu0 %v1831, 16
      %v1943 = vpop.permute.xlu0 %1942
      %1944 = vrot.lane.b32.xlu0 %v1843, 16
      %v1945 = vpop.permute.xlu0 %1944
      %1946 = vrot.lane.b32.xlu0 %v1855, 16
      %v1947 = vpop.permute.xlu0 %1946
      %1948 = vrot.lane.b32.xlu0 %v1867, 16
      %v1949 = vpop.permute.xlu0 %1948
      %1950 = vrot.lane.b32.xlu0 %v1879, 16
      %v1951 = vpop.permute.xlu0 %1950
      %1952 = vrot.lane.b32.xlu0 %v1891, 16
      %v1953 = vpop.permute.xlu0 %1952
      %1954 = vrot.lane.b32.xlu0 %v1903, 16
      %v1955 = vpop.permute.xlu0 %1954
      %1956 = vrot.lane.b32.xlu0 %v1915, 16
      %v1957 = vpop.permute.xlu0 %1956
      %1958 = vrot.lane.b32.xlu0 %v1927, 16
      %v1959 = vpop.permute.xlu0 %1958
      %v1976 = vunpack.c.l.b16 %v1013
      %v1977 = vunpack.c.l.b16 %v1014
      %v1978 = vunpack.c.l.b16 %v1015
      %v1979 = vunpack.c.l.b16 %v1016
      %v1980 = vunpack.c.l.b16 %v1017
      %v1981 = vunpack.c.l.b16 %v1018
      %v1982 = vunpack.c.l.b16 %v1019
      %v1983 = vunpack.c.l.b16 %v1020
      %v1984 = vunpack.c.l.b16 %v1021
      %v1985 = vunpack.c.l.b16 %v1022
      %v1986 = vunpack.c.l.b16 %v1023
      %v1987 = vunpack.c.l.b16 %v1024
      %v1988 = vunpack.c.l.b16 %v1025
      %v1989 = vunpack.c.l.b16 %v1026
      %v1990 = vunpack.c.l.b16 %v1027
      %v1991 = vunpack.c.l.b16 %v1028
      %v1992 = vpack.c.b16 %v1609, %v1976
      %v1993 = vpack.c.b16 %v1611, %v1977
      %v1994 = vpack.c.b16 %v1613, %v1978
      %v1995 = vpack.c.b16 %v1615, %v1979
      %v1996 = vpack.c.b16 %v1617, %v1980
      %v1997 = vpack.c.b16 %v1619, %v1981
      %v1998 = vpack.c.b16 %v1621, %v1982
      %v1999 = vpack.c.b16 %v1623, %v1983
      %v2000 = vpack.c.b16 %v1625, %v1984
      %v2001 = vpack.c.b16 %v1627, %v1985
      %v2002 = vpack.c.b16 %v1629, %v1986
      %v2003 = vpack.c.b16 %v1631, %v1987
      %v2004 = vpack.c.b16 %v1633, %v1988
      %v2005 = vpack.c.b16 %v1635, %v1989
      %v2006 = vpack.c.b16 %v1637, %v1990
      %v2007 = vpack.c.b16 %v1639, %v1991
      %v2008 = vrot.slane %v1992, 1
      %v2009 = vrot.slane %v1720, 1
      %v2010 = vsel %vm1495, %v2008, %v2009
      %v2011 = vrot.slane %v1993, 1
      %v2012 = vrot.slane %v1721, 1
      %v2013 = vsel %vm1495, %v2011, %v2012
      %v2014 = vrot.slane %v1994, 1
      %v2015 = vrot.slane %v1722, 1
      %v2016 = vsel %vm1495, %v2014, %v2015
      %v2017 = vrot.slane %v1995, 1
      %v2018 = vrot.slane %v1723, 1
      %v2019 = vsel %vm1495, %v2017, %v2018
      %v2020 = vrot.slane %v1996, 1
      %v2021 = vrot.slane %v1724, 1
      %v2022 = vsel %vm1495, %v2020, %v2021
      %v2023 = vrot.slane %v1997, 1
      %v2024 = vrot.slane %v1725, 1
      %v2025 = vsel %vm1495, %v2023, %v2024
      %v2026 = vrot.slane %v1998, 1
      %v2027 = vrot.slane %v1726, 1
      %v2028 = vsel %vm1495, %v2026, %v2027
      %v2029 = vrot.slane %v1999, 1
      %v2030 = vrot.slane %v1727, 1
      %v2031 = vsel %vm1495, %v2029, %v2030
      %v2032 = vrot.slane %v2000, 1
      %v2033 = vrot.slane %v1728, 1
      %v2034 = vsel %vm1495, %v2032, %v2033
      %v2035 = vrot.slane %v2001, 1
      %v2036 = vrot.slane %v1729, 1
      %v2037 = vsel %vm1495, %v2035, %v2036
      %v2038 = vrot.slane %v2002, 1
      %v2039 = vrot.slane %v1730, 1
      %v2040 = vsel %vm1495, %v2038, %v2039
      %v2041 = vrot.slane %v2003, 1
      %v2042 = vrot.slane %v1731, 1
      %v2043 = vsel %vm1495, %v2041, %v2042
      %v2044 = vrot.slane %v2004, 1
      %v2045 = vrot.slane %v1732, 1
      %v2046 = vsel %vm1495, %v2044, %v2045
      %v2047 = vrot.slane %v2005, 1
      %v2048 = vrot.slane %v1733, 1
      %v2049 = vsel %vm1495, %v2047, %v2048
      %v2050 = vrot.slane %v2006, 1
      %v2051 = vrot.slane %v1734, 1
      %v2052 = vsel %vm1495, %v2050, %v2051
      %v2053 = vrot.slane %v2007, 1
      %v2054 = vrot.slane %v1735, 1
      %v2055 = vsel %vm1495, %v2053, %v2054
      %2056 = vrot.lane.b32.xlu0 %v2010, 20
      %v2057 = vpop.permute.xlu0 %2056
      %2058 = vrot.lane.b32.xlu0 %v2013, 20
      %v2059 = vpop.permute.xlu0 %2058
      %2060 = vrot.lane.b32.xlu0 %v2016, 20
      %v2061 = vpop.permute.xlu0 %2060
      %2062 = vrot.lane.b32.xlu0 %v2019, 20
      %v2063 = vpop.permute.xlu0 %2062
      %2064 = vrot.lane.b32.xlu0 %v2022, 20
      %v2065 = vpop.permute.xlu0 %2064
      %2066 = vrot.lane.b32.xlu0 %v2025, 20
      %v2067 = vpop.permute.xlu0 %2066
      %2068 = vrot.lane.b32.xlu0 %v2028, 20
      %v2069 = vpop.permute.xlu0 %2068
      %2070 = vrot.lane.b32.xlu0 %v2031, 20
      %v2071 = vpop.permute.xlu0 %2070
      %2072 = vrot.lane.b32.xlu0 %v2034, 20
      %v2073 = vpop.permute.xlu0 %2072
      %2074 = vrot.lane.b32.xlu0 %v2037, 20
      %v2075 = vpop.permute.xlu0 %2074
      %2076 = vrot.lane.b32.xlu0 %v2040, 20
      %v2077 = vpop.permute.xlu0 %2076
      %2078 = vrot.lane.b32.xlu0 %v2043, 20
      %v2079 = vpop.permute.xlu0 %2078
      %2080 = vrot.lane.b32.xlu0 %v2046, 20
      %v2081 = vpop.permute.xlu0 %2080
      %2082 = vrot.lane.b32.xlu0 %v2049, 20
      %v2083 = vpop.permute.xlu0 %2082
      %2084 = vrot.lane.b32.xlu0 %v2052, 20
      %v2085 = vpop.permute.xlu0 %2084
      %2086 = vrot.lane.b32.xlu0 %v2055, 20
      %v2087 = vpop.permute.xlu0 %2086
      %v2120 = vunpack.c.l.b16 %v1030
      %v2121 = vunpack.c.l.b16 %v1031
      %v2122 = vunpack.c.l.b16 %v1032
      %v2123 = vunpack.c.l.b16 %v1033
      %v2124 = vunpack.c.l.b16 %v1034
      %v2125 = vunpack.c.l.b16 %v1035
      %v2126 = vunpack.c.l.b16 %v1036
      %v2127 = vunpack.c.l.b16 %v1037
      %v2128 = vunpack.c.l.b16 %v1038
      %v2129 = vunpack.c.l.b16 %v1039
      %v2130 = vunpack.c.l.b16 %v1040
      %v2131 = vunpack.c.l.b16 %v1041
      %v2132 = vunpack.c.l.b16 %v1042
      %v2133 = vunpack.c.l.b16 %v1043
      %v2134 = vunpack.c.l.b16 %v1044
      %v2135 = vunpack.c.l.b16 %v1045
      %v2136 = vunpack.c.l.b16 %v1046
      %v2137 = vunpack.c.l.b16 %v1047
      %v2138 = vunpack.c.l.b16 %v1048
      %v2139 = vunpack.c.l.b16 %v1049
      %v2140 = vunpack.c.l.b16 %v1050
      %v2141 = vunpack.c.l.b16 %v1051
      %v2142 = vunpack.c.l.b16 %v1052
      %v2143 = vunpack.c.l.b16 %v1053
      %v2144 = vunpack.c.l.b16 %v1054
      %v2145 = vunpack.c.l.b16 %v1055
      %v2146 = vunpack.c.l.b16 %v1056
      %v2147 = vunpack.c.l.b16 %v1057
      %v2148 = vunpack.c.l.b16 %v1058
      %v2149 = vunpack.c.l.b16 %v1059
      %v2150 = vunpack.c.l.b16 %v1060
      %v2151 = vunpack.c.l.b16 %v1061
      %v2152 = vpack.c.b16 %v2121, %v2120
      %v2153 = vpack.c.b16 %v2123, %v2122
      %v2154 = vpack.c.b16 %v2125, %v2124
      %v2155 = vpack.c.b16 %v2127, %v2126
      %v2156 = vpack.c.b16 %v2129, %v2128
      %v2157 = vpack.c.b16 %v2131, %v2130
      %v2158 = vpack.c.b16 %v2133, %v2132
      %v2159 = vpack.c.b16 %v2135, %v2134
      %v2160 = vpack.c.b16 %v2137, %v2136
      %v2161 = vpack.c.b16 %v2139, %v2138
      %v2162 = vpack.c.b16 %v2141, %v2140
      %v2163 = vpack.c.b16 %v2143, %v2142
      %v2164 = vpack.c.b16 %v2145, %v2144
      %v2165 = vpack.c.b16 %v2147, %v2146
      %v2166 = vpack.c.b16 %v2149, %v2148
      %v2167 = vpack.c.b16 %v2151, %v2150
      %2168 = vrot.lane.b32.xlu0 %v2152, 24
      %v2169 = vpop.permute.xlu0 %2168
      %2170 = vrot.lane.b32.xlu0 %v2153, 24
      %v2171 = vpop.permute.xlu0 %2170
      %2172 = vrot.lane.b32.xlu0 %v2154, 24
      %v2173 = vpop.permute.xlu0 %2172
      %2174 = vrot.lane.b32.xlu0 %v2155, 24
      %v2175 = vpop.permute.xlu0 %2174
      %2176 = vrot.lane.b32.xlu0 %v2156, 24
      %v2177 = vpop.permute.xlu0 %2176
      %2178 = vrot.lane.b32.xlu0 %v2157, 24
      %v2179 = vpop.permute.xlu0 %2178
      %2180 = vrot.lane.b32.xlu0 %v2158, 24
      %v2181 = vpop.permute.xlu0 %2180
      %2182 = vrot.lane.b32.xlu0 %v2159, 24
      %v2183 = vpop.permute.xlu0 %2182
      %2184 = vrot.lane.b32.xlu0 %v2160, 24
      %v2185 = vpop.permute.xlu0 %2184
      %2186 = vrot.lane.b32.xlu0 %v2161, 24
      %v2187 = vpop.permute.xlu0 %2186
      %2188 = vrot.lane.b32.xlu0 %v2162, 24
      %v2189 = vpop.permute.xlu0 %2188
      %2190 = vrot.lane.b32.xlu0 %v2163, 24
      %v2191 = vpop.permute.xlu0 %2190
      %2192 = vrot.lane.b32.xlu0 %v2164, 24
      %v2193 = vpop.permute.xlu0 %2192
      %2194 = vrot.lane.b32.xlu0 %v2165, 24
      %v2195 = vpop.permute.xlu0 %2194
      %2196 = vrot.lane.b32.xlu0 %v2166, 24
      %v2197 = vpop.permute.xlu0 %2196
      %2198 = vrot.lane.b32.xlu0 %v2167, 24
      %v2199 = vpop.permute.xlu0 %2198
      %v2216 = vunpack.c.l.b16 %v1062
      %v2217 = vunpack.c.l.b16 %v1063
      %v2218 = vunpack.c.l.b16 %v1064
      %v2219 = vunpack.c.l.b16 %v1065
      %v2220 = vunpack.c.l.b16 %v1066
      %v2221 = vunpack.c.l.b16 %v1067
      %v2222 = vunpack.c.l.b16 %v1068
      %v2223 = vunpack.c.l.b16 %v1069
      %v2224 = vunpack.c.l.b16 %v1070
      %v2225 = vunpack.c.l.b16 %v1071
      %v2226 = vunpack.c.l.b16 %v1072
      %v2227 = vunpack.c.l.b16 %v1073
      %v2228 = vunpack.c.l.b16 %v1074
      %v2229 = vunpack.c.l.b16 %v1075
      %v2230 = vunpack.c.l.b16 %v1076
      %v2231 = vunpack.c.l.b16 %v1077
      %v2232 = vpack.c.b16 %v2216, %v2216
      %v2233 = vpack.c.b16 %v2217, %v2217
      %v2234 = vpack.c.b16 %v2218, %v2218
      %v2235 = vpack.c.b16 %v2219, %v2219
      %v2236 = vpack.c.b16 %v2220, %v2220
      %v2237 = vpack.c.b16 %v2221, %v2221
      %v2238 = vpack.c.b16 %v2222, %v2222
      %v2239 = vpack.c.b16 %v2223, %v2223
      %v2240 = vpack.c.b16 %v2224, %v2224
      %v2241 = vpack.c.b16 %v2225, %v2225
      %v2242 = vpack.c.b16 %v2226, %v2226
      %v2243 = vpack.c.b16 %v2227, %v2227
      %v2244 = vpack.c.b16 %v2228, %v2228
      %v2245 = vpack.c.b16 %v2229, %v2229
      %v2246 = vpack.c.b16 %v2230, %v2230
      %v2247 = vpack.c.b16 %v2231, %v2231
      %v2249 = vshrl.u32 %v2152, 16
      %v2251 = vshll.u32 %v2152, 16
      %v2253 = vrot.slane %v2251, 1
      %v2254 = vor.u32 %v2249, %v2253
      %v2256 = vshll.u32 %v2232, 16
      %v2258 = vrot.slane %v2256, 1
      %v2259 = vsel %vm1222, %v2254, %v2258
      %v2261 = vshrl.u32 %v2153, 16
      %v2263 = vshll.u32 %v2153, 16
      %v2265 = vrot.slane %v2263, 1
      %v2266 = vor.u32 %v2261, %v2265
      %v2268 = vshll.u32 %v2233, 16
      %v2270 = vrot.slane %v2268, 1
      %v2271 = vsel %vm1222, %v2266, %v2270
      %v2273 = vshrl.u32 %v2154, 16
      %v2275 = vshll.u32 %v2154, 16
      %v2277 = vrot.slane %v2275, 1
      %v2278 = vor.u32 %v2273, %v2277
      %v2280 = vshll.u32 %v2234, 16
      %v2282 = vrot.slane %v2280, 1
      %v2283 = vsel %vm1222, %v2278, %v2282
      %v2285 = vshrl.u32 %v2155, 16
      %v2287 = vshll.u32 %v2155, 16
      %v2289 = vrot.slane %v2287, 1
      %v2290 = vor.u32 %v2285, %v2289
      %v2292 = vshll.u32 %v2235, 16
      %v2294 = vrot.slane %v2292, 1
      %v2295 = vsel %vm1222, %v2290, %v2294
      %v2297 = vshrl.u32 %v2156, 16
      %v2299 = vshll.u32 %v2156, 16
      %v2301 = vrot.slane %v2299, 1
      %v2302 = vor.u32 %v2297, %v2301
      %v2304 = vshll.u32 %v2236, 16
      %v2306 = vrot.slane %v2304, 1
      %v2307 = vsel %vm1222, %v2302, %v2306
      %v2309 = vshrl.u32 %v2157, 16
      %v2311 = vshll.u32 %v2157, 16
      %v2313 = vrot.slane %v2311, 1
      %v2314 = vor.u32 %v2309, %v2313
      %v2316 = vshll.u32 %v2237, 16
      %v2318 = vrot.slane %v2316, 1
      %v2319 = vsel %vm1222, %v2314, %v2318
      %v2321 = vshrl.u32 %v2158, 16
      %v2323 = vshll.u32 %v2158, 16
      %v2325 = vrot.slane %v2323, 1
      %v2326 = vor.u32 %v2321, %v2325
      %v2328 = vshll.u32 %v2238, 16
      %v2330 = vrot.slane %v2328, 1
      %v2331 = vsel %vm1222, %v2326, %v2330
      %v2333 = vshrl.u32 %v2159, 16
      %v2335 = vshll.u32 %v2159, 16
      %v2337 = vrot.slane %v2335, 1
      %v2338 = vor.u32 %v2333, %v2337
      %v2340 = vshll.u32 %v2239, 16
      %v2342 = vrot.slane %v2340, 1
      %v2343 = vsel %vm1222, %v2338, %v2342
      %v2345 = vshrl.u32 %v2160, 16
      %v2347 = vshll.u32 %v2160, 16
      %v2349 = vrot.slane %v2347, 1
      %v2350 = vor.u32 %v2345, %v2349
      %v2352 = vshll.u32 %v2240, 16
      %v2354 = vrot.slane %v2352, 1
      %v2355 = vsel %vm1222, %v2350, %v2354
      %v2357 = vshrl.u32 %v2161, 16
      %v2359 = vshll.u32 %v2161, 16
      %v2361 = vrot.slane %v2359, 1
      %v2362 = vor.u32 %v2357, %v2361
      %v2364 = vshll.u32 %v2241, 16
      %v2366 = vrot.slane %v2364, 1
      %v2367 = vsel %vm1222, %v2362, %v2366
      %v2369 = vshrl.u32 %v2162, 16
      %v2371 = vshll.u32 %v2162, 16
      %v2373 = vrot.slane %v2371, 1
      %v2374 = vor.u32 %v2369, %v2373
      %v2376 = vshll.u32 %v2242, 16
      %v2378 = vrot.slane %v2376, 1
      %v2379 = vsel %vm1222, %v2374, %v2378
      %v2381 = vshrl.u32 %v2163, 16
      %v2383 = vshll.u32 %v2163, 16
      %v2385 = vrot.slane %v2383, 1
      %v2386 = vor.u32 %v2381, %v2385
      %v2388 = vshll.u32 %v2243, 16
      %v2390 = vrot.slane %v2388, 1
      %v2391 = vsel %vm1222, %v2386, %v2390
      %v2393 = vshrl.u32 %v2164, 16
      %v2395 = vshll.u32 %v2164, 16
      %v2397 = vrot.slane %v2395, 1
      %v2398 = vor.u32 %v2393, %v2397
      %v2400 = vshll.u32 %v2244, 16
      %v2402 = vrot.slane %v2400, 1
      %v2403 = vsel %vm1222, %v2398, %v2402
      %v2405 = vshrl.u32 %v2165, 16
      %v2407 = vshll.u32 %v2165, 16
      %v2409 = vrot.slane %v2407, 1
      %v2410 = vor.u32 %v2405, %v2409
      %v2412 = vshll.u32 %v2245, 16
      %v2414 = vrot.slane %v2412, 1
      %v2415 = vsel %vm1222, %v2410, %v2414
      %v2417 = vshrl.u32 %v2166, 16
      %v2419 = vshll.u32 %v2166, 16
      %v2421 = vrot.slane %v2419, 1
      %v2422 = vor.u32 %v2417, %v2421
      %v2424 = vshll.u32 %v2246, 16
      %v2426 = vrot.slane %v2424, 1
      %v2427 = vsel %vm1222, %v2422, %v2426
      %v2429 = vshrl.u32 %v2167, 16
      %v2431 = vshll.u32 %v2167, 16
      %v2433 = vrot.slane %v2431, 1
      %v2434 = vor.u32 %v2429, %v2433
      %v2436 = vshll.u32 %v2247, 16
      %v2438 = vrot.slane %v2436, 1
      %v2439 = vsel %vm1222, %v2434, %v2438
      %2440 = vrot.lane.b32.xlu0 %v2259, 28
      %v2441 = vpop.permute.xlu0 %2440
      %2442 = vrot.lane.b32.xlu0 %v2271, 28
      %v2443 = vpop.permute.xlu0 %2442
      %2444 = vrot.lane.b32.xlu0 %v2283, 28
      %v2445 = vpop.permute.xlu0 %2444
      %2446 = vrot.lane.b32.xlu0 %v2295, 28
      %v2447 = vpop.permute.xlu0 %2446
      %2448 = vrot.lane.b32.xlu0 %v2307, 28
      %v2449 = vpop.permute.xlu0 %2448
      %2450 = vrot.lane.b32.xlu0 %v2319, 28
      %v2451 = vpop.permute.xlu0 %2450
      %2452 = vrot.lane.b32.xlu0 %v2331, 28
      %v2453 = vpop.permute.xlu0 %2452
      %2454 = vrot.lane.b32.xlu0 %v2343, 28
      %v2455 = vpop.permute.xlu0 %2454
      %2456 = vrot.lane.b32.xlu0 %v2355, 28
      %v2457 = vpop.permute.xlu0 %2456
      %2458 = vrot.lane.b32.xlu0 %v2367, 28
      %v2459 = vpop.permute.xlu0 %2458
      %2460 = vrot.lane.b32.xlu0 %v2379, 28
      %v2461 = vpop.permute.xlu0 %2460
      %2462 = vrot.lane.b32.xlu0 %v2391, 28
      %v2463 = vpop.permute.xlu0 %2462
      %2464 = vrot.lane.b32.xlu0 %v2403, 28
      %v2465 = vpop.permute.xlu0 %2464
      %2466 = vrot.lane.b32.xlu0 %v2415, 28
      %v2467 = vpop.permute.xlu0 %2466
      %2468 = vrot.lane.b32.xlu0 %v2427, 28
      %v2469 = vpop.permute.xlu0 %2468
      %2470 = vrot.lane.b32.xlu0 %v2439, 28
      %v2471 = vpop.permute.xlu0 %2470
      %v2488 = vunpack.c.l.b16 %v1078
      %v2489 = vunpack.c.l.b16 %v1079
      %v2490 = vunpack.c.l.b16 %v1080
      %v2491 = vunpack.c.l.b16 %v1081
      %v2492 = vunpack.c.l.b16 %v1082
      %v2493 = vunpack.c.l.b16 %v1083
      %v2494 = vunpack.c.l.b16 %v1084
      %v2495 = vunpack.c.l.b16 %v1085
      %v2496 = vunpack.c.l.b16 %v1086
      %v2497 = vunpack.c.l.b16 %v1087
      %v2498 = vunpack.c.l.b16 %v1088
      %v2499 = vunpack.c.l.b16 %v1089
      %v2500 = vunpack.c.l.b16 %v1090
      %v2501 = vunpack.c.l.b16 %v1091
      %v2502 = vunpack.c.l.b16 %v1092
      %v2503 = vunpack.c.l.b16 %v1093
      %v2504 = vpack.c.b16 %v2121, %v2488
      %v2505 = vpack.c.b16 %v2123, %v2489
      %v2506 = vpack.c.b16 %v2125, %v2490
      %v2507 = vpack.c.b16 %v2127, %v2491
      %v2508 = vpack.c.b16 %v2129, %v2492
      %v2509 = vpack.c.b16 %v2131, %v2493
      %v2510 = vpack.c.b16 %v2133, %v2494
      %v2511 = vpack.c.b16 %v2135, %v2495
      %v2512 = vpack.c.b16 %v2137, %v2496
      %v2513 = vpack.c.b16 %v2139, %v2497
      %v2514 = vpack.c.b16 %v2141, %v2498
      %v2515 = vpack.c.b16 %v2143, %v2499
      %v2516 = vpack.c.b16 %v2145, %v2500
      %v2517 = vpack.c.b16 %v2147, %v2501
      %v2518 = vpack.c.b16 %v2149, %v2502
      %v2519 = vpack.c.b16 %v2151, %v2503
      %v2520 = vrot.slane %v2504, 1
      %v2521 = vrot.slane %v2232, 1
      %v2522 = vsel %vm1495, %v2520, %v2521
      %v2523 = vrot.slane %v2505, 1
      %v2524 = vrot.slane %v2233, 1
      %v2525 = vsel %vm1495, %v2523, %v2524
      %v2526 = vrot.slane %v2506, 1
      %v2527 = vrot.slane %v2234, 1
      %v2528 = vsel %vm1495, %v2526, %v2527
      %v2529 = vrot.slane %v2507, 1
      %v2530 = vrot.slane %v2235, 1
      %v2531 = vsel %vm1495, %v2529, %v2530
      %v2532 = vrot.slane %v2508, 1
      %v2533 = vrot.slane %v2236, 1
      %v2534 = vsel %vm1495, %v2532, %v2533
      %v2535 = vrot.slane %v2509, 1
      %v2536 = vrot.slane %v2237, 1
      %v2537 = vsel %vm1495, %v2535, %v2536
      %v2538 = vrot.slane %v2510, 1
      %v2539 = vrot.slane %v2238, 1
      %v2540 = vsel %vm1495, %v2538, %v2539
      %v2541 = vrot.slane %v2511, 1
      %v2542 = vrot.slane %v2239, 1
      %v2543 = vsel %vm1495, %v2541, %v2542
      %v2544 = vrot.slane %v2512, 1
      %v2545 = vrot.slane %v2240, 1
      %v2546 = vsel %vm1495, %v2544, %v2545
      %v2547 = vrot.slane %v2513, 1
      %v2548 = vrot.slane %v2241, 1
      %v2549 = vsel %vm1495, %v2547, %v2548
      %v2550 = vrot.slane %v2514, 1
      %v2551 = vrot.slane %v2242, 1
      %v2552 = vsel %vm1495, %v2550, %v2551
      %v2553 = vrot.slane %v2515, 1
      %v2554 = vrot.slane %v2243, 1
      %v2555 = vsel %vm1495, %v2553, %v2554
      %v2556 = vrot.slane %v2516, 1
      %v2557 = vrot.slane %v2244, 1
      %v2558 = vsel %vm1495, %v2556, %v2557
      %v2559 = vrot.slane %v2517, 1
      %v2560 = vrot.slane %v2245, 1
      %v2561 = vsel %vm1495, %v2559, %v2560
      %v2562 = vrot.slane %v2518, 1
      %v2563 = vrot.slane %v2246, 1
      %v2564 = vsel %vm1495, %v2562, %v2563
      %v2565 = vrot.slane %v2519, 1
      %v2566 = vrot.slane %v2247, 1
      %v2567 = vsel %vm1495, %v2565, %v2566
      %2568 = vrot.lane.b32.xlu0 %v2522, 32
      %v2569 = vpop.permute.xlu0 %2568
      %2570 = vrot.lane.b32.xlu0 %v2525, 32
      %v2571 = vpop.permute.xlu0 %2570
      %2572 = vrot.lane.b32.xlu0 %v2528, 32
      %v2573 = vpop.permute.xlu0 %2572
      %2574 = vrot.lane.b32.xlu0 %v2531, 32
      %v2575 = vpop.permute.xlu0 %2574
      %2576 = vrot.lane.b32.xlu0 %v2534, 32
      %v2577 = vpop.permute.xlu0 %2576
      %2578 = vrot.lane.b32.xlu0 %v2537, 32
      %v2579 = vpop.permute.xlu0 %2578
      %2580 = vrot.lane.b32.xlu0 %v2540, 32
      %v2581 = vpop.permute.xlu0 %2580
      %2582 = vrot.lane.b32.xlu0 %v2543, 32
      %v2583 = vpop.permute.xlu0 %2582
      %2584 = vrot.lane.b32.xlu0 %v2546, 32
      %v2585 = vpop.permute.xlu0 %2584
      %2586 = vrot.lane.b32.xlu0 %v2549, 32
      %v2587 = vpop.permute.xlu0 %2586
      %2588 = vrot.lane.b32.xlu0 %v2552, 32
      %v2589 = vpop.permute.xlu0 %2588
      %2590 = vrot.lane.b32.xlu0 %v2555, 32
      %v2591 = vpop.permute.xlu0 %2590
      %2592 = vrot.lane.b32.xlu0 %v2558, 32
      %v2593 = vpop.permute.xlu0 %2592
      %2594 = vrot.lane.b32.xlu0 %v2561, 32
      %v2595 = vpop.permute.xlu0 %2594
      %2596 = vrot.lane.b32.xlu0 %v2564, 32
      %v2597 = vpop.permute.xlu0 %2596
      %2598 = vrot.lane.b32.xlu0 %v2567, 32
      %v2599 = vpop.permute.xlu0 %2598
      %vm2600 = vcmask 31744
      %v2602 = vsel %vm2600, %v1158, %v1416
      %v2604 = vsel %vm2600, %v1159, %v1418
      %v2606 = vsel %vm2600, %v1160, %v1420
      %v2608 = vsel %vm2600, %v1161, %v1422
      %v2610 = vsel %vm2600, %v1162, %v1424
      %v2612 = vsel %vm2600, %v1163, %v1426
      %v2614 = vsel %vm2600, %v1164, %v1428
      %v2616 = vsel %vm2600, %v1165, %v1430
      %v2618 = vsel %vm2600, %v1166, %v1432
      %v2620 = vsel %vm2600, %v1167, %v1434
      %v2622 = vsel %vm2600, %v1168, %v1436
      %v2624 = vsel %vm2600, %v1169, %v1438
      %v2626 = vsel %vm2600, %v1170, %v1440
      %v2628 = vsel %vm2600, %v1171, %v1442
      %v2630 = vsel %vm2600, %v1172, %v1444
      %v2632 = vsel %vm2600, %v1173, %v1446
      %vm2633 = vcmask 64512
      %v2635 = vsel %vm2633, %v2602, %v1545
      %v2637 = vsel %vm2633, %v2604, %v1547
      %v2639 = vsel %vm2633, %v2606, %v1549
      %v2641 = vsel %vm2633, %v2608, %v1551
      %v2643 = vsel %vm2633, %v2610, %v1553
      %v2645 = vsel %vm2633, %v2612, %v1555
      %v2647 = vsel %vm2633, %v2614, %v1557
      %v2649 = vsel %vm2633, %v2616, %v1559
      %v2651 = vsel %vm2633, %v2618, %v1561
      %v2653 = vsel %vm2633, %v2620, %v1563
      %v2655 = vsel %vm2633, %v2622, %v1565
      %v2657 = vsel %vm2633, %v2624, %v1567
      %v2659 = vsel %vm2633, %v2626, %v1569
      %v2661 = vsel %vm2633, %v2628, %v1571
      %v2663 = vsel %vm2633, %v2630, %v1573
      %v2665 = vsel %vm2633, %v2632, %v1575
      %vm2666 = vcmask 97280
      %v2668 = vsel %vm2666, %v2635, %v1657
      %v2670 = vsel %vm2666, %v2637, %v1659
      %v2672 = vsel %vm2666, %v2639, %v1661
      %v2674 = vsel %vm2666, %v2641, %v1663
      %v2676 = vsel %vm2666, %v2643, %v1665
      %v2678 = vsel %vm2666, %v2645, %v1667
      %v2680 = vsel %vm2666, %v2647, %v1669
      %v2682 = vsel %vm2666, %v2649, %v1671
      %v2684 = vsel %vm2666, %v2651, %v1673
      %v2686 = vsel %vm2666, %v2653, %v1675
      %v2688 = vsel %vm2666, %v2655, %v1677
      %v2690 = vsel %vm2666, %v2657, %v1679
      %v2692 = vsel %vm2666, %v2659, %v1681
      %v2694 = vsel %vm2666, %v2661, %v1683
      %v2696 = vsel %vm2666, %v2663, %v1685
      %v2698 = vsel %vm2666, %v2665, %v1687
      %vm2699 = vcmask 130048
      %v2701 = vsel %vm2699, %v2668, %v1929
      %v2703 = vsel %vm2699, %v2670, %v1931
      %v2705 = vsel %vm2699, %v2672, %v1933
      %v2707 = vsel %vm2699, %v2674, %v1935
      %v2709 = vsel %vm2699, %v2676, %v1937
      %v2711 = vsel %vm2699, %v2678, %v1939
      %v2713 = vsel %vm2699, %v2680, %v1941
      %v2715 = vsel %vm2699, %v2682, %v1943
      %v2717 = vsel %vm2699, %v2684, %v1945
      %v2719 = vsel %vm2699, %v2686, %v1947
      %v2721 = vsel %vm2699, %v2688, %v1949
      %v2723 = vsel %vm2699, %v2690, %v1951
      %v2725 = vsel %vm2699, %v2692, %v1953
      %v2727 = vsel %vm2699, %v2694, %v1955
      %v2729 = vsel %vm2699, %v2696, %v1957
      %v2731 = vsel %vm2699, %v2698, %v1959
      %vm2732 = vcmask 162816
      %v2734 = vsel %vm2732, %v2701, %v2057
      %v2736 = vsel %vm2732, %v2703, %v2059
      %v2738 = vsel %vm2732, %v2705, %v2061
      %v2740 = vsel %vm2732, %v2707, %v2063
      %v2742 = vsel %vm2732, %v2709, %v2065
      %v2744 = vsel %vm2732, %v2711, %v2067
      %v2746 = vsel %vm2732, %v2713, %v2069
      %v2748 = vsel %vm2732, %v2715, %v2071
      %v2750 = vsel %vm2732, %v2717, %v2073
      %v2752 = vsel %vm2732, %v2719, %v2075
      %v2754 = vsel %vm2732, %v2721, %v2077
      %v2756 = vsel %vm2732, %v2723, %v2079
      %v2758 = vsel %vm2732, %v2725, %v2081
      %v2760 = vsel %vm2732, %v2727, %v2083
      %v2762 = vsel %vm2732, %v2729, %v2085
      %v2764 = vsel %vm2732, %v2731, %v2087
      %vm2765 = vcmask 195584
      %v2767 = vsel %vm2765, %v2734, %v2169
      %v2769 = vsel %vm2765, %v2736, %v2171
      %v2771 = vsel %vm2765, %v2738, %v2173
      %v2773 = vsel %vm2765, %v2740, %v2175
      %v2775 = vsel %vm2765, %v2742, %v2177
      %v2777 = vsel %vm2765, %v2744, %v2179
      %v2779 = vsel %vm2765, %v2746, %v2181
      %v2781 = vsel %vm2765, %v2748, %v2183
      %v2783 = vsel %vm2765, %v2750, %v2185
      %v2785 = vsel %vm2765, %v2752, %v2187
      %v2787 = vsel %vm2765, %v2754, %v2189
      %v2789 = vsel %vm2765, %v2756, %v2191
      %v2791 = vsel %vm2765, %v2758, %v2193
      %v2793 = vsel %vm2765, %v2760, %v2195
      %v2795 = vsel %vm2765, %v2762, %v2197
      %v2797 = vsel %vm2765, %v2764, %v2199
      %vm2798 = vcmask 228352
      %v2800 = vsel %vm2798, %v2767, %v2441
      %v2802 = vsel %vm2798, %v2769, %v2443
      %v2804 = vsel %vm2798, %v2771, %v2445
      %v2806 = vsel %vm2798, %v2773, %v2447
      %v2808 = vsel %vm2798, %v2775, %v2449
      %v2810 = vsel %vm2798, %v2777, %v2451
      %v2812 = vsel %vm2798, %v2779, %v2453
      %v2814 = vsel %vm2798, %v2781, %v2455
      %v2816 = vsel %vm2798, %v2783, %v2457
      %v2818 = vsel %vm2798, %v2785, %v2459
      %v2820 = vsel %vm2798, %v2787, %v2461
      %v2822 = vsel %vm2798, %v2789, %v2463
      %v2824 = vsel %vm2798, %v2791, %v2465
      %v2826 = vsel %vm2798, %v2793, %v2467
      %v2828 = vsel %vm2798, %v2795, %v2469
      %v2830 = vsel %vm2798, %v2797, %v2471
      %vm2831 = vcmask 261120
      %v2833 = vsel %vm2831, %v2800, %v2569
      %v2835 = vsel %vm2831, %v2802, %v2571
      %v2837 = vsel %vm2831, %v2804, %v2573
      %v2839 = vsel %vm2831, %v2806, %v2575
      %v2841 = vsel %vm2831, %v2808, %v2577
      %v2843 = vsel %vm2831, %v2810, %v2579
      %v2845 = vsel %vm2831, %v2812, %v2581
      %v2847 = vsel %vm2831, %v2814, %v2583
      %v2849 = vsel %vm2831, %v2816, %v2585
      %v2851 = vsel %vm2831, %v2818, %v2587
      %v2853 = vsel %vm2831, %v2820, %v2589
      %v2855 = vsel %vm2831, %v2822, %v2591
      %v2857 = vsel %vm2831, %v2824, %v2593
      %v2859 = vsel %vm2831, %v2826, %v2595
      %v2861 = vsel %vm2831, %v2828, %v2597
      %v2863 = vsel %vm2831, %v2830, %v2599
      %v2864 = vld [vmem:[%s1] sm:$0xf]
      %v2865 = vld [vmem:[%s1 + $0x4] sm:$0xf]
      %v2866 = vld [vmem:[%s1 + $0x8] sm:$0xf]
      %v2867 = vld [vmem:[%s1 + $0xc] sm:$0xf]
      %v2868 = vld [vmem:[%s1 + $0x10] sm:$0x3]
      %v2869 = vld [vmem:[%s2] sm:$0x1]
      %v2871 = vlaneseq
      %v2872 = vshrl.u32 %v2871, 7
      %v2873 = vsub.s32 0, %v2872
      %v2874 = vrot.slane %v2869, %v2873
      %v2881 = vunpack.c.l.b16 %v2864
      %v2882 = vunpack.c.l.b16 %v2865
      %v2883 = vunpack.c.l.b16 %v2866
      %v2884 = vunpack.c.l.b16 %v2867
      %v2885 = vunpack.c.l.b16 %v2868
      %v2886 = vpack.c.b16 %v2882, %v2881
      %v2887 = vpack.c.b16 %v2884, %v2883
      %v2888 = vpack.c.b16 %v2885, %v2885
      %vm2891 = vcmask 293888
      %v2892 = vsel %vm2891, %v2833, 0
      %v2894 = vsel %vm2891, %v2835, 0
      %v2896 = vsel %vm2891, %v2837, 0
      %v2898 = vsel %vm2891, %v2839, 0
      %v2900 = vsel %vm2891, %v2841, 0
      %v2902 = vsel %vm2891, %v2843, 0
      %v2904 = vsel %vm2891, %v2845, 0
      %v2906 = vsel %vm2891, %v2847, 0
      %v2908 = vsel %vm2891, %v2849, 0
      %v2910 = vsel %vm2891, %v2851, 0
      %v2912 = vsel %vm2891, %v2853, 0
      %v2914 = vsel %vm2891, %v2855, 0
      %v2916 = vsel %vm2891, %v2857, 0
      %v2918 = vsel %vm2891, %v2859, 0
      %v2920 = vsel %vm2891, %v2861, 0
      %v2922 = vsel %vm2891, %v2863, 0
      %vm2924 = vcmask 1041408
      %v2926 = vsel %vm2924, %v2888, 0
      %2928 = vmatprep.subr.bf16.mxu0 0
      %2929 = vmatpush1.bf16.msra.mxu0 %v2886
      %2930 = vmatprep.subr.bf16.mxu0 0
      %2931 = vmatpush1.bf16.msra.mxu0 %v2887
      %2932 = vmatprep.subr.bf16.mxu0 0
      %2933 = vmatpush1.bf16.msra.mxu0 %v2926
      %2934 = vmatprep.subr.bf16.mxu0 0
      %2935 = vmatpush1.bf16.msra.mxu0 0
      %2936 = vmatprep.subr.bf16.mxu0 0
      %2937 = vmatpush1.bf16.msra.mxu0 0
      %2938 = vmatprep.subr.bf16.mxu0 0
      %2939 = vmatpush1.bf16.msra.mxu0 0
      %2940 = vmatprep.subr.bf16.mxu0 0
      %2941 = vmatpush1.bf16.msra.mxu0 0
      %2942 = vmatprep.subr.bf16.mxu0 0
      %2943 = vmatpush1.bf16.msra.mxu0 0
      %2944 = vmatprep.subr.bf16.mxu0 0
      %2945 = vmatpush1.bf16.msra.mxu0 0
      %2946 = vmatprep.subr.bf16.mxu0 0
      %2947 = vmatpush1.bf16.msra.mxu0 0
      %2948 = vmatprep.subr.bf16.mxu0 0
      %2949 = vmatpush1.bf16.msra.mxu0 0
      %2950 = vmatprep.subr.bf16.mxu0 0
      %2951 = vmatpush1.bf16.msra.mxu0 0
      %2952 = vmatprep.subr.bf16.mxu0 0
      %2953 = vmatpush1.bf16.msra.mxu0 0
      %2954 = vmatprep.subr.bf16.mxu0 0
      %2955 = vmatpush1.bf16.msra.mxu0 0
      %2956 = vmatprep.subr.bf16.mxu0 0
      %2957 = vmatpush1.bf16.msra.mxu0 0
      %2958 = vmatprep.subr.bf16.mxu0 0
      %2959 = vmatpush1.bf16.msra.mxu0 0
      %2960 = vmatprep.mubr.bf16.mxu0 0
      %2961 = vmatmul.mubr.bf16.gmra.mrb[0].mxu0 %v2892
      %v2962 = vpop.f32.mrb[0].mxu0
      %v2963 = vadd.f32 %v2874, %v2962
      %v2964 = vpop.f32.mrb[0].mxu0
      %v2965 = vpop.f32.mrb[0].mxu0
      %v2966 = vadd.f32 %v2874, %v2965
      %v2967 = vpop.f32.mrb[0].mxu0
      %2968 = vmatprep.mubr.bf16.mxu0 0
      %2969 = vmatmul.mubr.bf16.gmra.mrb[0].mxu0 %v2894
      %v2970 = vpop.f32.mrb[0].mxu0
      %v2971 = vadd.f32 %v2874, %v2970
      %v2972 = vpop.f32.mrb[0].mxu0
      %v2973 = vpop.f32.mrb[0].mxu0
      %v2974 = vadd.f32 %v2874, %v2973
      %v2975 = vpop.f32.mrb[0].mxu0
      %2976 = vmatprep.mubr.bf16.mxu0 0
      %2977 = vmatmul.mubr.bf16.gmra.mrb[0].mxu0 %v2896
      %v2978 = vpop.f32.mrb[0].mxu0
      %v2979 = vadd.f32 %v2874, %v2978
      %v2980 = vpop.f32.mrb[0].mxu0
      %v2981 = vpop.f32.mrb[0].mxu0
      %v2982 = vadd.f32 %v2874, %v2981
      %v2983 = vpop.f32.mrb[0].mxu0
      %2984 = vmatprep.mubr.bf16.mxu0 0
      %2985 = vmatmul.mubr.bf16.gmra.mrb[0].mxu0 %v2898
      %v2986 = vpop.f32.mrb[0].mxu0
      %v2987 = vadd.f32 %v2874, %v2986
      %v2988 = vpop.f32.mrb[0].mxu0
      %v2989 = vpop.f32.mrb[0].mxu0
      %v2990 = vadd.f32 %v2874, %v2989
      %v2991 = vpop.f32.mrb[0].mxu0
      %2992 = vmatprep.mubr.bf16.mxu0 0
      %2993 = vmatmul.mubr.bf16.gmra.mrb[0].mxu0 %v2900
      %v2994 = vpop.f32.mrb[0].mxu0
      %v2995 = vadd.f32 %v2874, %v2994
      %v2996 = vpop.f32.mrb[0].mxu0
      %v2997 = vpop.f32.mrb[0].mxu0
      %v2998 = vadd.f32 %v2874, %v2997
      %v2999 = vpop.f32.mrb[0].mxu0
      %3000 = vmatprep.mubr.bf16.mxu0 0
      %3001 = vmatmul.mubr.bf16.gmra.mrb[0].mxu0 %v2902
      %v3002 = vpop.f32.mrb[0].mxu0
      %v3003 = vadd.f32 %v2874, %v3002
      %v3004 = vpop.f32.mrb[0].mxu0
      %v3005 = vpop.f32.mrb[0].mxu0
      %v3006 = vadd.f32 %v2874, %v3005
      %v3007 = vpop.f32.mrb[0].mxu0
      %3008 = vmatprep.mubr.bf16.mxu0 0
      %3009 = vmatmul.mubr.bf16.gmra.mrb[0].mxu0 %v2904
      %v3010 = vpop.f32.mrb[0].mxu0
      %v3011 = vadd.f32 %v2874, %v3010
      %v3012 = vpop.f32.mrb[0].mxu0
      %v3013 = vpop.f32.mrb[0].mxu0
      %v3014 = vadd.f32 %v2874, %v3013
      %v3015 = vpop.f32.mrb[0].mxu0
      %3016 = vmatprep.mubr.bf16.mxu0 0
      %3017 = vmatmul.mubr.bf16.gmra.mrb[0].mxu0 %v2906
      %v3018 = vpop.f32.mrb[0].mxu0
      %v3019 = vadd.f32 %v2874, %v3018
      %v3020 = vpop.f32.mrb[0].mxu0
      %v3021 = vpop.f32.mrb[0].mxu0
      %v3022 = vadd.f32 %v2874, %v3021
      %v3023 = vpop.f32.mrb[0].mxu0
      %3024 = vmatprep.mubr.bf16.mxu0 0
      %3025 = vmatmul.mubr.bf16.gmra.mrb[0].mxu0 %v2908
      %v3026 = vpop.f32.mrb[0].mxu0
      %v3027 = vadd.f32 %v2874, %v3026
      %v3028 = vpop.f32.mrb[0].mxu0
      %v3029 = vpop.f32.mrb[0].mxu0
      %v3030 = vadd.f32 %v2874, %v3029
      %v3031 = vpop.f32.mrb[0].mxu0
      %3032 = vmatprep.mubr.bf16.mxu0 0
      %3033 = vmatmul.mubr.bf16.gmra.mrb[0].mxu0 %v2910
      %v3034 = vpop.f32.mrb[0].mxu0
      %v3035 = vadd.f32 %v2874, %v3034
      %v3036 = vpop.f32.mrb[0].mxu0
      %v3037 = vpop.f32.mrb[0].mxu0
      %v3038 = vadd.f32 %v2874, %v3037
      %v3039 = vpop.f32.mrb[0].mxu0
      %3040 = vmatprep.mubr.bf16.mxu0 0
      %3041 = vmatmul.mubr.bf16.gmra.mrb[0].mxu0 %v2912
      %v3042 = vpop.f32.mrb[0].mxu0
      %v3043 = vadd.f32 %v2874, %v3042
      %v3044 = vpop.f32.mrb[0].mxu0
      %v3045 = vpop.f32.mrb[0].mxu0
      %v3046 = vadd.f32 %v2874, %v3045
      %v3047 = vpop.f32.mrb[0].mxu0
      %3048 = vmatprep.mubr.bf16.mxu0 0
      %3049 = vmatmul.mubr.bf16.gmra.mrb[0].mxu0 %v2914
      %v3050 = vpop.f32.mrb[0].mxu0
      %v3051 = vadd.f32 %v2874, %v3050
      %v3052 = vpop.f32.mrb[0].mxu0
      %v3053 = vpop.f32.mrb[0].mxu0
      %v3054 = vadd.f32 %v2874, %v3053
      %v3055 = vpop.f32.mrb[0].mxu0
      %3056 = vmatprep.mubr.bf16.mxu0 0
      %3057 = vmatmul.mubr.bf16.gmra.mrb[0].mxu0 %v2916
      %v3058 = vpop.f32.mrb[0].mxu0
      %v3059 = vadd.f32 %v2874, %v3058
      %v3060 = vpop.f32.mrb[0].mxu0
      %v3061 = vpop.f32.mrb[0].mxu0
      %v3062 = vadd.f32 %v2874, %v3061
      %v3063 = vpop.f32.mrb[0].mxu0
      %3064 = vmatprep.mubr.bf16.mxu0 0
      %3065 = vmatmul.mubr.bf16.gmra.mrb[0].mxu0 %v2918
      %v3066 = vpop.f32.mrb[0].mxu0
      %v3067 = vadd.f32 %v2874, %v3066
      %v3068 = vpop.f32.mrb[0].mxu0
      %v3069 = vpop.f32.mrb[0].mxu0
      %v3070 = vadd.f32 %v2874, %v3069
      %v3071 = vpop.f32.mrb[0].mxu0
      %3072 = vmatprep.mubr.bf16.mxu0 0
      %3073 = vmatmul.mubr.bf16.gmra.mrb[0].mxu0 %v2920
      %v3074 = vpop.f32.mrb[0].mxu0
      %v3075 = vadd.f32 %v2874, %v3074
      %v3076 = vpop.f32.mrb[0].mxu0
      %v3077 = vpop.f32.mrb[0].mxu0
      %v3078 = vadd.f32 %v2874, %v3077
      %v3079 = vpop.f32.mrb[0].mxu0
      %3080 = vmatprep.mubr.bf16.mxu0 0
      %3081 = vmatmul.mubr.bf16.gmra.mrb[0].mxu0 %v2922
      %v3082 = vpop.f32.mrb[0].mxu0
      %v3083 = vadd.f32 %v2874, %v3082
      %v3084 = vpop.f32.mrb[0].mxu0
      %v3085 = vpop.f32.mrb[0].mxu0
      %v3086 = vadd.f32 %v2874, %v3085
      %v3087 = vpop.f32.mrb[0].mxu0
      %3088 = vdwg.mxu0
      %v3089 = vmax.f32 %v2963, 0.0
      %v3090 = vmax.f32 %v2966, 0.0
      %v3091 = vmax.f32 %v2971, 0.0
      %v3092 = vmax.f32 %v2974, 0.0
      %v3093 = vmax.f32 %v2979, 0.0
      %v3094 = vmax.f32 %v2982, 0.0
      %v3095 = vmax.f32 %v2987, 0.0
      %v3096 = vmax.f32 %v2990, 0.0
      %v3097 = vmax.f32 %v2995, 0.0
      %v3098 = vmax.f32 %v2998, 0.0
      %v3099 = vmax.f32 %v3003, 0.0
      %v3100 = vmax.f32 %v3006, 0.0
      %v3101 = vmax.f32 %v3011, 0.0
      %v3102 = vmax.f32 %v3014, 0.0
      %v3103 = vmax.f32 %v3019, 0.0
      %v3104 = vmax.f32 %v3022, 0.0
      %v3105 = vmax.f32 %v3027, 0.0
      %v3106 = vmax.f32 %v3030, 0.0
      %v3107 = vmax.f32 %v3035, 0.0
      %v3108 = vmax.f32 %v3038, 0.0
      %v3109 = vmax.f32 %v3043, 0.0
      %v3110 = vmax.f32 %v3046, 0.0
      %v3111 = vmax.f32 %v3051, 0.0
      %v3112 = vmax.f32 %v3054, 0.0
      %v3113 = vmax.f32 %v3059, 0.0
      %v3114 = vmax.f32 %v3062, 0.0
      %v3115 = vmax.f32 %v3067, 0.0
      %v3116 = vmax.f32 %v3070, 0.0
      %v3117 = vmax.f32 %v3075, 0.0
      %v3118 = vmax.f32 %v3078, 0.0
      %v3119 = vmax.f32 %v3083, 0.0
      %v3120 = vmax.f32 %v3086, 0.0
      %vm3121 = vcmask 60416
      %3122 = vst.msk [vmem:[#allocation3] sm:$0xf] %vm3121, 0
      %3123 = vst.msk [vmem:[#allocation3 + $0x4] sm:$0xf] %vm3121, 0
      %vm3124 = vcmask 57344
      %3125 = vst.msk [vmem:[#allocation3 + $0x8] sm:$0x1] %vm3124, 0
      %s3126 = scalar_lea.vmem [#allocation3], 204
      %3127 = vst.msk [vmem:[%s3126] sm:$0xf] %vm3121, 0
      %3128 = vst.msk [vmem:[%s3126 + $0x4] sm:$0xf] %vm3121, 0
      %3129 = vst.msk [vmem:[%s3126 + $0x8] sm:$0x1] %vm3124, 0
      %s3130 = scalar_lea.vmem [#allocation3], 12
      %vm3131 = vcmask 57344
      %vm3132 = vmand %vm3131, %vm285
      %v3133 = vld [vmem:[%s3130] sm:$0x1]
      %v3134 = vsel %vm3132, 0, %v3133
      %3135 = vst [vmem:[%s3130] sm:$0x1] %v3134
      %v3136 = vld [vmem:[%s3130 + $0xc] sm:$0x1]
      %v3137 = vsel %vm3132, 0, %v3136
      %3138 = vst [vmem:[%s3130 + $0xc] sm:$0x1] %v3137
      %v3139 = vld [vmem:[%s3130 + $0x18] sm:$0x1]
      %v3140 = vsel %vm3132, 0, %v3139
      %3141 = vst [vmem:[%s3130 + $0x18] sm:$0x1] %v3140
      %v3142 = vld [vmem:[%s3130 + $0x24] sm:$0x1]
      %v3143 = vsel %vm3132, 0, %v3142
      %3144 = vst [vmem:[%s3130 + $0x24] sm:$0x1] %v3143
      %v3145 = vld [vmem:[%s3130 + $0x30] sm:$0x1]
      %v3146 = vsel %vm3132, 0, %v3145
      %3147 = vst [vmem:[%s3130 + $0x30] sm:$0x1] %v3146
      %v3148 = vld [vmem:[%s3130 + $0x3c] sm:$0x1]
      %v3149 = vsel %vm3132, 0, %v3148
      %3150 = vst [vmem:[%s3130 + $0x3c] sm:$0x1] %v3149
      %v3151 = vld [vmem:[%s3130 + $0x48] sm:$0x1]
      %v3152 = vsel %vm3132, 0, %v3151
      %3153 = vst [vmem:[%s3130 + $0x48] sm:$0x1] %v3152
      %v3154 = vld [vmem:[%s3130 + $0x54] sm:$0x1]
      %v3155 = vsel %vm3132, 0, %v3154
      %3156 = vst [vmem:[%s3130 + $0x54] sm:$0x1] %v3155
      %v3157 = vld [vmem:[%s3130 + $0x60] sm:$0x1]
      %v3158 = vsel %vm3132, 0, %v3157
      %3159 = vst [vmem:[%s3130 + $0x60] sm:$0x1] %v3158
      %v3160 = vld [vmem:[%s3130 + $0x6c] sm:$0x1]
      %v3161 = vsel %vm3132, 0, %v3160
      %3162 = vst [vmem:[%s3130 + $0x6c] sm:$0x1] %v3161
      %v3163 = vld [vmem:[%s3130 + $0x78] sm:$0x1]
      %v3164 = vsel %vm3132, 0, %v3163
      %3165 = vst [vmem:[%s3130 + $0x78] sm:$0x1] %v3164
      %v3166 = vld [vmem:[%s3130 + $0x84] sm:$0x1]
      %v3167 = vsel %vm3132, 0, %v3166
      %3168 = vst [vmem:[%s3130 + $0x84] sm:$0x1] %v3167
      %v3169 = vld [vmem:[%s3130 + $0x90] sm:$0x1]
      %v3170 = vsel %vm3132, 0, %v3169
      %3171 = vst [vmem:[%s3130 + $0x90] sm:$0x1] %v3170
      %v3172 = vld [vmem:[%s3130 + $0x9c] sm:$0x1]
      %v3173 = vsel %vm3132, 0, %v3172
      %3174 = vst [vmem:[%s3130 + $0x9c] sm:$0x1] %v3173
      %v3175 = vld [vmem:[%s3130 + $0xa8] sm:$0x1]
      %v3176 = vsel %vm3132, 0, %v3175
      %3177 = vst [vmem:[%s3130 + $0xa8] sm:$0x1] %v3176
      %v3178 = vld [vmem:[%s3130 + $0xb4] sm:$0x1]
      %v3179 = vsel %vm3132, 0, %v3178
      %3180 = vst [vmem:[%s3130 + $0xb4] sm:$0x1] %v3179
      %vm3181 = vmand %vm3131, %vm335
      %v3182 = vld [vmem:[%s3130 + $0x8] sm:$0x1]
      %v3183 = vsel %vm3181, 0, %v3182
      %3184 = vst [vmem:[%s3130 + $0x8] sm:$0x1] %v3183
      %v3185 = vld [vmem:[%s3130 + $0x14] sm:$0x1]
      %v3186 = vsel %vm3181, 0, %v3185
      %3187 = vst [vmem:[%s3130 + $0x14] sm:$0x1] %v3186
      %v3188 = vld [vmem:[%s3130 + $0x20] sm:$0x1]
      %v3189 = vsel %vm3181, 0, %v3188
      %3190 = vst [vmem:[%s3130 + $0x20] sm:$0x1] %v3189
      %v3191 = vld [vmem:[%s3130 + $0x2c] sm:$0x1]
      %v3192 = vsel %vm3181, 0, %v3191
      %3193 = vst [vmem:[%s3130 + $0x2c] sm:$0x1] %v3192
      %v3194 = vld [vmem:[%s3130 + $0x38] sm:$0x1]
      %v3195 = vsel %vm3181, 0, %v3194
      %3196 = vst [vmem:[%s3130 + $0x38] sm:$0x1] %v3195
      %v3197 = vld [vmem:[%s3130 + $0x44] sm:$0x1]
      %v3198 = vsel %vm3181, 0, %v3197
      %3199 = vst [vmem:[%s3130 + $0x44] sm:$0x1] %v3198
      %v3200 = vld [vmem:[%s3130 + $0x50] sm:$0x1]
      %v3201 = vsel %vm3181, 0, %v3200
      %3202 = vst [vmem:[%s3130 + $0x50] sm:$0x1] %v3201
      %v3203 = vld [vmem:[%s3130 + $0x5c] sm:$0x1]
      %v3204 = vsel %vm3181, 0, %v3203
      %3205 = vst [vmem:[%s3130 + $0x5c] sm:$0x1] %v3204
      %v3206 = vld [vmem:[%s3130 + $0x68] sm:$0x1]
      %v3207 = vsel %vm3181, 0, %v3206
      %3208 = vst [vmem:[%s3130 + $0x68] sm:$0x1] %v3207
      %v3209 = vld [vmem:[%s3130 + $0x74] sm:$0x1]
      %v3210 = vsel %vm3181, 0, %v3209
      %3211 = vst [vmem:[%s3130 + $0x74] sm:$0x1] %v3210
      %v3212 = vld [vmem:[%s3130 + $0x80] sm:$0x1]
      %v3213 = vsel %vm3181, 0, %v3212
      %3214 = vst [vmem:[%s3130 + $0x80] sm:$0x1] %v3213
      %v3215 = vld [vmem:[%s3130 + $0x8c] sm:$0x1]
      %v3216 = vsel %vm3181, 0, %v3215
      %3217 = vst [vmem:[%s3130 + $0x8c] sm:$0x1] %v3216
      %v3218 = vld [vmem:[%s3130 + $0x98] sm:$0x1]
      %v3219 = vsel %vm3181, 0, %v3218
      %3220 = vst [vmem:[%s3130 + $0x98] sm:$0x1] %v3219
      %v3221 = vld [vmem:[%s3130 + $0xa4] sm:$0x1]
      %v3222 = vsel %vm3181, 0, %v3221
      %3223 = vst [vmem:[%s3130 + $0xa4] sm:$0x1] %v3222
      %v3224 = vld [vmem:[%s3130 + $0xb0] sm:$0x1]
      %v3225 = vsel %vm3181, 0, %v3224
      %3226 = vst [vmem:[%s3130 + $0xb0] sm:$0x1] %v3225
      %v3227 = vld [vmem:[%s3130 + $0xbc] sm:$0x1]
      %v3228 = vsel %vm3181, 0, %v3227
      %3229 = vst [vmem:[%s3130 + $0xbc] sm:$0x1] %v3228
      %v3230 = vpack.c.bf16 %v3090, %v3089
      %v3231 = vpack.c.bf16 %v3092, %v3091
      %v3232 = vpack.c.bf16 %v3094, %v3093
      %v3233 = vpack.c.bf16 %v3096, %v3095
      %v3234 = vpack.c.bf16 %v3098, %v3097
      %v3235 = vpack.c.bf16 %v3100, %v3099
      %v3236 = vpack.c.bf16 %v3102, %v3101
      %v3237 = vpack.c.bf16 %v3104, %v3103
      %v3238 = vpack.c.bf16 %v3106, %v3105
      %v3239 = vpack.c.bf16 %v3108, %v3107
      %v3240 = vpack.c.bf16 %v3110, %v3109
      %v3241 = vpack.c.bf16 %v3112, %v3111
      %v3242 = vpack.c.bf16 %v3114, %v3113
      %v3243 = vpack.c.bf16 %v3116, %v3115
      %v3244 = vpack.c.bf16 %v3118, %v3117
      %v3245 = vpack.c.bf16 %v3120, %v3119
      %v3262 = vunpack.c.l.b16 %v3230
      %v3263 = vunpack.c.h.b16 %v3230
      %v3264 = vunpack.c.l.b16 %v3231
      %v3265 = vunpack.c.h.b16 %v3231
      %v3266 = vunpack.c.l.b16 %v3232
      %v3267 = vunpack.c.h.b16 %v3232
      %v3268 = vunpack.c.l.b16 %v3233
      %v3269 = vunpack.c.h.b16 %v3233
      %v3270 = vunpack.c.l.b16 %v3234
      %v3271 = vunpack.c.h.b16 %v3234
      %v3272 = vunpack.c.l.b16 %v3235
      %v3273 = vunpack.c.h.b16 %v3235
      %v3274 = vunpack.c.l.b16 %v3236
      %v3275 = vunpack.c.h.b16 %v3236
      %v3276 = vunpack.c.l.b16 %v3237
      %v3277 = vunpack.c.h.b16 %v3237
      %v3278 = vunpack.c.l.b16 %v3238
      %v3279 = vunpack.c.h.b16 %v3238
      %v3280 = vunpack.c.l.b16 %v3239
      %v3281 = vunpack.c.h.b16 %v3239
      %v3282 = vunpack.c.l.b16 %v3240
      %v3283 = vunpack.c.h.b16 %v3240
      %v3284 = vunpack.c.l.b16 %v3241
      %v3285 = vunpack.c.h.b16 %v3241
      %v3286 = vunpack.c.l.b16 %v3242
      %v3287 = vunpack.c.h.b16 %v3242
      %v3288 = vunpack.c.l.b16 %v3243
      %v3289 = vunpack.c.h.b16 %v3243
      %v3290 = vunpack.c.l.b16 %v3244
      %v3291 = vunpack.c.h.b16 %v3244
      %v3292 = vunpack.c.l.b16 %v3245
      %v3293 = vunpack.c.h.b16 %v3245
      %v3294 = vpack.c.b16 %v3262, %v3262
      %v3295 = vpack.c.b16 %v3263, %v3263
      %v3296 = vpack.c.b16 %v3264, %v3264
      %v3297 = vpack.c.b16 %v3265, %v3265
      %v3298 = vpack.c.b16 %v3266, %v3266
      %v3299 = vpack.c.b16 %v3267, %v3267
      %v3300 = vpack.c.b16 %v3268, %v3268
      %v3301 = vpack.c.b16 %v3269, %v3269
      %v3302 = vpack.c.b16 %v3270, %v3270
      %v3303 = vpack.c.b16 %v3271, %v3271
      %v3304 = vpack.c.b16 %v3272, %v3272
      %v3305 = vpack.c.b16 %v3273, %v3273
      %v3306 = vpack.c.b16 %v3274, %v3274
      %v3307 = vpack.c.b16 %v3275, %v3275
      %v3308 = vpack.c.b16 %v3276, %v3276
      %v3309 = vpack.c.b16 %v3277, %v3277
      %v3310 = vpack.c.b16 %v3278, %v3278
      %v3311 = vpack.c.b16 %v3279, %v3279
      %v3312 = vpack.c.b16 %v3280, %v3280
      %v3313 = vpack.c.b16 %v3281, %v3281
      %v3314 = vpack.c.b16 %v3282, %v3282
      %v3315 = vpack.c.b16 %v3283, %v3283
      %v3316 = vpack.c.b16 %v3284, %v3284
      %v3317 = vpack.c.b16 %v3285, %v3285
      %v3318 = vpack.c.b16 %v3286, %v3286
      %v3319 = vpack.c.b16 %v3287, %v3287
      %v3320 = vpack.c.b16 %v3288, %v3288
      %v3321 = vpack.c.b16 %v3289, %v3289
      %v3322 = vpack.c.b16 %v3290, %v3290
      %v3323 = vpack.c.b16 %v3291, %v3291
      %v3324 = vpack.c.b16 %v3292, %v3292
      %v3325 = vpack.c.b16 %v3293, %v3293
      %v3327 = vshrl.u32 %v3294, 16
      %v3329 = vrot.slane %v3327, 7
      %v3330 = vshll.u32 %v3294, 16
      %v3332 = vor.u32 %v3329, %v3330
      %v3333 = vrot.slane %v3329, 4
      %v3335 = vshrl.u32 %v3295, 16
      %v3337 = vrot.slane %v3335, 7
      %v3338 = vshll.u32 %v3295, 16
      %v3340 = vor.u32 %v3337, %v3338
      %v3341 = vsel %vm466, %v3333, %v3340
      %v3342 = vrot.slane %v3337, 4
      %v3344 = vshrl.u32 %v3296, 16
      %v3346 = vrot.slane %v3344, 7
      %v3347 = vshll.u32 %v3296, 16
      %v3349 = vor.u32 %v3346, %v3347
      %v3350 = vrot.slane %v3346, 4
      %v3352 = vshrl.u32 %v3297, 16
      %v3354 = vrot.slane %v3352, 7
      %v3355 = vshll.u32 %v3297, 16
      %v3357 = vor.u32 %v3354, %v3355
      %v3358 = vsel %vm466, %v3350, %v3357
      %v3359 = vrot.slane %v3354, 4
      %v3361 = vshrl.u32 %v3298, 16
      %v3363 = vrot.slane %v3361, 7
      %v3364 = vshll.u32 %v3298, 16
      %v3366 = vor.u32 %v3363, %v3364
      %v3367 = vrot.slane %v3363, 4
      %v3369 = vshrl.u32 %v3299, 16
      %v3371 = vrot.slane %v3369, 7
      %v3372 = vshll.u32 %v3299, 16
      %v3374 = vor.u32 %v3371, %v3372
      %v3375 = vsel %vm466, %v3367, %v3374
      %v3376 = vrot.slane %v3371, 4
      %v3378 = vshrl.u32 %v3300, 16
      %v3380 = vrot.slane %v3378, 7
      %v3381 = vshll.u32 %v3300, 16
      %v3383 = vor.u32 %v3380, %v3381
      %v3384 = vrot.slane %v3380, 4
      %v3386 = vshrl.u32 %v3301, 16
      %v3388 = vrot.slane %v3386, 7
      %v3389 = vshll.u32 %v3301, 16
      %v3391 = vor.u32 %v3388, %v3389
      %v3392 = vsel %vm466, %v3384, %v3391
      %v3393 = vrot.slane %v3388, 4
      %v3395 = vshrl.u32 %v3302, 16
      %v3397 = vrot.slane %v3395, 7
      %v3398 = vshll.u32 %v3302, 16
      %v3400 = vor.u32 %v3397, %v3398
      %v3401 = vrot.slane %v3397, 4
      %v3403 = vshrl.u32 %v3303, 16
      %v3405 = vrot.slane %v3403, 7
      %v3406 = vshll.u32 %v3303, 16
      %v3408 = vor.u32 %v3405, %v3406
      %v3409 = vsel %vm466, %v3401, %v3408
      %v3410 = vrot.slane %v3405, 4
      %v3412 = vshrl.u32 %v3304, 16
      %v3414 = vrot.slane %v3412, 7
      %v3415 = vshll.u32 %v3304, 16
      %v3417 = vor.u32 %v3414, %v3415
      %v3418 = vrot.slane %v3414, 4
      %v3420 = vshrl.u32 %v3305, 16
      %v3422 = vrot.slane %v3420, 7
      %v3423 = vshll.u32 %v3305, 16
      %v3425 = vor.u32 %v3422, %v3423
      %v3426 = vsel %vm466, %v3418, %v3425
      %v3427 = vrot.slane %v3422, 4
      %v3429 = vshrl.u32 %v3306, 16
      %v3431 = vrot.slane %v3429, 7
      %v3432 = vshll.u32 %v3306, 16
      %v3434 = vor.u32 %v3431, %v3432
      %v3435 = vrot.slane %v3431, 4
      %v3437 = vshrl.u32 %v3307, 16
      %v3439 = vrot.slane %v3437, 7
      %v3440 = vshll.u32 %v3307, 16
      %v3442 = vor.u32 %v3439, %v3440
      %v3443 = vsel %vm466, %v3435, %v3442
      %v3444 = vrot.slane %v3439, 4
      %v3446 = vshrl.u32 %v3308, 16
      %v3448 = vrot.slane %v3446, 7
      %v3449 = vshll.u32 %v3308, 16
      %v3451 = vor.u32 %v3448, %v3449
      %v3452 = vrot.slane %v3448, 4
      %v3454 = vshrl.u32 %v3309, 16
      %v3456 = vrot.slane %v3454, 7
      %v3457 = vshll.u32 %v3309, 16
      %v3459 = vor.u32 %v3456, %v3457
      %v3460 = vsel %vm466, %v3452, %v3459
      %v3461 = vrot.slane %v3456, 4
      %v3463 = vshrl.u32 %v3310, 16
      %v3465 = vrot.slane %v3463, 7
      %v3466 = vshll.u32 %v3310, 16
      %v3468 = vor.u32 %v3465, %v3466
      %v3469 = vrot.slane %v3465, 4
      %v3471 = vshrl.u32 %v3311, 16
      %v3473 = vrot.slane %v3471, 7
      %v3474 = vshll.u32 %v3311, 16
      %v3476 = vor.u32 %v3473, %v3474
      %v3477 = vsel %vm466, %v3469, %v3476
      %v3478 = vrot.slane %v3473, 4
      %v3480 = vshrl.u32 %v3312, 16
      %v3482 = vrot.slane %v3480, 7
      %v3483 = vshll.u32 %v3312, 16
      %v3485 = vor.u32 %v3482, %v3483
      %v3486 = vrot.slane %v3482, 4
      %v3488 = vshrl.u32 %v3313, 16
      %v3490 = vrot.slane %v3488, 7
      %v3491 = vshll.u32 %v3313, 16
      %v3493 = vor.u32 %v3490, %v3491
      %v3494 = vsel %vm466, %v3486, %v3493
      %v3495 = vrot.slane %v3490, 4
      %v3497 = vshrl.u32 %v3314, 16
      %v3499 = vrot.slane %v3497, 7
      %v3500 = vshll.u32 %v3314, 16
      %v3502 = vor.u32 %v3499, %v3500
      %v3503 = vrot.slane %v3499, 4
      %v3505 = vshrl.u32 %v3315, 16
      %v3507 = vrot.slane %v3505, 7
      %v3508 = vshll.u32 %v3315, 16
      %v3510 = vor.u32 %v3507, %v3508
      %v3511 = vsel %vm466, %v3503, %v3510
      %v3512 = vrot.slane %v3507, 4
      %v3514 = vshrl.u32 %v3316, 16
      %v3516 = vrot.slane %v3514, 7
      %v3517 = vshll.u32 %v3316, 16
      %v3519 = vor.u32 %v3516, %v3517
      %v3520 = vrot.slane %v3516, 4
      %v3522 = vshrl.u32 %v3317, 16
      %v3524 = vrot.slane %v3522, 7
      %v3525 = vshll.u32 %v3317, 16
      %v3527 = vor.u32 %v3524, %v3525
      %v3528 = vsel %vm466, %v3520, %v3527
      %v3529 = vrot.slane %v3524, 4
      %v3531 = vshrl.u32 %v3318, 16
      %v3533 = vrot.slane %v3531, 7
      %v3534 = vshll.u32 %v3318, 16
      %v3536 = vor.u32 %v3533, %v3534
      %v3537 = vrot.slane %v3533, 4
      %v3539 = vshrl.u32 %v3319, 16
      %v3541 = vrot.slane %v3539, 7
      %v3542 = vshll.u32 %v3319, 16
      %v3544 = vor.u32 %v3541, %v3542
      %v3545 = vsel %vm466, %v3537, %v3544
      %v3546 = vrot.slane %v3541, 4
      %v3548 = vshrl.u32 %v3320, 16
      %v3550 = vrot.slane %v3548, 7
      %v3551 = vshll.u32 %v3320, 16
      %v3553 = vor.u32 %v3550, %v3551
      %v3554 = vrot.slane %v3550, 4
      %v3556 = vshrl.u32 %v3321, 16
      %v3558 = vrot.slane %v3556, 7
      %v3559 = vshll.u32 %v3321, 16
      %v3561 = vor.u32 %v3558, %v3559
      %v3562 = vsel %vm466, %v3554, %v3561
      %v3563 = vrot.slane %v3558, 4
      %v3565 = vshrl.u32 %v3322, 16
      %v3567 = vrot.slane %v3565, 7
      %v3568 = vshll.u32 %v3322, 16
      %v3570 = vor.u32 %v3567, %v3568
      %v3571 = vrot.slane %v3567, 4
      %v3573 = vshrl.u32 %v3323, 16
      %v3575 = vrot.slane %v3573, 7
      %v3576 = vshll.u32 %v3323, 16
      %v3578 = vor.u32 %v3575, %v3576
      %v3579 = vsel %vm466, %v3571, %v3578
      %v3580 = vrot.slane %v3575, 4
      %v3582 = vshrl.u32 %v3324, 16
      %v3584 = vrot.slane %v3582, 7
      %v3585 = vshll.u32 %v3324, 16
      %v3587 = vor.u32 %v3584, %v3585
      %v3588 = vrot.slane %v3584, 4
      %v3590 = vshrl.u32 %v3325, 16
      %v3592 = vrot.slane %v3590, 7
      %v3593 = vshll.u32 %v3325, 16
      %v3595 = vor.u32 %v3592, %v3593
      %v3596 = vsel %vm466, %v3588, %v3595
      %v3597 = vrot.slane %v3592, 4
      %vm3646 = vcmask 60416
      %vm3647 = vmand %vm3646, %vm335
      %v3648 = vld [vmem:[%s3130] sm:$0xf]
      %v3649 = vsel %vm3647, %v3332, %v3648
      %3650 = vst [vmem:[%s3130] sm:$0xf] %v3649
      %3651 = vst.msk [vmem:[%s3130 + $0x4] sm:$0xf] %vm3121, %v3341
      %v3652 = vld [vmem:[%s3130 + $0x8] sm:$0x1]
      %v3653 = vsel %vm3132, %v3342, %v3652
      %3654 = vst [vmem:[%s3130 + $0x8] sm:$0x1] %v3653
      %v3655 = vld [vmem:[%s3130 + $0xc] sm:$0xf]
      %v3656 = vsel %vm3647, %v3349, %v3655
      %3657 = vst [vmem:[%s3130 + $0xc] sm:$0xf] %v3656
      %3658 = vst.msk [vmem:[%s3130 + $0x10] sm:$0xf] %vm3121, %v3358
      %v3659 = vld [vmem:[%s3130 + $0x14] sm:$0x1]
      %v3660 = vsel %vm3132, %v3359, %v3659
      %3661 = vst [vmem:[%s3130 + $0x14] sm:$0x1] %v3660
      %v3662 = vld [vmem:[%s3130 + $0x18] sm:$0xf]
      %v3663 = vsel %vm3647, %v3366, %v3662
      %3664 = vst [vmem:[%s3130 + $0x18] sm:$0xf] %v3663
      %3665 = vst.msk [vmem:[%s3130 + $0x1c] sm:$0xf] %vm3121, %v3375
      %v3666 = vld [vmem:[%s3130 + $0x20] sm:$0x1]
      %v3667 = vsel %vm3132, %v3376, %v3666
      %3668 = vst [vmem:[%s3130 + $0x20] sm:$0x1] %v3667
      %v3669 = vld [vmem:[%s3130 + $0x24] sm:$0xf]
      %v3670 = vsel %vm3647, %v3383, %v3669
      %3671 = vst [vmem:[%s3130 + $0x24] sm:$0xf] %v3670
      %3672 = vst.msk [vmem:[%s3130 + $0x28] sm:$0xf] %vm3121, %v3392
      %v3673 = vld [vmem:[%s3130 + $0x2c] sm:$0x1]
      %v3674 = vsel %vm3132, %v3393, %v3673
      %3675 = vst [vmem:[%s3130 + $0x2c] sm:$0x1] %v3674
      %v3676 = vld [vmem:[%s3130 + $0x30] sm:$0xf]
      %v3677 = vsel %vm3647, %v3400, %v3676
      %3678 = vst [vmem:[%s3130 + $0x30] sm:$0xf] %v3677
      %3679 = vst.msk [vmem:[%s3130 + $0x34] sm:$0xf] %vm3121, %v3409
      %v3680 = vld [vmem:[%s3130 + $0x38] sm:$0x1]
      %v3681 = vsel %vm3132, %v3410, %v3680
      %3682 = vst [vmem:[%s3130 + $0x38] sm:$0x1] %v3681
      %v3683 = vld [vmem:[%s3130 + $0x3c] sm:$0xf]
      %v3684 = vsel %vm3647, %v3417, %v3683
      %3685 = vst [vmem:[%s3130 + $0x3c] sm:$0xf] %v3684
      %3686 = vst.msk [vmem:[%s3130 + $0x40] sm:$0xf] %vm3121, %v3426
      %v3687 = vld [vmem:[%s3130 + $0x44] sm:$0x1]
      %v3688 = vsel %vm3132, %v3427, %v3687
      %3689 = vst [vmem:[%s3130 + $0x44] sm:$0x1] %v3688
      %v3690 = vld [vmem:[%s3130 + $0x48] sm:$0xf]
      %v3691 = vsel %vm3647, %v3434, %v3690
      %3692 = vst [vmem:[%s3130 + $0x48] sm:$0xf] %v3691
      %3693 = vst.msk [vmem:[%s3130 + $0x4c] sm:$0xf] %vm3121, %v3443
      %v3694 = vld [vmem:[%s3130 + $0x50] sm:$0x1]
      %v3695 = vsel %vm3132, %v3444, %v3694
      %3696 = vst [vmem:[%s3130 + $0x50] sm:$0x1] %v3695
      %v3697 = vld [vmem:[%s3130 + $0x54] sm:$0xf]
      %v3698 = vsel %vm3647, %v3451, %v3697
      %3699 = vst [vmem:[%s3130 + $0x54] sm:$0xf] %v3698
      %3700 = vst.msk [vmem:[%s3130 + $0x58] sm:$0xf] %vm3121, %v3460
      %v3701 = vld [vmem:[%s3130 + $0x5c] sm:$0x1]
      %v3702 = vsel %vm3132, %v3461, %v3701
      %3703 = vst [vmem:[%s3130 + $0x5c] sm:$0x1] %v3702
      %v3704 = vld [vmem:[%s3130 + $0x60] sm:$0xf]
      %v3705 = vsel %vm3647, %v3468, %v3704
      %3706 = vst [vmem:[%s3130 + $0x60] sm:$0xf] %v3705
      %3707 = vst.msk [vmem:[%s3130 + $0x64] sm:$0xf] %vm3121, %v3477
      %v3708 = vld [vmem:[%s3130 + $0x68] sm:$0x1]
      %v3709 = vsel %vm3132, %v3478, %v3708
      %3710 = vst [vmem:[%s3130 + $0x68] sm:$0x1] %v3709
      %v3711 = vld [vmem:[%s3130 + $0x6c] sm:$0xf]
      %v3712 = vsel %vm3647, %v3485, %v3711
      %3713 = vst [vmem:[%s3130 + $0x6c] sm:$0xf] %v3712
      %3714 = vst.msk [vmem:[%s3130 + $0x70] sm:$0xf] %vm3121, %v3494
      %v3715 = vld [vmem:[%s3130 + $0x74] sm:$0x1]
      %v3716 = vsel %vm3132, %v3495, %v3715
      %3717 = vst [vmem:[%s3130 + $0x74] sm:$0x1] %v3716
      %v3718 = vld [vmem:[%s3130 + $0x78] sm:$0xf]
      %v3719 = vsel %vm3647, %v3502, %v3718
      %3720 = vst [vmem:[%s3130 + $0x78] sm:$0xf] %v3719
      %3721 = vst.msk [vmem:[%s3130 + $0x7c] sm:$0xf] %vm3121, %v3511
      %v3722 = vld [vmem:[%s3130 + $0x80] sm:$0x1]
      %v3723 = vsel %vm3132, %v3512, %v3722
      %3724 = vst [vmem:[%s3130 + $0x80] sm:$0x1] %v3723
      %v3725 = vld [vmem:[%s3130 + $0x84] sm:$0xf]
      %v3726 = vsel %vm3647, %v3519, %v3725
      %3727 = vst [vmem:[%s3130 + $0x84] sm:$0xf] %v3726
      %3728 = vst.msk [vmem:[%s3130 + $0x88] sm:$0xf] %vm3121, %v3528
      %v3729 = vld [vmem:[%s3130 + $0x8c] sm:$0x1]
      %v3730 = vsel %vm3132, %v3529, %v3729
      %3731 = vst [vmem:[%s3130 + $0x8c] sm:$0x1] %v3730
      %v3732 = vld [vmem:[%s3130 + $0x90] sm:$0xf]
      %v3733 = vsel %vm3647, %v3536, %v3732
      %3734 = vst [vmem:[%s3130 + $0x90] sm:$0xf] %v3733
      %3735 = vst.msk [vmem:[%s3130 + $0x94] sm:$0xf] %vm3121, %v3545
      %v3736 = vld [vmem:[%s3130 + $0x98] sm:$0x1]
      %v3737 = vsel %vm3132, %v3546, %v3736
      %3738 = vst [vmem:[%s3130 + $0x98] sm:$0x1] %v3737
      %v3739 = vld [vmem:[%s3130 + $0x9c] sm:$0xf]
      %v3740 = vsel %vm3647, %v3553, %v3739
      %3741 = vst [vmem:[%s3130 + $0x9c] sm:$0xf] %v3740
      %3742 = vst.msk [vmem:[%s3130 + $0xa0] sm:$0xf] %vm3121, %v3562
      %v3743 = vld [vmem:[%s3130 + $0xa4] sm:$0x1]
      %v3744 = vsel %vm3132, %v3563, %v3743
      %3745 = vst [vmem:[%s3130 + $0xa4] sm:$0x1] %v3744
      %v3746 = vld [vmem:[%s3130 + $0xa8] sm:$0xf]
      %v3747 = vsel %vm3647, %v3570, %v3746
      %3748 = vst [vmem:[%s3130 + $0xa8] sm:$0xf] %v3747
      %3749 = vst.msk [vmem:[%s3130 + $0xac] sm:$0xf] %vm3121, %v3579
      %v3750 = vld [vmem:[%s3130 + $0xb0] sm:$0x1]
      %v3751 = vsel %vm3132, %v3580, %v3750
      %3752 = vst [vmem:[%s3130 + $0xb0] sm:$0x1] %v3751
      %v3753 = vld [vmem:[%s3130 + $0xb4] sm:$0xf]
      %v3754 = vsel %vm3647, %v3587, %v3753
      %3755 = vst [vmem:[%s3130 + $0xb4] sm:$0xf] %v3754
      %3756 = vst.msk [vmem:[%s3130 + $0xb8] sm:$0xf] %vm3121, %v3596
      %v3757 = vld [vmem:[%s3130 + $0xbc] sm:$0x1]
      %v3758 = vsel %vm3132, %v3597, %v3757
      %3759 = vst [vmem:[%s3130 + $0xbc] sm:$0x1] %v3758
      %v3760 = vld [vmem:[#allocation3] sm:$0xf]
      %v3761 = vld [vmem:[#allocation3 + $0x4] sm:$0xf]
      %v3762 = vld [vmem:[#allocation3 + $0xc] sm:$0xf]
      %v3763 = vld [vmem:[#allocation3 + $0x10] sm:$0xf]
      %v3764 = vld [vmem:[#allocation3 + $0x18] sm:$0xf]
      %v3765 = vld [vmem:[#allocation3 + $0x1c] sm:$0xf]
      %v3766 = vld [vmem:[#allocation3 + $0x24] sm:$0xf]
      %v3767 = vld [vmem:[#allocation3 + $0x28] sm:$0xf]
      %v3768 = vld [vmem:[#allocation3 + $0x30] sm:$0xf]
      %v3769 = vld [vmem:[#allocation3 + $0x34] sm:$0xf]
      %v3770 = vld [vmem:[#allocation3 + $0x3c] sm:$0xf]
      %v3771 = vld [vmem:[#allocation3 + $0x40] sm:$0xf]
      %v3772 = vld [vmem:[#allocation3 + $0x48] sm:$0xf]
      %v3773 = vld [vmem:[#allocation3 + $0x4c] sm:$0xf]
      %v3774 = vld [vmem:[#allocation3 + $0x54] sm:$0xf]
      %v3775 = vld [vmem:[#allocation3 + $0x58] sm:$0xf]
      %v3776 = vld [vmem:[#allocation3 + $0x60] sm:$0xf]
      %v3777 = vld [vmem:[#allocation3 + $0x64] sm:$0xf]
      %v3778 = vld [vmem:[#allocation3 + $0x6c] sm:$0xf]
      %v3779 = vld [vmem:[#allocation3 + $0x70] sm:$0xf]
      %v3780 = vld [vmem:[#allocation3 + $0x78] sm:$0xf]
      %v3781 = vld [vmem:[#allocation3 + $0x7c] sm:$0xf]
      %v3782 = vld [vmem:[#allocation3 + $0x84] sm:$0xf]
      %v3783 = vld [vmem:[#allocation3 + $0x88] sm:$0xf]
      %v3784 = vld [vmem:[#allocation3 + $0x90] sm:$0xf]
      %v3785 = vld [vmem:[#allocation3 + $0x94] sm:$0xf]
      %v3786 = vld [vmem:[#allocation3 + $0x9c] sm:$0xf]
      %v3787 = vld [vmem:[#allocation3 + $0xa0] sm:$0xf]
      %v3788 = vld [vmem:[#allocation3 + $0xa8] sm:$0xf]
      %v3789 = vld [vmem:[#allocation3 + $0xac] sm:$0xf]
      %v3790 = vld [vmem:[#allocation3 + $0xb4] sm:$0xf]
      %v3791 = vld [vmem:[#allocation3 + $0xb8] sm:$0xf]
      %v3792 = vld [vmem:[#allocation3 + $0x8] sm:$0x1]
      %v3793 = vld [vmem:[#allocation3 + $0x14] sm:$0x1]
      %v3794 = vld [vmem:[#allocation3 + $0x20] sm:$0x1]
      %v3795 = vld [vmem:[#allocation3 + $0x2c] sm:$0x1]
      %v3796 = vld [vmem:[#allocation3 + $0x38] sm:$0x1]
      %v3797 = vld [vmem:[#allocation3 + $0x44] sm:$0x1]
      %v3798 = vld [vmem:[#allocation3 + $0x50] sm:$0x1]
      %v3799 = vld [vmem:[#allocation3 + $0x5c] sm:$0x1]
      %v3800 = vld [vmem:[#allocation3 + $0x68] sm:$0x1]
      %v3801 = vld [vmem:[#allocation3 + $0x74] sm:$0x1]
      %v3802 = vld [vmem:[#allocation3 + $0x80] sm:$0x1]
      %v3803 = vld [vmem:[#allocation3 + $0x8c] sm:$0x1]
      %v3804 = vld [vmem:[#allocation3 + $0x98] sm:$0x1]
      %v3805 = vld [vmem:[#allocation3 + $0xa4] sm:$0x1]
      %v3806 = vld [vmem:[#allocation3 + $0xb0] sm:$0x1]
      %v3807 = vld [vmem:[#allocation3 + $0xbc] sm:$0x1]
      %v3808 = vld [vmem:[#allocation3] sm:$0xe]
      %v3809 = vld [vmem:[#allocation3 + $0xc] sm:$0xe]
      %v3810 = vld [vmem:[#allocation3 + $0x18] sm:$0xe]
      %v3811 = vld [vmem:[#allocation3 + $0x24] sm:$0xe]
      %v3812 = vld [vmem:[#allocation3 + $0x30] sm:$0xe]
      %v3813 = vld [vmem:[#allocation3 + $0x3c] sm:$0xe]
      %v3814 = vld [vmem:[#allocation3 + $0x48] sm:$0xe]
      %v3815 = vld [vmem:[#allocation3 + $0x54] sm:$0xe]
      %v3816 = vld [vmem:[#allocation3 + $0x60] sm:$0xe]
      %v3817 = vld [vmem:[#allocation3 + $0x6c] sm:$0xe]
      %v3818 = vld [vmem:[#allocation3 + $0x78] sm:$0xe]
      %v3819 = vld [vmem:[#allocation3 + $0x84] sm:$0xe]
      %v3820 = vld [vmem:[#allocation3 + $0x90] sm:$0xe]
      %v3821 = vld [vmem:[#allocation3 + $0x9c] sm:$0xe]
      %v3822 = vld [vmem:[#allocation3 + $0xa8] sm:$0xe]
      %v3823 = vld [vmem:[#allocation3 + $0xb4] sm:$0xe]
      %v3824 = vld [vmem:[%s3130] sm:$0xf]
      %v3825 = vld [vmem:[%s3130 + $0x4] sm:$0xf]
      %v3826 = vld [vmem:[%s3130 + $0xc] sm:$0xf]
      %v3827 = vld [vmem:[%s3130 + $0x10] sm:$0xf]
      %v3828 = vld [vmem:[%s3130 + $0x18] sm:$0xf]
      %v3829 = vld [vmem:[%s3130 + $0x1c] sm:$0xf]
      %v3830 = vld [vmem:[%s3130 + $0x24] sm:$0xf]
      %v3831 = vld [vmem:[%s3130 + $0x28] sm:$0xf]
      %v3832 = vld [vmem:[%s3130 + $0x30] sm:$0xf]
      %v3833 = vld [vmem:[%s3130 + $0x34] sm:$0xf]
      %v3834 = vld [vmem:[%s3130 + $0x3c] sm:$0xf]
      %v3835 = vld [vmem:[%s3130 + $0x40] sm:$0xf]
      %v3836 = vld [vmem:[%s3130 + $0x48] sm:$0xf]
      %v3837 = vld [vmem:[%s3130 + $0x4c] sm:$0xf]
      %v3838 = vld [vmem:[%s3130 + $0x54] sm:$0xf]
      %v3839 = vld [vmem:[%s3130 + $0x58] sm:$0xf]
      %v3840 = vld [vmem:[%s3130 + $0x60] sm:$0xf]
      %v3841 = vld [vmem:[%s3130 + $0x64] sm:$0xf]
      %v3842 = vld [vmem:[%s3130 + $0x6c] sm:$0xf]
      %v3843 = vld [vmem:[%s3130 + $0x70] sm:$0xf]
      %v3844 = vld [vmem:[%s3130 + $0x78] sm:$0xf]
      %v3845 = vld [vmem:[%s3130 + $0x7c] sm:$0xf]
      %v3846 = vld [vmem:[%s3130 + $0x84] sm:$0xf]
      %v3847 = vld [vmem:[%s3130 + $0x88] sm:$0xf]
      %v3848 = vld [vmem:[%s3130 + $0x90] sm:$0xf]
      %v3849 = vld [vmem:[%s3130 + $0x94] sm:$0xf]
      %v3850 = vld [vmem:[%s3130 + $0x9c] sm:$0xf]
      %v3851 = vld [vmem:[%s3130 + $0xa0] sm:$0xf]
      %v3852 = vld [vmem:[%s3130 + $0xa8] sm:$0xf]
      %v3853 = vld [vmem:[%s3130 + $0xac] sm:$0xf]
      %v3854 = vld [vmem:[%s3130 + $0xb4] sm:$0xf]
      %v3855 = vld [vmem:[%s3130 + $0xb8] sm:$0xf]
      %v3856 = vld [vmem:[%s3130 + $0x8] sm:$0x1]
      %v3857 = vld [vmem:[%s3130 + $0x14] sm:$0x1]
      %v3858 = vld [vmem:[%s3130 + $0x20] sm:$0x1]
      %v3859 = vld [vmem:[%s3130 + $0x2c] sm:$0x1]
      %v3860 = vld [vmem:[%s3130 + $0x38] sm:$0x1]
      %v3861 = vld [vmem:[%s3130 + $0x44] sm:$0x1]
      %v3862 = vld [vmem:[%s3130 + $0x50] sm:$0x1]
      %v3863 = vld [vmem:[%s3130 + $0x5c] sm:$0x1]
      %v3864 = vld [vmem:[%s3130 + $0x68] sm:$0x1]
      %v3865 = vld [vmem:[%s3130 + $0x74] sm:$0x1]
      %v3866 = vld [vmem:[%s3130 + $0x80] sm:$0x1]
      %v3867 = vld [vmem:[%s3130 + $0x8c] sm:$0x1]
      %v3868 = vld [vmem:[%s3130 + $0x98] sm:$0x1]
      %v3869 = vld [vmem:[%s3130 + $0xa4] sm:$0x1]
      %v3870 = vld [vmem:[%s3130 + $0xb0] sm:$0x1]
      %v3871 = vld [vmem:[%s3130 + $0xbc] sm:$0x1]
      %v3872 = vld [vmem:[%s3130] sm:$0xe]
      %v3873 = vld [vmem:[%s3130 + $0xc] sm:$0xe]
      %v3874 = vld [vmem:[%s3130 + $0x18] sm:$0xe]
      %v3875 = vld [vmem:[%s3130 + $0x24] sm:$0xe]
      %v3876 = vld [vmem:[%s3130 + $0x30] sm:$0xe]
      %v3877 = vld [vmem:[%s3130 + $0x3c] sm:$0xe]
      %v3878 = vld [vmem:[%s3130 + $0x48] sm:$0xe]
      %v3879 = vld [vmem:[%s3130 + $0x54] sm:$0xe]
      %v3880 = vld [vmem:[%s3130 + $0x60] sm:$0xe]
      %v3881 = vld [vmem:[%s3130 + $0x6c] sm:$0xe]
      %v3882 = vld [vmem:[%s3130 + $0x78] sm:$0xe]
      %v3883 = vld [vmem:[%s3130 + $0x84] sm:$0xe]
      %v3884 = vld [vmem:[%s3130 + $0x90] sm:$0xe]
      %v3885 = vld [vmem:[%s3130 + $0x9c] sm:$0xe]
      %v3886 = vld [vmem:[%s3130 + $0xa8] sm:$0xe]
      %v3887 = vld [vmem:[%s3130 + $0xb4] sm:$0xe]
      %s3888 = scalar_lea.vmem [#allocation3], 24
      %v3889 = vld [vmem:[%s3888] sm:$0xf]
      %v3890 = vld [vmem:[%s3888 + $0x4] sm:$0xf]
      %v3891 = vld [vmem:[%s3888 + $0xc] sm:$0xf]
      %v3892 = vld [vmem:[%s3888 + $0x10] sm:$0xf]
      %v3893 = vld [vmem:[%s3888 + $0x18] sm:$0xf]
      %v3894 = vld [vmem:[%s3888 + $0x1c] sm:$0xf]
      %v3895 = vld [vmem:[%s3888 + $0x24] sm:$0xf]
      %v3896 = vld [vmem:[%s3888 + $0x28] sm:$0xf]
      %v3897 = vld [vmem:[%s3888 + $0x30] sm:$0xf]
      %v3898 = vld [vmem:[%s3888 + $0x34] sm:$0xf]
      %v3899 = vld [vmem:[%s3888 + $0x3c] sm:$0xf]
      %v3900 = vld [vmem:[%s3888 + $0x40] sm:$0xf]
      %v3901 = vld [vmem:[%s3888 + $0x48] sm:$0xf]
      %v3902 = vld [vmem:[%s3888 + $0x4c] sm:$0xf]
      %v3903 = vld [vmem:[%s3888 + $0x54] sm:$0xf]
      %v3904 = vld [vmem:[%s3888 + $0x58] sm:$0xf]
      %v3905 = vld [vmem:[%s3888 + $0x60] sm:$0xf]
      %v3906 = vld [vmem:[%s3888 + $0x64] sm:$0xf]
      %v3907 = vld [vmem:[%s3888 + $0x6c] sm:$0xf]
      %v3908 = vld [vmem:[%s3888 + $0x70] sm:$0xf]
      %v3909 = vld [vmem:[%s3888 + $0x78] sm:$0xf]
      %v3910 = vld [vmem:[%s3888 + $0x7c] sm:$0xf]
      %v3911 = vld [vmem:[%s3888 + $0x84] sm:$0xf]
      %v3912 = vld [vmem:[%s3888 + $0x88] sm:$0xf]
      %v3913 = vld [vmem:[%s3888 + $0x90] sm:$0xf]
      %v3914 = vld [vmem:[%s3888 + $0x94] sm:$0xf]
      %v3915 = vld [vmem:[%s3888 + $0x9c] sm:$0xf]
      %v3916 = vld [vmem:[%s3888 + $0xa0] sm:$0xf]
      %v3917 = vld [vmem:[%s3888 + $0xa8] sm:$0xf]
      %v3918 = vld [vmem:[%s3888 + $0xac] sm:$0xf]
      %v3919 = vld [vmem:[%s3888 + $0xb4] sm:$0xf]
      %v3920 = vld [vmem:[%s3888 + $0xb8] sm:$0xf]
      %v3921 = vld [vmem:[%s3888 + $0x8] sm:$0x1]
      %v3922 = vld [vmem:[%s3888 + $0x14] sm:$0x1]
      %v3923 = vld [vmem:[%s3888 + $0x20] sm:$0x1]
      %v3924 = vld [vmem:[%s3888 + $0x2c] sm:$0x1]
      %v3925 = vld [vmem:[%s3888 + $0x38] sm:$0x1]
      %v3926 = vld [vmem:[%s3888 + $0x44] sm:$0x1]
      %v3927 = vld [vmem:[%s3888 + $0x50] sm:$0x1]
      %v3928 = vld [vmem:[%s3888 + $0x5c] sm:$0x1]
      %v3929 = vld [vmem:[%s3888 + $0x68] sm:$0x1]
      %v3930 = vld [vmem:[%s3888 + $0x74] sm:$0x1]
      %v3931 = vld [vmem:[%s3888 + $0x80] sm:$0x1]
      %v3932 = vld [vmem:[%s3888 + $0x8c] sm:$0x1]
      %v3933 = vld [vmem:[%s3888 + $0x98] sm:$0x1]
      %v3934 = vld [vmem:[%s3888 + $0xa4] sm:$0x1]
      %v3935 = vld [vmem:[%s3888 + $0xb0] sm:$0x1]
      %v3936 = vld [vmem:[%s3888 + $0xbc] sm:$0x1]
      %v3937 = vld [vmem:[%s3888] sm:$0xe]
      %v3938 = vld [vmem:[%s3888 + $0xc] sm:$0xe]
      %v3939 = vld [vmem:[%s3888 + $0x18] sm:$0xe]
      %v3940 = vld [vmem:[%s3888 + $0x24] sm:$0xe]
      %v3941 = vld [vmem:[%s3888 + $0x30] sm:$0xe]
      %v3942 = vld [vmem:[%s3888 + $0x3c] sm:$0xe]
      %v3943 = vld [vmem:[%s3888 + $0x48] sm:$0xe]
      %v3944 = vld [vmem:[%s3888 + $0x54] sm:$0xe]
      %v3945 = vld [vmem:[%s3888 + $0x60] sm:$0xe]
      %v3946 = vld [vmem:[%s3888 + $0x6c] sm:$0xe]
      %v3947 = vld [vmem:[%s3888 + $0x78] sm:$0xe]
      %v3948 = vld [vmem:[%s3888 + $0x84] sm:$0xe]
      %v3949 = vld [vmem:[%s3888 + $0x90] sm:$0xe]
      %v3950 = vld [vmem:[%s3888 + $0x9c] sm:$0xe]
      %v3951 = vld [vmem:[%s3888 + $0xa8] sm:$0xe]
      %v3952 = vld [vmem:[%s3888 + $0xb4] sm:$0xe]
      %v3985 = vunpack.c.l.b16 %v3760
      %v3986 = vunpack.c.l.b16 %v3761
      %v3987 = vunpack.c.l.b16 %v3762
      %v3988 = vunpack.c.l.b16 %v3763
      %v3989 = vunpack.c.l.b16 %v3764
      %v3990 = vunpack.c.l.b16 %v3765
      %v3991 = vunpack.c.l.b16 %v3766
      %v3992 = vunpack.c.l.b16 %v3767
      %v3993 = vunpack.c.l.b16 %v3768
      %v3994 = vunpack.c.l.b16 %v3769
      %v3995 = vunpack.c.l.b16 %v3770
      %v3996 = vunpack.c.l.b16 %v3771
      %v3997 = vunpack.c.l.b16 %v3772
      %v3998 = vunpack.c.l.b16 %v3773
      %v3999 = vunpack.c.l.b16 %v3774
      %v4000 = vunpack.c.l.b16 %v3775
      %v4001 = vunpack.c.l.b16 %v3776
      %v4002 = vunpack.c.l.b16 %v3777
      %v4003 = vunpack.c.l.b16 %v3778
      %v4004 = vunpack.c.l.b16 %v3779
      %v4005 = vunpack.c.l.b16 %v3780
      %v4006 = vunpack.c.l.b16 %v3781
      %v4007 = vunpack.c.l.b16 %v3782
      %v4008 = vunpack.c.l.b16 %v3783
      %v4009 = vunpack.c.l.b16 %v3784
      %v4010 = vunpack.c.l.b16 %v3785
      %v4011 = vunpack.c.l.b16 %v3786
      %v4012 = vunpack.c.l.b16 %v3787
      %v4013 = vunpack.c.l.b16 %v3788
      %v4014 = vunpack.c.l.b16 %v3789
      %v4015 = vunpack.c.l.b16 %v3790
      %v4016 = vunpack.c.l.b16 %v3791
      %v4017 = vpack.c.b16 %v3986, %v3985
      %v4018 = vpack.c.b16 %v3988, %v3987
      %v4019 = vpack.c.b16 %v3990, %v3989
      %v4020 = vpack.c.b16 %v3992, %v3991
      %v4021 = vpack.c.b16 %v3994, %v3993
      %v4022 = vpack.c.b16 %v3996, %v3995
      %v4023 = vpack.c.b16 %v3998, %v3997
      %v4024 = vpack.c.b16 %v4000, %v3999
      %v4025 = vpack.c.b16 %v4002, %v4001
      %v4026 = vpack.c.b16 %v4004, %v4003
      %v4027 = vpack.c.b16 %v4006, %v4005
      %v4028 = vpack.c.b16 %v4008, %v4007
      %v4029 = vpack.c.b16 %v4010, %v4009
      %v4030 = vpack.c.b16 %v4012, %v4011
      %v4031 = vpack.c.b16 %v4014, %v4013
      %v4032 = vpack.c.b16 %v4016, %v4015
      %v4049 = vunpack.c.l.b16 %v3792
      %v4050 = vunpack.c.l.b16 %v3793
      %v4051 = vunpack.c.l.b16 %v3794
      %v4052 = vunpack.c.l.b16 %v3795
      %v4053 = vunpack.c.l.b16 %v3796
      %v4054 = vunpack.c.l.b16 %v3797
      %v4055 = vunpack.c.l.b16 %v3798
      %v4056 = vunpack.c.l.b16 %v3799
      %v4057 = vunpack.c.l.b16 %v3800
      %v4058 = vunpack.c.l.b16 %v3801
      %v4059 = vunpack.c.l.b16 %v3802
      %v4060 = vunpack.c.l.b16 %v3803
      %v4061 = vunpack.c.l.b16 %v3804
      %v4062 = vunpack.c.l.b16 %v3805
      %v4063 = vunpack.c.l.b16 %v3806
      %v4064 = vunpack.c.l.b16 %v3807
      %v4065 = vpack.c.b16 %v4049, %v4049
      %v4066 = vpack.c.b16 %v4050, %v4050
      %v4067 = vpack.c.b16 %v4051, %v4051
      %v4068 = vpack.c.b16 %v4052, %v4052
      %v4069 = vpack.c.b16 %v4053, %v4053
      %v4070 = vpack.c.b16 %v4054, %v4054
      %v4071 = vpack.c.b16 %v4055, %v4055
      %v4072 = vpack.c.b16 %v4056, %v4056
      %v4073 = vpack.c.b16 %v4057, %v4057
      %v4074 = vpack.c.b16 %v4058, %v4058
      %v4075 = vpack.c.b16 %v4059, %v4059
      %v4076 = vpack.c.b16 %v4060, %v4060
      %v4077 = vpack.c.b16 %v4061, %v4061
      %v4078 = vpack.c.b16 %v4062, %v4062
      %v4079 = vpack.c.b16 %v4063, %v4063
      %v4080 = vpack.c.b16 %v4064, %v4064
      %v4082 = vshrl.u32 %v4017, 16
      %v4084 = vshll.u32 %v4017, 16
      %v4086 = vrot.slane %v4084, 1
      %v4087 = vor.u32 %v4082, %v4086
      %v4089 = vshll.u32 %v4065, 16
      %v4091 = vrot.slane %v4089, 1
      %v4092 = vsel %vm1222, %v4087, %v4091
      %v4094 = vshrl.u32 %v4018, 16
      %v4096 = vshll.u32 %v4018, 16
      %v4098 = vrot.slane %v4096, 1
      %v4099 = vor.u32 %v4094, %v4098
      %v4101 = vshll.u32 %v4066, 16
      %v4103 = vrot.slane %v4101, 1
      %v4104 = vsel %vm1222, %v4099, %v4103
      %v4106 = vshrl.u32 %v4019, 16
      %v4108 = vshll.u32 %v4019, 16
      %v4110 = vrot.slane %v4108, 1
      %v4111 = vor.u32 %v4106, %v4110
      %v4113 = vshll.u32 %v4067, 16
      %v4115 = vrot.slane %v4113, 1
      %v4116 = vsel %vm1222, %v4111, %v4115
      %v4118 = vshrl.u32 %v4020, 16
      %v4120 = vshll.u32 %v4020, 16
      %v4122 = vrot.slane %v4120, 1
      %v4123 = vor.u32 %v4118, %v4122
      %v4125 = vshll.u32 %v4068, 16
      %v4127 = vrot.slane %v4125, 1
      %v4128 = vsel %vm1222, %v4123, %v4127
      %v4130 = vshrl.u32 %v4021, 16
      %v4132 = vshll.u32 %v4021, 16
      %v4134 = vrot.slane %v4132, 1
      %v4135 = vor.u32 %v4130, %v4134
      %v4137 = vshll.u32 %v4069, 16
      %v4139 = vrot.slane %v4137, 1
      %v4140 = vsel %vm1222, %v4135, %v4139
      %v4142 = vshrl.u32 %v4022, 16
      %v4144 = vshll.u32 %v4022, 16
      %v4146 = vrot.slane %v4144, 1
      %v4147 = vor.u32 %v4142, %v4146
      %v4149 = vshll.u32 %v4070, 16
      %v4151 = vrot.slane %v4149, 1
      %v4152 = vsel %vm1222, %v4147, %v4151
      %v4154 = vshrl.u32 %v4023, 16
      %v4156 = vshll.u32 %v4023, 16
      %v4158 = vrot.slane %v4156, 1
      %v4159 = vor.u32 %v4154, %v4158
      %v4161 = vshll.u32 %v4071, 16
      %v4163 = vrot.slane %v4161, 1
      %v4164 = vsel %vm1222, %v4159, %v4163
      %v4166 = vshrl.u32 %v4024, 16
      %v4168 = vshll.u32 %v4024, 16
      %v4170 = vrot.slane %v4168, 1
      %v4171 = vor.u32 %v4166, %v4170
      %v4173 = vshll.u32 %v4072, 16
      %v4175 = vrot.slane %v4173, 1
      %v4176 = vsel %vm1222, %v4171, %v4175
      %v4178 = vshrl.u32 %v4025, 16
      %v4180 = vshll.u32 %v4025, 16
      %v4182 = vrot.slane %v4180, 1
      %v4183 = vor.u32 %v4178, %v4182
      %v4185 = vshll.u32 %v4073, 16
      %v4187 = vrot.slane %v4185, 1
      %v4188 = vsel %vm1222, %v4183, %v4187
      %v4190 = vshrl.u32 %v4026, 16
      %v4192 = vshll.u32 %v4026, 16
      %v4194 = vrot.slane %v4192, 1
      %v4195 = vor.u32 %v4190, %v4194
      %v4197 = vshll.u32 %v4074, 16
      %v4199 = vrot.slane %v4197, 1
      %v4200 = vsel %vm1222, %v4195, %v4199
      %v4202 = vshrl.u32 %v4027, 16
      %v4204 = vshll.u32 %v4027, 16
      %v4206 = vrot.slane %v4204, 1
      %v4207 = vor.u32 %v4202, %v4206
      %v4209 = vshll.u32 %v4075, 16
      %v4211 = vrot.slane %v4209, 1
      %v4212 = vsel %vm1222, %v4207, %v4211
      %v4214 = vshrl.u32 %v4028, 16
      %v4216 = vshll.u32 %v4028, 16
      %v4218 = vrot.slane %v4216, 1
      %v4219 = vor.u32 %v4214, %v4218
      %v4221 = vshll.u32 %v4076, 16
      %v4223 = vrot.slane %v4221, 1
      %v4224 = vsel %vm1222, %v4219, %v4223
      %v4226 = vshrl.u32 %v4029, 16
      %v4228 = vshll.u32 %v4029, 16
      %v4230 = vrot.slane %v4228, 1
      %v4231 = vor.u32 %v4226, %v4230
      %v4233 = vshll.u32 %v4077, 16
      %v4235 = vrot.slane %v4233, 1
      %v4236 = vsel %vm1222, %v4231, %v4235
      %v4238 = vshrl.u32 %v4030, 16
      %v4240 = vshll.u32 %v4030, 16
      %v4242 = vrot.slane %v4240, 1
      %v4243 = vor.u32 %v4238, %v4242
      %v4245 = vshll.u32 %v4078, 16
      %v4247 = vrot.slane %v4245, 1
      %v4248 = vsel %vm1222, %v4243, %v4247
      %v4250 = vshrl.u32 %v4031, 16
      %v4252 = vshll.u32 %v4031, 16
      %v4254 = vrot.slane %v4252, 1
      %v4255 = vor.u32 %v4250, %v4254
      %v4257 = vshll.u32 %v4079, 16
      %v4259 = vrot.slane %v4257, 1
      %v4260 = vsel %vm1222, %v4255, %v4259
      %v4262 = vshrl.u32 %v4032, 16
      %v4264 = vshll.u32 %v4032, 16
      %v4266 = vrot.slane %v4264, 1
      %v4267 = vor.u32 %v4262, %v4266
      %v4269 = vshll.u32 %v4080, 16
      %v4271 = vrot.slane %v4269, 1
      %v4272 = vsel %vm1222, %v4267, %v4271
      %4273 = vrot.lane.b32.xlu0 %v4092, 8
      %v4274 = vpop.permute.xlu0 %4273
      %4275 = vrot.lane.b32.xlu0 %v4104, 8
      %v4276 = vpop.permute.xlu0 %4275
      %4277 = vrot.lane.b32.xlu0 %v4116, 8
      %v4278 = vpop.permute.xlu0 %4277
      %4279 = vrot.lane.b32.xlu0 %v4128, 8
      %v4280 = vpop.permute.xlu0 %4279
      %4281 = vrot.lane.b32.xlu0 %v4140, 8
      %v4282 = vpop.permute.xlu0 %4281
      %4283 = vrot.lane.b32.xlu0 %v4152, 8
      %v4284 = vpop.permute.xlu0 %4283
      %4285 = vrot.lane.b32.xlu0 %v4164, 8
      %v4286 = vpop.permute.xlu0 %4285
      %4287 = vrot.lane.b32.xlu0 %v4176, 8
      %v4288 = vpop.permute.xlu0 %4287
      %4289 = vrot.lane.b32.xlu0 %v4188, 8
      %v4290 = vpop.permute.xlu0 %4289
      %4291 = vrot.lane.b32.xlu0 %v4200, 8
      %v4292 = vpop.permute.xlu0 %4291
      %4293 = vrot.lane.b32.xlu0 %v4212, 8
      %v4294 = vpop.permute.xlu0 %4293
      %4295 = vrot.lane.b32.xlu0 %v4224, 8
      %v4296 = vpop.permute.xlu0 %4295
      %4297 = vrot.lane.b32.xlu0 %v4236, 8
      %v4298 = vpop.permute.xlu0 %4297
      %4299 = vrot.lane.b32.xlu0 %v4248, 8
      %v4300 = vpop.permute.xlu0 %4299
      %4301 = vrot.lane.b32.xlu0 %v4260, 8
      %v4302 = vpop.permute.xlu0 %4301
      %4303 = vrot.lane.b32.xlu0 %v4272, 8
      %v4304 = vpop.permute.xlu0 %4303
      %v4321 = vunpack.c.l.b16 %v3808
      %v4322 = vunpack.c.l.b16 %v3809
      %v4323 = vunpack.c.l.b16 %v3810
      %v4324 = vunpack.c.l.b16 %v3811
      %v4325 = vunpack.c.l.b16 %v3812
      %v4326 = vunpack.c.l.b16 %v3813
      %v4327 = vunpack.c.l.b16 %v3814
      %v4328 = vunpack.c.l.b16 %v3815
      %v4329 = vunpack.c.l.b16 %v3816
      %v4330 = vunpack.c.l.b16 %v3817
      %v4331 = vunpack.c.l.b16 %v3818
      %v4332 = vunpack.c.l.b16 %v3819
      %v4333 = vunpack.c.l.b16 %v3820
      %v4334 = vunpack.c.l.b16 %v3821
      %v4335 = vunpack.c.l.b16 %v3822
      %v4336 = vunpack.c.l.b16 %v3823
      %v4337 = vpack.c.b16 %v3986, %v4321
      %v4338 = vpack.c.b16 %v3988, %v4322
      %v4339 = vpack.c.b16 %v3990, %v4323
      %v4340 = vpack.c.b16 %v3992, %v4324
      %v4341 = vpack.c.b16 %v3994, %v4325
      %v4342 = vpack.c.b16 %v3996, %v4326
      %v4343 = vpack.c.b16 %v3998, %v4327
      %v4344 = vpack.c.b16 %v4000, %v4328
      %v4345 = vpack.c.b16 %v4002, %v4329
      %v4346 = vpack.c.b16 %v4004, %v4330
      %v4347 = vpack.c.b16 %v4006, %v4331
      %v4348 = vpack.c.b16 %v4008, %v4332
      %v4349 = vpack.c.b16 %v4010, %v4333
      %v4350 = vpack.c.b16 %v4012, %v4334
      %v4351 = vpack.c.b16 %v4014, %v4335
      %v4352 = vpack.c.b16 %v4016, %v4336
      %v4353 = vrot.slane %v4337, 1
      %v4354 = vrot.slane %v4065, 1
      %v4355 = vsel %vm1495, %v4353, %v4354
      %v4356 = vrot.slane %v4338, 1
      %v4357 = vrot.slane %v4066, 1
      %v4358 = vsel %vm1495, %v4356, %v4357
      %v4359 = vrot.slane %v4339, 1
      %v4360 = vrot.slane %v4067, 1
      %v4361 = vsel %vm1495, %v4359, %v4360
      %v4362 = vrot.slane %v4340, 1
      %v4363 = vrot.slane %v4068, 1
      %v4364 = vsel %vm1495, %v4362, %v4363
      %v4365 = vrot.slane %v4341, 1
      %v4366 = vrot.slane %v4069, 1
      %v4367 = vsel %vm1495, %v4365, %v4366
      %v4368 = vrot.slane %v4342, 1
      %v4369 = vrot.slane %v4070, 1
      %v4370 = vsel %vm1495, %v4368, %v4369
      %v4371 = vrot.slane %v4343, 1
      %v4372 = vrot.slane %v4071, 1
      %v4373 = vsel %vm1495, %v4371, %v4372
      %v4374 = vrot.slane %v4344, 1
      %v4375 = vrot.slane %v4072, 1
      %v4376 = vsel %vm1495, %v4374, %v4375
      %v4377 = vrot.slane %v4345, 1
      %v4378 = vrot.slane %v4073, 1
      %v4379 = vsel %vm1495, %v4377, %v4378
      %v4380 = vrot.slane %v4346, 1
      %v4381 = vrot.slane %v4074, 1
      %v4382 = vsel %vm1495, %v4380, %v4381
      %v4383 = vrot.slane %v4347, 1
      %v4384 = vrot.slane %v4075, 1
      %v4385 = vsel %vm1495, %v4383, %v4384
      %v4386 = vrot.slane %v4348, 1
      %v4387 = vrot.slane %v4076, 1
      %v4388 = vsel %vm1495, %v4386, %v4387
      %v4389 = vrot.slane %v4349, 1
      %v4390 = vrot.slane %v4077, 1
      %v4391 = vsel %vm1495, %v4389, %v4390
      %v4392 = vrot.slane %v4350, 1
      %v4393 = vrot.slane %v4078, 1
      %v4394 = vsel %vm1495, %v4392, %v4393
      %v4395 = vrot.slane %v4351, 1
      %v4396 = vrot.slane %v4079, 1
      %v4397 = vsel %vm1495, %v4395, %v4396
      %v4398 = vrot.slane %v4352, 1
      %v4399 = vrot.slane %v4080, 1
      %v4400 = vsel %vm1495, %v4398, %v4399
      %4401 = vrot.lane.b32.xlu0 %v4355, 16
      %v4402 = vpop.permute.xlu0 %4401
      %4403 = vrot.lane.b32.xlu0 %v4358, 16
      %v4404 = vpop.permute.xlu0 %4403
      %4405 = vrot.lane.b32.xlu0 %v4361, 16
      %v4406 = vpop.permute.xlu0 %4405
      %4407 = vrot.lane.b32.xlu0 %v4364, 16
      %v4408 = vpop.permute.xlu0 %4407
      %4409 = vrot.lane.b32.xlu0 %v4367, 16
      %v4410 = vpop.permute.xlu0 %4409
      %4411 = vrot.lane.b32.xlu0 %v4370, 16
      %v4412 = vpop.permute.xlu0 %4411
      %4413 = vrot.lane.b32.xlu0 %v4373, 16
      %v4414 = vpop.permute.xlu0 %4413
      %4415 = vrot.lane.b32.xlu0 %v4376, 16
      %v4416 = vpop.permute.xlu0 %4415
      %4417 = vrot.lane.b32.xlu0 %v4379, 16
      %v4418 = vpop.permute.xlu0 %4417
      %4419 = vrot.lane.b32.xlu0 %v4382, 16
      %v4420 = vpop.permute.xlu0 %4419
      %4421 = vrot.lane.b32.xlu0 %v4385, 16
      %v4422 = vpop.permute.xlu0 %4421
      %4423 = vrot.lane.b32.xlu0 %v4388, 16
      %v4424 = vpop.permute.xlu0 %4423
      %4425 = vrot.lane.b32.xlu0 %v4391, 16
      %v4426 = vpop.permute.xlu0 %4425
      %4427 = vrot.lane.b32.xlu0 %v4394, 16
      %v4428 = vpop.permute.xlu0 %4427
      %4429 = vrot.lane.b32.xlu0 %v4397, 16
      %v4430 = vpop.permute.xlu0 %4429
      %4431 = vrot.lane.b32.xlu0 %v4400, 16
      %v4432 = vpop.permute.xlu0 %4431
      %v4465 = vunpack.c.l.b16 %v3824
      %v4466 = vunpack.c.l.b16 %v3825
      %v4467 = vunpack.c.l.b16 %v3826
      %v4468 = vunpack.c.l.b16 %v3827
      %v4469 = vunpack.c.l.b16 %v3828
      %v4470 = vunpack.c.l.b16 %v3829
      %v4471 = vunpack.c.l.b16 %v3830
      %v4472 = vunpack.c.l.b16 %v3831
      %v4473 = vunpack.c.l.b16 %v3832
      %v4474 = vunpack.c.l.b16 %v3833
      %v4475 = vunpack.c.l.b16 %v3834
      %v4476 = vunpack.c.l.b16 %v3835
      %v4477 = vunpack.c.l.b16 %v3836
      %v4478 = vunpack.c.l.b16 %v3837
      %v4479 = vunpack.c.l.b16 %v3838
      %v4480 = vunpack.c.l.b16 %v3839
      %v4481 = vunpack.c.l.b16 %v3840
      %v4482 = vunpack.c.l.b16 %v3841
      %v4483 = vunpack.c.l.b16 %v3842
      %v4484 = vunpack.c.l.b16 %v3843
      %v4485 = vunpack.c.l.b16 %v3844
      %v4486 = vunpack.c.l.b16 %v3845
      %v4487 = vunpack.c.l.b16 %v3846
      %v4488 = vunpack.c.l.b16 %v3847
      %v4489 = vunpack.c.l.b16 %v3848
      %v4490 = vunpack.c.l.b16 %v3849
      %v4491 = vunpack.c.l.b16 %v3850
      %v4492 = vunpack.c.l.b16 %v3851
      %v4493 = vunpack.c.l.b16 %v3852
      %v4494 = vunpack.c.l.b16 %v3853
      %v4495 = vunpack.c.l.b16 %v3854
      %v4496 = vunpack.c.l.b16 %v3855
      %v4497 = vpack.c.b16 %v4466, %v4465
      %v4498 = vpack.c.b16 %v4468, %v4467
      %v4499 = vpack.c.b16 %v4470, %v4469
      %v4500 = vpack.c.b16 %v4472, %v4471
      %v4501 = vpack.c.b16 %v4474, %v4473
      %v4502 = vpack.c.b16 %v4476, %v4475
      %v4503 = vpack.c.b16 %v4478, %v4477
      %v4504 = vpack.c.b16 %v4480, %v4479
      %v4505 = vpack.c.b16 %v4482, %v4481
      %v4506 = vpack.c.b16 %v4484, %v4483
      %v4507 = vpack.c.b16 %v4486, %v4485
      %v4508 = vpack.c.b16 %v4488, %v4487
      %v4509 = vpack.c.b16 %v4490, %v4489
      %v4510 = vpack.c.b16 %v4492, %v4491
      %v4511 = vpack.c.b16 %v4494, %v4493
      %v4512 = vpack.c.b16 %v4496, %v4495
      %4513 = vrot.lane.b32.xlu0 %v4497, 24
      %v4514 = vpop.permute.xlu0 %4513
      %4515 = vrot.lane.b32.xlu0 %v4498, 24
      %v4516 = vpop.permute.xlu0 %4515
      %4517 = vrot.lane.b32.xlu0 %v4499, 24
      %v4518 = vpop.permute.xlu0 %4517
      %4519 = vrot.lane.b32.xlu0 %v4500, 24
      %v4520 = vpop.permute.xlu0 %4519
      %4521 = vrot.lane.b32.xlu0 %v4501, 24
      %v4522 = vpop.permute.xlu0 %4521
      %4523 = vrot.lane.b32.xlu0 %v4502, 24
      %v4524 = vpop.permute.xlu0 %4523
      %4525 = vrot.lane.b32.xlu0 %v4503, 24
      %v4526 = vpop.permute.xlu0 %4525
      %4527 = vrot.lane.b32.xlu0 %v4504, 24
      %v4528 = vpop.permute.xlu0 %4527
      %4529 = vrot.lane.b32.xlu0 %v4505, 24
      %v4530 = vpop.permute.xlu0 %4529
      %4531 = vrot.lane.b32.xlu0 %v4506, 24
      %v4532 = vpop.permute.xlu0 %4531
      %4533 = vrot.lane.b32.xlu0 %v4507, 24
      %v4534 = vpop.permute.xlu0 %4533
      %4535 = vrot.lane.b32.xlu0 %v4508, 24
      %v4536 = vpop.permute.xlu0 %4535
      %4537 = vrot.lane.b32.xlu0 %v4509, 24
      %v4538 = vpop.permute.xlu0 %4537
      %4539 = vrot.lane.b32.xlu0 %v4510, 24
      %v4540 = vpop.permute.xlu0 %4539
      %4541 = vrot.lane.b32.xlu0 %v4511, 24
      %v4542 = vpop.permute.xlu0 %4541
      %4543 = vrot.lane.b32.xlu0 %v4512, 24
      %v4544 = vpop.permute.xlu0 %4543
      %v4561 = vunpack.c.l.b16 %v3856
      %v4562 = vunpack.c.l.b16 %v3857
      %v4563 = vunpack.c.l.b16 %v3858
      %v4564 = vunpack.c.l.b16 %v3859
      %v4565 = vunpack.c.l.b16 %v3860
      %v4566 = vunpack.c.l.b16 %v3861
      %v4567 = vunpack.c.l.b16 %v3862
      %v4568 = vunpack.c.l.b16 %v3863
      %v4569 = vunpack.c.l.b16 %v3864
      %v4570 = vunpack.c.l.b16 %v3865
      %v4571 = vunpack.c.l.b16 %v3866
      %v4572 = vunpack.c.l.b16 %v3867
      %v4573 = vunpack.c.l.b16 %v3868
      %v4574 = vunpack.c.l.b16 %v3869
      %v4575 = vunpack.c.l.b16 %v3870
      %v4576 = vunpack.c.l.b16 %v3871
      %v4577 = vpack.c.b16 %v4561, %v4561
      %v4578 = vpack.c.b16 %v4562, %v4562
      %v4579 = vpack.c.b16 %v4563, %v4563
      %v4580 = vpack.c.b16 %v4564, %v4564
      %v4581 = vpack.c.b16 %v4565, %v4565
      %v4582 = vpack.c.b16 %v4566, %v4566
      %v4583 = vpack.c.b16 %v4567, %v4567
      %v4584 = vpack.c.b16 %v4568, %v4568
      %v4585 = vpack.c.b16 %v4569, %v4569
      %v4586 = vpack.c.b16 %v4570, %v4570
      %v4587 = vpack.c.b16 %v4571, %v4571
      %v4588 = vpack.c.b16 %v4572, %v4572
      %v4589 = vpack.c.b16 %v4573, %v4573
      %v4590 = vpack.c.b16 %v4574, %v4574
      %v4591 = vpack.c.b16 %v4575, %v4575
      %v4592 = vpack.c.b16 %v4576, %v4576
      %v4594 = vshrl.u32 %v4497, 16
      %v4596 = vshll.u32 %v4497, 16
      %v4598 = vrot.slane %v4596, 1
      %v4599 = vor.u32 %v4594, %v4598
      %v4601 = vshll.u32 %v4577, 16
      %v4603 = vrot.slane %v4601, 1
      %v4604 = vsel %vm1222, %v4599, %v4603
      %v4606 = vshrl.u32 %v4498, 16
      %v4608 = vshll.u32 %v4498, 16
      %v4610 = vrot.slane %v4608, 1
      %v4611 = vor.u32 %v4606, %v4610
      %v4613 = vshll.u32 %v4578, 16
      %v4615 = vrot.slane %v4613, 1
      %v4616 = vsel %vm1222, %v4611, %v4615
      %v4618 = vshrl.u32 %v4499, 16
      %v4620 = vshll.u32 %v4499, 16
      %v4622 = vrot.slane %v4620, 1
      %v4623 = vor.u32 %v4618, %v4622
      %v4625 = vshll.u32 %v4579, 16
      %v4627 = vrot.slane %v4625, 1
      %v4628 = vsel %vm1222, %v4623, %v4627
      %v4630 = vshrl.u32 %v4500, 16
      %v4632 = vshll.u32 %v4500, 16
      %v4634 = vrot.slane %v4632, 1
      %v4635 = vor.u32 %v4630, %v4634
      %v4637 = vshll.u32 %v4580, 16
      %v4639 = vrot.slane %v4637, 1
      %v4640 = vsel %vm1222, %v4635, %v4639
      %v4642 = vshrl.u32 %v4501, 16
      %v4644 = vshll.u32 %v4501, 16
      %v4646 = vrot.slane %v4644, 1
      %v4647 = vor.u32 %v4642, %v4646
      %v4649 = vshll.u32 %v4581, 16
      %v4651 = vrot.slane %v4649, 1
      %v4652 = vsel %vm1222, %v4647, %v4651
      %v4654 = vshrl.u32 %v4502, 16
      %v4656 = vshll.u32 %v4502, 16
      %v4658 = vrot.slane %v4656, 1
      %v4659 = vor.u32 %v4654, %v4658
      %v4661 = vshll.u32 %v4582, 16
      %v4663 = vrot.slane %v4661, 1
      %v4664 = vsel %vm1222, %v4659, %v4663
      %v4666 = vshrl.u32 %v4503, 16
      %v4668 = vshll.u32 %v4503, 16
      %v4670 = vrot.slane %v4668, 1
      %v4671 = vor.u32 %v4666, %v4670
      %v4673 = vshll.u32 %v4583, 16
      %v4675 = vrot.slane %v4673, 1
      %v4676 = vsel %vm1222, %v4671, %v4675
      %v4678 = vshrl.u32 %v4504, 16
      %v4680 = vshll.u32 %v4504, 16
      %v4682 = vrot.slane %v4680, 1
      %v4683 = vor.u32 %v4678, %v4682
      %v4685 = vshll.u32 %v4584, 16
      %v4687 = vrot.slane %v4685, 1
      %v4688 = vsel %vm1222, %v4683, %v4687
      %v4690 = vshrl.u32 %v4505, 16
      %v4692 = vshll.u32 %v4505, 16
      %v4694 = vrot.slane %v4692, 1
      %v4695 = vor.u32 %v4690, %v4694
      %v4697 = vshll.u32 %v4585, 16
      %v4699 = vrot.slane %v4697, 1
      %v4700 = vsel %vm1222, %v4695, %v4699
      %v4702 = vshrl.u32 %v4506, 16
      %v4704 = vshll.u32 %v4506, 16
      %v4706 = vrot.slane %v4704, 1
      %v4707 = vor.u32 %v4702, %v4706
      %v4709 = vshll.u32 %v4586, 16
      %v4711 = vrot.slane %v4709, 1
      %v4712 = vsel %vm1222, %v4707, %v4711
      %v4714 = vshrl.u32 %v4507, 16
      %v4716 = vshll.u32 %v4507, 16
      %v4718 = vrot.slane %v4716, 1
      %v4719 = vor.u32 %v4714, %v4718
      %v4721 = vshll.u32 %v4587, 16
      %v4723 = vrot.slane %v4721, 1
      %v4724 = vsel %vm1222, %v4719, %v4723
      %v4726 = vshrl.u32 %v4508, 16
      %v4728 = vshll.u32 %v4508, 16
      %v4730 = vrot.slane %v4728, 1
      %v4731 = vor.u32 %v4726, %v4730
      %v4733 = vshll.u32 %v4588, 16
      %v4735 = vrot.slane %v4733, 1
      %v4736 = vsel %vm1222, %v4731, %v4735
      %v4738 = vshrl.u32 %v4509, 16
      %v4740 = vshll.u32 %v4509, 16
      %v4742 = vrot.slane %v4740, 1
      %v4743 = vor.u32 %v4738, %v4742
      %v4745 = vshll.u32 %v4589, 16
      %v4747 = vrot.slane %v4745, 1
      %v4748 = vsel %vm1222, %v4743, %v4747
      %v4750 = vshrl.u32 %v4510, 16
      %v4752 = vshll.u32 %v4510, 16
      %v4754 = vrot.slane %v4752, 1
      %v4755 = vor.u32 %v4750, %v4754
      %v4757 = vshll.u32 %v4590, 16
      %v4759 = vrot.slane %v4757, 1
      %v4760 = vsel %vm1222, %v4755, %v4759
      %v4762 = vshrl.u32 %v4511, 16
      %v4764 = vshll.u32 %v4511, 16
      %v4766 = vrot.slane %v4764, 1
      %v4767 = vor.u32 %v4762, %v4766
      %v4769 = vshll.u32 %v4591, 16
      %v4771 = vrot.slane %v4769, 1
      %v4772 = vsel %vm1222, %v4767, %v4771
      %v4774 = vshrl.u32 %v4512, 16
      %v4776 = vshll.u32 %v4512, 16
      %v4778 = vrot.slane %v4776, 1
      %v4779 = vor.u32 %v4774, %v4778
      %v4781 = vshll.u32 %v4592, 16
      %v4783 = vrot.slane %v4781, 1
      %v4784 = vsel %vm1222, %v4779, %v4783
      %4785 = vrot.lane.b32.xlu0 %v4604, 32
      %v4786 = vpop.permute.xlu0 %4785
      %4787 = vrot.lane.b32.xlu0 %v4616, 32
      %v4788 = vpop.permute.xlu0 %4787
      %4789 = vrot.lane.b32.xlu0 %v4628, 32
      %v4790 = vpop.permute.xlu0 %4789
      %4791 = vrot.lane.b32.xlu0 %v4640, 32
      %v4792 = vpop.permute.xlu0 %4791
      %4793 = vrot.lane.b32.xlu0 %v4652, 32
      %v4794 = vpop.permute.xlu0 %4793
      %4795 = vrot.lane.b32.xlu0 %v4664, 32
      %v4796 = vpop.permute.xlu0 %4795
      %4797 = vrot.lane.b32.xlu0 %v4676, 32
      %v4798 = vpop.permute.xlu0 %4797
      %4799 = vrot.lane.b32.xlu0 %v4688, 32
      %v4800 = vpop.permute.xlu0 %4799
      %4801 = vrot.lane.b32.xlu0 %v4700, 32
      %v4802 = vpop.permute.xlu0 %4801
      %4803 = vrot.lane.b32.xlu0 %v4712, 32
      %v4804 = vpop.permute.xlu0 %4803
      %4805 = vrot.lane.b32.xlu0 %v4724, 32
      %v4806 = vpop.permute.xlu0 %4805
      %4807 = vrot.lane.b32.xlu0 %v4736, 32
      %v4808 = vpop.permute.xlu0 %4807
      %4809 = vrot.lane.b32.xlu0 %v4748, 32
      %v4810 = vpop.permute.xlu0 %4809
      %4811 = vrot.lane.b32.xlu0 %v4760, 32
      %v4812 = vpop.permute.xlu0 %4811
      %4813 = vrot.lane.b32.xlu0 %v4772, 32
      %v4814 = vpop.permute.xlu0 %4813
      %4815 = vrot.lane.b32.xlu0 %v4784, 32
      %v4816 = vpop.permute.xlu0 %4815
      %v4833 = vunpack.c.l.b16 %v3872
      %v4834 = vunpack.c.l.b16 %v3873
      %v4835 = vunpack.c.l.b16 %v3874
      %v4836 = vunpack.c.l.b16 %v3875
      %v4837 = vunpack.c.l.b16 %v3876
      %v4838 = vunpack.c.l.b16 %v3877
      %v4839 = vunpack.c.l.b16 %v3878
      %v4840 = vunpack.c.l.b16 %v3879
      %v4841 = vunpack.c.l.b16 %v3880
      %v4842 = vunpack.c.l.b16 %v3881
      %v4843 = vunpack.c.l.b16 %v3882
      %v4844 = vunpack.c.l.b16 %v3883
      %v4845 = vunpack.c.l.b16 %v3884
      %v4846 = vunpack.c.l.b16 %v3885
      %v4847 = vunpack.c.l.b16 %v3886
      %v4848 = vunpack.c.l.b16 %v3887
      %v4849 = vpack.c.b16 %v4466, %v4833
      %v4850 = vpack.c.b16 %v4468, %v4834
      %v4851 = vpack.c.b16 %v4470, %v4835
      %v4852 = vpack.c.b16 %v4472, %v4836
      %v4853 = vpack.c.b16 %v4474, %v4837
      %v4854 = vpack.c.b16 %v4476, %v4838
      %v4855 = vpack.c.b16 %v4478, %v4839
      %v4856 = vpack.c.b16 %v4480, %v4840
      %v4857 = vpack.c.b16 %v4482, %v4841
      %v4858 = vpack.c.b16 %v4484, %v4842
      %v4859 = vpack.c.b16 %v4486, %v4843
      %v4860 = vpack.c.b16 %v4488, %v4844
      %v4861 = vpack.c.b16 %v4490, %v4845
      %v4862 = vpack.c.b16 %v4492, %v4846
      %v4863 = vpack.c.b16 %v4494, %v4847
      %v4864 = vpack.c.b16 %v4496, %v4848
      %v4865 = vrot.slane %v4849, 1
      %v4866 = vrot.slane %v4577, 1
      %v4867 = vsel %vm1495, %v4865, %v4866
      %v4868 = vrot.slane %v4850, 1
      %v4869 = vrot.slane %v4578, 1
      %v4870 = vsel %vm1495, %v4868, %v4869
      %v4871 = vrot.slane %v4851, 1
      %v4872 = vrot.slane %v4579, 1
      %v4873 = vsel %vm1495, %v4871, %v4872
      %v4874 = vrot.slane %v4852, 1
      %v4875 = vrot.slane %v4580, 1
      %v4876 = vsel %vm1495, %v4874, %v4875
      %v4877 = vrot.slane %v4853, 1
      %v4878 = vrot.slane %v4581, 1
      %v4879 = vsel %vm1495, %v4877, %v4878
      %v4880 = vrot.slane %v4854, 1
      %v4881 = vrot.slane %v4582, 1
      %v4882 = vsel %vm1495, %v4880, %v4881
      %v4883 = vrot.slane %v4855, 1
      %v4884 = vrot.slane %v4583, 1
      %v4885 = vsel %vm1495, %v4883, %v4884
      %v4886 = vrot.slane %v4856, 1
      %v4887 = vrot.slane %v4584, 1
      %v4888 = vsel %vm1495, %v4886, %v4887
      %v4889 = vrot.slane %v4857, 1
      %v4890 = vrot.slane %v4585, 1
      %v4891 = vsel %vm1495, %v4889, %v4890
      %v4892 = vrot.slane %v4858, 1
      %v4893 = vrot.slane %v4586, 1
      %v4894 = vsel %vm1495, %v4892, %v4893
      %v4895 = vrot.slane %v4859, 1
      %v4896 = vrot.slane %v4587, 1
      %v4897 = vsel %vm1495, %v4895, %v4896
      %v4898 = vrot.slane %v4860, 1
      %v4899 = vrot.slane %v4588, 1
      %v4900 = vsel %vm1495, %v4898, %v4899
      %v4901 = vrot.slane %v4861, 1
      %v4902 = vrot.slane %v4589, 1
      %v4903 = vsel %vm1495, %v4901, %v4902
      %v4904 = vrot.slane %v4862, 1
      %v4905 = vrot.slane %v4590, 1
      %v4906 = vsel %vm1495, %v4904, %v4905
      %v4907 = vrot.slane %v4863, 1
      %v4908 = vrot.slane %v4591, 1
      %v4909 = vsel %vm1495, %v4907, %v4908
      %v4910 = vrot.slane %v4864, 1
      %v4911 = vrot.slane %v4592, 1
      %v4912 = vsel %vm1495, %v4910, %v4911
      %4913 = vrot.lane.b32.xlu0 %v4867, 40
      %v4914 = vpop.permute.xlu0 %4913
      %4915 = vrot.lane.b32.xlu0 %v4870, 40
      %v4916 = vpop.permute.xlu0 %4915
      %4917 = vrot.lane.b32.xlu0 %v4873, 40
      %v4918 = vpop.permute.xlu0 %4917
      %4919 = vrot.lane.b32.xlu0 %v4876, 40
      %v4920 = vpop.permute.xlu0 %4919
      %4921 = vrot.lane.b32.xlu0 %v4879, 40
      %v4922 = vpop.permute.xlu0 %4921
      %4923 = vrot.lane.b32.xlu0 %v4882, 40
      %v4924 = vpop.permute.xlu0 %4923
      %4925 = vrot.lane.b32.xlu0 %v4885, 40
      %v4926 = vpop.permute.xlu0 %4925
      %4927 = vrot.lane.b32.xlu0 %v4888, 40
      %v4928 = vpop.permute.xlu0 %4927
      %4929 = vrot.lane.b32.xlu0 %v4891, 40
      %v4930 = vpop.permute.xlu0 %4929
      %4931 = vrot.lane.b32.xlu0 %v4894, 40
      %v4932 = vpop.permute.xlu0 %4931
      %4933 = vrot.lane.b32.xlu0 %v4897, 40
      %v4934 = vpop.permute.xlu0 %4933
      %4935 = vrot.lane.b32.xlu0 %v4900, 40
      %v4936 = vpop.permute.xlu0 %4935
      %4937 = vrot.lane.b32.xlu0 %v4903, 40
      %v4938 = vpop.permute.xlu0 %4937
      %4939 = vrot.lane.b32.xlu0 %v4906, 40
      %v4940 = vpop.permute.xlu0 %4939
      %4941 = vrot.lane.b32.xlu0 %v4909, 40
      %v4942 = vpop.permute.xlu0 %4941
      %4943 = vrot.lane.b32.xlu0 %v4912, 40
      %v4944 = vpop.permute.xlu0 %4943
      %v4977 = vunpack.c.l.b16 %v3889
      %v4978 = vunpack.c.l.b16 %v3890
      %v4979 = vunpack.c.l.b16 %v3891
      %v4980 = vunpack.c.l.b16 %v3892
      %v4981 = vunpack.c.l.b16 %v3893
      %v4982 = vunpack.c.l.b16 %v3894
      %v4983 = vunpack.c.l.b16 %v3895
      %v4984 = vunpack.c.l.b16 %v3896
      %v4985 = vunpack.c.l.b16 %v3897
      %v4986 = vunpack.c.l.b16 %v3898
      %v4987 = vunpack.c.l.b16 %v3899
      %v4988 = vunpack.c.l.b16 %v3900
      %v4989 = vunpack.c.l.b16 %v3901
      %v4990 = vunpack.c.l.b16 %v3902
      %v4991 = vunpack.c.l.b16 %v3903
      %v4992 = vunpack.c.l.b16 %v3904
      %v4993 = vunpack.c.l.b16 %v3905
      %v4994 = vunpack.c.l.b16 %v3906
      %v4995 = vunpack.c.l.b16 %v3907
      %v4996 = vunpack.c.l.b16 %v3908
      %v4997 = vunpack.c.l.b16 %v3909
      %v4998 = vunpack.c.l.b16 %v3910
      %v4999 = vunpack.c.l.b16 %v3911
      %v5000 = vunpack.c.l.b16 %v3912
      %v5001 = vunpack.c.l.b16 %v3913
      %v5002 = vunpack.c.l.b16 %v3914
      %v5003 = vunpack.c.l.b16 %v3915
      %v5004 = vunpack.c.l.b16 %v3916
      %v5005 = vunpack.c.l.b16 %v3917
      %v5006 = vunpack.c.l.b16 %v3918
      %v5007 = vunpack.c.l.b16 %v3919
      %v5008 = vunpack.c.l.b16 %v3920
      %v5009 = vpack.c.b16 %v4978, %v4977
      %v5010 = vpack.c.b16 %v4980, %v4979
      %v5011 = vpack.c.b16 %v4982, %v4981
      %v5012 = vpack.c.b16 %v4984, %v4983
      %v5013 = vpack.c.b16 %v4986, %v4985
      %v5014 = vpack.c.b16 %v4988, %v4987
      %v5015 = vpack.c.b16 %v4990, %v4989
      %v5016 = vpack.c.b16 %v4992, %v4991
      %v5017 = vpack.c.b16 %v4994, %v4993
      %v5018 = vpack.c.b16 %v4996, %v4995
      %v5019 = vpack.c.b16 %v4998, %v4997
      %v5020 = vpack.c.b16 %v5000, %v4999
      %v5021 = vpack.c.b16 %v5002, %v5001
      %v5022 = vpack.c.b16 %v5004, %v5003
      %v5023 = vpack.c.b16 %v5006, %v5005
      %v5024 = vpack.c.b16 %v5008, %v5007
      %5025 = vrot.lane.b32.xlu0 %v5009, 48
      %v5026 = vpop.permute.xlu0 %5025
      %5027 = vrot.lane.b32.xlu0 %v5010, 48
      %v5028 = vpop.permute.xlu0 %5027
      %5029 = vrot.lane.b32.xlu0 %v5011, 48
      %v5030 = vpop.permute.xlu0 %5029
      %5031 = vrot.lane.b32.xlu0 %v5012, 48
      %v5032 = vpop.permute.xlu0 %5031
      %5033 = vrot.lane.b32.xlu0 %v5013, 48
      %v5034 = vpop.permute.xlu0 %5033
      %5035 = vrot.lane.b32.xlu0 %v5014, 48
      %v5036 = vpop.permute.xlu0 %5035
      %5037 = vrot.lane.b32.xlu0 %v5015, 48
      %v5038 = vpop.permute.xlu0 %5037
      %5039 = vrot.lane.b32.xlu0 %v5016, 48
      %v5040 = vpop.permute.xlu0 %5039
      %5041 = vrot.lane.b32.xlu0 %v5017, 48
      %v5042 = vpop.permute.xlu0 %5041
      %5043 = vrot.lane.b32.xlu0 %v5018, 48
      %v5044 = vpop.permute.xlu0 %5043
      %5045 = vrot.lane.b32.xlu0 %v5019, 48
      %v5046 = vpop.permute.xlu0 %5045
      %5047 = vrot.lane.b32.xlu0 %v5020, 48
      %v5048 = vpop.permute.xlu0 %5047
      %5049 = vrot.lane.b32.xlu0 %v5021, 48
      %v5050 = vpop.permute.xlu0 %5049
      %5051 = vrot.lane.b32.xlu0 %v5022, 48
      %v5052 = vpop.permute.xlu0 %5051
      %5053 = vrot.lane.b32.xlu0 %v5023, 48
      %v5054 = vpop.permute.xlu0 %5053
      %5055 = vrot.lane.b32.xlu0 %v5024, 48
      %v5056 = vpop.permute.xlu0 %5055
      %v5073 = vunpack.c.l.b16 %v3921
      %v5074 = vunpack.c.l.b16 %v3922
      %v5075 = vunpack.c.l.b16 %v3923
      %v5076 = vunpack.c.l.b16 %v3924
      %v5077 = vunpack.c.l.b16 %v3925
      %v5078 = vunpack.c.l.b16 %v3926
      %v5079 = vunpack.c.l.b16 %v3927
      %v5080 = vunpack.c.l.b16 %v3928
      %v5081 = vunpack.c.l.b16 %v3929
      %v5082 = vunpack.c.l.b16 %v3930
      %v5083 = vunpack.c.l.b16 %v3931
      %v5084 = vunpack.c.l.b16 %v3932
      %v5085 = vunpack.c.l.b16 %v3933
      %v5086 = vunpack.c.l.b16 %v3934
      %v5087 = vunpack.c.l.b16 %v3935
      %v5088 = vunpack.c.l.b16 %v3936
      %v5089 = vpack.c.b16 %v5073, %v5073
      %v5090 = vpack.c.b16 %v5074, %v5074
      %v5091 = vpack.c.b16 %v5075, %v5075
      %v5092 = vpack.c.b16 %v5076, %v5076
      %v5093 = vpack.c.b16 %v5077, %v5077
      %v5094 = vpack.c.b16 %v5078, %v5078
      %v5095 = vpack.c.b16 %v5079, %v5079
      %v5096 = vpack.c.b16 %v5080, %v5080
      %v5097 = vpack.c.b16 %v5081, %v5081
      %v5098 = vpack.c.b16 %v5082, %v5082
      %v5099 = vpack.c.b16 %v5083, %v5083
      %v5100 = vpack.c.b16 %v5084, %v5084
      %v5101 = vpack.c.b16 %v5085, %v5085
      %v5102 = vpack.c.b16 %v5086, %v5086
      %v5103 = vpack.c.b16 %v5087, %v5087
      %v5104 = vpack.c.b16 %v5088, %v5088
      %v5106 = vshrl.u32 %v5009, 16
      %v5108 = vshll.u32 %v5009, 16
      %v5110 = vrot.slane %v5108, 1
      %v5111 = vor.u32 %v5106, %v5110
      %v5113 = vshll.u32 %v5089, 16
      %v5115 = vrot.slane %v5113, 1
      %v5116 = vsel %vm1222, %v5111, %v5115
      %v5118 = vshrl.u32 %v5010, 16
      %v5120 = vshll.u32 %v5010, 16
      %v5122 = vrot.slane %v5120, 1
      %v5123 = vor.u32 %v5118, %v5122
      %v5125 = vshll.u32 %v5090, 16
      %v5127 = vrot.slane %v5125, 1
      %v5128 = vsel %vm1222, %v5123, %v5127
      %v5130 = vshrl.u32 %v5011, 16
      %v5132 = vshll.u32 %v5011, 16
      %v5134 = vrot.slane %v5132, 1
      %v5135 = vor.u32 %v5130, %v5134
      %v5137 = vshll.u32 %v5091, 16
      %v5139 = vrot.slane %v5137, 1
      %v5140 = vsel %vm1222, %v5135, %v5139
      %v5142 = vshrl.u32 %v5012, 16
      %v5144 = vshll.u32 %v5012, 16
      %v5146 = vrot.slane %v5144, 1
      %v5147 = vor.u32 %v5142, %v5146
      %v5149 = vshll.u32 %v5092, 16
      %v5151 = vrot.slane %v5149, 1
      %v5152 = vsel %vm1222, %v5147, %v5151
      %v5154 = vshrl.u32 %v5013, 16
      %v5156 = vshll.u32 %v5013, 16
      %v5158 = vrot.slane %v5156, 1
      %v5159 = vor.u32 %v5154, %v5158
      %v5161 = vshll.u32 %v5093, 16
      %v5163 = vrot.slane %v5161, 1
      %v5164 = vsel %vm1222, %v5159, %v5163
      %v5166 = vshrl.u32 %v5014, 16
      %v5168 = vshll.u32 %v5014, 16
      %v5170 = vrot.slane %v5168, 1
      %v5171 = vor.u32 %v5166, %v5170
      %v5173 = vshll.u32 %v5094, 16
      %v5175 = vrot.slane %v5173, 1
      %v5176 = vsel %vm1222, %v5171, %v5175
      %v5178 = vshrl.u32 %v5015, 16
      %v5180 = vshll.u32 %v5015, 16
      %v5182 = vrot.slane %v5180, 1
      %v5183 = vor.u32 %v5178, %v5182
      %v5185 = vshll.u32 %v5095, 16
      %v5187 = vrot.slane %v5185, 1
      %v5188 = vsel %vm1222, %v5183, %v5187
      %v5190 = vshrl.u32 %v5016, 16
      %v5192 = vshll.u32 %v5016, 16
      %v5194 = vrot.slane %v5192, 1
      %v5195 = vor.u32 %v5190, %v5194
      %v5197 = vshll.u32 %v5096, 16
      %v5199 = vrot.slane %v5197, 1
      %v5200 = vsel %vm1222, %v5195, %v5199
      %v5202 = vshrl.u32 %v5017, 16
      %v5204 = vshll.u32 %v5017, 16
      %v5206 = vrot.slane %v5204, 1
      %v5207 = vor.u32 %v5202, %v5206
      %v5209 = vshll.u32 %v5097, 16
      %v5211 = vrot.slane %v5209, 1
      %v5212 = vsel %vm1222, %v5207, %v5211
      %v5214 = vshrl.u32 %v5018, 16
      %v5216 = vshll.u32 %v5018, 16
      %v5218 = vrot.slane %v5216, 1
      %v5219 = vor.u32 %v5214, %v5218
      %v5221 = vshll.u32 %v5098, 16
      %v5223 = vrot.slane %v5221, 1
      %v5224 = vsel %vm1222, %v5219, %v5223
      %v5226 = vshrl.u32 %v5019, 16
      %v5228 = vshll.u32 %v5019, 16
      %v5230 = vrot.slane %v5228, 1
      %v5231 = vor.u32 %v5226, %v5230
      %v5233 = vshll.u32 %v5099, 16
      %v5235 = vrot.slane %v5233, 1
      %v5236 = vsel %vm1222, %v5231, %v5235
      %v5238 = vshrl.u32 %v5020, 16
      %v5240 = vshll.u32 %v5020, 16
      %v5242 = vrot.slane %v5240, 1
      %v5243 = vor.u32 %v5238, %v5242
      %v5245 = vshll.u32 %v5100, 16
      %v5247 = vrot.slane %v5245, 1
      %v5248 = vsel %vm1222, %v5243, %v5247
      %v5250 = vshrl.u32 %v5021, 16
      %v5252 = vshll.u32 %v5021, 16
      %v5254 = vrot.slane %v5252, 1
      %v5255 = vor.u32 %v5250, %v5254
      %v5257 = vshll.u32 %v5101, 16
      %v5259 = vrot.slane %v5257, 1
      %v5260 = vsel %vm1222, %v5255, %v5259
      %v5262 = vshrl.u32 %v5022, 16
      %v5264 = vshll.u32 %v5022, 16
      %v5266 = vrot.slane %v5264, 1
      %v5267 = vor.u32 %v5262, %v5266
      %v5269 = vshll.u32 %v5102, 16
      %v5271 = vrot.slane %v5269, 1
      %v5272 = vsel %vm1222, %v5267, %v5271
      %v5274 = vshrl.u32 %v5023, 16
      %v5276 = vshll.u32 %v5023, 16
      %v5278 = vrot.slane %v5276, 1
      %v5279 = vor.u32 %v5274, %v5278
      %v5281 = vshll.u32 %v5103, 16
      %v5283 = vrot.slane %v5281, 1
      %v5284 = vsel %vm1222, %v5279, %v5283
      %v5286 = vshrl.u32 %v5024, 16
      %v5288 = vshll.u32 %v5024, 16
      %v5290 = vrot.slane %v5288, 1
      %v5291 = vor.u32 %v5286, %v5290
      %v5293 = vshll.u32 %v5104, 16
      %v5295 = vrot.slane %v5293, 1
      %v5296 = vsel %vm1222, %v5291, %v5295
      %5297 = vrot.lane.b32.xlu0 %v5116, 56
      %v5298 = vpop.permute.xlu0 %5297
      %5299 = vrot.lane.b32.xlu0 %v5128, 56
      %v5300 = vpop.permute.xlu0 %5299
      %5301 = vrot.lane.b32.xlu0 %v5140, 56
      %v5302 = vpop.permute.xlu0 %5301
      %5303 = vrot.lane.b32.xlu0 %v5152, 56
      %v5304 = vpop.permute.xlu0 %5303
      %5305 = vrot.lane.b32.xlu0 %v5164, 56
      %v5306 = vpop.permute.xlu0 %5305
      %5307 = vrot.lane.b32.xlu0 %v5176, 56
      %v5308 = vpop.permute.xlu0 %5307
      %5309 = vrot.lane.b32.xlu0 %v5188, 56
      %v5310 = vpop.permute.xlu0 %5309
      %5311 = vrot.lane.b32.xlu0 %v5200, 56
      %v5312 = vpop.permute.xlu0 %5311
      %5313 = vrot.lane.b32.xlu0 %v5212, 56
      %v5314 = vpop.permute.xlu0 %5313
      %5315 = vrot.lane.b32.xlu0 %v5224, 56
      %v5316 = vpop.permute.xlu0 %5315
      %5317 = vrot.lane.b32.xlu0 %v5236, 56
      %v5318 = vpop.permute.xlu0 %5317
      %5319 = vrot.lane.b32.xlu0 %v5248, 56
      %v5320 = vpop.permute.xlu0 %5319
      %5321 = vrot.lane.b32.xlu0 %v5260, 56
      %v5322 = vpop.permute.xlu0 %5321
      %5323 = vrot.lane.b32.xlu0 %v5272, 56
      %v5324 = vpop.permute.xlu0 %5323
      %5325 = vrot.lane.b32.xlu0 %v5284, 56
      %v5326 = vpop.permute.xlu0 %5325
      %5327 = vrot.lane.b32.xlu0 %v5296, 56
      %v5328 = vpop.permute.xlu0 %5327
      %v5345 = vunpack.c.l.b16 %v3937
      %v5346 = vunpack.c.l.b16 %v3938
      %v5347 = vunpack.c.l.b16 %v3939
      %v5348 = vunpack.c.l.b16 %v3940
      %v5349 = vunpack.c.l.b16 %v3941
      %v5350 = vunpack.c.l.b16 %v3942
      %v5351 = vunpack.c.l.b16 %v3943
      %v5352 = vunpack.c.l.b16 %v3944
      %v5353 = vunpack.c.l.b16 %v3945
      %v5354 = vunpack.c.l.b16 %v3946
      %v5355 = vunpack.c.l.b16 %v3947
      %v5356 = vunpack.c.l.b16 %v3948
      %v5357 = vunpack.c.l.b16 %v3949
      %v5358 = vunpack.c.l.b16 %v3950
      %v5359 = vunpack.c.l.b16 %v3951
      %v5360 = vunpack.c.l.b16 %v3952
      %v5361 = vpack.c.b16 %v4978, %v5345
      %v5362 = vpack.c.b16 %v4980, %v5346
      %v5363 = vpack.c.b16 %v4982, %v5347
      %v5364 = vpack.c.b16 %v4984, %v5348
      %v5365 = vpack.c.b16 %v4986, %v5349
      %v5366 = vpack.c.b16 %v4988, %v5350
      %v5367 = vpack.c.b16 %v4990, %v5351
      %v5368 = vpack.c.b16 %v4992, %v5352
      %v5369 = vpack.c.b16 %v4994, %v5353
      %v5370 = vpack.c.b16 %v4996, %v5354
      %v5371 = vpack.c.b16 %v4998, %v5355
      %v5372 = vpack.c.b16 %v5000, %v5356
      %v5373 = vpack.c.b16 %v5002, %v5357
      %v5374 = vpack.c.b16 %v5004, %v5358
      %v5375 = vpack.c.b16 %v5006, %v5359
      %v5376 = vpack.c.b16 %v5008, %v5360
      %v5377 = vrot.slane %v5361, 1
      %v5378 = vrot.slane %v5089, 1
      %v5379 = vsel %vm1495, %v5377, %v5378
      %v5380 = vrot.slane %v5362, 1
      %v5381 = vrot.slane %v5090, 1
      %v5382 = vsel %vm1495, %v5380, %v5381
      %v5383 = vrot.slane %v5363, 1
      %v5384 = vrot.slane %v5091, 1
      %v5385 = vsel %vm1495, %v5383, %v5384
      %v5386 = vrot.slane %v5364, 1
      %v5387 = vrot.slane %v5092, 1
      %v5388 = vsel %vm1495, %v5386, %v5387
      %v5389 = vrot.slane %v5365, 1
      %v5390 = vrot.slane %v5093, 1
      %v5391 = vsel %vm1495, %v5389, %v5390
      %v5392 = vrot.slane %v5366, 1
      %v5393 = vrot.slane %v5094, 1
      %v5394 = vsel %vm1495, %v5392, %v5393
      %v5395 = vrot.slane %v5367, 1
      %v5396 = vrot.slane %v5095, 1
      %v5397 = vsel %vm1495, %v5395, %v5396
      %v5398 = vrot.slane %v5368, 1
      %v5399 = vrot.slane %v5096, 1
      %v5400 = vsel %vm1495, %v5398, %v5399
      %v5401 = vrot.slane %v5369, 1
      %v5402 = vrot.slane %v5097, 1
      %v5403 = vsel %vm1495, %v5401, %v5402
      %v5404 = vrot.slane %v5370, 1
      %v5405 = vrot.slane %v5098, 1
      %v5406 = vsel %vm1495, %v5404, %v5405
      %v5407 = vrot.slane %v5371, 1
      %v5408 = vrot.slane %v5099, 1
      %v5409 = vsel %vm1495, %v5407, %v5408
      %v5410 = vrot.slane %v5372, 1
      %v5411 = vrot.slane %v5100, 1
      %v5412 = vsel %vm1495, %v5410, %v5411
      %v5413 = vrot.slane %v5373, 1
      %v5414 = vrot.slane %v5101, 1
      %v5415 = vsel %vm1495, %v5413, %v5414
      %v5416 = vrot.slane %v5374, 1
      %v5417 = vrot.slane %v5102, 1
      %v5418 = vsel %vm1495, %v5416, %v5417
      %v5419 = vrot.slane %v5375, 1
      %v5420 = vrot.slane %v5103, 1
      %v5421 = vsel %vm1495, %v5419, %v5420
      %v5422 = vrot.slane %v5376, 1
      %v5423 = vrot.slane %v5104, 1
      %v5424 = vsel %vm1495, %v5422, %v5423
      %5425 = vrot.lane.b32.xlu0 %v5379, 64
      %v5426 = vpop.permute.xlu0 %5425
      %5427 = vrot.lane.b32.xlu0 %v5382, 64
      %v5428 = vpop.permute.xlu0 %5427
      %5429 = vrot.lane.b32.xlu0 %v5385, 64
      %v5430 = vpop.permute.xlu0 %5429
      %5431 = vrot.lane.b32.xlu0 %v5388, 64
      %v5432 = vpop.permute.xlu0 %5431
      %5433 = vrot.lane.b32.xlu0 %v5391, 64
      %v5434 = vpop.permute.xlu0 %5433
      %5435 = vrot.lane.b32.xlu0 %v5394, 64
      %v5436 = vpop.permute.xlu0 %5435
      %5437 = vrot.lane.b32.xlu0 %v5397, 64
      %v5438 = vpop.permute.xlu0 %5437
      %5439 = vrot.lane.b32.xlu0 %v5400, 64
      %v5440 = vpop.permute.xlu0 %5439
      %5441 = vrot.lane.b32.xlu0 %v5403, 64
      %v5442 = vpop.permute.xlu0 %5441
      %5443 = vrot.lane.b32.xlu0 %v5406, 64
      %v5444 = vpop.permute.xlu0 %5443
      %5445 = vrot.lane.b32.xlu0 %v5409, 64
      %v5446 = vpop.permute.xlu0 %5445
      %5447 = vrot.lane.b32.xlu0 %v5412, 64
      %v5448 = vpop.permute.xlu0 %5447
      %5449 = vrot.lane.b32.xlu0 %v5415, 64
      %v5450 = vpop.permute.xlu0 %5449
      %5451 = vrot.lane.b32.xlu0 %v5418, 64
      %v5452 = vpop.permute.xlu0 %5451
      %5453 = vrot.lane.b32.xlu0 %v5421, 64
      %v5454 = vpop.permute.xlu0 %5453
      %5455 = vrot.lane.b32.xlu0 %v5424, 64
      %v5456 = vpop.permute.xlu0 %5455
      %v5458 = vsel %vm2633, %v4017, %v4274
      %v5460 = vsel %vm2633, %v4018, %v4276
      %v5462 = vsel %vm2633, %v4019, %v4278
      %v5464 = vsel %vm2633, %v4020, %v4280
      %v5466 = vsel %vm2633, %v4021, %v4282
      %v5468 = vsel %vm2633, %v4022, %v4284
      %v5470 = vsel %vm2633, %v4023, %v4286
      %v5472 = vsel %vm2633, %v4024, %v4288
      %v5474 = vsel %vm2633, %v4025, %v4290
      %v5476 = vsel %vm2633, %v4026, %v4292
      %v5478 = vsel %vm2633, %v4027, %v4294
      %v5480 = vsel %vm2633, %v4028, %v4296
      %v5482 = vsel %vm2633, %v4029, %v4298
      %v5484 = vsel %vm2633, %v4030, %v4300
      %v5486 = vsel %vm2633, %v4031, %v4302
      %v5488 = vsel %vm2633, %v4032, %v4304
      %v5490 = vsel %vm2699, %v5458, %v4402
      %v5492 = vsel %vm2699, %v5460, %v4404
      %v5494 = vsel %vm2699, %v5462, %v4406
      %v5496 = vsel %vm2699, %v5464, %v4408
      %v5498 = vsel %vm2699, %v5466, %v4410
      %v5500 = vsel %vm2699, %v5468, %v4412
      %v5502 = vsel %vm2699, %v5470, %v4414
      %v5504 = vsel %vm2699, %v5472, %v4416
      %v5506 = vsel %vm2699, %v5474, %v4418
      %v5508 = vsel %vm2699, %v5476, %v4420
      %v5510 = vsel %vm2699, %v5478, %v4422
      %v5512 = vsel %vm2699, %v5480, %v4424
      %v5514 = vsel %vm2699, %v5482, %v4426
      %v5516 = vsel %vm2699, %v5484, %v4428
      %v5518 = vsel %vm2699, %v5486, %v4430
      %v5520 = vsel %vm2699, %v5488, %v4432
      %v5522 = vsel %vm2765, %v5490, %v4514
      %v5524 = vsel %vm2765, %v5492, %v4516
      %v5526 = vsel %vm2765, %v5494, %v4518
      %v5528 = vsel %vm2765, %v5496, %v4520
      %v5530 = vsel %vm2765, %v5498, %v4522
      %v5532 = vsel %vm2765, %v5500, %v4524
      %v5534 = vsel %vm2765, %v5502, %v4526
      %v5536 = vsel %vm2765, %v5504, %v4528
      %v5538 = vsel %vm2765, %v5506, %v4530
      %v5540 = vsel %vm2765, %v5508, %v4532
      %v5542 = vsel %vm2765, %v5510, %v4534
      %v5544 = vsel %vm2765, %v5512, %v4536
      %v5546 = vsel %vm2765, %v5514, %v4538
      %v5548 = vsel %vm2765, %v5516, %v4540
      %v5550 = vsel %vm2765, %v5518, %v4542
      %v5552 = vsel %vm2765, %v5520, %v4544
      %v5554 = vsel %vm2831, %v5522, %v4786
      %v5556 = vsel %vm2831, %v5524, %v4788
      %v5558 = vsel %vm2831, %v5526, %v4790
      %v5560 = vsel %vm2831, %v5528, %v4792
      %v5562 = vsel %vm2831, %v5530, %v4794
      %v5564 = vsel %vm2831, %v5532, %v4796
      %v5566 = vsel %vm2831, %v5534, %v4798
      %v5568 = vsel %vm2831, %v5536, %v4800
      %v5570 = vsel %vm2831, %v5538, %v4802
      %v5572 = vsel %vm2831, %v5540, %v4804
      %v5574 = vsel %vm2831, %v5542, %v4806
      %v5576 = vsel %vm2831, %v5544, %v4808
      %v5578 = vsel %vm2831, %v5546, %v4810
      %v5580 = vsel %vm2831, %v5548, %v4812
      %v5582 = vsel %vm2831, %v5550, %v4814
      %v5584 = vsel %vm2831, %v5552, %v4816
      %vm5585 = vcmask 326656
      %v5587 = vsel %vm5585, %v5554, %v4914
      %v5589 = vsel %vm5585, %v5556, %v4916
      %v5591 = vsel %vm5585, %v5558, %v4918
      %v5593 = vsel %vm5585, %v5560, %v4920
      %v5595 = vsel %vm5585, %v5562, %v4922
      %v5597 = vsel %vm5585, %v5564, %v4924
      %v5599 = vsel %vm5585, %v5566, %v4926
      %v5601 = vsel %vm5585, %v5568, %v4928
      %v5603 = vsel %vm5585, %v5570, %v4930
      %v5605 = vsel %vm5585, %v5572, %v4932
      %v5607 = vsel %vm5585, %v5574, %v4934
      %v5609 = vsel %vm5585, %v5576, %v4936
      %v5611 = vsel %vm5585, %v5578, %v4938
      %v5613 = vsel %vm5585, %v5580, %v4940
      %v5615 = vsel %vm5585, %v5582, %v4942
      %v5617 = vsel %vm5585, %v5584, %v4944
      %vm5618 = vcmask 392192
      %v5620 = vsel %vm5618, %v5587, %v5026
      %v5622 = vsel %vm5618, %v5589, %v5028
      %v5624 = vsel %vm5618, %v5591, %v5030
      %v5626 = vsel %vm5618, %v5593, %v5032
      %v5628 = vsel %vm5618, %v5595, %v5034
      %v5630 = vsel %vm5618, %v5597, %v5036
      %v5632 = vsel %vm5618, %v5599, %v5038
      %v5634 = vsel %vm5618, %v5601, %v5040
      %v5636 = vsel %vm5618, %v5603, %v5042
      %v5638 = vsel %vm5618, %v5605, %v5044
      %v5640 = vsel %vm5618, %v5607, %v5046
      %v5642 = vsel %vm5618, %v5609, %v5048
      %v5644 = vsel %vm5618, %v5611, %v5050
      %v5646 = vsel %vm5618, %v5613, %v5052
      %v5648 = vsel %vm5618, %v5615, %v5054
      %v5650 = vsel %vm5618, %v5617, %v5056
      %vm5651 = vcmask 457728
      %v5653 = vsel %vm5651, %v5620, %v5298
      %v5655 = vsel %vm5651, %v5622, %v5300
      %v5657 = vsel %vm5651, %v5624, %v5302
      %v5659 = vsel %vm5651, %v5626, %v5304
      %v5661 = vsel %vm5651, %v5628, %v5306
      %v5663 = vsel %vm5651, %v5630, %v5308
      %v5665 = vsel %vm5651, %v5632, %v5310
      %v5667 = vsel %vm5651, %v5634, %v5312
      %v5669 = vsel %vm5651, %v5636, %v5314
      %v5671 = vsel %vm5651, %v5638, %v5316
      %v5673 = vsel %vm5651, %v5640, %v5318
      %v5675 = vsel %vm5651, %v5642, %v5320
      %v5677 = vsel %vm5651, %v5644, %v5322
      %v5679 = vsel %vm5651, %v5646, %v5324
      %v5681 = vsel %vm5651, %v5648, %v5326
      %v5683 = vsel %vm5651, %v5650, %v5328
      %vm5684 = vcmask 523264
      %v5686 = vsel %vm5684, %v5653, %v5426
      %v5688 = vsel %vm5684, %v5655, %v5428
      %v5690 = vsel %vm5684, %v5657, %v5430
      %v5692 = vsel %vm5684, %v5659, %v5432
      %v5694 = vsel %vm5684, %v5661, %v5434
      %v5696 = vsel %vm5684, %v5663, %v5436
      %v5698 = vsel %vm5684, %v5665, %v5438
      %v5700 = vsel %vm5684, %v5667, %v5440
      %v5702 = vsel %vm5684, %v5669, %v5442
      %v5704 = vsel %vm5684, %v5671, %v5444
      %v5706 = vsel %vm5684, %v5673, %v5446
      %v5708 = vsel %vm5684, %v5675, %v5448
      %v5710 = vsel %vm5684, %v5677, %v5450
      %v5712 = vsel %vm5684, %v5679, %v5452
      %v5714 = vsel %vm5684, %v5681, %v5454
      %v5716 = vsel %vm5684, %v5683, %v5456
      %v5717 = vld [vmem:[%s3] sm:$0xf]
      %v5718 = vld [vmem:[%s3 + $0x4] sm:$0xf]
      %v5719 = vld [vmem:[%s3 + $0x8] sm:$0xf]
      %v5720 = vld [vmem:[%s3 + $0xc] sm:$0xf]
      %v5721 = vld [vmem:[%s3 + $0x10] sm:$0xf]
      %v5722 = vld [vmem:[%s3 + $0x14] sm:$0xf]
      %v5723 = vld [vmem:[%s3 + $0x18] sm:$0xf]
      %v5724 = vld [vmem:[%s3 + $0x1c] sm:$0xf]
      %v5725 = vld [vmem:[%s3 + $0x20] sm:$0xf]
      %v5726 = vld [vmem:[%s4] sm:$0x1]
      %v5728 = vlaneseq
      %v5729 = vshrl.u32 %v5728, 7
      %v5730 = vsub.s32 0, %v5729
      %v5731 = vrot.slane %v5726, %v5730
      %v5742 = vunpack.c.l.b16 %v5717
      %v5743 = vunpack.c.l.b16 %v5718
      %v5744 = vunpack.c.l.b16 %v5719
      %v5745 = vunpack.c.l.b16 %v5720
      %v5746 = vunpack.c.l.b16 %v5721
      %v5747 = vunpack.c.l.b16 %v5722
      %v5748 = vunpack.c.l.b16 %v5723
      %v5749 = vunpack.c.l.b16 %v5724
      %v5750 = vunpack.c.l.b16 %v5725
      %v5751 = vpack.c.b16 %v5743, %v5742
      %v5752 = vpack.c.b16 %v5745, %v5744
      %v5753 = vpack.c.b16 %v5747, %v5746
      %v5754 = vpack.c.b16 %v5749, %v5748
      %v5755 = vpack.c.b16 %v5750, %v5750
      %vm5760 = vcmask 588800
      %v5761 = vsel %vm5760, %v5686, 0
      %v5763 = vsel %vm5760, %v5688, 0
      %v5765 = vsel %vm5760, %v5690, 0
      %v5767 = vsel %vm5760, %v5692, 0
      %v5769 = vsel %vm5760, %v5694, 0
      %v5771 = vsel %vm5760, %v5696, 0
      %v5773 = vsel %vm5760, %v5698, 0
      %v5775 = vsel %vm5760, %v5700, 0
      %v5777 = vsel %vm5760, %v5702, 0
      %v5779 = vsel %vm5760, %v5704, 0
      %v5781 = vsel %vm5760, %v5706, 0
      %v5783 = vsel %vm5760, %v5708, 0
      %v5785 = vsel %vm5760, %v5710, 0
      %v5787 = vsel %vm5760, %v5712, 0
      %v5789 = vsel %vm5760, %v5714, 0
      %v5791 = vsel %vm5760, %v5716, 0
      %vm5793 = vcmask 1043456
      %v5795 = vsel %vm5793, %v5755, 0
      %5797 = vmatprep.subr.bf16.mxu0 0
      %5798 = vmatpush1.bf16.msra.mxu0 %v5751
      %5799 = vmatprep.subr.bf16.mxu0 0
      %5800 = vmatpush1.bf16.msra.mxu0 %v5752
      %5801 = vmatprep.subr.bf16.mxu0 0
      %5802 = vmatpush1.bf16.msra.mxu0 %v5753
      %5803 = vmatprep.subr.bf16.mxu0 0
      %5804 = vmatpush1.bf16.msra.mxu0 %v5754
      %5805 = vmatprep.subr.bf16.mxu0 0
      %5806 = vmatpush1.bf16.msra.mxu0 %v5795
      %5807 = vmatprep.subr.bf16.mxu0 0
      %5808 = vmatpush1.bf16.msra.mxu0 0
      %5809 = vmatprep.subr.bf16.mxu0 0
      %5810 = vmatpush1.bf16.msra.mxu0 0
      %5811 = vmatprep.subr.bf16.mxu0 0
      %5812 = vmatpush1.bf16.msra.mxu0 0
      %5813 = vmatprep.subr.bf16.mxu0 0
      %5814 = vmatpush1.bf16.msra.mxu0 0
      %5815 = vmatprep.subr.bf16.mxu0 0
      %5816 = vmatpush1.bf16.msra.mxu0 0
      %5817 = vmatprep.subr.bf16.mxu0 0
      %5818 = vmatpush1.bf16.msra.mxu0 0
      %5819 = vmatprep.subr.bf16.mxu0 0
      %5820 = vmatpush1.bf16.msra.mxu0 0
      %5821 = vmatprep.subr.bf16.mxu0 0
      %5822 = vmatpush1.bf16.msra.mxu0 0
      %5823 = vmatprep.subr.bf16.mxu0 0
      %5824 = vmatpush1.bf16.msra.mxu0 0
      %5825 = vmatprep.subr.bf16.mxu0 0
      %5826 = vmatpush1.bf16.msra.mxu0 0
      %5827 = vmatprep.subr.bf16.mxu0 0
      %5828 = vmatpush1.bf16.msra.mxu0 0
      %5829 = vmatprep.mubr.bf16.mxu0 0
      %5830 = vmatmul.mubr.bf16.gmra.mrb[0].mxu0 %v5761
      %v5831 = vpop.f32.mrb[0].mxu0
      %v5832 = vadd.f32 %v5731, %v5831
      %v5833 = vpop.f32.mrb[0].mxu0
      %v5834 = vpop.f32.mrb[0].mxu0
      %v5835 = vadd.f32 %v5731, %v5834
      %v5836 = vpop.f32.mrb[0].mxu0
      %5837 = vmatprep.mubr.bf16.mxu0 0
      %5838 = vmatmul.mubr.bf16.gmra.mrb[0].mxu0 %v5763
      %v5839 = vpop.f32.mrb[0].mxu0
      %v5840 = vadd.f32 %v5731, %v5839
      %v5841 = vpop.f32.mrb[0].mxu0
      %v5842 = vpop.f32.mrb[0].mxu0
      %v5843 = vadd.f32 %v5731, %v5842
      %v5844 = vpop.f32.mrb[0].mxu0
      %5845 = vmatprep.mubr.bf16.mxu0 0
      %5846 = vmatmul.mubr.bf16.gmra.mrb[0].mxu0 %v5765
      %v5847 = vpop.f32.mrb[0].mxu0
      %v5848 = vadd.f32 %v5731, %v5847
      %v5849 = vpop.f32.mrb[0].mxu0
      %v5850 = vpop.f32.mrb[0].mxu0
      %v5851 = vadd.f32 %v5731, %v5850
      %v5852 = vpop.f32.mrb[0].mxu0
      %5853 = vmatprep.mubr.bf16.mxu0 0
      %5854 = vmatmul.mubr.bf16.gmra.mrb[0].mxu0 %v5767
      %v5855 = vpop.f32.mrb[0].mxu0
      %v5856 = vadd.f32 %v5731, %v5855
      %v5857 = vpop.f32.mrb[0].mxu0
      %v5858 = vpop.f32.mrb[0].mxu0
      %v5859 = vadd.f32 %v5731, %v5858
      %v5860 = vpop.f32.mrb[0].mxu0
      %5861 = vmatprep.mubr.bf16.mxu0 0
      %5862 = vmatmul.mubr.bf16.gmra.mrb[0].mxu0 %v5769
      %v5863 = vpop.f32.mrb[0].mxu0
      %v5864 = vadd.f32 %v5731, %v5863
      %v5865 = vpop.f32.mrb[0].mxu0
      %v5866 = vpop.f32.mrb[0].mxu0
      %v5867 = vadd.f32 %v5731, %v5866
      %v5868 = vpop.f32.mrb[0].mxu0
      %5869 = vmatprep.mubr.bf16.mxu0 0
      %5870 = vmatmul.mubr.bf16.gmra.mrb[0].mxu0 %v5771
      %v5871 = vpop.f32.mrb[0].mxu0
      %v5872 = vadd.f32 %v5731, %v5871
      %v5873 = vpop.f32.mrb[0].mxu0
      %v5874 = vpop.f32.mrb[0].mxu0
      %v5875 = vadd.f32 %v5731, %v5874
      %v5876 = vpop.f32.mrb[0].mxu0
      %5877 = vmatprep.mubr.bf16.mxu0 0
      %5878 = vmatmul.mubr.bf16.gmra.mrb[0].mxu0 %v5773
      %v5879 = vpop.f32.mrb[0].mxu0
      %v5880 = vadd.f32 %v5731, %v5879
      %v5881 = vpop.f32.mrb[0].mxu0
      %v5882 = vpop.f32.mrb[0].mxu0
      %v5883 = vadd.f32 %v5731, %v5882
      %v5884 = vpop.f32.mrb[0].mxu0
      %5885 = vmatprep.mubr.bf16.mxu0 0
      %5886 = vmatmul.mubr.bf16.gmra.mrb[0].mxu0 %v5775
      %v5887 = vpop.f32.mrb[0].mxu0
      %v5888 = vadd.f32 %v5731, %v5887
      %v5889 = vpop.f32.mrb[0].mxu0
      %v5890 = vpop.f32.mrb[0].mxu0
      %v5891 = vadd.f32 %v5731, %v5890
      %v5892 = vpop.f32.mrb[0].mxu0
      %5893 = vmatprep.mubr.bf16.mxu0 0
      %5894 = vmatmul.mubr.bf16.gmra.mrb[0].mxu0 %v5777
      %v5895 = vpop.f32.mrb[0].mxu0
      %v5896 = vadd.f32 %v5731, %v5895
      %v5897 = vpop.f32.mrb[0].mxu0
      %v5898 = vpop.f32.mrb[0].mxu0
      %v5899 = vadd.f32 %v5731, %v5898
      %v5900 = vpop.f32.mrb[0].mxu0
      %5901 = vmatprep.mubr.bf16.mxu0 0
      %5902 = vmatmul.mubr.bf16.gmra.mrb[0].mxu0 %v5779
      %v5903 = vpop.f32.mrb[0].mxu0
      %v5904 = vadd.f32 %v5731, %v5903
      %v5905 = vpop.f32.mrb[0].mxu0
      %v5906 = vpop.f32.mrb[0].mxu0
      %v5907 = vadd.f32 %v5731, %v5906
      %v5908 = vpop.f32.mrb[0].mxu0
      %5909 = vmatprep.mubr.bf16.mxu0 0
      %5910 = vmatmul.mubr.bf16.gmra.mrb[0].mxu0 %v5781
      %v5911 = vpop.f32.mrb[0].mxu0
      %v5912 = vadd.f32 %v5731, %v5911
      %v5913 = vpop.f32.mrb[0].mxu0
      %v5914 = vpop.f32.mrb[0].mxu0
      %v5915 = vadd.f32 %v5731, %v5914
      %v5916 = vpop.f32.mrb[0].mxu0
      %5917 = vmatprep.mubr.bf16.mxu0 0
      %5918 = vmatmul.mubr.bf16.gmra.mrb[0].mxu0 %v5783
      %v5919 = vpop.f32.mrb[0].mxu0
      %v5920 = vadd.f32 %v5731, %v5919
      %v5921 = vpop.f32.mrb[0].mxu0
      %v5922 = vpop.f32.mrb[0].mxu0
      %v5923 = vadd.f32 %v5731, %v5922
      %v5924 = vpop.f32.mrb[0].mxu0
      %5925 = vmatprep.mubr.bf16.mxu0 0
      %5926 = vmatmul.mubr.bf16.gmra.mrb[0].mxu0 %v5785
      %v5927 = vpop.f32.mrb[0].mxu0
      %v5928 = vadd.f32 %v5731, %v5927
      %v5929 = vpop.f32.mrb[0].mxu0
      %v5930 = vpop.f32.mrb[0].mxu0
      %v5931 = vadd.f32 %v5731, %v5930
      %v5932 = vpop.f32.mrb[0].mxu0
      %5933 = vmatprep.mubr.bf16.mxu0 0
      %5934 = vmatmul.mubr.bf16.gmra.mrb[0].mxu0 %v5787
      %v5935 = vpop.f32.mrb[0].mxu0
      %v5936 = vadd.f32 %v5731, %v5935
      %v5937 = vpop.f32.mrb[0].mxu0
      %v5938 = vpop.f32.mrb[0].mxu0
      %v5939 = vadd.f32 %v5731, %v5938
      %v5940 = vpop.f32.mrb[0].mxu0
      %5941 = vmatprep.mubr.bf16.mxu0 0
      %5942 = vmatmul.mubr.bf16.gmra.mrb[0].mxu0 %v5789
      %v5943 = vpop.f32.mrb[0].mxu0
      %v5944 = vadd.f32 %v5731, %v5943
      %v5945 = vpop.f32.mrb[0].mxu0
      %v5946 = vpop.f32.mrb[0].mxu0
      %v5947 = vadd.f32 %v5731, %v5946
      %v5948 = vpop.f32.mrb[0].mxu0
      %5949 = vmatprep.mubr.bf16.mxu0 0
      %5950 = vmatmul.mubr.bf16.gmra.mrb[0].mxu0 %v5791
      %v5951 = vpop.f32.mrb[0].mxu0
      %v5952 = vadd.f32 %v5731, %v5951
      %v5953 = vpop.f32.mrb[0].mxu0
      %v5954 = vpop.f32.mrb[0].mxu0
      %v5955 = vadd.f32 %v5731, %v5954
      %v5956 = vpop.f32.mrb[0].mxu0
      %5957 = vdwg.mxu0
      %v5958 = vmax.f32 %v5832, 0.0
      %v5959 = vmax.f32 %v5835, 0.0
      %v5960 = vmax.f32 %v5840, 0.0
      %v5961 = vmax.f32 %v5843, 0.0
      %v5962 = vmax.f32 %v5848, 0.0
      %v5963 = vmax.f32 %v5851, 0.0
      %v5964 = vmax.f32 %v5856, 0.0
      %v5965 = vmax.f32 %v5859, 0.0
      %v5966 = vmax.f32 %v5864, 0.0
      %v5967 = vmax.f32 %v5867, 0.0
      %v5968 = vmax.f32 %v5872, 0.0
      %v5969 = vmax.f32 %v5875, 0.0
      %v5970 = vmax.f32 %v5880, 0.0
      %v5971 = vmax.f32 %v5883, 0.0
      %v5972 = vmax.f32 %v5888, 0.0
      %v5973 = vmax.f32 %v5891, 0.0
      %v5974 = vmax.f32 %v5896, 0.0
      %v5975 = vmax.f32 %v5899, 0.0
      %v5976 = vmax.f32 %v5904, 0.0
      %v5977 = vmax.f32 %v5907, 0.0
      %v5978 = vmax.f32 %v5912, 0.0
      %v5979 = vmax.f32 %v5915, 0.0
      %v5980 = vmax.f32 %v5920, 0.0
      %v5981 = vmax.f32 %v5923, 0.0
      %v5982 = vmax.f32 %v5928, 0.0
      %v5983 = vmax.f32 %v5931, 0.0
      %v5984 = vmax.f32 %v5936, 0.0
      %v5985 = vmax.f32 %v5939, 0.0
      %v5986 = vmax.f32 %v5944, 0.0
      %v5987 = vmax.f32 %v5947, 0.0
      %v5988 = vmax.f32 %v5952, 0.0
      %v5989 = vmax.f32 %v5955, 0.0
      %v5990 = vpack.c.bf16 %v5959, %v5958
      %v5991 = vpack.c.bf16 %v5961, %v5960
      %v5992 = vpack.c.bf16 %v5963, %v5962
      %v5993 = vpack.c.bf16 %v5965, %v5964
      %v5994 = vpack.c.bf16 %v5967, %v5966
      %v5995 = vpack.c.bf16 %v5969, %v5968
      %v5996 = vpack.c.bf16 %v5971, %v5970
      %v5997 = vpack.c.bf16 %v5973, %v5972
      %v5998 = vpack.c.bf16 %v5975, %v5974
      %v5999 = vpack.c.bf16 %v5977, %v5976
      %v6000 = vpack.c.bf16 %v5979, %v5978
      %v6001 = vpack.c.bf16 %v5981, %v5980
      %v6002 = vpack.c.bf16 %v5983, %v5982
      %v6003 = vpack.c.bf16 %v5985, %v5984
      %v6004 = vpack.c.bf16 %v5987, %v5986
      %v6005 = vpack.c.bf16 %v5989, %v5988
      %v6022 = vunpack.c.l.b16 %v5990
      %v6023 = vunpack.c.h.b16 %v5990
      %v6024 = vunpack.c.l.b16 %v5991
      %v6025 = vunpack.c.h.b16 %v5991
      %v6026 = vunpack.c.l.b16 %v5992
      %v6027 = vunpack.c.h.b16 %v5992
      %v6028 = vunpack.c.l.b16 %v5993
      %v6029 = vunpack.c.h.b16 %v5993
      %v6030 = vunpack.c.l.b16 %v5994
      %v6031 = vunpack.c.h.b16 %v5994
      %v6032 = vunpack.c.l.b16 %v5995
      %v6033 = vunpack.c.h.b16 %v5995
      %v6034 = vunpack.c.l.b16 %v5996
      %v6035 = vunpack.c.h.b16 %v5996
      %v6036 = vunpack.c.l.b16 %v5997
      %v6037 = vunpack.c.h.b16 %v5997
      %v6038 = vunpack.c.l.b16 %v5998
      %v6039 = vunpack.c.h.b16 %v5998
      %v6040 = vunpack.c.l.b16 %v5999
      %v6041 = vunpack.c.h.b16 %v5999
      %v6042 = vunpack.c.l.b16 %v6000
      %v6043 = vunpack.c.h.b16 %v6000
      %v6044 = vunpack.c.l.b16 %v6001
      %v6045 = vunpack.c.h.b16 %v6001
      %v6046 = vunpack.c.l.b16 %v6002
      %v6047 = vunpack.c.h.b16 %v6002
      %v6048 = vunpack.c.l.b16 %v6003
      %v6049 = vunpack.c.h.b16 %v6003
      %v6050 = vunpack.c.l.b16 %v6004
      %v6051 = vunpack.c.h.b16 %v6004
      %v6052 = vunpack.c.l.b16 %v6005
      %v6053 = vunpack.c.h.b16 %v6005
      %v6054 = vpack.c.b16 %v6022, %v6022
      %v6055 = vpack.c.b16 %v6023, %v6023
      %v6056 = vpack.c.b16 %v6024, %v6024
      %v6057 = vpack.c.b16 %v6025, %v6025
      %v6058 = vpack.c.b16 %v6026, %v6026
      %v6059 = vpack.c.b16 %v6027, %v6027
      %v6060 = vpack.c.b16 %v6028, %v6028
      %v6061 = vpack.c.b16 %v6029, %v6029
      %v6062 = vpack.c.b16 %v6030, %v6030
      %v6063 = vpack.c.b16 %v6031, %v6031
      %v6064 = vpack.c.b16 %v6032, %v6032
      %v6065 = vpack.c.b16 %v6033, %v6033
      %v6066 = vpack.c.b16 %v6034, %v6034
      %v6067 = vpack.c.b16 %v6035, %v6035
      %v6068 = vpack.c.b16 %v6036, %v6036
      %v6069 = vpack.c.b16 %v6037, %v6037
      %v6070 = vpack.c.b16 %v6038, %v6038
      %v6071 = vpack.c.b16 %v6039, %v6039
      %v6072 = vpack.c.b16 %v6040, %v6040
      %v6073 = vpack.c.b16 %v6041, %v6041
      %v6074 = vpack.c.b16 %v6042, %v6042
      %v6075 = vpack.c.b16 %v6043, %v6043
      %v6076 = vpack.c.b16 %v6044, %v6044
      %v6077 = vpack.c.b16 %v6045, %v6045
      %v6078 = vpack.c.b16 %v6046, %v6046
      %v6079 = vpack.c.b16 %v6047, %v6047
      %v6080 = vpack.c.b16 %v6048, %v6048
      %v6081 = vpack.c.b16 %v6049, %v6049
      %v6082 = vpack.c.b16 %v6050, %v6050
      %v6083 = vpack.c.b16 %v6051, %v6051
      %v6084 = vpack.c.b16 %v6052, %v6052
      %v6085 = vpack.c.b16 %v6053, %v6053
      %6118 = vst.msk [vmem:[%s224] sm:$0xf] %vm3121, %v6054
      %6119 = vst.msk [vmem:[%s224 + $0x4] sm:$0xf] %vm3121, %v6055
      %6120 = vst.msk [vmem:[%s224 + $0x8] sm:$0xf] %vm3121, %v6056
      %6121 = vst.msk [vmem:[%s224 + $0xc] sm:$0xf] %vm3121, %v6057
      %6122 = vst.msk [vmem:[%s224 + $0x10] sm:$0xf] %vm3121, %v6058
      %6123 = vst.msk [vmem:[%s224 + $0x14] sm:$0xf] %vm3121, %v6059
      %6124 = vst.msk [vmem:[%s224 + $0x18] sm:$0xf] %vm3121, %v6060
      %6125 = vst.msk [vmem:[%s224 + $0x1c] sm:$0xf] %vm3121, %v6061
      %6126 = vst.msk [vmem:[%s224 + $0x20] sm:$0xf] %vm3121, %v6062
      %6127 = vst.msk [vmem:[%s224 + $0x24] sm:$0xf] %vm3121, %v6063
      %6128 = vst.msk [vmem:[%s224 + $0x28] sm:$0xf] %vm3121, %v6064
      %6129 = vst.msk [vmem:[%s224 + $0x2c] sm:$0xf] %vm3121, %v6065
      %6130 = vst.msk [vmem:[%s224 + $0x30] sm:$0xf] %vm3121, %v6066
      %6131 = vst.msk [vmem:[%s224 + $0x34] sm:$0xf] %vm3121, %v6067
      %6132 = vst.msk [vmem:[%s224 + $0x38] sm:$0xf] %vm3121, %v6068
      %6133 = vst.msk [vmem:[%s224 + $0x3c] sm:$0xf] %vm3121, %v6069
      %6134 = vst.msk [vmem:[%s224 + $0x40] sm:$0xf] %vm3121, %v6070
      %6135 = vst.msk [vmem:[%s224 + $0x44] sm:$0xf] %vm3121, %v6071
      %6136 = vst.msk [vmem:[%s224 + $0x48] sm:$0xf] %vm3121, %v6072
      %6137 = vst.msk [vmem:[%s224 + $0x4c] sm:$0xf] %vm3121, %v6073
      %6138 = vst.msk [vmem:[%s224 + $0x50] sm:$0xf] %vm3121, %v6074
      %6139 = vst.msk [vmem:[%s224 + $0x54] sm:$0xf] %vm3121, %v6075
      %6140 = vst.msk [vmem:[%s224 + $0x58] sm:$0xf] %vm3121, %v6076
      %6141 = vst.msk [vmem:[%s224 + $0x5c] sm:$0xf] %vm3121, %v6077
      %6142 = vst.msk [vmem:[%s224 + $0x60] sm:$0xf] %vm3121, %v6078
      %6143 = vst.msk [vmem:[%s224 + $0x64] sm:$0xf] %vm3121, %v6079
      %6144 = vst.msk [vmem:[%s224 + $0x68] sm:$0xf] %vm3121, %v6080
      %6145 = vst.msk [vmem:[%s224 + $0x6c] sm:$0xf] %vm3121, %v6081
      %6146 = vst.msk [vmem:[%s224 + $0x70] sm:$0xf] %vm3121, %v6082
      %6147 = vst.msk [vmem:[%s224 + $0x74] sm:$0xf] %vm3121, %v6083
      %6148 = vst.msk [vmem:[%s224 + $0x78] sm:$0xf] %vm3121, %v6084
      %6149 = vst.msk [vmem:[%s224 + $0x7c] sm:$0xf] %vm3121, %v6085
      %p6150 = scmp.lt.s32.totalorder %s16, 1
      %s6151 = scalar_select %p6150, %s16, 1
      %s6152 = smul.addr %s6151, 32
      %s6153 = smul.addr %s6152, 4
      %s6154 = scalar_lea.vmem %s5, %s6153
      // Predicated region
      $region41: #{encoder_forward.3} parent=39 // pred_check
        %p6155 = pneg %p144
      $region42: #{encoder_forward.3} parent=39 // pred_check_branch
        %6157 = sbr.rel (%p6155) target = $region44
      $region43: #{encoder_forward.3} parent=39 // pred_region
        _
      $region44: #{encoder_forward.3} parent=39 // pred_fallthru
        _
    $region40: #{encoder_forward.3} parent=5 // pred_fallthru
      _
    %p6158 = scmp.le.s32.totalorder 2, %s11
    // Predicated region
    $region45: #{encoder_forward.3} parent=5 // pred_check
      %p6159 = pneg %p6158
    $region46: #{encoder_forward.3} parent=5 // pred_check_branch
      %6161 = sbr.rel (%p6159) target = $region48
    $region47: #{encoder_forward.3} parent=5 // pred_region
      %s6162 = ssub.s32 %s11, 2
      // Predicated region
      $region49: #{encoder_forward.3} parent=47 // pred_check
        %p6163 = pneg %p150
      $region50: #{encoder_forward.3} parent=47 // pred_check_branch
        %6165 = sbr.rel (%p6163) target = $region52
      $region51: #{encoder_forward.3} parent=47 // pred_region
        %p6166 = scmp.lt.s32.totalorder %s17, 1
        %s6167 = scalar_select %p6166, %s17, 1
        %s6168 = smul.addr %s6167, 32
        %s6169 = smul.addr %s6168, 4
        %s6170 = scalar_lea.vmem %s5, %s6169
      $region52: #{encoder_forward.3} parent=47 // pred_fallthru
        _
    $region48: #{encoder_forward.3} parent=5 // pred_fallthru
      _
  $region6: #{encoder_forward.3} parent=0 // loop_footer
    %s15 = sadd.s32 1, %s11
  $region7: #{encoder_forward.3} parent=0 // loop_footer_branch
    %10 = sbr.rel target = $region3
  $region8: #{encoder_forward.3} parent=0 // loop_exit
    _

</llo_original>
